<compile_context>
chip_gen: v7x
topology: tpu7x:2x2x1
jax: 0.10.0
libtpu: 0.0.40
codegen_flags: <defaults>
</compile_context>

<pallas_src>
import functools

import jax
import jax.numpy as jnp
from jax import lax
from jax.experimental import pallas as pl
from jax.experimental.pallas import tpu as pltpu


def _round_up(v, m):
    return ((v + m - 1) // m) * m


def _fold_bn(bn, eps=1e-5):
    gamma, beta, mean, var = bn
    scale = gamma / jnp.sqrt(var + eps)
    return scale, beta - mean * scale


# ----------------------------------------------------------------------------
# Fused ResBlock kernel (one grid step == one image)
# ----------------------------------------------------------------------------
def _stack_taps(stk_ref, src_ref, c, shifts, m):
    """stk[k*c:(k+1)*c, j] = src[:, j + s_k]   (zero where j+s_k out of range).

    Builds a (9*c, m) bf16 im2col block in VMEM from 9 lane-shifted copies of
    src (which already carries the zero ring / zero lane-pad tail), so each
    conv becomes a single big-K MXU dot.
    """
    for k, s in enumerate(shifts):
        r0, r1 = k * c, (k + 1) * c
        if s >= 0:
            if s > 0:
                stk_ref[r0:r1, m - s:m] = jnp.zeros((c, s), jnp.bfloat16)
            stk_ref[r0:r1, 0:m - s] = src_ref[:, s:m]
        else:
            t = -s
            stk_ref[r0:r1, 0:t] = jnp.zeros((c, t), jnp.bfloat16)
            stk_ref[r0:r1, t:m] = src_ref[:, 0:m - t]


def _resblock_kernel(*refs, m, wp, cin, cout, conv1_im2col, has_proj):
    """Fused ResBlock on one image's (C, m) lane-dense block.

    m  : per-image padded lane count (multiple of 128)
    wp : padded output row width (Wo + 2), used to derive the 9 tap shifts
    """
    (xin_ref, w1_ref, s1_ref, b1_ref,
     w2_ref, s2_ref, b2_ref, ring_ref) = refs[:8]
    rest = refs[8:]
    if has_proj:
        wsh_ref, ssh_ref, bsh_ref = rest[:3]
        rest = rest[3:]
    o_ref = rest[0]
    if conv1_im2col:
        hbf_ref, stk_ref = rest[1:]
    else:
        xbf_ref, hbf_ref, stk_ref = rest[1:]

    shifts = tuple(di * wp + dj for di in (-1, 0, 1) for dj in (-1, 0, 1))
    ring = ring_ref[...]                                     # (1, m) f32

    # ---- conv1 + BN1 + ReLU (one big-K bf16 MXU dot) ------------------------
    if conv1_im2col:
        # stride != 1: (9*Cin, m) bf16 im2col prepared by the wrapper.
        acc1 = jnp.dot(w1_ref[...], xin_ref[...],
                       preferred_element_type=jnp.float32)   # (Cout, m)
    else:
        xbf_ref[...] = xin_ref[...].astype(jnp.bfloat16)     # single cast pass
        _stack_taps(stk_ref, xbf_ref, cin, shifts, m)
        acc1 = jnp.dot(w1_ref[...], stk_ref[0:9 * cin, :],
                       preferred_element_type=jnp.float32)
    # zero the ring / lane pad so it acts as conv2's implicit zero padding
    h = jnp.maximum(acc1 * s1_ref[...] + b1_ref[...], 0.0) * ring
    hbf_ref[...] = h.astype(jnp.bfloat16)                    # single cast pass

    # ---- conv2 + BN2 (always stride 1), VMEM-resident -----------------------
    _stack_taps(stk_ref, hbf_ref, cout, shifts, m)
    acc2 = jnp.dot(w2_ref[...], stk_ref[0:9 * cout, :],
                   preferred_element_type=jnp.float32)
    left = acc2 * s2_ref[...] + b2_ref[...]

    # ---- shortcut ------------------------------------------------------------
    if has_proj:
        if conv1_im2col:
            # centre tap of the im2col == the stride-subsampled input
            sc_in = xin_ref[4 * cin:5 * cin, :]              # (Cin, m) bf16
        else:
            sc_in = xbf_ref[...]
        sc = jnp.dot(wsh_ref[...], sc_in, preferred_element_type=jnp.float32)
        sc = sc * ssh_ref[...] + bsh_ref[...]
    else:
        sc = xin_ref[...]                                    # identity, f32

    # final ReLU; re-zero the ring so the layout stays chain-safe
    o_ref[...] = jnp.maximum(left + sc, 0.0) * ring


# ----------------------------------------------------------------------------
# Layout helpers (used only at the network boundary)
# ----------------------------------------------------------------------------
def _ring_mask(hp, wp, m):
    vh = (jnp.arange(hp) >= 1) & (jnp.arange(hp) <= hp - 2)
    vw = (jnp.arange(wp) >= 1) & (jnp.arange(wp) <= wp - 2)
    ring = (vh[:, None] & vw[None, :]).astype(jnp.float32).reshape(1, hp * wp)
    return jnp.pad(ring, ((0, 0), (0, m - hp * wp)))


def to_block_layout(x):
    """(N, C, H, W) NCHW f32 -> ((C, N*M) padded channel-major, (N, H, W))."""
    N, C, H, W = x.shape
    hp, wp = H + 2, W + 2
    mimg = hp * wp
    m = _round_up(mimg, 128)
    xp = jnp.pad(x, ((0, 0), (0, 0), (1, 1), (1, 1)))
    xf = jnp.transpose(xp, (1, 0, 2, 3)).reshape(C, N, mimg)
    xf = jnp.pad(xf, ((0, 0), (0, 0), (0, m - mimg)))
    return xf.reshape(C, N * m), (N, H, W)


def from_block_layout(y, spatial, c):
    N, H, W = spatial
    hp, wp = H + 2, W + 2
    m = _round_up(hp * wp, 128)
    y = y.reshape(c, N, m)[:, :, :hp * wp].reshape(c, N, hp, wp)
    y = y[:, :, 1:H + 1, 1:W + 1]
    return jnp.transpose(y, (1, 0, 2, 3))


# ----------------------------------------------------------------------------
# Wrapper: one fused pallas_call per ResBlock, persistent layout in/out
# ----------------------------------------------------------------------------
def resblock_forward(x, spatial, p):
    """x: (Cin, N*Mi) persistent layout; spatial=(N, H, W) valid dims.

    Returns (y, (N, Ho, Wo)) in the same layout family.
    """
    N, H, W = spatial
    Cout, Cin = p["w1"].shape[:2]
    stride = p["stride"]
    has_proj = "wsh" in p

    Ho = (H - 1) // stride + 1
    Wo = (W - 1) // stride + 1
    hp_i, wp_i = H + 2, W + 2
    hp_o, wp_o = Ho + 2, Wo + 2
    mi = _round_up(hp_i * wp_i, 128)
    mo = _round_up(hp_o * wp_o, 128)

    s1, b1 = _fold_bn(p["bn1"])
    s2, b2 = _fold_bn(p["bn2"])
    # tap-major, channel-minor weight layout matching the stacked im2col rows
    w1t = jnp.transpose(p["w1"], (0, 2, 3, 1)).reshape(Cout, 9 * Cin)
    w2t = jnp.transpose(p["w2"], (0, 2, 3, 1)).reshape(Cout, 9 * Cout)
    w1t, w2t = w1t.astype(jnp.bfloat16), w2t.astype(jnp.bfloat16)
    ring = _ring_mask(hp_o, wp_o, mo)

    if stride == 1:
        xin = x                                   # (Cin, N*mi), mi == mo
        conv1_im2col = False
    else:
        # TODO(synk): the strided conv1 gather is a wrapper-side im2col (the
        # uniform lane-shift trick only expresses stride-1 taps); moving it
        # in-kernel would need per-row strided pl.ds reads.
        x4 = x.reshape(Cin, N, mi)[:, :, :hp_i * wp_i]
        x4 = x4.reshape(Cin, N, hp_i, wp_i)
        taps = []
        for ki in range(3):
            for kj in range(3):
                taps.append(x4[:, :, ki:ki + stride * (Ho - 1) + 1:stride,
                                     kj:kj + stride * (Wo - 1) + 1:stride])
        a1 = jnp.stack(taps, axis=0).reshape(9 * Cin, N, Ho, Wo)
        a1 = jnp.pad(a1, ((0, 0), (0, 0), (1, 1), (1, 1)))
        a1 = a1.reshape(9 * Cin, N, hp_o * wp_o)
        a1 = jnp.pad(a1, ((0, 0), (0, 0), (0, mo - hp_o * wp_o)))
        xin = a1.reshape(9 * Cin, N * mo).astype(jnp.bfloat16)
        conv1_im2col = True
        assert has_proj  # the nn module always projects when stride != 1

    inputs = [xin, w1t, s1.reshape(Cout, 1), b1.reshape(Cout, 1),
              w2t, s2.reshape(Cout, 1), b2.reshape(Cout, 1), ring]
    if has_proj:
        ssh, bsh = _fold_bn(p["bnsh"])
        inputs += [p["wsh"].reshape(Cout, Cin).astype(jnp.bfloat16),
                   ssh.reshape(Cout, 1), bsh.reshape(Cout, 1)]

    def full_spec(a):
        zeros = (0,) * a.ndim
        return pl.BlockSpec(a.shape, lambda n, _z=zeros: _z)

    in_specs = [pl.BlockSpec((xin.shape[0], mo if conv1_im2col else mi),
                             lambda n: (0, n))]
    in_specs += [full_spec(a) for a in inputs[1:]]

    scratch = []
    if not conv1_im2col:
        scratch.append(pltpu.VMEM((Cin, mo), jnp.bfloat16))           # xbf
    scratch.append(pltpu.VMEM((Cout, mo), jnp.bfloat16))              # hbf
    scratch.append(pltpu.VMEM((9 * max(Cin, Cout), mo), jnp.bfloat16))  # stack

    flops = 2 * N * mo * (9 * Cin * Cout + 9 * Cout * Cout
                          + (Cin * Cout if has_proj else 0))
    bytes_accessed = (sum(int(a.size) * a.dtype.itemsize for a in inputs)
                      + Cout * N * mo * 4)
    cost = pl.CostEstimate(flops=flops, transcendentals=0,
                           bytes_accessed=bytes_accessed)

    kernel = functools.partial(_resblock_kernel, m=mo, wp=wp_o, cin=Cin,
                               cout=Cout, conv1_im2col=conv1_im2col,
                               has_proj=has_proj)

    out = pl.pallas_call(
        kernel,
        grid=(N,),
        in_specs=in_specs,
        out_specs=pl.BlockSpec((Cout, mo), lambda n: (0, n)),
        out_shape=jax.ShapeDtypeStruct((Cout, N * mo), jnp.float32),
        scratch_shapes=scratch,
        compiler_params=pltpu.CompilerParams(
            dimension_semantics=("parallel",),
            vmem_limit_bytes=32 * 1024 * 1024),
        cost_estimate=cost,
    )(*inputs)

    return out, (N, Ho, Wo)


# ----------------------------------------------------------------------------
# Pure-JAX reference, precision-matched (bf16 operands, f32 accumulation)
# ----------------------------------------------------------------------------
def resblock_reference(x, p):
    dn = ("NCHW", "OIHW", "NCHW")

    def conv_bf16(inp, w, stride, pad):
        return lax.conv_general_dilated(
            inp.astype(jnp.bfloat16), w.astype(jnp.bfloat16),
            (stride, stride), pad, dimension_numbers=dn,
            preferred_element_type=jnp.float32)

    stride = p["stride"]
    s1, b1 = _fold_bn(p["bn1"])
    s2, b2 = _fold_bn(p["bn2"])
    y = conv_bf16(x, p["w1"], stride, ((1, 1), (1, 1)))
    y = jnp.maximum(y * s1[None, :, None, None] + b1[None, :, None, None], 0.0)
    y = conv_bf16(y, p["w2"], 1, ((1, 1), (1, 1)))
    y = y * s2[None, :, None, None] + b2[None, :, None, None]
    if "wsh" in p:
        ssh, bsh = _fold_bn(p["bnsh"])
        sc = conv_bf16(x, p["wsh"], stride, ((0, 0), (0, 0)))
        sc = sc * ssh[None, :, None, None] + bsh[None, :, None, None]
    else:
        sc = x
    return jnp.maximum(y + sc, 0.0)


# ----------------------------------------------------------------------------
# Deterministic synthetic parameters
# ----------------------------------------------------------------------------
def _init_bn(key, c):
    k1, k2, k3, k4 = jax.random.split(key, 4)
    gamma = 1.0 + 0.1 * jax.random.normal(k1, (c,), jnp.float32)
    beta = 0.1 * jax.random.normal(k2, (c,), jnp.float32)
    mean = 0.1 * jax.random.normal(k3, (c,), jnp.float32)
    var = 0.5 + jax.random.uniform(k4, (c,), jnp.float32)
    return gamma, beta, mean, var


def init_resblock(key, cin, cout, stride=1):
    ks = jax.random.split(key, 6)
    p = {"stride": stride,
         "w1": 0.1 * jax.random.normal(ks[0], (cout, cin, 3, 3), jnp.float32),
         "w2": 0.1 * jax.random.normal(ks[1], (cout, cout, 3, 3), jnp.float32),
         "bn1": _init_bn(ks[2], cout),
         "bn2": _init_bn(ks[3], cout)}
    if stride != 1 or cin != cout:
        p["wsh"] = 0.1 * jax.random.normal(ks[4], (cout, cin, 1, 1), jnp.float32)
        p["bnsh"] = _init_bn(ks[5], cout)
    return p


if __name__ == "__main__":
    key = jax.random.PRNGKey(0)
    kx, k1, k2, k3 = jax.random.split(key, 4)

    # PyTorch-convention NCHW input: batch=2, 4 channels, 16x16 spatial
    x = jax.random.normal(kx, (2, 4, 16, 16), jnp.float32)

    # exercise all three structural variants of ResBlock
    blocks = [init_resblock(k1, 4, 32, stride=1),    # 1x1 projection shortcut
              init_resblock(k2, 32, 32, stride=1),   # identity shortcut
              init_resblock(k3, 32, 64, stride=2)]   # strided projection

    @jax.jit
    def forward(inp):
        y, spatial = to_block_layout(inp)
        for blk in blocks:
            y, spatial = resblock_forward(y, spatial, blk)
        return from_block_layout(y, spatial, blocks[-1]["w1"].shape[0])

    y = jax.block_until_ready(forward(x))
    assert y.shape == (2, 64, 8, 8), y.shape
    assert bool(jnp.all(jnp.isfinite(y)))
    assert bool(jnp.all(y >= 0.0))            # final ReLU

    # precision-matched pure-JAX reference (bf16 operands, f32 accumulation)
    y_ref = x
    for blk in blocks:
        y_ref = resblock_reference(y_ref, blk)
    y_ref = jax.block_until_ready(y_ref)

    max_err = float(jnp.max(jnp.abs(y - y_ref)))
    tol = 1e-2 * max(1.0, float(jnp.max(jnp.abs(y_ref))))
    assert max_err < tol, (max_err, tol)

    print("KERNEL_OK")
</pallas_src>

<mosaic_0001>
module attributes {stable_mosaic.version = 11 : i64} {
  func.func @_resblock_kernel(%arg0: i32, %arg1: memref<4x384xf32, #tpu.memory_space<vmem>>, %arg2: memref<32x36xbf16, #tpu.memory_space<vmem>>, %arg3: memref<32x1xf32, #tpu.memory_space<vmem>>, %arg4: memref<32x1xf32, #tpu.memory_space<vmem>>, %arg5: memref<32x288xbf16, #tpu.memory_space<vmem>>, %arg6: memref<32x1xf32, #tpu.memory_space<vmem>>, %arg7: memref<32x1xf32, #tpu.memory_space<vmem>>, %arg8: memref<1x384xf32, #tpu.memory_space<vmem>>, %arg9: memref<32x4xbf16, #tpu.memory_space<vmem>>, %arg10: memref<32x1xf32, #tpu.memory_space<vmem>>, %arg11: memref<32x1xf32, #tpu.memory_space<vmem>>, %arg12: memref<32x384xf32, #tpu.memory_space<vmem>>, %arg13: memref<4x384xbf16, #tpu.memory_space<vmem>>, %arg14: memref<32x384xbf16, #tpu.memory_space<vmem>>, %arg15: memref<288x384xbf16, #tpu.memory_space<vmem>>) attributes {dimension_semantics = [#tpu.dimension_semantics<parallel>], iteration_bounds = array<i64: 2>, scalar_prefetch = 0 : i64, scratch_operands = 3 : i64, tpu.core_type = #tpu.core_type<tc>, window_params = [{transform_indices = @transform_0, window_bounds = array<i64: 4, 384>}, {pipeline_mode = #tpu.pipeline_mode<synchronous>, transform_indices = @transform_1, window_bounds = array<i64: 32, 36>}, {pipeline_mode = #tpu.pipeline_mode<synchronous>, transform_indices = @transform_2, window_bounds = array<i64: 32, 1>}, {pipeline_mode = #tpu.pipeline_mode<synchronous>, transform_indices = @transform_3, window_bounds = array<i64: 32, 1>}, {pipeline_mode = #tpu.pipeline_mode<synchronous>, transform_indices = @transform_4, window_bounds = array<i64: 32, 288>}, {pipeline_mode = #tpu.pipeline_mode<synchronous>, transform_indices = @transform_5, window_bounds = array<i64: 32, 1>}, {pipeline_mode = #tpu.pipeline_mode<synchronous>, transform_indices = @transform_6, window_bounds = array<i64: 32, 1>}, {pipeline_mode = #tpu.pipeline_mode<synchronous>, transform_indices = @transform_7, window_bounds = array<i64: 1, 384>}, {pipeline_mode = #tpu.pipeline_mode<synchronous>, transform_indices = @transform_8, window_bounds = array<i64: 32, 4>}, {pipeline_mode = #tpu.pipeline_mode<synchronous>, transform_indices = @transform_9, window_bounds = array<i64: 32, 1>}, {pipeline_mode = #tpu.pipeline_mode<synchronous>, transform_indices = @transform_10, window_bounds = array<i64: 32, 1>}, {transform_indices = @transform_11, window_bounds = array<i64: 32, 384>}]} {
    %c0 = arith.constant 0 : index
    %c0_0 = arith.constant 0 : index
    %0 = vector.load %arg8[%c0, %c0_0] : memref<1x384xf32, #tpu.memory_space<vmem>>, vector<1x384xf32>
    %c0_1 = arith.constant 0 : index
    %c0_2 = arith.constant 0 : index
    %1 = vector.load %arg1[%c0_1, %c0_2] : memref<4x384xf32, #tpu.memory_space<vmem>>, vector<4x384xf32>
    %2 = arith.truncf %1 : vector<4x384xf32> to vector<4x384xbf16>
    %c0_3 = arith.constant 0 : index
    %c0_4 = arith.constant 0 : index
    %3 = vector.load %arg13[%c0_3, %c0_4] : memref<4x384xbf16, #tpu.memory_space<vmem>>, vector<4x384xbf16>
    tpu.vector_store %arg13[%c0_3, %c0_4], %2 {strides = array<i32>} : memref<4x384xbf16, #tpu.memory_space<vmem>>, vector<4x384xbf16>,
    %cst = arith.constant 0.000000e+00 : bf16
    %4 = vector.broadcast %cst : bf16 to vector<4x19xbf16>
    %c0_5 = arith.constant 0 : index
    %c0_6 = arith.constant 0 : index
    %5 = vector.load %arg15[%c0_5, %c0_6] : memref<288x384xbf16, #tpu.memory_space<vmem>>, vector<4x19xbf16>
    tpu.vector_store %arg15[%c0_5, %c0_6], %4 {strides = array<i32>} : memref<288x384xbf16, #tpu.memory_space<vmem>>, vector<4x19xbf16>,
    %c0_7 = arith.constant 0 : index
    %c0_8 = arith.constant 0 : index
    %6 = vector.load %arg13[%c0_7, %c0_8] : memref<4x384xbf16, #tpu.memory_space<vmem>>, vector<4x365xbf16>
    %c0_9 = arith.constant 0 : index
    %c19 = arith.constant 19 : index
    %7 = vector.load %arg15[%c0_9, %c19] : memref<288x384xbf16, #tpu.memory_space<vmem>>, vector<4x365xbf16>
    tpu.vector_store %arg15[%c0_9, %c19], %6 {strides = array<i32>} : memref<288x384xbf16, #tpu.memory_space<vmem>>, vector<4x365xbf16>,
    %cst_10 = arith.constant 0.000000e+00 : bf16
    %8 = vector.broadcast %cst_10 : bf16 to vector<4x18xbf16>
    %c4 = arith.constant 4 : index
    %c0_11 = arith.constant 0 : index
    %9 = vector.load %arg15[%c4, %c0_11] : memref<288x384xbf16, #tpu.memory_space<vmem>>, vector<4x18xbf16>
    tpu.vector_store %arg15[%c4, %c0_11], %8 {strides = array<i32>} : memref<288x384xbf16, #tpu.memory_space<vmem>>, vector<4x18xbf16>,
    %c0_12 = arith.constant 0 : index
    %c0_13 = arith.constant 0 : index
    %10 = vector.load %arg13[%c0_12, %c0_13] : memref<4x384xbf16, #tpu.memory_space<vmem>>, vector<4x366xbf16>
    %c4_14 = arith.constant 4 : index
    %c18 = arith.constant 18 : index
    %11 = vector.load %arg15[%c4_14, %c18] : memref<288x384xbf16, #tpu.memory_space<vmem>>, vector<4x366xbf16>
    tpu.vector_store %arg15[%c4_14, %c18], %10 {strides = array<i32>} : memref<288x384xbf16, #tpu.memory_space<vmem>>, vector<4x366xbf16>,
    %cst_15 = arith.constant 0.000000e+00 : bf16
    %12 = vector.broadcast %cst_15 : bf16 to vector<4x17xbf16>
    %c8 = arith.constant 8 : index
    %c0_16 = arith.constant 0 : index
    %13 = vector.load %arg15[%c8, %c0_16] : memref<288x384xbf16, #tpu.memory_space<vmem>>, vector<4x17xbf16>
    tpu.vector_store %arg15[%c8, %c0_16], %12 {strides = array<i32>} : memref<288x384xbf16, #tpu.memory_space<vmem>>, vector<4x17xbf16>,
    %c0_17 = arith.constant 0 : index
    %c0_18 = arith.constant 0 : index
    %14 = vector.load %arg13[%c0_17, %c0_18] : memref<4x384xbf16, #tpu.memory_space<vmem>>, vector<4x367xbf16>
    %c8_19 = arith.constant 8 : index
    %c17 = arith.constant 17 : index
    %15 = vector.load %arg15[%c8_19, %c17] : memref<288x384xbf16, #tpu.memory_space<vmem>>, vector<4x367xbf16>
    tpu.vector_store %arg15[%c8_19, %c17], %14 {strides = array<i32>} : memref<288x384xbf16, #tpu.memory_space<vmem>>, vector<4x367xbf16>,
    %cst_20 = arith.constant 0.000000e+00 : bf16
    %16 = vector.broadcast %cst_20 : bf16 to vector<4x1xbf16>
    %c12 = arith.constant 12 : index
    %c0_21 = arith.constant 0 : index
    %17 = vector.load %arg15[%c12, %c0_21] : memref<288x384xbf16, #tpu.memory_space<vmem>>, vector<4x1xbf16>
    tpu.vector_store %arg15[%c12, %c0_21], %16 {strides = array<i32>} : memref<288x384xbf16, #tpu.memory_space<vmem>>, vector<4x1xbf16>,
    %c0_22 = arith.constant 0 : index
    %c0_23 = arith.constant 0 : index
    %18 = vector.load %arg13[%c0_22, %c0_23] : memref<4x384xbf16, #tpu.memory_space<vmem>>, vector<4x383xbf16>
    %c12_24 = arith.constant 12 : index
    %c1 = arith.constant 1 : index
    %19 = vector.load %arg15[%c12_24, %c1] : memref<288x384xbf16, #tpu.memory_space<vmem>>, vector<4x383xbf16>
    tpu.vector_store %arg15[%c12_24, %c1], %18 {strides = array<i32>} : memref<288x384xbf16, #tpu.memory_space<vmem>>, vector<4x383xbf16>,
    %c0_25 = arith.constant 0 : index
    %c0_26 = arith.constant 0 : index
    %20 = vector.load %arg13[%c0_25, %c0_26] : memref<4x384xbf16, #tpu.memory_space<vmem>>, vector<4x384xbf16>
    %c16 = arith.constant 16 : index
    %c0_27 = arith.constant 0 : index
    %21 = vector.load %arg15[%c16, %c0_27] : memref<288x384xbf16, #tpu.memory_space<vmem>>, vector<4x384xbf16>
    tpu.vector_store %arg15[%c16, %c0_27], %20 {strides = array<i32>} : memref<288x384xbf16, #tpu.memory_space<vmem>>, vector<4x384xbf16>,
    %cst_28 = arith.constant 0.000000e+00 : bf16
    %22 = vector.broadcast %cst_28 : bf16 to vector<4x1xbf16>
    %c20 = arith.constant 20 : index
    %c383 = arith.constant 383 : index
    %23 = vector.load %arg15[%c20, %c383] : memref<288x384xbf16, #tpu.memory_space<vmem>>, vector<4x1xbf16>
    tpu.vector_store %arg15[%c20, %c383], %22 {strides = array<i32>} : memref<288x384xbf16, #tpu.memory_space<vmem>>, vector<4x1xbf16>,
    %c0_29 = arith.constant 0 : index
    %c1_30 = arith.constant 1 : index
    %24 = vector.load %arg13[%c0_29, %c1_30] : memref<4x384xbf16, #tpu.memory_space<vmem>>, vector<4x383xbf16>
    %c20_31 = arith.constant 20 : index
    %c0_32 = arith.constant 0 : index
    %25 = vector.load %arg15[%c20_31, %c0_32] : memref<288x384xbf16, #tpu.memory_space<vmem>>, vector<4x383xbf16>
    tpu.vector_store %arg15[%c20_31, %c0_32], %24 {strides = array<i32>} : memref<288x384xbf16, #tpu.memory_space<vmem>>, vector<4x383xbf16>,
    %cst_33 = arith.constant 0.000000e+00 : bf16
    %26 = vector.broadcast %cst_33 : bf16 to vector<4x17xbf16>
    %c24 = arith.constant 24 : index
    %c367 = arith.constant 367 : index
    %27 = vector.load %arg15[%c24, %c367] : memref<288x384xbf16, #tpu.memory_space<vmem>>, vector<4x17xbf16>
    tpu.vector_store %arg15[%c24, %c367], %26 {strides = array<i32>} : memref<288x384xbf16, #tpu.memory_space<vmem>>, vector<4x17xbf16>,
    %c0_34 = arith.constant 0 : index
    %c17_35 = arith.constant 17 : index
    %28 = vector.load %arg13[%c0_34, %c17_35] : memref<4x384xbf16, #tpu.memory_space<vmem>>, vector<4x367xbf16>
    %c24_36 = arith.constant 24 : index
    %c0_37 = arith.constant 0 : index
    %29 = vector.load %arg15[%c24_36, %c0_37] : memref<288x384xbf16, #tpu.memory_space<vmem>>, vector<4x367xbf16>
    tpu.vector_store %arg15[%c24_36, %c0_37], %28 {strides = array<i32>} : memref<288x384xbf16, #tpu.memory_space<vmem>>, vector<4x367xbf16>,
    %cst_38 = arith.constant 0.000000e+00 : bf16
    %30 = vector.broadcast %cst_38 : bf16 to vector<4x18xbf16>
    %c28 = arith.constant 28 : index
    %c366 = arith.constant 366 : index
    %31 = vector.load %arg15[%c28, %c366] : memref<288x384xbf16, #tpu.memory_space<vmem>>, vector<4x18xbf16>
    tpu.vector_store %arg15[%c28, %c366], %30 {strides = array<i32>} : memref<288x384xbf16, #tpu.memory_space<vmem>>, vector<4x18xbf16>,
    %c0_39 = arith.constant 0 : index
    %c18_40 = arith.constant 18 : index
    %32 = vector.load %arg13[%c0_39, %c18_40] : memref<4x384xbf16, #tpu.memory_space<vmem>>, vector<4x366xbf16>
    %c28_41 = arith.constant 28 : index
    %c0_42 = arith.constant 0 : index
    %33 = vector.load %arg15[%c28_41, %c0_42] : memref<288x384xbf16, #tpu.memory_space<vmem>>, vector<4x366xbf16>
    tpu.vector_store %arg15[%c28_41, %c0_42], %32 {strides = array<i32>} : memref<288x384xbf16, #tpu.memory_space<vmem>>, vector<4x366xbf16>,
    %cst_43 = arith.constant 0.000000e+00 : bf16
    %34 = vector.broadcast %cst_43 : bf16 to vector<4x19xbf16>
    %c32 = arith.constant 32 : index
    %c365 = arith.constant 365 : index
    %35 = vector.load %arg15[%c32, %c365] : memref<288x384xbf16, #tpu.memory_space<vmem>>, vector<4x19xbf16>
    tpu.vector_store %arg15[%c32, %c365], %34 {strides = array<i32>} : memref<288x384xbf16, #tpu.memory_space<vmem>>, vector<4x19xbf16>,
    %c0_44 = arith.constant 0 : index
    %c19_45 = arith.constant 19 : index
    %36 = vector.load %arg13[%c0_44, %c19_45] : memref<4x384xbf16, #tpu.memory_space<vmem>>, vector<4x365xbf16>
    %c32_46 = arith.constant 32 : index
    %c0_47 = arith.constant 0 : index
    %37 = vector.load %arg15[%c32_46, %c0_47] : memref<288x384xbf16, #tpu.memory_space<vmem>>, vector<4x365xbf16>
    tpu.vector_store %arg15[%c32_46, %c0_47], %36 {strides = array<i32>} : memref<288x384xbf16, #tpu.memory_space<vmem>>, vector<4x365xbf16>,
    %c0_48 = arith.constant 0 : index
    %c0_49 = arith.constant 0 : index
    %38 = vector.load %arg2[%c0_48, %c0_49] : memref<32x36xbf16, #tpu.memory_space<vmem>>, vector<32x36xbf16>
    %c0_50 = arith.constant 0 : index
    %c0_51 = arith.constant 0 : index
    %39 = vector.load %arg15[%c0_50, %c0_51] : memref<288x384xbf16, #tpu.memory_space<vmem>>, vector<36x384xbf16>
    %cst_52 = arith.constant dense<0.000000e+00> : vector<32x384xf32>
    %40 = tpu.matmul %38, %39, %cst_52 {dimension_numbers = #tpu.dot_dimension_numbers<[1], [0], [0], [1], [0, 0, 1, 1], [], []>} : vector<32x36xbf16>, vector<36x384xbf16>, vector<32x384xf32> -> vector<32x384xf32>
    %c0_53 = arith.constant 0 : index
    %c0_54 = arith.constant 0 : index
    %41 = vector.load %arg3[%c0_53, %c0_54] : memref<32x1xf32, #tpu.memory_space<vmem>>, vector<32x1xf32>
    %42 = vector.broadcast %41 : vector<32x1xf32> to vector<32x384xf32>
    %43 = arith.mulf %40, %42 : vector<32x384xf32>
    %c0_55 = arith.constant 0 : index
    %c0_56 = arith.constant 0 : index
    %44 = vector.load %arg4[%c0_55, %c0_56] : memref<32x1xf32, #tpu.memory_space<vmem>>, vector<32x1xf32>
    %45 = vector.broadcast %44 : vector<32x1xf32> to vector<32x384xf32>
    %46 = arith.addf %43, %45 : vector<32x384xf32>
    %cst_57 = arith.constant 0.000000e+00 : f32
    %47 = vector.broadcast %cst_57 : f32 to vector<32x384xf32>
    %48 = arith.maximumf %46, %47 : vector<32x384xf32>
    %49 = vector.broadcast %0 : vector<1x384xf32> to vector<32x384xf32>
    %50 = arith.mulf %48, %49 : vector<32x384xf32>
    %51 = arith.truncf %50 : vector<32x384xf32> to vector<32x384xbf16>
    %c0_58 = arith.constant 0 : index
    %c0_59 = arith.constant 0 : index
    %52 = vector.load %arg14[%c0_58, %c0_59] : memref<32x384xbf16, #tpu.memory_space<vmem>>, vector<32x384xbf16>
    tpu.vector_store %arg14[%c0_58, %c0_59], %51 {strides = array<i32>} : memref<32x384xbf16, #tpu.memory_space<vmem>>, vector<32x384xbf16>,
    %cst_60 = arith.constant 0.000000e+00 : bf16
    %53 = vector.broadcast %cst_60 : bf16 to vector<32x19xbf16>
    %c0_61 = arith.constant 0 : index
    %c0_62 = arith.constant 0 : index
    %54 = vector.load %arg15[%c0_61, %c0_62] : memref<288x384xbf16, #tpu.memory_space<vmem>>, vector<32x19xbf16>
    tpu.vector_store %arg15[%c0_61, %c0_62], %53 {strides = array<i32>} : memref<288x384xbf16, #tpu.memory_space<vmem>>, vector<32x19xbf16>,
    %c0_63 = arith.constant 0 : index
    %c0_64 = arith.constant 0 : index
    %55 = vector.load %arg14[%c0_63, %c0_64] : memref<32x384xbf16, #tpu.memory_space<vmem>>, vector<32x365xbf16>
    %c0_65 = arith.constant 0 : index
    %c19_66 = arith.constant 19 : index
    %56 = vector.load %arg15[%c0_65, %c19_66] : memref<288x384xbf16, #tpu.memory_space<vmem>>, vector<32x365xbf16>
    tpu.vector_store %arg15[%c0_65, %c19_66], %55 {strides = array<i32>} : memref<288x384xbf16, #tpu.memory_space<vmem>>, vector<32x365xbf16>,
    %cst_67 = arith.constant 0.000000e+00 : bf16
    %57 = vector.broadcast %cst_67 : bf16 to vector<32x18xbf16>
    %c32_68 = arith.constant 32 : index
    %c0_69 = arith.constant 0 : index
    %58 = vector.load %arg15[%c32_68, %c0_69] : memref<288x384xbf16, #tpu.memory_space<vmem>>, vector<32x18xbf16>
    tpu.vector_store %arg15[%c32_68, %c0_69], %57 {strides = array<i32>} : memref<288x384xbf16, #tpu.memory_space<vmem>>, vector<32x18xbf16>,
    %c0_70 = arith.constant 0 : index
    %c0_71 = arith.constant 0 : index
    %59 = vector.load %arg14[%c0_70, %c0_71] : memref<32x384xbf16, #tpu.memory_space<vmem>>, vector<32x366xbf16>
    %c32_72 = arith.constant 32 : index
    %c18_73 = arith.constant 18 : index
    %60 = vector.load %arg15[%c32_72, %c18_73] : memref<288x384xbf16, #tpu.memory_space<vmem>>, vector<32x366xbf16>
    tpu.vector_store %arg15[%c32_72, %c18_73], %59 {strides = array<i32>} : memref<288x384xbf16, #tpu.memory_space<vmem>>, vector<32x366xbf16>,
    %cst_74 = arith.constant 0.000000e+00 : bf16
    %61 = vector.broadcast %cst_74 : bf16 to vector<32x17xbf16>
    %c64 = arith.constant 64 : index
    %c0_75 = arith.constant 0 : index
    %62 = vector.load %arg15[%c64, %c0_75] : memref<288x384xbf16, #tpu.memory_space<vmem>>, vector<32x17xbf16>
    tpu.vector_store %arg15[%c64, %c0_75], %61 {strides = array<i32>} : memref<288x384xbf16, #tpu.memory_space<vmem>>, vector<32x17xbf16>,
    %c0_76 = arith.constant 0 : index
    %c0_77 = arith.constant 0 : index
    %63 = vector.load %arg14[%c0_76, %c0_77] : memref<32x384xbf16, #tpu.memory_space<vmem>>, vector<32x367xbf16>
    %c64_78 = arith.constant 64 : index
    %c17_79 = arith.constant 17 : index
    %64 = vector.load %arg15[%c64_78, %c17_79] : memref<288x384xbf16, #tpu.memory_space<vmem>>, vector<32x367xbf16>
    tpu.vector_store %arg15[%c64_78, %c17_79], %63 {strides = array<i32>} : memref<288x384xbf16, #tpu.memory_space<vmem>>, vector<32x367xbf16>,
    %cst_80 = arith.constant 0.000000e+00 : bf16
    %65 = vector.broadcast %cst_80 : bf16 to vector<32x1xbf16>
    %c96 = arith.constant 96 : index
    %c0_81 = arith.constant 0 : index
    %66 = vector.load %arg15[%c96, %c0_81] : memref<288x384xbf16, #tpu.memory_space<vmem>>, vector<32x1xbf16>
    tpu.vector_store %arg15[%c96, %c0_81], %65 {strides = array<i32>} : memref<288x384xbf16, #tpu.memory_space<vmem>>, vector<32x1xbf16>,
    %c0_82 = arith.constant 0 : index
    %c0_83 = arith.constant 0 : index
    %67 = vector.load %arg14[%c0_82, %c0_83] : memref<32x384xbf16, #tpu.memory_space<vmem>>, vector<32x383xbf16>
    %c96_84 = arith.constant 96 : index
    %c1_85 = arith.constant 1 : index
    %68 = vector.load %arg15[%c96_84, %c1_85] : memref<288x384xbf16, #tpu.memory_space<vmem>>, vector<32x383xbf16>
    tpu.vector_store %arg15[%c96_84, %c1_85], %67 {strides = array<i32>} : memref<288x384xbf16, #tpu.memory_space<vmem>>, vector<32x383xbf16>,
    %c0_86 = arith.constant 0 : index
    %c0_87 = arith.constant 0 : index
    %69 = vector.load %arg14[%c0_86, %c0_87] : memref<32x384xbf16, #tpu.memory_space<vmem>>, vector<32x384xbf16>
    %c128 = arith.constant 128 : index
    %c0_88 = arith.constant 0 : index
    %70 = vector.load %arg15[%c128, %c0_88] : memref<288x384xbf16, #tpu.memory_space<vmem>>, vector<32x384xbf16>
    tpu.vector_store %arg15[%c128, %c0_88], %69 {strides = array<i32>} : memref<288x384xbf16, #tpu.memory_space<vmem>>, vector<32x384xbf16>,
    %cst_89 = arith.constant 0.000000e+00 : bf16
    %71 = vector.broadcast %cst_89 : bf16 to vector<32x1xbf16>
    %c160 = arith.constant 160 : index
    %c383_90 = arith.constant 383 : index
    %72 = vector.load %arg15[%c160, %c383_90] : memref<288x384xbf16, #tpu.memory_space<vmem>>, vector<32x1xbf16>
    tpu.vector_store %arg15[%c160, %c383_90], %71 {strides = array<i32>} : memref<288x384xbf16, #tpu.memory_space<vmem>>, vector<32x1xbf16>,
    %c0_91 = arith.constant 0 : index
    %c1_92 = arith.constant 1 : index
    %73 = vector.load %arg14[%c0_91, %c1_92] : memref<32x384xbf16, #tpu.memory_space<vmem>>, vector<32x383xbf16>
    %c160_93 = arith.constant 160 : index
    %c0_94 = arith.constant 0 : index
    %74 = vector.load %arg15[%c160_93, %c0_94] : memref<288x384xbf16, #tpu.memory_space<vmem>>, vector<32x383xbf16>
    tpu.vector_store %arg15[%c160_93, %c0_94], %73 {strides = array<i32>} : memref<288x384xbf16, #tpu.memory_space<vmem>>, vector<32x383xbf16>,
    %cst_95 = arith.constant 0.000000e+00 : bf16
    %75 = vector.broadcast %cst_95 : bf16 to vector<32x17xbf16>
    %c192 = arith.constant 192 : index
    %c367_96 = arith.constant 367 : index
    %76 = vector.load %arg15[%c192, %c367_96] : memref<288x384xbf16, #tpu.memory_space<vmem>>, vector<32x17xbf16>
    tpu.vector_store %arg15[%c192, %c367_96], %75 {strides = array<i32>} : memref<288x384xbf16, #tpu.memory_space<vmem>>, vector<32x17xbf16>,
    %c0_97 = arith.constant 0 : index
    %c17_98 = arith.constant 17 : index
    %77 = vector.load %arg14[%c0_97, %c17_98] : memref<32x384xbf16, #tpu.memory_space<vmem>>, vector<32x367xbf16>
    %c192_99 = arith.constant 192 : index
    %c0_100 = arith.constant 0 : index
    %78 = vector.load %arg15[%c192_99, %c0_100] : memref<288x384xbf16, #tpu.memory_space<vmem>>, vector<32x367xbf16>
    tpu.vector_store %arg15[%c192_99, %c0_100], %77 {strides = array<i32>} : memref<288x384xbf16, #tpu.memory_space<vmem>>, vector<32x367xbf16>,
    %cst_101 = arith.constant 0.000000e+00 : bf16
    %79 = vector.broadcast %cst_101 : bf16 to vector<32x18xbf16>
    %c224 = arith.constant 224 : index
    %c366_102 = arith.constant 366 : index
    %80 = vector.load %arg15[%c224, %c366_102] : memref<288x384xbf16, #tpu.memory_space<vmem>>, vector<32x18xbf16>
    tpu.vector_store %arg15[%c224, %c366_102], %79 {strides = array<i32>} : memref<288x384xbf16, #tpu.memory_space<vmem>>, vector<32x18xbf16>,
    %c0_103 = arith.constant 0 : index
    %c18_104 = arith.constant 18 : index
    %81 = vector.load %arg14[%c0_103, %c18_104] : memref<32x384xbf16, #tpu.memory_space<vmem>>, vector<32x366xbf16>
    %c224_105 = arith.constant 224 : index
    %c0_106 = arith.constant 0 : index
    %82 = vector.load %arg15[%c224_105, %c0_106] : memref<288x384xbf16, #tpu.memory_space<vmem>>, vector<32x366xbf16>
    tpu.vector_store %arg15[%c224_105, %c0_106], %81 {strides = array<i32>} : memref<288x384xbf16, #tpu.memory_space<vmem>>, vector<32x366xbf16>,
    %cst_107 = arith.constant 0.000000e+00 : bf16
    %83 = vector.broadcast %cst_107 : bf16 to vector<32x19xbf16>
    %c256 = arith.constant 256 : index
    %c365_108 = arith.constant 365 : index
    %84 = vector.load %arg15[%c256, %c365_108] : memref<288x384xbf16, #tpu.memory_space<vmem>>, vector<32x19xbf16>
    tpu.vector_store %arg15[%c256, %c365_108], %83 {strides = array<i32>} : memref<288x384xbf16, #tpu.memory_space<vmem>>, vector<32x19xbf16>,
    %c0_109 = arith.constant 0 : index
    %c19_110 = arith.constant 19 : index
    %85 = vector.load %arg14[%c0_109, %c19_110] : memref<32x384xbf16, #tpu.memory_space<vmem>>, vector<32x365xbf16>
    %c256_111 = arith.constant 256 : index
    %c0_112 = arith.constant 0 : index
    %86 = vector.load %arg15[%c256_111, %c0_112] : memref<288x384xbf16, #tpu.memory_space<vmem>>, vector<32x365xbf16>
    tpu.vector_store %arg15[%c256_111, %c0_112], %85 {strides = array<i32>} : memref<288x384xbf16, #tpu.memory_space<vmem>>, vector<32x365xbf16>,
    %c0_113 = arith.constant 0 : index
    %c0_114 = arith.constant 0 : index
    %87 = vector.load %arg5[%c0_113, %c0_114] : memref<32x288xbf16, #tpu.memory_space<vmem>>, vector<32x288xbf16>
    %c0_115 = arith.constant 0 : index
    %c0_116 = arith.constant 0 : index
    %88 = vector.load %arg15[%c0_115, %c0_116] : memref<288x384xbf16, #tpu.memory_space<vmem>>, vector<288x384xbf16>
    %cst_117 = arith.constant dense<0.000000e+00> : vector<32x384xf32>
    %89 = tpu.matmul %87, %88, %cst_117 {dimension_numbers = #tpu.dot_dimension_numbers<[1], [0], [0], [1], [0, 0, 1, 1], [], []>} : vector<32x288xbf16>, vector<288x384xbf16>, vector<32x384xf32> -> vector<32x384xf32>
    %c0_118 = arith.constant 0 : index
    %c0_119 = arith.constant 0 : index
    %90 = vector.load %arg6[%c0_118, %c0_119] : memref<32x1xf32, #tpu.memory_space<vmem>>, vector<32x1xf32>
    %91 = vector.broadcast %90 : vector<32x1xf32> to vector<32x384xf32>
    %92 = arith.mulf %89, %91 : vector<32x384xf32>
    %c0_120 = arith.constant 0 : index
    %c0_121 = arith.constant 0 : index
    %93 = vector.load %arg7[%c0_120, %c0_121] : memref<32x1xf32, #tpu.memory_space<vmem>>, vector<32x1xf32>
    %94 = vector.broadcast %93 : vector<32x1xf32> to vector<32x384xf32>
    %95 = arith.addf %92, %94 : vector<32x384xf32>
    %c0_122 = arith.constant 0 : index
    %c0_123 = arith.constant 0 : index
    %96 = vector.load %arg13[%c0_122, %c0_123] : memref<4x384xbf16, #tpu.memory_space<vmem>>, vector<4x384xbf16>
    %c0_124 = arith.constant 0 : index
    %c0_125 = arith.constant 0 : index
    %97 = vector.load %arg9[%c0_124, %c0_125] : memref<32x4xbf16, #tpu.memory_space<vmem>>, vector<32x4xbf16>
    %cst_126 = arith.constant dense<0.000000e+00> : vector<32x384xf32>
    %98 = tpu.matmul %97, %96, %cst_126 {dimension_numbers = #tpu.dot_dimension_numbers<[1], [0], [0], [1], [0, 0, 1, 1], [], []>} : vector<32x4xbf16>, vector<4x384xbf16>, vector<32x384xf32> -> vector<32x384xf32>
    %c0_127 = arith.constant 0 : index
    %c0_128 = arith.constant 0 : index
    %99 = vector.load %arg10[%c0_127, %c0_128] : memref<32x1xf32, #tpu.memory_space<vmem>>, vector<32x1xf32>
    %100 = vector.broadcast %99 : vector<32x1xf32> to vector<32x384xf32>
    %101 = arith.mulf %98, %100 : vector<32x384xf32>
    %c0_129 = arith.constant 0 : index
    %c0_130 = arith.constant 0 : index
    %102 = vector.load %arg11[%c0_129, %c0_130] : memref<32x1xf32, #tpu.memory_space<vmem>>, vector<32x1xf32>
    %103 = vector.broadcast %102 : vector<32x1xf32> to vector<32x384xf32>
    %104 = arith.addf %101, %103 : vector<32x384xf32>
    %105 = arith.addf %95, %104 : vector<32x384xf32>
    %cst_131 = arith.constant 0.000000e+00 : f32
    %106 = vector.broadcast %cst_131 : f32 to vector<32x384xf32>
    %107 = arith.maximumf %105, %106 : vector<32x384xf32>
    %108 = vector.broadcast %0 : vector<1x384xf32> to vector<32x384xf32>
    %109 = arith.mulf %107, %108 : vector<32x384xf32>
    %c0_132 = arith.constant 0 : index
    %c0_133 = arith.constant 0 : index
    %110 = vector.load %arg12[%c0_132, %c0_133] : memref<32x384xf32, #tpu.memory_space<vmem>>, vector<32x384xf32>
    tpu.vector_store %arg12[%c0_132, %c0_133], %109 {strides = array<i32>} : memref<32x384xf32, #tpu.memory_space<vmem>>, vector<32x384xf32>,
    return
  }
  func.func @transform_0(%arg0: i32) -> (i32, i32) {
    %c0_i32 = arith.constant 0 : i32
    %c0_i32_0 = arith.constant 0 : i32
    return %c0_i32, %arg0 : i32, i32
  }
  func.func @transform_1(%arg0: i32) -> (i32, i32) {
    %c0_i32 = arith.constant 0 : i32
    %c0_i32_0 = arith.constant 0 : i32
    %c0_i32_1 = arith.constant 0 : i32
    return %c0_i32, %c0_i32_0 : i32, i32
  }
  func.func @transform_2(%arg0: i32) -> (i32, i32) {
    %c0_i32 = arith.constant 0 : i32
    %c0_i32_0 = arith.constant 0 : i32
    %c0_i32_1 = arith.constant 0 : i32
    return %c0_i32, %c0_i32_0 : i32, i32
  }
  func.func @transform_3(%arg0: i32) -> (i32, i32) {
    %c0_i32 = arith.constant 0 : i32
    %c0_i32_0 = arith.constant 0 : i32
    %c0_i32_1 = arith.constant 0 : i32
    return %c0_i32, %c0_i32_0 : i32, i32
  }
  func.func @transform_4(%arg0: i32) -> (i32, i32) {
    %c0_i32 = arith.constant 0 : i32
    %c0_i32_0 = arith.constant 0 : i32
    %c0_i32_1 = arith.constant 0 : i32
    return %c0_i32, %c0_i32_0 : i32, i32
  }
  func.func @transform_5(%arg0: i32) -> (i32, i32) {
    %c0_i32 = arith.constant 0 : i32
    %c0_i32_0 = arith.constant 0 : i32
    %c0_i32_1 = arith.constant 0 : i32
    return %c0_i32, %c0_i32_0 : i32, i32
  }
  func.func @transform_6(%arg0: i32) -> (i32, i32) {
    %c0_i32 = arith.constant 0 : i32
    %c0_i32_0 = arith.constant 0 : i32
    %c0_i32_1 = arith.constant 0 : i32
    return %c0_i32, %c0_i32_0 : i32, i32
  }
  func.func @transform_7(%arg0: i32) -> (i32, i32) {
    %c0_i32 = arith.constant 0 : i32
    %c0_i32_0 = arith.constant 0 : i32
    %c0_i32_1 = arith.constant 0 : i32
    return %c0_i32, %c0_i32_0 : i32, i32
  }
  func.func @transform_8(%arg0: i32) -> (i32, i32) {
    %c0_i32 = arith.constant 0 : i32
    %c0_i32_0 = arith.constant 0 : i32
    %c0_i32_1 = arith.constant 0 : i32
    return %c0_i32, %c0_i32_0 : i32, i32
  }
  func.func @transform_9(%arg0: i32) -> (i32, i32) {
    %c0_i32 = arith.constant 0 : i32
    %c0_i32_0 = arith.constant 0 : i32
    %c0_i32_1 = arith.constant 0 : i32
    return %c0_i32, %c0_i32_0 : i32, i32
  }
  func.func @transform_10(%arg0: i32) -> (i32, i32) {
    %c0_i32 = arith.constant 0 : i32
    %c0_i32_0 = arith.constant 0 : i32
    %c0_i32_1 = arith.constant 0 : i32
    return %c0_i32, %c0_i32_0 : i32, i32
  }
  func.func @transform_11(%arg0: i32) -> (i32, i32) {
    %c0_i32 = arith.constant 0 : i32
    %c0_i32_0 = arith.constant 0 : i32
    return %c0_i32, %arg0 : i32, i32
  }
}

module attributes {stable_mosaic.version = 11 : i64} {
  func.func @_resblock_kernel(%arg0: i32, %arg1: memref<32x384xf32, #tpu.memory_space<vmem>>, %arg2: memref<32x288xbf16, #tpu.memory_space<vmem>>, %arg3: memref<32x1xf32, #tpu.memory_space<vmem>>, %arg4: memref<32x1xf32, #tpu.memory_space<vmem>>, %arg5: memref<32x288xbf16, #tpu.memory_space<vmem>>, %arg6: memref<32x1xf32, #tpu.memory_space<vmem>>, %arg7: memref<32x1xf32, #tpu.memory_space<vmem>>, %arg8: memref<1x384xf32, #tpu.memory_space<vmem>>, %arg9: memref<32x384xf32, #tpu.memory_space<vmem>>, %arg10: memref<32x384xbf16, #tpu.memory_space<vmem>>, %arg11: memref<32x384xbf16, #tpu.memory_space<vmem>>, %arg12: memref<288x384xbf16, #tpu.memory_space<vmem>>) attributes {dimension_semantics = [#tpu.dimension_semantics<parallel>], iteration_bounds = array<i64: 2>, scalar_prefetch = 0 : i64, scratch_operands = 3 : i64, tpu.core_type = #tpu.core_type<tc>, window_params = [{transform_indices = @transform_0, window_bounds = array<i64: 32, 384>}, {pipeline_mode = #tpu.pipeline_mode<synchronous>, transform_indices = @transform_1, window_bounds = array<i64: 32, 288>}, {pipeline_mode = #tpu.pipeline_mode<synchronous>, transform_indices = @transform_2, window_bounds = array<i64: 32, 1>}, {pipeline_mode = #tpu.pipeline_mode<synchronous>, transform_indices = @transform_3, window_bounds = array<i64: 32, 1>}, {pipeline_mode = #tpu.pipeline_mode<synchronous>, transform_indices = @transform_4, window_bounds = array<i64: 32, 288>}, {pipeline_mode = #tpu.pipeline_mode<synchronous>, transform_indices = @transform_5, window_bounds = array<i64: 32, 1>}, {pipeline_mode = #tpu.pipeline_mode<synchronous>, transform_indices = @transform_6, window_bounds = array<i64: 32, 1>}, {pipeline_mode = #tpu.pipeline_mode<synchronous>, transform_indices = @transform_7, window_bounds = array<i64: 1, 384>}, {transform_indices = @transform_8, window_bounds = array<i64: 32, 384>}]} {
    %c0 = arith.constant 0 : index
    %c0_0 = arith.constant 0 : index
    %0 = vector.load %arg8[%c0, %c0_0] : memref<1x384xf32, #tpu.memory_space<vmem>>, vector<1x384xf32>
    %c0_1 = arith.constant 0 : index
    %c0_2 = arith.constant 0 : index
    %1 = vector.load %arg1[%c0_1, %c0_2] : memref<32x384xf32, #tpu.memory_space<vmem>>, vector<32x384xf32>
    %2 = arith.truncf %1 : vector<32x384xf32> to vector<32x384xbf16>
    %c0_3 = arith.constant 0 : index
    %c0_4 = arith.constant 0 : index
    %3 = vector.load %arg10[%c0_3, %c0_4] : memref<32x384xbf16, #tpu.memory_space<vmem>>, vector<32x384xbf16>
    tpu.vector_store %arg10[%c0_3, %c0_4], %2 {strides = array<i32>} : memref<32x384xbf16, #tpu.memory_space<vmem>>, vector<32x384xbf16>,
    %cst = arith.constant 0.000000e+00 : bf16
    %4 = vector.broadcast %cst : bf16 to vector<32x19xbf16>
    %c0_5 = arith.constant 0 : index
    %c0_6 = arith.constant 0 : index
    %5 = vector.load %arg12[%c0_5, %c0_6] : memref<288x384xbf16, #tpu.memory_space<vmem>>, vector<32x19xbf16>
    tpu.vector_store %arg12[%c0_5, %c0_6], %4 {strides = array<i32>} : memref<288x384xbf16, #tpu.memory_space<vmem>>, vector<32x19xbf16>,
    %c0_7 = arith.constant 0 : index
    %c0_8 = arith.constant 0 : index
    %6 = vector.load %arg10[%c0_7, %c0_8] : memref<32x384xbf16, #tpu.memory_space<vmem>>, vector<32x365xbf16>
    %c0_9 = arith.constant 0 : index
    %c19 = arith.constant 19 : index
    %7 = vector.load %arg12[%c0_9, %c19] : memref<288x384xbf16, #tpu.memory_space<vmem>>, vector<32x365xbf16>
    tpu.vector_store %arg12[%c0_9, %c19], %6 {strides = array<i32>} : memref<288x384xbf16, #tpu.memory_space<vmem>>, vector<32x365xbf16>,
    %cst_10 = arith.constant 0.000000e+00 : bf16
    %8 = vector.broadcast %cst_10 : bf16 to vector<32x18xbf16>
    %c32 = arith.constant 32 : index
    %c0_11 = arith.constant 0 : index
    %9 = vector.load %arg12[%c32, %c0_11] : memref<288x384xbf16, #tpu.memory_space<vmem>>, vector<32x18xbf16>
    tpu.vector_store %arg12[%c32, %c0_11], %8 {strides = array<i32>} : memref<288x384xbf16, #tpu.memory_space<vmem>>, vector<32x18xbf16>,
    %c0_12 = arith.constant 0 : index
    %c0_13 = arith.constant 0 : index
    %10 = vector.load %arg10[%c0_12, %c0_13] : memref<32x384xbf16, #tpu.memory_space<vmem>>, vector<32x366xbf16>
    %c32_14 = arith.constant 32 : index
    %c18 = arith.constant 18 : index
    %11 = vector.load %arg12[%c32_14, %c18] : memref<288x384xbf16, #tpu.memory_space<vmem>>, vector<32x366xbf16>
    tpu.vector_store %arg12[%c32_14, %c18], %10 {strides = array<i32>} : memref<288x384xbf16, #tpu.memory_space<vmem>>, vector<32x366xbf16>,
    %cst_15 = arith.constant 0.000000e+00 : bf16
    %12 = vector.broadcast %cst_15 : bf16 to vector<32x17xbf16>
    %c64 = arith.constant 64 : index
    %c0_16 = arith.constant 0 : index
    %13 = vector.load %arg12[%c64, %c0_16] : memref<288x384xbf16, #tpu.memory_space<vmem>>, vector<32x17xbf16>
    tpu.vector_store %arg12[%c64, %c0_16], %12 {strides = array<i32>} : memref<288x384xbf16, #tpu.memory_space<vmem>>, vector<32x17xbf16>,
    %c0_17 = arith.constant 0 : index
    %c0_18 = arith.constant 0 : index
    %14 = vector.load %arg10[%c0_17, %c0_18] : memref<32x384xbf16, #tpu.memory_space<vmem>>, vector<32x367xbf16>
    %c64_19 = arith.constant 64 : index
    %c17 = arith.constant 17 : index
    %15 = vector.load %arg12[%c64_19, %c17] : memref<288x384xbf16, #tpu.memory_space<vmem>>, vector<32x367xbf16>
    tpu.vector_store %arg12[%c64_19, %c17], %14 {strides = array<i32>} : memref<288x384xbf16, #tpu.memory_space<vmem>>, vector<32x367xbf16>,
    %cst_20 = arith.constant 0.000000e+00 : bf16
    %16 = vector.broadcast %cst_20 : bf16 to vector<32x1xbf16>
    %c96 = arith.constant 96 : index
    %c0_21 = arith.constant 0 : index
    %17 = vector.load %arg12[%c96, %c0_21] : memref<288x384xbf16, #tpu.memory_space<vmem>>, vector<32x1xbf16>
    tpu.vector_store %arg12[%c96, %c0_21], %16 {strides = array<i32>} : memref<288x384xbf16, #tpu.memory_space<vmem>>, vector<32x1xbf16>,
    %c0_22 = arith.constant 0 : index
    %c0_23 = arith.constant 0 : index
    %18 = vector.load %arg10[%c0_22, %c0_23] : memref<32x384xbf16, #tpu.memory_space<vmem>>, vector<32x383xbf16>
    %c96_24 = arith.constant 96 : index
    %c1 = arith.constant 1 : index
    %19 = vector.load %arg12[%c96_24, %c1] : memref<288x384xbf16, #tpu.memory_space<vmem>>, vector<32x383xbf16>
    tpu.vector_store %arg12[%c96_24, %c1], %18 {strides = array<i32>} : memref<288x384xbf16, #tpu.memory_space<vmem>>, vector<32x383xbf16>,
    %c0_25 = arith.constant 0 : index
    %c0_26 = arith.constant 0 : index
    %20 = vector.load %arg10[%c0_25, %c0_26] : memref<32x384xbf16, #tpu.memory_space<vmem>>, vector<32x384xbf16>
    %c128 = arith.constant 128 : index
    %c0_27 = arith.constant 0 : index
    %21 = vector.load %arg12[%c128, %c0_27] : memref<288x384xbf16, #tpu.memory_space<vmem>>, vector<32x384xbf16>
    tpu.vector_store %arg12[%c128, %c0_27], %20 {strides = array<i32>} : memref<288x384xbf16, #tpu.memory_space<vmem>>, vector<32x384xbf16>,
    %cst_28 = arith.constant 0.000000e+00 : bf16
    %22 = vector.broadcast %cst_28 : bf16 to vector<32x1xbf16>
    %c160 = arith.constant 160 : index
    %c383 = arith.constant 383 : index
    %23 = vector.load %arg12[%c160, %c383] : memref<288x384xbf16, #tpu.memory_space<vmem>>, vector<32x1xbf16>
    tpu.vector_store %arg12[%c160, %c383], %22 {strides = array<i32>} : memref<288x384xbf16, #tpu.memory_space<vmem>>, vector<32x1xbf16>,
    %c0_29 = arith.constant 0 : index
    %c1_30 = arith.constant 1 : index
    %24 = vector.load %arg10[%c0_29, %c1_30] : memref<32x384xbf16, #tpu.memory_space<vmem>>, vector<32x383xbf16>
    %c160_31 = arith.constant 160 : index
    %c0_32 = arith.constant 0 : index
    %25 = vector.load %arg12[%c160_31, %c0_32] : memref<288x384xbf16, #tpu.memory_space<vmem>>, vector<32x383xbf16>
    tpu.vector_store %arg12[%c160_31, %c0_32], %24 {strides = array<i32>} : memref<288x384xbf16, #tpu.memory_space<vmem>>, vector<32x383xbf16>,
    %cst_33 = arith.constant 0.000000e+00 : bf16
    %26 = vector.broadcast %cst_33 : bf16 to vector<32x17xbf16>
    %c192 = arith.constant 192 : index
    %c367 = arith.constant 367 : index
    %27 = vector.load %arg12[%c192, %c367] : memref<288x384xbf16, #tpu.memory_space<vmem>>, vector<32x17xbf16>
    tpu.vector_store %arg12[%c192, %c367], %26 {strides = array<i32>} : memref<288x384xbf16, #tpu.memory_space<vmem>>, vector<32x17xbf16>,
    %c0_34 = arith.constant 0 : index
    %c17_35 = arith.constant 17 : index
    %28 = vector.load %arg10[%c0_34, %c17_35] : memref<32x384xbf16, #tpu.memory_space<vmem>>, vector<32x367xbf16>
    %c192_36 = arith.constant 192 : index
    %c0_37 = arith.constant 0 : index
    %29 = vector.load %arg12[%c192_36, %c0_37] : memref<288x384xbf16, #tpu.memory_space<vmem>>, vector<32x367xbf16>
    tpu.vector_store %arg12[%c192_36, %c0_37], %28 {strides = array<i32>} : memref<288x384xbf16, #tpu.memory_space<vmem>>, vector<32x367xbf16>,
    %cst_38 = arith.constant 0.000000e+00 : bf16
    %30 = vector.broadcast %cst_38 : bf16 to vector<32x18xbf16>
    %c224 = arith.constant 224 : index
    %c366 = arith.constant 366 : index
    %31 = vector.load %arg12[%c224, %c366] : memref<288x384xbf16, #tpu.memory_space<vmem>>, vector<32x18xbf16>
    tpu.vector_store %arg12[%c224, %c366], %30 {strides = array<i32>} : memref<288x384xbf16, #tpu.memory_space<vmem>>, vector<32x18xbf16>,
    %c0_39 = arith.constant 0 : index
    %c18_40 = arith.constant 18 : index
    %32 = vector.load %arg10[%c0_39, %c18_40] : memref<32x384xbf16, #tpu.memory_space<vmem>>, vector<32x366xbf16>
    %c224_41 = arith.constant 224 : index
    %c0_42 = arith.constant 0 : index
    %33 = vector.load %arg12[%c224_41, %c0_42] : memref<288x384xbf16, #tpu.memory_space<vmem>>, vector<32x366xbf16>
    tpu.vector_store %arg12[%c224_41, %c0_42], %32 {strides = array<i32>} : memref<288x384xbf16, #tpu.memory_space<vmem>>, vector<32x366xbf16>,
    %cst_43 = arith.constant 0.000000e+00 : bf16
    %34 = vector.broadcast %cst_43 : bf16 to vector<32x19xbf16>
    %c256 = arith.constant 256 : index
    %c365 = arith.constant 365 : index
    %35 = vector.load %arg12[%c256, %c365] : memref<288x384xbf16, #tpu.memory_space<vmem>>, vector<32x19xbf16>
    tpu.vector_store %arg12[%c256, %c365], %34 {strides = array<i32>} : memref<288x384xbf16, #tpu.memory_space<vmem>>, vector<32x19xbf16>,
    %c0_44 = arith.constant 0 : index
    %c19_45 = arith.constant 19 : index
    %36 = vector.load %arg10[%c0_44, %c19_45] : memref<32x384xbf16, #tpu.memory_space<vmem>>, vector<32x365xbf16>
    %c256_46 = arith.constant 256 : index
    %c0_47 = arith.constant 0 : index
    %37 = vector.load %arg12[%c256_46, %c0_47] : memref<288x384xbf16, #tpu.memory_space<vmem>>, vector<32x365xbf16>
    tpu.vector_store %arg12[%c256_46, %c0_47], %36 {strides = array<i32>} : memref<288x384xbf16, #tpu.memory_space<vmem>>, vector<32x365xbf16>,
    %c0_48 = arith.constant 0 : index
    %c0_49 = arith.constant 0 : index
    %38 = vector.load %arg2[%c0_48, %c0_49] : memref<32x288xbf16, #tpu.memory_space<vmem>>, vector<32x288xbf16>
    %c0_50 = arith.constant 0 : index
    %c0_51 = arith.constant 0 : index
    %39 = vector.load %arg12[%c0_50, %c0_51] : memref<288x384xbf16, #tpu.memory_space<vmem>>, vector<288x384xbf16>
    %cst_52 = arith.constant dense<0.000000e+00> : vector<32x384xf32>
    %40 = tpu.matmul %38, %39, %cst_52 {dimension_numbers = #tpu.dot_dimension_numbers<[1], [0], [0], [1], [0, 0, 1, 1], [], []>} : vector<32x288xbf16>, vector<288x384xbf16>, vector<32x384xf32> -> vector<32x384xf32>
    %c0_53 = arith.constant 0 : index
    %c0_54 = arith.constant 0 : index
    %41 = vector.load %arg3[%c0_53, %c0_54] : memref<32x1xf32, #tpu.memory_space<vmem>>, vector<32x1xf32>
    %42 = vector.broadcast %41 : vector<32x1xf32> to vector<32x384xf32>
    %43 = arith.mulf %40, %42 : vector<32x384xf32>
    %c0_55 = arith.constant 0 : index
    %c0_56 = arith.constant 0 : index
    %44 = vector.load %arg4[%c0_55, %c0_56] : memref<32x1xf32, #tpu.memory_space<vmem>>, vector<32x1xf32>
    %45 = vector.broadcast %44 : vector<32x1xf32> to vector<32x384xf32>
    %46 = arith.addf %43, %45 : vector<32x384xf32>
    %cst_57 = arith.constant 0.000000e+00 : f32
    %47 = vector.broadcast %cst_57 : f32 to vector<32x384xf32>
    %48 = arith.maximumf %46, %47 : vector<32x384xf32>
    %49 = vector.broadcast %0 : vector<1x384xf32> to vector<32x384xf32>
    %50 = arith.mulf %48, %49 : vector<32x384xf32>
    %51 = arith.truncf %50 : vector<32x384xf32> to vector<32x384xbf16>
    %c0_58 = arith.constant 0 : index
    %c0_59 = arith.constant 0 : index
    %52 = vector.load %arg11[%c0_58, %c0_59] : memref<32x384xbf16, #tpu.memory_space<vmem>>, vector<32x384xbf16>
    tpu.vector_store %arg11[%c0_58, %c0_59], %51 {strides = array<i32>} : memref<32x384xbf16, #tpu.memory_space<vmem>>, vector<32x384xbf16>,
    %cst_60 = arith.constant 0.000000e+00 : bf16
    %53 = vector.broadcast %cst_60 : bf16 to vector<32x19xbf16>
    %c0_61 = arith.constant 0 : index
    %c0_62 = arith.constant 0 : index
    %54 = vector.load %arg12[%c0_61, %c0_62] : memref<288x384xbf16, #tpu.memory_space<vmem>>, vector<32x19xbf16>
    tpu.vector_store %arg12[%c0_61, %c0_62], %53 {strides = array<i32>} : memref<288x384xbf16, #tpu.memory_space<vmem>>, vector<32x19xbf16>,
    %c0_63 = arith.constant 0 : index
    %c0_64 = arith.constant 0 : index
    %55 = vector.load %arg11[%c0_63, %c0_64] : memref<32x384xbf16, #tpu.memory_space<vmem>>, vector<32x365xbf16>
    %c0_65 = arith.constant 0 : index
    %c19_66 = arith.constant 19 : index
    %56 = vector.load %arg12[%c0_65, %c19_66] : memref<288x384xbf16, #tpu.memory_space<vmem>>, vector<32x365xbf16>
    tpu.vector_store %arg12[%c0_65, %c19_66], %55 {strides = array<i32>} : memref<288x384xbf16, #tpu.memory_space<vmem>>, vector<32x365xbf16>,
    %cst_67 = arith.constant 0.000000e+00 : bf16
    %57 = vector.broadcast %cst_67 : bf16 to vector<32x18xbf16>
    %c32_68 = arith.constant 32 : index
    %c0_69 = arith.constant 0 : index
    %58 = vector.load %arg12[%c32_68, %c0_69] : memref<288x384xbf16, #tpu.memory_space<vmem>>, vector<32x18xbf16>
    tpu.vector_store %arg12[%c32_68, %c0_69], %57 {strides = array<i32>} : memref<288x384xbf16, #tpu.memory_space<vmem>>, vector<32x18xbf16>,
    %c0_70 = arith.constant 0 : index
    %c0_71 = arith.constant 0 : index
    %59 = vector.load %arg11[%c0_70, %c0_71] : memref<32x384xbf16, #tpu.memory_space<vmem>>, vector<32x366xbf16>
    %c32_72 = arith.constant 32 : index
    %c18_73 = arith.constant 18 : index
    %60 = vector.load %arg12[%c32_72, %c18_73] : memref<288x384xbf16, #tpu.memory_space<vmem>>, vector<32x366xbf16>
    tpu.vector_store %arg12[%c32_72, %c18_73], %59 {strides = array<i32>} : memref<288x384xbf16, #tpu.memory_space<vmem>>, vector<32x366xbf16>,
    %cst_74 = arith.constant 0.000000e+00 : bf16
    %61 = vector.broadcast %cst_74 : bf16 to vector<32x17xbf16>
    %c64_75 = arith.constant 64 : index
    %c0_76 = arith.constant 0 : index
    %62 = vector.load %arg12[%c64_75, %c0_76] : memref<288x384xbf16, #tpu.memory_space<vmem>>, vector<32x17xbf16>
    tpu.vector_store %arg12[%c64_75, %c0_76], %61 {strides = array<i32>} : memref<288x384xbf16, #tpu.memory_space<vmem>>, vector<32x17xbf16>,
    %c0_77 = arith.constant 0 : index
    %c0_78 = arith.constant 0 : index
    %63 = vector.load %arg11[%c0_77, %c0_78] : memref<32x384xbf16, #tpu.memory_space<vmem>>, vector<32x367xbf16>
    %c64_79 = arith.constant 64 : index
    %c17_80 = arith.constant 17 : index
    %64 = vector.load %arg12[%c64_79, %c17_80] : memref<288x384xbf16, #tpu.memory_space<vmem>>, vector<32x367xbf16>
    tpu.vector_store %arg12[%c64_79, %c17_80], %63 {strides = array<i32>} : memref<288x384xbf16, #tpu.memory_space<vmem>>, vector<32x367xbf16>,
    %cst_81 = arith.constant 0.000000e+00 : bf16
    %65 = vector.broadcast %cst_81 : bf16 to vector<32x1xbf16>
    %c96_82 = arith.constant 96 : index
    %c0_83 = arith.constant 0 : index
    %66 = vector.load %arg12[%c96_82, %c0_83] : memref<288x384xbf16, #tpu.memory_space<vmem>>, vector<32x1xbf16>
    tpu.vector_store %arg12[%c96_82, %c0_83], %65 {strides = array<i32>} : memref<288x384xbf16, #tpu.memory_space<vmem>>, vector<32x1xbf16>,
    %c0_84 = arith.constant 0 : index
    %c0_85 = arith.constant 0 : index
    %67 = vector.load %arg11[%c0_84, %c0_85] : memref<32x384xbf16, #tpu.memory_space<vmem>>, vector<32x383xbf16>
    %c96_86 = arith.constant 96 : index
    %c1_87 = arith.constant 1 : index
    %68 = vector.load %arg12[%c96_86, %c1_87] : memref<288x384xbf16, #tpu.memory_space<vmem>>, vector<32x383xbf16>
    tpu.vector_store %arg12[%c96_86, %c1_87], %67 {strides = array<i32>} : memref<288x384xbf16, #tpu.memory_space<vmem>>, vector<32x383xbf16>,
    %c0_88 = arith.constant 0 : index
    %c0_89 = arith.constant 0 : index
    %69 = vector.load %arg11[%c0_88, %c0_89] : memref<32x384xbf16, #tpu.memory_space<vmem>>, vector<32x384xbf16>
    %c128_90 = arith.constant 128 : index
    %c0_91 = arith.constant 0 : index
    %70 = vector.load %arg12[%c128_90, %c0_91] : memref<288x384xbf16, #tpu.memory_space<vmem>>, vector<32x384xbf16>
    tpu.vector_store %arg12[%c128_90, %c0_91], %69 {strides = array<i32>} : memref<288x384xbf16, #tpu.memory_space<vmem>>, vector<32x384xbf16>,
    %cst_92 = arith.constant 0.000000e+00 : bf16
    %71 = vector.broadcast %cst_92 : bf16 to vector<32x1xbf16>
    %c160_93 = arith.constant 160 : index
    %c383_94 = arith.constant 383 : index
    %72 = vector.load %arg12[%c160_93, %c383_94] : memref<288x384xbf16, #tpu.memory_space<vmem>>, vector<32x1xbf16>
    tpu.vector_store %arg12[%c160_93, %c383_94], %71 {strides = array<i32>} : memref<288x384xbf16, #tpu.memory_space<vmem>>, vector<32x1xbf16>,
    %c0_95 = arith.constant 0 : index
    %c1_96 = arith.constant 1 : index
    %73 = vector.load %arg11[%c0_95, %c1_96] : memref<32x384xbf16, #tpu.memory_space<vmem>>, vector<32x383xbf16>
    %c160_97 = arith.constant 160 : index
    %c0_98 = arith.constant 0 : index
    %74 = vector.load %arg12[%c160_97, %c0_98] : memref<288x384xbf16, #tpu.memory_space<vmem>>, vector<32x383xbf16>
    tpu.vector_store %arg12[%c160_97, %c0_98], %73 {strides = array<i32>} : memref<288x384xbf16, #tpu.memory_space<vmem>>, vector<32x383xbf16>,
    %cst_99 = arith.constant 0.000000e+00 : bf16
    %75 = vector.broadcast %cst_99 : bf16 to vector<32x17xbf16>
    %c192_100 = arith.constant 192 : index
    %c367_101 = arith.constant 367 : index
    %76 = vector.load %arg12[%c192_100, %c367_101] : memref<288x384xbf16, #tpu.memory_space<vmem>>, vector<32x17xbf16>
    tpu.vector_store %arg12[%c192_100, %c367_101], %75 {strides = array<i32>} : memref<288x384xbf16, #tpu.memory_space<vmem>>, vector<32x17xbf16>,
    %c0_102 = arith.constant 0 : index
    %c17_103 = arith.constant 17 : index
    %77 = vector.load %arg11[%c0_102, %c17_103] : memref<32x384xbf16, #tpu.memory_space<vmem>>, vector<32x367xbf16>
    %c192_104 = arith.constant 192 : index
    %c0_105 = arith.constant 0 : index
    %78 = vector.load %arg12[%c192_104, %c0_105] : memref<288x384xbf16, #tpu.memory_space<vmem>>, vector<32x367xbf16>
    tpu.vector_store %arg12[%c192_104, %c0_105], %77 {strides = array<i32>} : memref<288x384xbf16, #tpu.memory_space<vmem>>, vector<32x367xbf16>,
    %cst_106 = arith.constant 0.000000e+00 : bf16
    %79 = vector.broadcast %cst_106 : bf16 to vector<32x18xbf16>
    %c224_107 = arith.constant 224 : index
    %c366_108 = arith.constant 366 : index
    %80 = vector.load %arg12[%c224_107, %c366_108] : memref<288x384xbf16, #tpu.memory_space<vmem>>, vector<32x18xbf16>
    tpu.vector_store %arg12[%c224_107, %c366_108], %79 {strides = array<i32>} : memref<288x384xbf16, #tpu.memory_space<vmem>>, vector<32x18xbf16>,
    %c0_109 = arith.constant 0 : index
    %c18_110 = arith.constant 18 : index
    %81 = vector.load %arg11[%c0_109, %c18_110] : memref<32x384xbf16, #tpu.memory_space<vmem>>, vector<32x366xbf16>
    %c224_111 = arith.constant 224 : index
    %c0_112 = arith.constant 0 : index
    %82 = vector.load %arg12[%c224_111, %c0_112] : memref<288x384xbf16, #tpu.memory_space<vmem>>, vector<32x366xbf16>
    tpu.vector_store %arg12[%c224_111, %c0_112], %81 {strides = array<i32>} : memref<288x384xbf16, #tpu.memory_space<vmem>>, vector<32x366xbf16>,
    %cst_113 = arith.constant 0.000000e+00 : bf16
    %83 = vector.broadcast %cst_113 : bf16 to vector<32x19xbf16>
    %c256_114 = arith.constant 256 : index
    %c365_115 = arith.constant 365 : index
    %84 = vector.load %arg12[%c256_114, %c365_115] : memref<288x384xbf16, #tpu.memory_space<vmem>>, vector<32x19xbf16>
    tpu.vector_store %arg12[%c256_114, %c365_115], %83 {strides = array<i32>} : memref<288x384xbf16, #tpu.memory_space<vmem>>, vector<32x19xbf16>,
    %c0_116 = arith.constant 0 : index
    %c19_117 = arith.constant 19 : index
    %85 = vector.load %arg11[%c0_116, %c19_117] : memref<32x384xbf16, #tpu.memory_space<vmem>>, vector<32x365xbf16>
    %c256_118 = arith.constant 256 : index
    %c0_119 = arith.constant 0 : index
    %86 = vector.load %arg12[%c256_118, %c0_119] : memref<288x384xbf16, #tpu.memory_space<vmem>>, vector<32x365xbf16>
    tpu.vector_store %arg12[%c256_118, %c0_119], %85 {strides = array<i32>} : memref<288x384xbf16, #tpu.memory_space<vmem>>, vector<32x365xbf16>,
    %c0_120 = arith.constant 0 : index
    %c0_121 = arith.constant 0 : index
    %87 = vector.load %arg5[%c0_120, %c0_121] : memref<32x288xbf16, #tpu.memory_space<vmem>>, vector<32x288xbf16>
    %c0_122 = arith.constant 0 : index
    %c0_123 = arith.constant 0 : index
    %88 = vector.load %arg12[%c0_122, %c0_123] : memref<288x384xbf16, #tpu.memory_space<vmem>>, vector<288x384xbf16>
    %cst_124 = arith.constant dense<0.000000e+00> : vector<32x384xf32>
    %89 = tpu.matmul %87, %88, %cst_124 {dimension_numbers = #tpu.dot_dimension_numbers<[1], [0], [0], [1], [0, 0, 1, 1], [], []>} : vector<32x288xbf16>, vector<288x384xbf16>, vector<32x384xf32> -> vector<32x384xf32>
    %c0_125 = arith.constant 0 : index
    %c0_126 = arith.constant 0 : index
    %90 = vector.load %arg6[%c0_125, %c0_126] : memref<32x1xf32, #tpu.memory_space<vmem>>, vector<32x1xf32>
    %91 = vector.broadcast %90 : vector<32x1xf32> to vector<32x384xf32>
    %92 = arith.mulf %89, %91 : vector<32x384xf32>
    %c0_127 = arith.constant 0 : index
    %c0_128 = arith.constant 0 : index
    %93 = vector.load %arg7[%c0_127, %c0_128] : memref<32x1xf32, #tpu.memory_space<vmem>>, vector<32x1xf32>
    %94 = vector.broadcast %93 : vector<32x1xf32> to vector<32x384xf32>
    %95 = arith.addf %92, %94 : vector<32x384xf32>
    %c0_129 = arith.constant 0 : index
    %c0_130 = arith.constant 0 : index
    %96 = vector.load %arg1[%c0_129, %c0_130] : memref<32x384xf32, #tpu.memory_space<vmem>>, vector<32x384xf32>
    %97 = arith.addf %95, %96 : vector<32x384xf32>
    %cst_131 = arith.constant 0.000000e+00 : f32
    %98 = vector.broadcast %cst_131 : f32 to vector<32x384xf32>
    %99 = arith.maximumf %97, %98 : vector<32x384xf32>
    %100 = vector.broadcast %0 : vector<1x384xf32> to vector<32x384xf32>
    %101 = arith.mulf %99, %100 : vector<32x384xf32>
    %c0_132 = arith.constant 0 : index
    %c0_133 = arith.constant 0 : index
    %102 = vector.load %arg9[%c0_132, %c0_133] : memref<32x384xf32, #tpu.memory_space<vmem>>, vector<32x384xf32>
    tpu.vector_store %arg9[%c0_132, %c0_133], %101 {strides = array<i32>} : memref<32x384xf32, #tpu.memory_space<vmem>>, vector<32x384xf32>,
    return
  }
  func.func @transform_0(%arg0: i32) -> (i32, i32) {
    %c0_i32 = arith.constant 0 : i32
    %c0_i32_0 = arith.constant 0 : i32
    return %c0_i32, %arg0 : i32, i32
  }
  func.func @transform_1(%arg0: i32) -> (i32, i32) {
    %c0_i32 = arith.constant 0 : i32
    %c0_i32_0 = arith.constant 0 : i32
    %c0_i32_1 = arith.constant 0 : i32
    return %c0_i32, %c0_i32_0 : i32, i32
  }
  func.func @transform_2(%arg0: i32) -> (i32, i32) {
    %c0_i32 = arith.constant 0 : i32
    %c0_i32_0 = arith.constant 0 : i32
    %c0_i32_1 = arith.constant 0 : i32
    return %c0_i32, %c0_i32_0 : i32, i32
  }
  func.func @transform_3(%arg0: i32) -> (i32, i32) {
    %c0_i32 = arith.constant 0 : i32
    %c0_i32_0 = arith.constant 0 : i32
    %c0_i32_1 = arith.constant 0 : i32
    return %c0_i32, %c0_i32_0 : i32, i32
  }
  func.func @transform_4(%arg0: i32) -> (i32, i32) {
    %c0_i32 = arith.constant 0 : i32
    %c0_i32_0 = arith.constant 0 : i32
    %c0_i32_1 = arith.constant 0 : i32
    return %c0_i32, %c0_i32_0 : i32, i32
  }
  func.func @transform_5(%arg0: i32) -> (i32, i32) {
    %c0_i32 = arith.constant 0 : i32
    %c0_i32_0 = arith.constant 0 : i32
    %c0_i32_1 = arith.constant 0 : i32
    return %c0_i32, %c0_i32_0 : i32, i32
  }
  func.func @transform_6(%arg0: i32) -> (i32, i32) {
    %c0_i32 = arith.constant 0 : i32
    %c0_i32_0 = arith.constant 0 : i32
    %c0_i32_1 = arith.constant 0 : i32
    return %c0_i32, %c0_i32_0 : i32, i32
  }
  func.func @transform_7(%arg0: i32) -> (i32, i32) {
    %c0_i32 = arith.constant 0 : i32
    %c0_i32_0 = arith.constant 0 : i32
    %c0_i32_1 = arith.constant 0 : i32
    return %c0_i32, %c0_i32_0 : i32, i32
  }
  func.func @transform_8(%arg0: i32) -> (i32, i32) {
    %c0_i32 = arith.constant 0 : i32
    %c0_i32_0 = arith.constant 0 : i32
    return %c0_i32, %arg0 : i32, i32
  }
}

module attributes {stable_mosaic.version = 11 : i64} {
  func.func @_resblock_kernel(%arg0: i32, %arg1: memref<288x128xbf16, #tpu.memory_space<vmem>>, %arg2: memref<64x288xbf16, #tpu.memory_space<vmem>>, %arg3: memref<64x1xf32, #tpu.memory_space<vmem>>, %arg4: memref<64x1xf32, #tpu.memory_space<vmem>>, %arg5: memref<64x576xbf16, #tpu.memory_space<vmem>>, %arg6: memref<64x1xf32, #tpu.memory_space<vmem>>, %arg7: memref<64x1xf32, #tpu.memory_space<vmem>>, %arg8: memref<1x128xf32, #tpu.memory_space<vmem>>, %arg9: memref<64x32xbf16, #tpu.memory_space<vmem>>, %arg10: memref<64x1xf32, #tpu.memory_space<vmem>>, %arg11: memref<64x1xf32, #tpu.memory_space<vmem>>, %arg12: memref<64x128xf32, #tpu.memory_space<vmem>>, %arg13: memref<64x128xbf16, #tpu.memory_space<vmem>>, %arg14: memref<576x128xbf16, #tpu.memory_space<vmem>>) attributes {dimension_semantics = [#tpu.dimension_semantics<parallel>], iteration_bounds = array<i64: 2>, scalar_prefetch = 0 : i64, scratch_operands = 2 : i64, tpu.core_type = #tpu.core_type<tc>, window_params = [{transform_indices = @transform_0, window_bounds = array<i64: 288, 128>}, {pipeline_mode = #tpu.pipeline_mode<synchronous>, transform_indices = @transform_1, window_bounds = array<i64: 64, 288>}, {pipeline_mode = #tpu.pipeline_mode<synchronous>, transform_indices = @transform_2, window_bounds = array<i64: 64, 1>}, {pipeline_mode = #tpu.pipeline_mode<synchronous>, transform_indices = @transform_3, window_bounds = array<i64: 64, 1>}, {pipeline_mode = #tpu.pipeline_mode<synchronous>, transform_indices = @transform_4, window_bounds = array<i64: 64, 576>}, {pipeline_mode = #tpu.pipeline_mode<synchronous>, transform_indices = @transform_5, window_bounds = array<i64: 64, 1>}, {pipeline_mode = #tpu.pipeline_mode<synchronous>, transform_indices = @transform_6, window_bounds = array<i64: 64, 1>}, {pipeline_mode = #tpu.pipeline_mode<synchronous>, transform_indices = @transform_7, window_bounds = array<i64: 1, 128>}, {pipeline_mode = #tpu.pipeline_mode<synchronous>, transform_indices = @transform_8, window_bounds = array<i64: 64, 32>}, {pipeline_mode = #tpu.pipeline_mode<synchronous>, transform_indices = @transform_9, window_bounds = array<i64: 64, 1>}, {pipeline_mode = #tpu.pipeline_mode<synchronous>, transform_indices = @transform_10, window_bounds = array<i64: 64, 1>}, {transform_indices = @transform_11, window_bounds = array<i64: 64, 128>}]} {
    %c0 = arith.constant 0 : index
    %c0_0 = arith.constant 0 : index
    %0 = vector.load %arg8[%c0, %c0_0] : memref<1x128xf32, #tpu.memory_space<vmem>>, vector<1x128xf32>
    %c0_1 = arith.constant 0 : index
    %c0_2 = arith.constant 0 : index
    %1 = vector.load %arg2[%c0_1, %c0_2] : memref<64x288xbf16, #tpu.memory_space<vmem>>, vector<64x288xbf16>
    %c0_3 = arith.constant 0 : index
    %c0_4 = arith.constant 0 : index
    %2 = vector.load %arg1[%c0_3, %c0_4] : memref<288x128xbf16, #tpu.memory_space<vmem>>, vector<288x128xbf16>
    %cst = arith.constant dense<0.000000e+00> : vector<64x128xf32>
    %3 = tpu.matmul %1, %2, %cst {dimension_numbers = #tpu.dot_dimension_numbers<[1], [0], [0], [1], [0, 0, 1, 1], [], []>} : vector<64x288xbf16>, vector<288x128xbf16>, vector<64x128xf32> -> vector<64x128xf32>
    %c0_5 = arith.constant 0 : index
    %c0_6 = arith.constant 0 : index
    %4 = vector.load %arg3[%c0_5, %c0_6] : memref<64x1xf32, #tpu.memory_space<vmem>>, vector<64x1xf32>
    %5 = vector.broadcast %4 : vector<64x1xf32> to vector<64x128xf32>
    %6 = arith.mulf %3, %5 : vector<64x128xf32>
    %c0_7 = arith.constant 0 : index
    %c0_8 = arith.constant 0 : index
    %7 = vector.load %arg4[%c0_7, %c0_8] : memref<64x1xf32, #tpu.memory_space<vmem>>, vector<64x1xf32>
    %8 = vector.broadcast %7 : vector<64x1xf32> to vector<64x128xf32>
    %9 = arith.addf %6, %8 : vector<64x128xf32>
    %cst_9 = arith.constant 0.000000e+00 : f32
    %10 = vector.broadcast %cst_9 : f32 to vector<64x128xf32>
    %11 = arith.maximumf %9, %10 : vector<64x128xf32>
    %12 = vector.broadcast %0 : vector<1x128xf32> to vector<64x128xf32>
    %13 = arith.mulf %11, %12 : vector<64x128xf32>
    %14 = arith.truncf %13 : vector<64x128xf32> to vector<64x128xbf16>
    %c0_10 = arith.constant 0 : index
    %c0_11 = arith.constant 0 : index
    %15 = vector.load %arg13[%c0_10, %c0_11] : memref<64x128xbf16, #tpu.memory_space<vmem>>, vector<64x128xbf16>
    tpu.vector_store %arg13[%c0_10, %c0_11], %14 {strides = array<i32>} : memref<64x128xbf16, #tpu.memory_space<vmem>>, vector<64x128xbf16>,
    %cst_12 = arith.constant 0.000000e+00 : bf16
    %16 = vector.broadcast %cst_12 : bf16 to vector<64x11xbf16>
    %c0_13 = arith.constant 0 : index
    %c0_14 = arith.constant 0 : index
    %17 = vector.load %arg14[%c0_13, %c0_14] : memref<576x128xbf16, #tpu.memory_space<vmem>>, vector<64x11xbf16>
    tpu.vector_store %arg14[%c0_13, %c0_14], %16 {strides = array<i32>} : memref<576x128xbf16, #tpu.memory_space<vmem>>, vector<64x11xbf16>,
    %c0_15 = arith.constant 0 : index
    %c0_16 = arith.constant 0 : index
    %18 = vector.load %arg13[%c0_15, %c0_16] : memref<64x128xbf16, #tpu.memory_space<vmem>>, vector<64x117xbf16>
    %c0_17 = arith.constant 0 : index
    %c11 = arith.constant 11 : index
    %19 = vector.load %arg14[%c0_17, %c11] : memref<576x128xbf16, #tpu.memory_space<vmem>>, vector<64x117xbf16>
    tpu.vector_store %arg14[%c0_17, %c11], %18 {strides = array<i32>} : memref<576x128xbf16, #tpu.memory_space<vmem>>, vector<64x117xbf16>,
    %cst_18 = arith.constant 0.000000e+00 : bf16
    %20 = vector.broadcast %cst_18 : bf16 to vector<64x10xbf16>
    %c64 = arith.constant 64 : index
    %c0_19 = arith.constant 0 : index
    %21 = vector.load %arg14[%c64, %c0_19] : memref<576x128xbf16, #tpu.memory_space<vmem>>, vector<64x10xbf16>
    tpu.vector_store %arg14[%c64, %c0_19], %20 {strides = array<i32>} : memref<576x128xbf16, #tpu.memory_space<vmem>>, vector<64x10xbf16>,
    %c0_20 = arith.constant 0 : index
    %c0_21 = arith.constant 0 : index
    %22 = vector.load %arg13[%c0_20, %c0_21] : memref<64x128xbf16, #tpu.memory_space<vmem>>, vector<64x118xbf16>
    %c64_22 = arith.constant 64 : index
    %c10 = arith.constant 10 : index
    %23 = vector.load %arg14[%c64_22, %c10] : memref<576x128xbf16, #tpu.memory_space<vmem>>, vector<64x118xbf16>
    tpu.vector_store %arg14[%c64_22, %c10], %22 {strides = array<i32>} : memref<576x128xbf16, #tpu.memory_space<vmem>>, vector<64x118xbf16>,
    %cst_23 = arith.constant 0.000000e+00 : bf16
    %24 = vector.broadcast %cst_23 : bf16 to vector<64x9xbf16>
    %c128 = arith.constant 128 : index
    %c0_24 = arith.constant 0 : index
    %25 = vector.load %arg14[%c128, %c0_24] : memref<576x128xbf16, #tpu.memory_space<vmem>>, vector<64x9xbf16>
    tpu.vector_store %arg14[%c128, %c0_24], %24 {strides = array<i32>} : memref<576x128xbf16, #tpu.memory_space<vmem>>, vector<64x9xbf16>,
    %c0_25 = arith.constant 0 : index
    %c0_26 = arith.constant 0 : index
    %26 = vector.load %arg13[%c0_25, %c0_26] : memref<64x128xbf16, #tpu.memory_space<vmem>>, vector<64x119xbf16>
    %c128_27 = arith.constant 128 : index
    %c9 = arith.constant 9 : index
    %27 = vector.load %arg14[%c128_27, %c9] : memref<576x128xbf16, #tpu.memory_space<vmem>>, vector<64x119xbf16>
    tpu.vector_store %arg14[%c128_27, %c9], %26 {strides = array<i32>} : memref<576x128xbf16, #tpu.memory_space<vmem>>, vector<64x119xbf16>,
    %cst_28 = arith.constant 0.000000e+00 : bf16
    %28 = vector.broadcast %cst_28 : bf16 to vector<64x1xbf16>
    %c192 = arith.constant 192 : index
    %c0_29 = arith.constant 0 : index
    %29 = vector.load %arg14[%c192, %c0_29] : memref<576x128xbf16, #tpu.memory_space<vmem>>, vector<64x1xbf16>
    tpu.vector_store %arg14[%c192, %c0_29], %28 {strides = array<i32>} : memref<576x128xbf16, #tpu.memory_space<vmem>>, vector<64x1xbf16>,
    %c0_30 = arith.constant 0 : index
    %c0_31 = arith.constant 0 : index
    %30 = vector.load %arg13[%c0_30, %c0_31] : memref<64x128xbf16, #tpu.memory_space<vmem>>, vector<64x127xbf16>
    %c192_32 = arith.constant 192 : index
    %c1 = arith.constant 1 : index
    %31 = vector.load %arg14[%c192_32, %c1] : memref<576x128xbf16, #tpu.memory_space<vmem>>, vector<64x127xbf16>
    tpu.vector_store %arg14[%c192_32, %c1], %30 {strides = array<i32>} : memref<576x128xbf16, #tpu.memory_space<vmem>>, vector<64x127xbf16>,
    %c0_33 = arith.constant 0 : index
    %c0_34 = arith.constant 0 : index
    %32 = vector.load %arg13[%c0_33, %c0_34] : memref<64x128xbf16, #tpu.memory_space<vmem>>, vector<64x128xbf16>
    %c256 = arith.constant 256 : index
    %c0_35 = arith.constant 0 : index
    %33 = vector.load %arg14[%c256, %c0_35] : memref<576x128xbf16, #tpu.memory_space<vmem>>, vector<64x128xbf16>
    tpu.vector_store %arg14[%c256, %c0_35], %32 {strides = array<i32>} : memref<576x128xbf16, #tpu.memory_space<vmem>>, vector<64x128xbf16>,
    %cst_36 = arith.constant 0.000000e+00 : bf16
    %34 = vector.broadcast %cst_36 : bf16 to vector<64x1xbf16>
    %c320 = arith.constant 320 : index
    %c127 = arith.constant 127 : index
    %35 = vector.load %arg14[%c320, %c127] : memref<576x128xbf16, #tpu.memory_space<vmem>>, vector<64x1xbf16>
    tpu.vector_store %arg14[%c320, %c127], %34 {strides = array<i32>} : memref<576x128xbf16, #tpu.memory_space<vmem>>, vector<64x1xbf16>,
    %c0_37 = arith.constant 0 : index
    %c1_38 = arith.constant 1 : index
    %36 = vector.load %arg13[%c0_37, %c1_38] : memref<64x128xbf16, #tpu.memory_space<vmem>>, vector<64x127xbf16>
    %c320_39 = arith.constant 320 : index
    %c0_40 = arith.constant 0 : index
    %37 = vector.load %arg14[%c320_39, %c0_40] : memref<576x128xbf16, #tpu.memory_space<vmem>>, vector<64x127xbf16>
    tpu.vector_store %arg14[%c320_39, %c0_40], %36 {strides = array<i32>} : memref<576x128xbf16, #tpu.memory_space<vmem>>, vector<64x127xbf16>,
    %cst_41 = arith.constant 0.000000e+00 : bf16
    %38 = vector.broadcast %cst_41 : bf16 to vector<64x9xbf16>
    %c384 = arith.constant 384 : index
    %c119 = arith.constant 119 : index
    %39 = vector.load %arg14[%c384, %c119] : memref<576x128xbf16, #tpu.memory_space<vmem>>, vector<64x9xbf16>
    tpu.vector_store %arg14[%c384, %c119], %38 {strides = array<i32>} : memref<576x128xbf16, #tpu.memory_space<vmem>>, vector<64x9xbf16>,
    %c0_42 = arith.constant 0 : index
    %c9_43 = arith.constant 9 : index
    %40 = vector.load %arg13[%c0_42, %c9_43] : memref<64x128xbf16, #tpu.memory_space<vmem>>, vector<64x119xbf16>
    %c384_44 = arith.constant 384 : index
    %c0_45 = arith.constant 0 : index
    %41 = vector.load %arg14[%c384_44, %c0_45] : memref<576x128xbf16, #tpu.memory_space<vmem>>, vector<64x119xbf16>
    tpu.vector_store %arg14[%c384_44, %c0_45], %40 {strides = array<i32>} : memref<576x128xbf16, #tpu.memory_space<vmem>>, vector<64x119xbf16>,
    %cst_46 = arith.constant 0.000000e+00 : bf16
    %42 = vector.broadcast %cst_46 : bf16 to vector<64x10xbf16>
    %c448 = arith.constant 448 : index
    %c118 = arith.constant 118 : index
    %43 = vector.load %arg14[%c448, %c118] : memref<576x128xbf16, #tpu.memory_space<vmem>>, vector<64x10xbf16>
    tpu.vector_store %arg14[%c448, %c118], %42 {strides = array<i32>} : memref<576x128xbf16, #tpu.memory_space<vmem>>, vector<64x10xbf16>,
    %c0_47 = arith.constant 0 : index
    %c10_48 = arith.constant 10 : index
    %44 = vector.load %arg13[%c0_47, %c10_48] : memref<64x128xbf16, #tpu.memory_space<vmem>>, vector<64x118xbf16>
    %c448_49 = arith.constant 448 : index
    %c0_50 = arith.constant 0 : index
    %45 = vector.load %arg14[%c448_49, %c0_50] : memref<576x128xbf16, #tpu.memory_space<vmem>>, vector<64x118xbf16>
    tpu.vector_store %arg14[%c448_49, %c0_50], %44 {strides = array<i32>} : memref<576x128xbf16, #tpu.memory_space<vmem>>, vector<64x118xbf16>,
    %cst_51 = arith.constant 0.000000e+00 : bf16
    %46 = vector.broadcast %cst_51 : bf16 to vector<64x11xbf16>
    %c512 = arith.constant 512 : index
    %c117 = arith.constant 117 : index
    %47 = vector.load %arg14[%c512, %c117] : memref<576x128xbf16, #tpu.memory_space<vmem>>, vector<64x11xbf16>
    tpu.vector_store %arg14[%c512, %c117], %46 {strides = array<i32>} : memref<576x128xbf16, #tpu.memory_space<vmem>>, vector<64x11xbf16>,
    %c0_52 = arith.constant 0 : index
    %c11_53 = arith.constant 11 : index
    %48 = vector.load %arg13[%c0_52, %c11_53] : memref<64x128xbf16, #tpu.memory_space<vmem>>, vector<64x117xbf16>
    %c512_54 = arith.constant 512 : index
    %c0_55 = arith.constant 0 : index
    %49 = vector.load %arg14[%c512_54, %c0_55] : memref<576x128xbf16, #tpu.memory_space<vmem>>, vector<64x117xbf16>
    tpu.vector_store %arg14[%c512_54, %c0_55], %48 {strides = array<i32>} : memref<576x128xbf16, #tpu.memory_space<vmem>>, vector<64x117xbf16>,
    %c0_56 = arith.constant 0 : index
    %c0_57 = arith.constant 0 : index
    %50 = vector.load %arg5[%c0_56, %c0_57] : memref<64x576xbf16, #tpu.memory_space<vmem>>, vector<64x576xbf16>
    %c0_58 = arith.constant 0 : index
    %c0_59 = arith.constant 0 : index
    %51 = vector.load %arg14[%c0_58, %c0_59] : memref<576x128xbf16, #tpu.memory_space<vmem>>, vector<576x128xbf16>
    %cst_60 = arith.constant dense<0.000000e+00> : vector<64x128xf32>
    %52 = tpu.matmul %50, %51, %cst_60 {dimension_numbers = #tpu.dot_dimension_numbers<[1], [0], [0], [1], [0, 0, 1, 1], [], []>} : vector<64x576xbf16>, vector<576x128xbf16>, vector<64x128xf32> -> vector<64x128xf32>
    %c0_61 = arith.constant 0 : index
    %c0_62 = arith.constant 0 : index
    %53 = vector.load %arg6[%c0_61, %c0_62] : memref<64x1xf32, #tpu.memory_space<vmem>>, vector<64x1xf32>
    %54 = vector.broadcast %53 : vector<64x1xf32> to vector<64x128xf32>
    %55 = arith.mulf %52, %54 : vector<64x128xf32>
    %c0_63 = arith.constant 0 : index
    %c0_64 = arith.constant 0 : index
    %56 = vector.load %arg7[%c0_63, %c0_64] : memref<64x1xf32, #tpu.memory_space<vmem>>, vector<64x1xf32>
    %57 = vector.broadcast %56 : vector<64x1xf32> to vector<64x128xf32>
    %58 = arith.addf %55, %57 : vector<64x128xf32>
    %c128_65 = arith.constant 128 : index
    %c0_66 = arith.constant 0 : index
    %59 = vector.load %arg1[%c128_65, %c0_66] : memref<288x128xbf16, #tpu.memory_space<vmem>>, vector<32x128xbf16>
    %c0_67 = arith.constant 0 : index
    %c0_68 = arith.constant 0 : index
    %60 = vector.load %arg9[%c0_67, %c0_68] : memref<64x32xbf16, #tpu.memory_space<vmem>>, vector<64x32xbf16>
    %cst_69 = arith.constant dense<0.000000e+00> : vector<64x128xf32>
    %61 = tpu.matmul %60, %59, %cst_69 {dimension_numbers = #tpu.dot_dimension_numbers<[1], [0], [0], [1], [0, 0, 1, 1], [], []>} : vector<64x32xbf16>, vector<32x128xbf16>, vector<64x128xf32> -> vector<64x128xf32>
    %c0_70 = arith.constant 0 : index
    %c0_71 = arith.constant 0 : index
    %62 = vector.load %arg10[%c0_70, %c0_71] : memref<64x1xf32, #tpu.memory_space<vmem>>, vector<64x1xf32>
    %63 = vector.broadcast %62 : vector<64x1xf32> to vector<64x128xf32>
    %64 = arith.mulf %61, %63 : vector<64x128xf32>
    %c0_72 = arith.constant 0 : index
    %c0_73 = arith.constant 0 : index
    %65 = vector.load %arg11[%c0_72, %c0_73] : memref<64x1xf32, #tpu.memory_space<vmem>>, vector<64x1xf32>
    %66 = vector.broadcast %65 : vector<64x1xf32> to vector<64x128xf32>
    %67 = arith.addf %64, %66 : vector<64x128xf32>
    %68 = arith.addf %58, %67 : vector<64x128xf32>
    %cst_74 = arith.constant 0.000000e+00 : f32
    %69 = vector.broadcast %cst_74 : f32 to vector<64x128xf32>
    %70 = arith.maximumf %68, %69 : vector<64x128xf32>
    %71 = vector.broadcast %0 : vector<1x128xf32> to vector<64x128xf32>
    %72 = arith.mulf %70, %71 : vector<64x128xf32>
    %c0_75 = arith.constant 0 : index
    %c0_76 = arith.constant 0 : index
    %73 = vector.load %arg12[%c0_75, %c0_76] : memref<64x128xf32, #tpu.memory_space<vmem>>, vector<64x128xf32>
    tpu.vector_store %arg12[%c0_75, %c0_76], %72 {strides = array<i32>} : memref<64x128xf32, #tpu.memory_space<vmem>>, vector<64x128xf32>,
    return
  }
  func.func @transform_0(%arg0: i32) -> (i32, i32) {
    %c0_i32 = arith.constant 0 : i32
    %c0_i32_0 = arith.constant 0 : i32
    return %c0_i32, %arg0 : i32, i32
  }
  func.func @transform_1(%arg0: i32) -> (i32, i32) {
    %c0_i32 = arith.constant 0 : i32
    %c0_i32_0 = arith.constant 0 : i32
    %c0_i32_1 = arith.constant 0 : i32
    return %c0_i32, %c0_i32_0 : i32, i32
  }
  func.func @transform_2(%arg0: i32) -> (i32, i32) {
    %c0_i32 = arith.constant 0 : i32
    %c0_i32_0 = arith.constant 0 : i32
    %c0_i32_1 = arith.constant 0 : i32
    return %c0_i32, %c0_i32_0 : i32, i32
  }
  func.func @transform_3(%arg0: i32) -> (i32, i32) {
    %c0_i32 = arith.constant 0 : i32
    %c0_i32_0 = arith.constant 0 : i32
    %c0_i32_1 = arith.constant 0 : i32
    return %c0_i32, %c0_i32_0 : i32, i32
  }
  func.func @transform_4(%arg0: i32) -> (i32, i32) {
    %c0_i32 = arith.constant 0 : i32
    %c0_i32_0 = arith.constant 0 : i32
    %c0_i32_1 = arith.constant 0 : i32
    return %c0_i32, %c0_i32_0 : i32, i32
  }
  func.func @transform_5(%arg0: i32) -> (i32, i32) {
    %c0_i32 = arith.constant 0 : i32
    %c0_i32_0 = arith.constant 0 : i32
    %c0_i32_1 = arith.constant 0 : i32
    return %c0_i32, %c0_i32_0 : i32, i32
  }
  func.func @transform_6(%arg0: i32) -> (i32, i32) {
    %c0_i32 = arith.constant 0 : i32
    %c0_i32_0 = arith.constant 0 : i32
    %c0_i32_1 = arith.constant 0 : i32
    return %c0_i32, %c0_i32_0 : i32, i32
  }
  func.func @transform_7(%arg0: i32) -> (i32, i32) {
    %c0_i32 = arith.constant 0 : i32
    %c0_i32_0 = arith.constant 0 : i32
    %c0_i32_1 = arith.constant 0 : i32
    return %c0_i32, %c0_i32_0 : i32, i32
  }
  func.func @transform_8(%arg0: i32) -> (i32, i32) {
    %c0_i32 = arith.constant 0 : i32
    %c0_i32_0 = arith.constant 0 : i32
    %c0_i32_1 = arith.constant 0 : i32
    return %c0_i32, %c0_i32_0 : i32, i32
  }
  func.func @transform_9(%arg0: i32) -> (i32, i32) {
    %c0_i32 = arith.constant 0 : i32
    %c0_i32_0 = arith.constant 0 : i32
    %c0_i32_1 = arith.constant 0 : i32
    return %c0_i32, %c0_i32_0 : i32, i32
  }
  func.func @transform_10(%arg0: i32) -> (i32, i32) {
    %c0_i32 = arith.constant 0 : i32
    %c0_i32_0 = arith.constant 0 : i32
    %c0_i32_1 = arith.constant 0 : i32
    return %c0_i32, %c0_i32_0 : i32, i32
  }
  func.func @transform_11(%arg0: i32) -> (i32, i32) {
    %c0_i32 = arith.constant 0 : i32
    %c0_i32_0 = arith.constant 0 : i32
    return %c0_i32, %arg0 : i32, i32
  }
}

</mosaic_0001>

<llo_original>
// kernel: forward.3
$region0: #{forward.3}
  #allocation0 [shape = 'u32[]', space=smem, size = 0x4, offset = 0x4, fixed_abs, tag = 'smem constant byte address 0x4 - core index']
  #allocation1 [shape = 'u32[144,128]{1,0:T(1,128)}', space=vmem, size = 0x12000, scoped, tag = 'internal scratch']
  #allocation2 [shape = 'bf16[4,384]{1,0:T(4,128)(2,1)}', space=vmem, size = 0xc00, scoped, tag = 'scratch operand']
  #allocation3 [shape = 'bf16[32,384]{1,0:T(16,128)(2,1)}', space=vmem, size = 0x6000, scoped, tag = 'scratch operand']
  #allocation4 [shape = 'bf16[288,384]{1,0:T(16,128)(2,1)}', space=vmem, size = 0x36000, scoped, tag = 'scratch operand']
  %s0 = inlined_call_operand.vmem [shape: f32[4,768], index: 0, kind: input, shape index: {}]
  %s1 = inlined_call_operand.vmem [shape: bf16[32,36], index: 1, kind: input, shape index: {}]
  %s2 = inlined_call_operand.vmem [shape: f32[32,1], index: 2, kind: input, shape index: {}]
  %s3 = inlined_call_operand.vmem [shape: f32[32,1], index: 3, kind: input, shape index: {}]
  %s4 = inlined_call_operand.vmem [shape: bf16[32,288], index: 4, kind: input, shape index: {}]
  %s5 = inlined_call_operand.vmem [shape: f32[32,1], index: 5, kind: input, shape index: {}]
  %s6 = inlined_call_operand.vmem [shape: f32[32,1], index: 6, kind: input, shape index: {}]
  %s7 = inlined_call_operand.vmem [shape: f32[1,384], index: 7, kind: input, shape index: {}]
  %s8 = inlined_call_operand.vmem [shape: bf16[32,4], index: 8, kind: input, shape index: {}]
  %s9 = inlined_call_operand.vmem [shape: f32[32,1], index: 9, kind: input, shape index: {}]
  %s10 = inlined_call_operand.vmem [shape: f32[32,1], index: 10, kind: input, shape index: {}]
  %s11 = inlined_call_operand.vmem [shape: f32[32,768], index: 11, kind: output, shape index: {}]
  %s12 = sld [smem:[#allocation0]]
  $region96: #{forward.3} parent=0
    _
  %s14 = ssub.s32 1, %s12
  %s15 = scalar_select 0, %s14, %s12
  $region1: #{forward.3} parent=0
    #allocation5 [shape = 'u8[98304]{0}', space=vmem, size = 0x18000, scoped, tag = 'output window, operand 0']
    loop: start=0, step=1, limit=4
    $region2: #{forward.3} parent=1 // loop_pre_header
      _
    $region3: #{forward.3} parent=1 // loop_header
      %s17 = sphi 0, %s21
      %p18 = scmp.ge.s32.totalorder %s17, 4
      %s27 = sphi 0, %s29
      %s30 = sphi 0, %s27
      %s31 = sphi 0, %s30
      %s47 = sphi 0, %s31
      %s51 = sphi 0, %s51
      %s53 = sphi 0, %s51
      %s54 = sphi 0, %s53
      %s68 = sphi 0, %s54
      %s72 = sphi 0, %s72
      %s74 = sphi 0, %s72
      %s75 = sphi 0, %s74
      %s89 = sphi 0, %s75
      %s93 = sphi 0, %s93
      %s95 = sphi 0, %s93
      %s96 = sphi 0, %s95
      %s110 = sphi 0, %s96
      %s114 = sphi 0, %s114
      %s116 = sphi 0, %s114
      %s117 = sphi 0, %s116
      %s131 = sphi 0, %s117
      %s135 = sphi 0, %s135
      %s137 = sphi 0, %s135
      %s138 = sphi 0, %s137
      %s152 = sphi 0, %s138
      %s156 = sphi 0, %s156
      %s158 = sphi 0, %s156
      %s159 = sphi 0, %s158
      %s173 = sphi 0, %s159
      %s177 = sphi 0, %s177
      %s179 = sphi 0, %s177
      %s180 = sphi 0, %s179
      %s194 = sphi 0, %s180
      %s198 = sphi 0, %s198
      %s200 = sphi 0, %s198
      %s201 = sphi 0, %s200
      %s215 = sphi 0, %s201
      %s219 = sphi 0, %s219
      %s221 = sphi 0, %s219
      %s222 = sphi 0, %s221
      %s236 = sphi 0, %s222
      %s240 = sphi 0, %s240
      %s242 = sphi 0, %s240
      %s243 = sphi 0, %s242
      %s257 = sphi 0, %s243
      %s263 = sphi 0, %s265
      %s266 = sphi 0, %s263
      %s267 = sphi 0, %s266
      %s283 = sphi 0, %s267
    $region4: #{forward.3} parent=1 // loop_header_branch
      %20 = sbr.rel (%p18) target = $region8
    $region5: #{forward.3} parent=1 // loop_body
      %s22 = ssub.s32 %s17, 1
      %s23 = ssub.s32 %s17, 2
      %s24 = sadd.s32 %s17, 1
      %s25 = ssub.s32 %s17, %s24
      %p26 = scmp.eq.s32.totalorder %s25, 0
      %s28 = sadd.s32 %s27, 1
      %s29 = scalar_select %p26, %s27, %s28
      %p32 = pneg %p26
      %p33 = scmp.eq.s32.totalorder %s17, 1
      %p34 = por %p32, %p33
      %p35 = scmp.ne.s32.totalorder %s27, %s30
      %p36 = scmp.eq.s32.totalorder %s17, 0
      %p37 = por %p35, %p36
      %p38 = scmp.ne.s32.totalorder %s27, %s30
      %p39 = scmp.eq.s32.totalorder %s22, 1
      %p40 = por %p38, %p39
      %p41 = scmp.ne.s32.totalorder %s30, %s31
      %p42 = scmp.eq.s32.totalorder %s22, 0
      %p43 = por %p41, %p42
      %p44 = scmp.ne.s32.totalorder %s30, %s31
      %p45 = scmp.eq.s32.totalorder %s23, 1
      %p46 = por %p44, %p45
      %p48 = scmp.ne.s32.totalorder %s31, %s47
      %p49 = scmp.eq.s32.totalorder %s23, 0
      %p50 = por %p48, %p49
      %s52 = sadd.s32 %s51, 1
      %p55 = scmp.eq.s32.totalorder %s17, 1
      %p56 = scmp.ne.s32.totalorder %s51, %s53
      %p57 = scmp.eq.s32.totalorder %s17, 0
      %p58 = por %p56, %p57
      %p59 = scmp.ne.s32.totalorder %s51, %s53
      %p60 = scmp.eq.s32.totalorder %s22, 1
      %p61 = por %p59, %p60
      %p62 = scmp.ne.s32.totalorder %s53, %s54
      %p63 = scmp.eq.s32.totalorder %s22, 0
      %p64 = por %p62, %p63
      %p65 = scmp.ne.s32.totalorder %s53, %s54
      %p66 = scmp.eq.s32.totalorder %s23, 1
      %p67 = por %p65, %p66
      %p69 = scmp.ne.s32.totalorder %s54, %s68
      %p70 = scmp.eq.s32.totalorder %s23, 0
      %p71 = por %p69, %p70
      %s73 = sadd.s32 %s72, 1
      %p76 = scmp.eq.s32.totalorder %s17, 1
      %p77 = scmp.ne.s32.totalorder %s72, %s74
      %p78 = scmp.eq.s32.totalorder %s17, 0
      %p79 = por %p77, %p78
      %p80 = scmp.ne.s32.totalorder %s72, %s74
      %p81 = scmp.eq.s32.totalorder %s22, 1
      %p82 = por %p80, %p81
      %p83 = scmp.ne.s32.totalorder %s74, %s75
      %p84 = scmp.eq.s32.totalorder %s22, 0
      %p85 = por %p83, %p84
      %p86 = scmp.ne.s32.totalorder %s74, %s75
      %p87 = scmp.eq.s32.totalorder %s23, 1
      %p88 = por %p86, %p87
      %p90 = scmp.ne.s32.totalorder %s75, %s89
      %p91 = scmp.eq.s32.totalorder %s23, 0
      %p92 = por %p90, %p91
      %s94 = sadd.s32 %s93, 1
      %p97 = scmp.eq.s32.totalorder %s17, 1
      %p98 = scmp.ne.s32.totalorder %s93, %s95
      %p99 = scmp.eq.s32.totalorder %s17, 0
      %p100 = por %p98, %p99
      %p101 = scmp.ne.s32.totalorder %s93, %s95
      %p102 = scmp.eq.s32.totalorder %s22, 1
      %p103 = por %p101, %p102
      %p104 = scmp.ne.s32.totalorder %s95, %s96
      %p105 = scmp.eq.s32.totalorder %s22, 0
      %p106 = por %p104, %p105
      %p107 = scmp.ne.s32.totalorder %s95, %s96
      %p108 = scmp.eq.s32.totalorder %s23, 1
      %p109 = por %p107, %p108
      %p111 = scmp.ne.s32.totalorder %s96, %s110
      %p112 = scmp.eq.s32.totalorder %s23, 0
      %p113 = por %p111, %p112
      %s115 = sadd.s32 %s114, 1
      %p118 = scmp.eq.s32.totalorder %s17, 1
      %p119 = scmp.ne.s32.totalorder %s114, %s116
      %p120 = scmp.eq.s32.totalorder %s17, 0
      %p121 = por %p119, %p120
      %p122 = scmp.ne.s32.totalorder %s114, %s116
      %p123 = scmp.eq.s32.totalorder %s22, 1
      %p124 = por %p122, %p123
      %p125 = scmp.ne.s32.totalorder %s116, %s117
      %p126 = scmp.eq.s32.totalorder %s22, 0
      %p127 = por %p125, %p126
      %p128 = scmp.ne.s32.totalorder %s116, %s117
      %p129 = scmp.eq.s32.totalorder %s23, 1
      %p130 = por %p128, %p129
      %p132 = scmp.ne.s32.totalorder %s117, %s131
      %p133 = scmp.eq.s32.totalorder %s23, 0
      %p134 = por %p132, %p133
      %s136 = sadd.s32 %s135, 1
      %p139 = scmp.eq.s32.totalorder %s17, 1
      %p140 = scmp.ne.s32.totalorder %s135, %s137
      %p141 = scmp.eq.s32.totalorder %s17, 0
      %p142 = por %p140, %p141
      %p143 = scmp.ne.s32.totalorder %s135, %s137
      %p144 = scmp.eq.s32.totalorder %s22, 1
      %p145 = por %p143, %p144
      %p146 = scmp.ne.s32.totalorder %s137, %s138
      %p147 = scmp.eq.s32.totalorder %s22, 0
      %p148 = por %p146, %p147
      %p149 = scmp.ne.s32.totalorder %s137, %s138
      %p150 = scmp.eq.s32.totalorder %s23, 1
      %p151 = por %p149, %p150
      %p153 = scmp.ne.s32.totalorder %s138, %s152
      %p154 = scmp.eq.s32.totalorder %s23, 0
      %p155 = por %p153, %p154
      %s157 = sadd.s32 %s156, 1
      %p160 = scmp.eq.s32.totalorder %s17, 1
      %p161 = scmp.ne.s32.totalorder %s156, %s158
      %p162 = scmp.eq.s32.totalorder %s17, 0
      %p163 = por %p161, %p162
      %p164 = scmp.ne.s32.totalorder %s156, %s158
      %p165 = scmp.eq.s32.totalorder %s22, 1
      %p166 = por %p164, %p165
      %p167 = scmp.ne.s32.totalorder %s158, %s159
      %p168 = scmp.eq.s32.totalorder %s22, 0
      %p169 = por %p167, %p168
      %p170 = scmp.ne.s32.totalorder %s158, %s159
      %p171 = scmp.eq.s32.totalorder %s23, 1
      %p172 = por %p170, %p171
      %p174 = scmp.ne.s32.totalorder %s159, %s173
      %p175 = scmp.eq.s32.totalorder %s23, 0
      %p176 = por %p174, %p175
      %s178 = sadd.s32 %s177, 1
      %p181 = scmp.eq.s32.totalorder %s17, 1
      %p182 = scmp.ne.s32.totalorder %s177, %s179
      %p183 = scmp.eq.s32.totalorder %s17, 0
      %p184 = por %p182, %p183
      %p185 = scmp.ne.s32.totalorder %s177, %s179
      %p186 = scmp.eq.s32.totalorder %s22, 1
      %p187 = por %p185, %p186
      %p188 = scmp.ne.s32.totalorder %s179, %s180
      %p189 = scmp.eq.s32.totalorder %s22, 0
      %p190 = por %p188, %p189
      %p191 = scmp.ne.s32.totalorder %s179, %s180
      %p192 = scmp.eq.s32.totalorder %s23, 1
      %p193 = por %p191, %p192
      %p195 = scmp.ne.s32.totalorder %s180, %s194
      %p196 = scmp.eq.s32.totalorder %s23, 0
      %p197 = por %p195, %p196
      %s199 = sadd.s32 %s198, 1
      %p202 = scmp.eq.s32.totalorder %s17, 1
      %p203 = scmp.ne.s32.totalorder %s198, %s200
      %p204 = scmp.eq.s32.totalorder %s17, 0
      %p205 = por %p203, %p204
      %p206 = scmp.ne.s32.totalorder %s198, %s200
      %p207 = scmp.eq.s32.totalorder %s22, 1
      %p208 = por %p206, %p207
      %p209 = scmp.ne.s32.totalorder %s200, %s201
      %p210 = scmp.eq.s32.totalorder %s22, 0
      %p211 = por %p209, %p210
      %p212 = scmp.ne.s32.totalorder %s200, %s201
      %p213 = scmp.eq.s32.totalorder %s23, 1
      %p214 = por %p212, %p213
      %p216 = scmp.ne.s32.totalorder %s201, %s215
      %p217 = scmp.eq.s32.totalorder %s23, 0
      %p218 = por %p216, %p217
      %s220 = sadd.s32 %s219, 1
      %p223 = scmp.eq.s32.totalorder %s17, 1
      %p224 = scmp.ne.s32.totalorder %s219, %s221
      %p225 = scmp.eq.s32.totalorder %s17, 0
      %p226 = por %p224, %p225
      %p227 = scmp.ne.s32.totalorder %s219, %s221
      %p228 = scmp.eq.s32.totalorder %s22, 1
      %p229 = por %p227, %p228
      %p230 = scmp.ne.s32.totalorder %s221, %s222
      %p231 = scmp.eq.s32.totalorder %s22, 0
      %p232 = por %p230, %p231
      %p233 = scmp.ne.s32.totalorder %s221, %s222
      %p234 = scmp.eq.s32.totalorder %s23, 1
      %p235 = por %p233, %p234
      %p237 = scmp.ne.s32.totalorder %s222, %s236
      %p238 = scmp.eq.s32.totalorder %s23, 0
      %p239 = por %p237, %p238
      %s241 = sadd.s32 %s240, 1
      %p244 = scmp.eq.s32.totalorder %s17, 1
      %p245 = scmp.ne.s32.totalorder %s240, %s242
      %p246 = scmp.eq.s32.totalorder %s17, 0
      %p247 = por %p245, %p246
      %p248 = scmp.ne.s32.totalorder %s240, %s242
      %p249 = scmp.eq.s32.totalorder %s22, 1
      %p250 = por %p248, %p249
      %p251 = scmp.ne.s32.totalorder %s242, %s243
      %p252 = scmp.eq.s32.totalorder %s22, 0
      %p253 = por %p251, %p252
      %p254 = scmp.ne.s32.totalorder %s242, %s243
      %p255 = scmp.eq.s32.totalorder %s23, 1
      %p256 = por %p254, %p255
      %p258 = scmp.ne.s32.totalorder %s243, %s257
      %p259 = scmp.eq.s32.totalorder %s23, 0
      %p260 = por %p258, %p259
      %s261 = ssub.s32 %s17, %s24
      %p262 = scmp.eq.s32.totalorder %s261, 0
      %s264 = sadd.s32 %s263, 1
      %s265 = scalar_select %p262, %s263, %s264
      %p268 = pneg %p262
      %p269 = scmp.eq.s32.totalorder %s17, 1
      %p270 = por %p268, %p269
      %p271 = scmp.ne.s32.totalorder %s263, %s266
      %p272 = scmp.eq.s32.totalorder %s17, 0
      %p273 = por %p271, %p272
      %p274 = scmp.ne.s32.totalorder %s263, %s266
      %p275 = scmp.eq.s32.totalorder %s22, 1
      %p276 = por %p274, %p275
      %p277 = scmp.ne.s32.totalorder %s266, %s267
      %p278 = scmp.eq.s32.totalorder %s22, 0
      %p279 = por %p277, %p278
      %p280 = scmp.ne.s32.totalorder %s266, %s267
      %p281 = scmp.eq.s32.totalorder %s23, 1
      %p282 = por %p280, %p281
      %p284 = scmp.ne.s32.totalorder %s267, %s283
      %p285 = scmp.eq.s32.totalorder %s23, 0
      %p286 = por %p284, %p285
      %p287 = scmp.le.s32.totalorder 1, %s17
      %p288 = scmp.lt.s32.totalorder %s17, 3
      %p289 = pnand %p287, %p288
      %p290 = pneg %p289
      // Predicated region
      $region9: #{forward.3} parent=5 // pred_check
        _
      $region10: #{forward.3} parent=5 // pred_check_branch
        %292 = sbr.rel (%p289) target = $region12
      $region11: #{forward.3} parent=5 // pred_region
        %s293 = ssub.s32 %s17, 1
        // Predicated region
        $region13: #{forward.3} parent=11 // pred_check
          %p294 = pneg %p64
        $region14: #{forward.3} parent=11 // pred_check_branch
          %296 = sbr.rel (%p294) target = $region16
        $region15: #{forward.3} parent=11 // pred_region
          _
        $region16: #{forward.3} parent=11 // pred_fallthru
          _
        // Predicated region
        $region17: #{forward.3} parent=11 // pred_check
          %p297 = pneg %p85
        $region18: #{forward.3} parent=11 // pred_check_branch
          %299 = sbr.rel (%p297) target = $region20
        $region19: #{forward.3} parent=11 // pred_region
          _
        $region20: #{forward.3} parent=11 // pred_fallthru
          _
        // Predicated region
        $region21: #{forward.3} parent=11 // pred_check
          %p300 = pneg %p106
        $region22: #{forward.3} parent=11 // pred_check_branch
          %302 = sbr.rel (%p300) target = $region24
        $region23: #{forward.3} parent=11 // pred_region
          _
        $region24: #{forward.3} parent=11 // pred_fallthru
          _
        // Predicated region
        $region25: #{forward.3} parent=11 // pred_check
          %p303 = pneg %p127
        $region26: #{forward.3} parent=11 // pred_check_branch
          %305 = sbr.rel (%p303) target = $region28
        $region27: #{forward.3} parent=11 // pred_region
          _
        $region28: #{forward.3} parent=11 // pred_fallthru
          _
        // Predicated region
        $region29: #{forward.3} parent=11 // pred_check
          %p306 = pneg %p148
        $region30: #{forward.3} parent=11 // pred_check_branch
          %308 = sbr.rel (%p306) target = $region32
        $region31: #{forward.3} parent=11 // pred_region
          _
        $region32: #{forward.3} parent=11 // pred_fallthru
          _
        // Predicated region
        $region33: #{forward.3} parent=11 // pred_check
          %p309 = pneg %p169
        $region34: #{forward.3} parent=11 // pred_check_branch
          %311 = sbr.rel (%p309) target = $region36
        $region35: #{forward.3} parent=11 // pred_region
          _
        $region36: #{forward.3} parent=11 // pred_fallthru
          _
        // Predicated region
        $region37: #{forward.3} parent=11 // pred_check
          %p312 = pneg %p190
        $region38: #{forward.3} parent=11 // pred_check_branch
          %314 = sbr.rel (%p312) target = $region40
        $region39: #{forward.3} parent=11 // pred_region
          _
        $region40: #{forward.3} parent=11 // pred_fallthru
          _
        // Predicated region
        $region41: #{forward.3} parent=11 // pred_check
          %p315 = pneg %p211
        $region42: #{forward.3} parent=11 // pred_check_branch
          %317 = sbr.rel (%p315) target = $region44
        $region43: #{forward.3} parent=11 // pred_region
          _
        $region44: #{forward.3} parent=11 // pred_fallthru
          _
        // Predicated region
        $region45: #{forward.3} parent=11 // pred_check
          %p318 = pneg %p232
        $region46: #{forward.3} parent=11 // pred_check_branch
          %320 = sbr.rel (%p318) target = $region48
        $region47: #{forward.3} parent=11 // pred_region
          _
        $region48: #{forward.3} parent=11 // pred_fallthru
          _
        // Predicated region
        $region49: #{forward.3} parent=11 // pred_check
          %p321 = pneg %p253
        $region50: #{forward.3} parent=11 // pred_check_branch
          %323 = sbr.rel (%p321) target = $region52
        $region51: #{forward.3} parent=11 // pred_region
          _
        $region52: #{forward.3} parent=11 // pred_fallthru
          _
      $region12: #{forward.3} parent=5 // pred_fallthru
        _
      %p324 = scmp.lt.s32.totalorder %s17, 2
      // Predicated region
      $region53: #{forward.3} parent=5 // pred_check
        %p325 = pneg %p324
      $region54: #{forward.3} parent=5 // pred_check_branch
        %327 = sbr.rel (%p325) target = $region56
      $region55: #{forward.3} parent=5 // pred_region
        // Predicated region
        $region57: #{forward.3} parent=55 // pred_check
          %p328 = pneg %p37
        $region58: #{forward.3} parent=55 // pred_check_branch
          %330 = sbr.rel (%p328) target = $region60
        $region59: #{forward.3} parent=55 // pred_region
          %s331 = smul.u32 3, %s17
          %p332 = scmp.lt.s32.totalorder %s331, 5
          %s333 = scalar_select %p332, %s331, 5
          %s334 = smul.addr %s333, 4
          %s335 = scalar_lea.vmem %s0, %s334
          %s336 = smul.u32 3, %s17
        $region60: #{forward.3} parent=55 // pred_fallthru
          _
      $region56: #{forward.3} parent=5 // pred_fallthru
        _
      %p337 = scmp.le.s32.totalorder 1, %s17
      %p338 = scmp.lt.s32.totalorder %s17, 3
      %p339 = pnand %p337, %p338
      %p340 = pneg %p339
      // Predicated region
      $region61: #{forward.3} parent=5 // pred_check
        _
      $region62: #{forward.3} parent=5 // pred_check_branch
        %342 = sbr.rel (%p339) target = $region64
      $region63: #{forward.3} parent=5 // pred_region
        %s343 = ssub.s32 %s17, 1
        %s344 = smul.u32 3, %s22
        %p345 = scmp.lt.s32.totalorder %s344, 5
        %s346 = scalar_select %p345, %s344, 5
        %s347 = smul.addr %s346, 4
        %s348 = scalar_lea.vmem %s0, %s347
        %p349 = pneg %p43
        %p350 = pneg %p40
        %p351 = pneg %p64
        %p352 = pneg %p61
        %p353 = pneg %p85
        %p354 = pneg %p82
        %p355 = pneg %p106
        %p356 = pneg %p103
        %p357 = pneg %p127
        %p358 = pneg %p124
        %p359 = pneg %p148
        %p360 = pneg %p145
        %p361 = pneg %p169
        %p362 = pneg %p166
        %p363 = pneg %p190
        %p364 = pneg %p187
        %p365 = pneg %p211
        %p366 = pneg %p208
        %p367 = pneg %p232
        %p368 = pneg %p229
        %p369 = pneg %p253
        %p370 = pneg %p250
        %p371 = pneg %p279
        %p372 = pneg %p276
        %s373 = sand.u32 %s266, 1
        %s374 = sand.u32 %s266, 1
        %s375 = smul.addr %s374, 96
        %s376 = scalar_lea.vmem [#allocation5], %s375
        %s377 = smul.u32 3, %s22
        %p378 = scmp.lt.s32.totalorder %s377, 5
        %s379 = scalar_select %p378, %s377, 5
        %s380 = smul.addr %s379, 4
        %s381 = scalar_lea.vmem %s0, %s380
        %s382 = smul.u32 3, %s22
        %s383 = smul.u32 3, %s22
        %v385 = vld [vmem:[%s7] sm:$0x7]
        %v386 = vld [vmem:[%s381] sm:$0xff]
        %v387 = vld [vmem:[%s381 + $0x8] sm:$0xf]
        %v389 = vcombine.high %v386, %v386
        %v391 = vpack.c.bf16 %v386, %v386
        %v392 = vpack.c.bf16 %v389, %v389
        %v393 = vpack.c.bf16 %v387, %v387
        %v397 = vcombine.low %v391, %v392
        %v399 = vunpack.c.l.s4 1983009808
        %v400 = vunpack.c.0.s8 %v399
        %v401 = vlaneseq
        %v402 = vshrl.u32 %v401, 7
        %v403 = vsub.s32 %v400, %v402
        %v404 = vrot.slane %v397, %v403
        %v406 = vunpack.c.l.s4 1983009808
        %v407 = vunpack.c.0.s8 %v406
        %v408 = vlaneseq
        %v409 = vshrl.u32 %v408, 7
        %v410 = vsub.s32 %v407, %v409
        %v411 = vrot.slane %v393, %v410
        %v412 = vcombine.low %v404, %v411
        %414 = vst [vmem:[#allocation2] sm:$0x3f] %v412
        %vm415 = vcmask 148480
        %416 = vst.msk [vmem:[#allocation4] sm:$0x3] %vm415, 0
        %v417 = vld [vmem:[#allocation2] sm:$0x3f]
        %v419 = vcombine.high %v417, %v417
        %v421 = vunpack.c.l.s4 1983009808
        %v422 = vunpack.c.0.s8 %v421
        %v423 = vlaneseq
        %v424 = vshrl.u32 %v423, 7
        %v425 = vsub.s32 %v422, %v424
        %v426 = vrot.slane %v417, %v425
        %v428 = vunpack.c.l.s4 1983009808
        %v429 = vunpack.c.0.s8 %v428
        %v430 = vlaneseq
        %v431 = vshrl.u32 %v430, 7
        %v432 = vsub.s32 %v429, %v431
        %v433 = vrot.slane %v419, %v432
        %v434 = vcombine.high %v426, %v426
        %435 = vrot.lane.b32.xlu0 %v426, 19
        %v436 = vpop.permute.xlu0 %435
        %437 = vrot.lane.b32.xlu0 %v434, 19
        %v438 = vpop.permute.xlu0 %437
        %439 = vrot.lane.b32.xlu0 %v433, 19
        %v440 = vpop.permute.xlu0 %439
        %vm441 = vcmask 154624
        %v442 = vsel %vm441, %v436, %v438
        %v443 = vsel %vm441, %v438, %v440
        %vm447 = vcmask 1041560
        %448 = vst.msk [vmem:[#allocation4] sm:$0x3] %vm447, %v436
        %449 = vst [vmem:[#allocation4 + $0x8] sm:$0x3] %v442
        %450 = vst [vmem:[#allocation4 + $0x10] sm:$0x3] %v443
        %vm451 = vcmask 142338
        %452 = vst.msk [vmem:[#allocation4] sm:$0xc] %vm451, 0
        %v453 = vld [vmem:[#allocation2] sm:$0x3f]
        %v455 = vcombine.low %v453, %v453
        %v457 = vunpack.c.l.s4 1983009808
        %v458 = vunpack.c.0.s8 %v457
        %v459 = vlaneseq
        %v460 = vshrl.u32 %v459, 7
        %v461 = vsub.s32 %v458, %v460
        %v462 = vrot.slane %v455, %v461
        %v464 = vunpack.c.l.s4 1983009808
        %v465 = vunpack.c.0.s8 %v464
        %v466 = vlaneseq
        %v467 = vshrl.u32 %v466, 7
        %v468 = vsub.s32 %v465, %v467
        %v469 = vrot.slane %v453, %v468
        %v470 = vcombine.high %v462, %v462
        %471 = vrot.lane.b32.xlu0 %v462, 18
        %v472 = vpop.permute.xlu0 %471
        %473 = vrot.lane.b32.xlu0 %v470, 18
        %v474 = vpop.permute.xlu0 %473
        %475 = vrot.lane.b32.xlu0 %v469, 18
        %v476 = vpop.permute.xlu0 %475
        %vm477 = vcmask 146432
        %v478 = vsel %vm477, %v472, %v474
        %v479 = vsel %vm477, %v474, %v476
        %vm483 = vcmask 1043602
        %484 = vst.msk [vmem:[#allocation4] sm:$0xc] %vm483, %v472
        %485 = vst [vmem:[#allocation4 + $0x8] sm:$0xc] %v478
        %486 = vst [vmem:[#allocation4 + $0x10] sm:$0xc] %v479
        %vm487 = vcmask 136196
        %488 = vst.msk [vmem:[#allocation4] sm:$0x30] %vm487, 0
        %v489 = vld [vmem:[#allocation2] sm:$0x3f]
        %v491 = vcombine.high %v489, %v489
        %v493 = vunpack.c.l.s4 1983009808
        %v494 = vunpack.c.0.s8 %v493
        %v495 = vlaneseq
        %v496 = vshrl.u32 %v495, 7
        %v497 = vsub.s32 %v494, %v496
        %v498 = vrot.slane %v489, %v497
        %v500 = vunpack.c.l.s4 1983009808
        %v501 = vunpack.c.0.s8 %v500
        %v502 = vlaneseq
        %v503 = vshrl.u32 %v502, 7
        %v504 = vsub.s32 %v501, %v503
        %v505 = vrot.slane %v491, %v504
        %v506 = vcombine.low %v498, %v498
        %v507 = vcombine.low %v505, %v505
        %508 = vrot.lane.b32.xlu0 %v506, 17
        %v509 = vpop.permute.xlu0 %508
        %510 = vrot.lane.b32.xlu0 %v498, 17
        %v511 = vpop.permute.xlu0 %510
        %512 = vrot.lane.b32.xlu0 %v507, 17
        %v513 = vpop.permute.xlu0 %512
        %vm514 = vcmask 138240
        %v515 = vsel %vm514, %v509, %v511
        %v516 = vsel %vm514, %v511, %v513
        %vm520 = vcmask 1045644
        %521 = vst.msk [vmem:[#allocation4] sm:$0x30] %vm520, %v509
        %522 = vst [vmem:[#allocation4 + $0x8] sm:$0x30] %v515
        %523 = vst [vmem:[#allocation4 + $0x10] sm:$0x30] %v516
        %vm524 = vcmask 7174
        %525 = vst.msk [vmem:[#allocation4] sm:$0xc0] %vm524, 0
        %v526 = vld [vmem:[#allocation2] sm:$0x3f]
        %v528 = vcombine.low %v526, %v526
        %v530 = vunpack.c.l.s4 1983009808
        %v531 = vunpack.c.0.s8 %v530
        %v532 = vlaneseq
        %v533 = vshrl.u32 %v532, 7
        %v534 = vsub.s32 %v531, %v533
        %v535 = vrot.slane %v528, %v534
        %v537 = vunpack.c.l.s4 1983009808
        %v538 = vunpack.c.0.s8 %v537
        %v539 = vlaneseq
        %v540 = vshrl.u32 %v539, 7
        %v541 = vsub.s32 %v538, %v540
        %v542 = vrot.slane %v526, %v541
        %v543 = vcombine.low %v535, %v535
        %v544 = vcombine.low %v542, %v542
        %545 = vrot.lane.b32.xlu0 %v543, 1
        %v546 = vpop.permute.xlu0 %545
        %547 = vrot.lane.b32.xlu0 %v535, 1
        %v548 = vpop.permute.xlu0 %547
        %549 = vrot.lane.b32.xlu0 %v544, 1
        %v550 = vpop.permute.xlu0 %549
        %vm551 = vcmask 7168
        %v552 = vsel %vm551, %v546, %v548
        %v553 = vsel %vm551, %v548, %v550
        %vm557 = vcmask 1047566
        %558 = vst.msk [vmem:[#allocation4] sm:$0xc0] %vm557, %v546
        %559 = vst [vmem:[#allocation4 + $0x8] sm:$0xc0] %v552
        %560 = vst [vmem:[#allocation4 + $0x10] sm:$0xc0] %v553
        %v561 = vld [vmem:[#allocation2] sm:$0x3f]
        %v563 = vcombine.high %v561, %v561
        %v565 = vunpack.c.l.s4 1983009808
        %v566 = vunpack.c.0.s8 %v565
        %v567 = vlaneseq
        %v568 = vshrl.u32 %v567, 7
        %v569 = vsub.s32 %v566, %v568
        %v570 = vrot.slane %v561, %v569
        %v572 = vunpack.c.l.s4 1983009808
        %v573 = vunpack.c.0.s8 %v572
        %v574 = vlaneseq
        %v575 = vshrl.u32 %v574, 7
        %v576 = vsub.s32 %v573, %v575
        %v577 = vrot.slane %v563, %v576
        %v578 = vcombine.high %v570, %v570
        %582 = vst [vmem:[#allocation4 + $0x18] sm:$0x3] %v570
        %583 = vst [vmem:[#allocation4 + $0x20] sm:$0x3] %v578
        %584 = vst [vmem:[#allocation4 + $0x28] sm:$0x3] %v577
        %vm585 = vcmask 1044474
        %586 = vst.msk [vmem:[#allocation4 + $0x28] sm:$0xc] %vm585, 0
        %v587 = vld [vmem:[#allocation2] sm:$0x3f]
        %v589 = vcombine.low %v587, %v587
        %v591 = vunpack.c.l.s4 1983009808
        %v592 = vunpack.c.0.s8 %v591
        %v593 = vlaneseq
        %v594 = vshrl.u32 %v593, 7
        %v595 = vsub.s32 %v592, %v594
        %v596 = vrot.slane %v589, %v595
        %v598 = vunpack.c.l.s4 1983009808
        %v599 = vunpack.c.0.s8 %v598
        %v600 = vlaneseq
        %v601 = vshrl.u32 %v600, 7
        %v602 = vsub.s32 %v599, %v601
        %v603 = vrot.slane %v587, %v602
        %v604 = vcombine.high %v596, %v596
        %605 = vrot.lane.b32.xlu0 %v596, 127
        %v606 = vpop.permute.xlu0 %605
        %607 = vrot.lane.b32.xlu0 %v604, 127
        %v608 = vpop.permute.xlu0 %607
        %609 = vrot.lane.b32.xlu0 %v603, 127
        %v610 = vpop.permute.xlu0 %609
        %vm611 = vcmask 1039360
        %v612 = vsel %vm611, %v606, %v608
        %v613 = vsel %vm611, %v608, %v610
        %617 = vst [vmem:[#allocation4 + $0x18] sm:$0xc] %v612
        %618 = vst [vmem:[#allocation4 + $0x20] sm:$0xc] %v613
        %vm619 = vcmask 1035266
        %620 = vst.msk [vmem:[#allocation4 + $0x28] sm:$0xc] %vm619, %v610
        %vm621 = vcmask 1046396
        %622 = vst.msk [vmem:[#allocation4 + $0x28] sm:$0x30] %vm621, 0
        %v623 = vld [vmem:[#allocation2] sm:$0x3f]
        %v625 = vcombine.high %v623, %v623
        %v627 = vunpack.c.l.s4 1983009808
        %v628 = vunpack.c.0.s8 %v627
        %v629 = vlaneseq
        %v630 = vshrl.u32 %v629, 7
        %v631 = vsub.s32 %v628, %v630
        %v632 = vrot.slane %v623, %v631
        %v634 = vunpack.c.l.s4 1983009808
        %v635 = vunpack.c.0.s8 %v634
        %v636 = vlaneseq
        %v637 = vshrl.u32 %v636, 7
        %v638 = vsub.s32 %v635, %v637
        %v639 = vrot.slane %v625, %v638
        %v640 = vcombine.low %v632, %v632
        %v641 = vcombine.low %v639, %v639
        %642 = vrot.lane.b32.xlu0 %v640, 111
        %v643 = vpop.permute.xlu0 %642
        %644 = vrot.lane.b32.xlu0 %v632, 111
        %v645 = vpop.permute.xlu0 %644
        %646 = vrot.lane.b32.xlu0 %v641, 111
        %v647 = vpop.permute.xlu0 %646
        %vm648 = vcmask 908288
        %v649 = vsel %vm648, %v643, %v645
        %v650 = vsel %vm648, %v645, %v647
        %654 = vst [vmem:[#allocation4 + $0x18] sm:$0x30] %v649
        %655 = vst [vmem:[#allocation4 + $0x20] sm:$0x30] %v650
        %vm656 = vcmask 906244
        %657 = vst.msk [vmem:[#allocation4 + $0x28] sm:$0x30] %vm656, %v647
        %vm658 = vcmask 1048438
        %659 = vst.msk [vmem:[#allocation4 + $0x28] sm:$0xc0] %vm658, 0
        %v660 = vld [vmem:[#allocation2] sm:$0x3f]
        %v662 = vcombine.low %v660, %v660
        %v664 = vunpack.c.l.s4 1983009808
        %v665 = vunpack.c.0.s8 %v664
        %v666 = vlaneseq
        %v667 = vshrl.u32 %v666, 7
        %v668 = vsub.s32 %v665, %v667
        %v669 = vrot.slane %v662, %v668
        %v671 = vunpack.c.l.s4 1983009808
        %v672 = vunpack.c.0.s8 %v671
        %v673 = vlaneseq
        %v674 = vshrl.u32 %v673, 7
        %v675 = vsub.s32 %v672, %v674
        %v676 = vrot.slane %v660, %v675
        %v677 = vcombine.low %v669, %v669
        %v678 = vcombine.low %v676, %v676
        %679 = vrot.lane.b32.xlu0 %v677, 110
        %v680 = vpop.permute.xlu0 %679
        %681 = vrot.lane.b32.xlu0 %v669, 110
        %v682 = vpop.permute.xlu0 %681
        %683 = vrot.lane.b32.xlu0 %v678, 110
        %v684 = vpop.permute.xlu0 %683
        %vm685 = vcmask 900096
        %v686 = vsel %vm685, %v680, %v682
        %v687 = vsel %vm685, %v682, %v684
        %691 = vst [vmem:[#allocation4 + $0x18] sm:$0xc0] %v686
        %692 = vst [vmem:[#allocation4 + $0x20] sm:$0xc0] %v687
        %vm693 = vcmask 900102
        %694 = vst.msk [vmem:[#allocation4 + $0x28] sm:$0xc0] %vm693, %v684
        %vm695 = vcmask 1042280
        %696 = vst.msk [vmem:[#allocation4 + $0x40] sm:$0x3] %vm695, 0
        %v697 = vld [vmem:[#allocation2] sm:$0x3f]
        %v699 = vcombine.high %v697, %v697
        %v701 = vunpack.c.l.s4 1983009808
        %v702 = vunpack.c.0.s8 %v701
        %v703 = vlaneseq
        %v704 = vshrl.u32 %v703, 7
        %v705 = vsub.s32 %v702, %v704
        %v706 = vrot.slane %v697, %v705
        %v708 = vunpack.c.l.s4 1983009808
        %v709 = vunpack.c.0.s8 %v708
        %v710 = vlaneseq
        %v711 = vshrl.u32 %v710, 7
        %v712 = vsub.s32 %v709, %v711
        %v713 = vrot.slane %v699, %v712
        %v714 = vcombine.high %v706, %v706
        %715 = vrot.lane.b32.xlu0 %v706, 109
        %v716 = vpop.permute.xlu0 %715
        %717 = vrot.lane.b32.xlu0 %v714, 109
        %v718 = vpop.permute.xlu0 %717
        %719 = vrot.lane.b32.xlu0 %v713, 109
        %v720 = vpop.permute.xlu0 %719
        %vm721 = vcmask 891904
        %v722 = vsel %vm721, %v716, %v718
        %v723 = vsel %vm721, %v718, %v720
        %727 = vst [vmem:[#allocation4 + $0x30] sm:$0x3] %v722
        %728 = vst [vmem:[#allocation4 + $0x38] sm:$0x3] %v723
        %vm729 = vcmask 885760
        %730 = vst.msk [vmem:[#allocation4 + $0x40] sm:$0x3] %vm729, %v720
        %v731 = vld [vmem:[%s1] sm:$0xf]
        %v732 = vld [vmem:[%s1 + $0x4] sm:$0xf]
        %v733 = vld [vmem:[%s1 + $0x8] sm:$0xf]
        %v734 = vld [vmem:[%s1 + $0xc] sm:$0xf]
        %v735 = vld [vmem:[#allocation4] sm:$0xff]
        %v736 = vld [vmem:[#allocation4 + $0x8] sm:$0xff]
        %v737 = vld [vmem:[#allocation4 + $0x10] sm:$0xff]
        %v738 = vld [vmem:[#allocation4 + $0x18] sm:$0xff]
        %v739 = vld [vmem:[#allocation4 + $0x20] sm:$0xff]
        %v740 = vld [vmem:[#allocation4 + $0x28] sm:$0xff]
        %v741 = vld [vmem:[#allocation4 + $0x30] sm:$0x3]
        %v742 = vld [vmem:[#allocation4 + $0x38] sm:$0x3]
        %v743 = vld [vmem:[#allocation4 + $0x40] sm:$0x3]
        %v748 = vunpack.c.l.b16 %v731
        %v749 = vunpack.c.l.b16 %v732
        %v750 = vunpack.c.l.b16 %v733
        %v751 = vunpack.c.l.b16 %v734
        %v752 = vpack.c.b16 %v749, %v748
        %v753 = vpack.c.b16 %v751, %v750
        %vm754 = vcmask 293888
        %v756 = vsel %vm754, %v752, 0
        %v759 = vsel %vm754, %v753, 0
        %vm761 = vcmask 1041408
        %v763 = vsel %vm761, %v741, 0
        %v766 = vsel %vm761, %v742, 0
        %v769 = vsel %vm761, %v743, 0
        %771 = vmatprep.subr.bf16.mxu0 %v736
        %772 = vmatpush1.bf16.msra.mxu0 %v735
        %773 = vmatprep.subr.bf16.mxu0 %v739
        %774 = vmatpush1.bf16.msra.mxu0 %v738
        %775 = vmatprep.subr.bf16.mxu0 %v766
        %776 = vmatpush1.bf16.msra.mxu0 %v763
        %777 = vmatprep.subr.bf16.mxu0 0
        %778 = vmatpush1.bf16.msra.mxu0 0
        %779 = vmatprep.subr.bf16.mxu0 0
        %780 = vmatpush1.bf16.msra.mxu0 0
        %781 = vmatprep.subr.bf16.mxu0 0
        %782 = vmatpush1.bf16.msra.mxu0 0
        %783 = vmatprep.subr.bf16.mxu0 0
        %784 = vmatpush1.bf16.msra.mxu0 0
        %785 = vmatprep.subr.bf16.mxu0 0
        %786 = vmatpush1.bf16.msra.mxu0 0
        %787 = vmatprep.subr.bf16.mxu0 0
        %788 = vmatpush1.bf16.msra.mxu0 0
        %789 = vmatprep.subr.bf16.mxu0 0
        %790 = vmatpush1.bf16.msra.mxu0 0
        %791 = vmatprep.subr.bf16.mxu0 0
        %792 = vmatpush1.bf16.msra.mxu0 0
        %793 = vmatprep.subr.bf16.mxu0 0
        %794 = vmatpush1.bf16.msra.mxu0 0
        %795 = vmatprep.subr.bf16.mxu0 0
        %796 = vmatpush1.bf16.msra.mxu0 0
        %797 = vmatprep.subr.bf16.mxu0 0
        %798 = vmatpush1.bf16.msra.mxu0 0
        %799 = vmatprep.subr.bf16.mxu0 0
        %800 = vmatpush1.bf16.msra.mxu0 0
        %801 = vmatprep.subr.bf16.mxu0 0
        %802 = vmatpush1.bf16.msra.mxu0 0
        %803 = vmatprep.mubr.bf16.mxu0 0
        %804 = vmatmul.mubr.bf16.gmra.mrb[0].mxu0 %v756
        %v805 = vpop.f32.mrb[0].mxu0
        %v806 = vadd.f32 0.0, %v805
        %v807 = vpop.f32.mrb[0].mxu0
        %v808 = vadd.f32 0.0, %v807
        %v809 = vpop.f32.mrb[0].mxu0
        %v810 = vadd.f32 0.0, %v809
        %v811 = vpop.f32.mrb[0].mxu0
        %v812 = vadd.f32 0.0, %v811
        %813 = vmatprep.mubr.bf16.mxu0 0
        %814 = vmatmul.mubr.bf16.gmra.mrb[0].mxu0 %v759
        %v815 = vpop.f32.mrb[0].mxu0
        %v816 = vadd.f32 0.0, %v815
        %v817 = vpop.f32.mrb[0].mxu0
        %v818 = vadd.f32 0.0, %v817
        %v819 = vpop.f32.mrb[0].mxu0
        %v820 = vadd.f32 0.0, %v819
        %v821 = vpop.f32.mrb[0].mxu0
        %v822 = vadd.f32 0.0, %v821
        %823 = vdwg.mxu0
        %824 = vmatprep.subr.bf16.mxu0 0
        %825 = vmatpush1.bf16.msra.mxu0 %v737
        %826 = vmatprep.subr.bf16.mxu0 0
        %827 = vmatpush1.bf16.msra.mxu0 %v740
        %828 = vmatprep.subr.bf16.mxu0 0
        %829 = vmatpush1.bf16.msra.mxu0 %v769
        %830 = vmatprep.subr.bf16.mxu0 0
        %831 = vmatpush1.bf16.msra.mxu0 0
        %832 = vmatprep.subr.bf16.mxu0 0
        %833 = vmatpush1.bf16.msra.mxu0 0
        %834 = vmatprep.subr.bf16.mxu0 0
        %835 = vmatpush1.bf16.msra.mxu0 0
        %836 = vmatprep.subr.bf16.mxu0 0
        %837 = vmatpush1.bf16.msra.mxu0 0
        %838 = vmatprep.subr.bf16.mxu0 0
        %839 = vmatpush1.bf16.msra.mxu0 0
        %840 = vmatprep.subr.bf16.mxu0 0
        %841 = vmatpush1.bf16.msra.mxu0 0
        %842 = vmatprep.subr.bf16.mxu0 0
        %843 = vmatpush1.bf16.msra.mxu0 0
        %844 = vmatprep.subr.bf16.mxu0 0
        %845 = vmatpush1.bf16.msra.mxu0 0
        %846 = vmatprep.subr.bf16.mxu0 0
        %847 = vmatpush1.bf16.msra.mxu0 0
        %848 = vmatprep.subr.bf16.mxu0 0
        %849 = vmatpush1.bf16.msra.mxu0 0
        %850 = vmatprep.subr.bf16.mxu0 0
        %851 = vmatpush1.bf16.msra.mxu0 0
        %852 = vmatprep.subr.bf16.mxu0 0
        %853 = vmatpush1.bf16.msra.mxu0 0
        %854 = vmatprep.subr.bf16.mxu0 0
        %855 = vmatpush1.bf16.msra.mxu0 0
        %856 = vmatprep.mubr.bf16.mxu0 0
        %857 = vmatmul.mubr.bf16.gmra.mrb[0].mxu0 %v756
        %v858 = vpop.f32.mrb[0].mxu0
        %v859 = vadd.f32 0.0, %v858
        %v860 = vpop.f32.mrb[0].mxu0
        %v861 = vpop.f32.mrb[0].mxu0
        %v862 = vadd.f32 0.0, %v861
        %v863 = vpop.f32.mrb[0].mxu0
        %864 = vmatprep.mubr.bf16.mxu0 0
        %865 = vmatmul.mubr.bf16.gmra.mrb[0].mxu0 %v759
        %v866 = vpop.f32.mrb[0].mxu0
        %v867 = vadd.f32 0.0, %v866
        %v868 = vpop.f32.mrb[0].mxu0
        %v869 = vpop.f32.mrb[0].mxu0
        %v870 = vadd.f32 0.0, %v869
        %v871 = vpop.f32.mrb[0].mxu0
        %872 = vdwg.mxu0
        %v873 = vld [vmem:[%s2] sm:$0xff]
        %v874 = vld [vmem:[%s2 + $0x8] sm:$0xff]
        %v875 = vld [vmem:[%s2 + $0x10] sm:$0xff]
        %v876 = vld [vmem:[%s2 + $0x18] sm:$0xff]
        %878 = vset.pattern.permute.xlu0 0
        %879 = vperm.xlu0 %878, %v873
        %v880 = vpop.permute.xlu0 %879
        %883 = vset.pattern.permute.xlu0 0
        %884 = vperm.xlu0 %883, %v874
        %v885 = vpop.permute.xlu0 %884
        %888 = vset.pattern.permute.xlu0 0
        %889 = vperm.xlu0 %888, %v875
        %v890 = vpop.permute.xlu0 %889
        %893 = vset.pattern.permute.xlu0 0
        %894 = vperm.xlu0 %893, %v876
        %v895 = vpop.permute.xlu0 %894
        %v897 = vmul.f32 %v806, %v880
        %v898 = vmul.f32 %v808, %v880
        %v899 = vmul.f32 %v859, %v880
        %v900 = vmul.f32 %v810, %v885
        %v901 = vmul.f32 %v812, %v885
        %v902 = vmul.f32 %v862, %v885
        %v903 = vmul.f32 %v816, %v890
        %v904 = vmul.f32 %v818, %v890
        %v905 = vmul.f32 %v867, %v890
        %v906 = vmul.f32 %v820, %v895
        %v907 = vmul.f32 %v822, %v895
        %v908 = vmul.f32 %v870, %v895
        %v909 = vld [vmem:[%s3] sm:$0xff]
        %v910 = vld [vmem:[%s3 + $0x8] sm:$0xff]
        %v911 = vld [vmem:[%s3 + $0x10] sm:$0xff]
        %v912 = vld [vmem:[%s3 + $0x18] sm:$0xff]
        %914 = vset.pattern.permute.xlu0 0
        %915 = vperm.xlu0 %914, %v909
        %v916 = vpop.permute.xlu0 %915
        %919 = vset.pattern.permute.xlu0 0
        %920 = vperm.xlu0 %919, %v910
        %v921 = vpop.permute.xlu0 %920
        %924 = vset.pattern.permute.xlu0 0
        %925 = vperm.xlu0 %924, %v911
        %v926 = vpop.permute.xlu0 %925
        %929 = vset.pattern.permute.xlu0 0
        %930 = vperm.xlu0 %929, %v912
        %v931 = vpop.permute.xlu0 %930
        %v933 = vadd.f32 %v897, %v916
        %v934 = vadd.f32 %v898, %v916
        %v935 = vadd.f32 %v899, %v916
        %v936 = vadd.f32 %v900, %v921
        %v937 = vadd.f32 %v901, %v921
        %v938 = vadd.f32 %v902, %v921
        %v939 = vadd.f32 %v903, %v926
        %v940 = vadd.f32 %v904, %v926
        %v941 = vadd.f32 %v905, %v926
        %v942 = vadd.f32 %v906, %v931
        %v943 = vadd.f32 %v907, %v931
        %v944 = vadd.f32 %v908, %v931
        %v945 = vmax.f32 %v933, 0.0
        %v946 = vmax.f32 %v934, 0.0
        %v947 = vmax.f32 %v935, 0.0
        %v948 = vmax.f32 %v936, 0.0
        %v949 = vmax.f32 %v937, 0.0
        %v950 = vmax.f32 %v938, 0.0
        %v951 = vmax.f32 %v939, 0.0
        %v952 = vmax.f32 %v940, 0.0
        %v953 = vmax.f32 %v941, 0.0
        %v954 = vmax.f32 %v942, 0.0
        %v955 = vmax.f32 %v943, 0.0
        %v956 = vmax.f32 %v944, 0.0
        %v958 = vlaneseq
        %v959 = vshrl.u32 %v958, 7
        %v960 = vsub.s32 0, %v959
        %v961 = vrot.slane %v385, %v960
        %v962 = vlaneseq
        %v963 = vshrl.u32 %v962, 7
        %v964 = vsub.s32 1, %v963
        %v965 = vrot.slane %v385, %v964
        %v966 = vlaneseq
        %v967 = vshrl.u32 %v966, 7
        %v968 = vsub.s32 2, %v967
        %v969 = vrot.slane %v385, %v968
        %v973 = vmul.f32 %v945, %v961
        %v974 = vmul.f32 %v946, %v965
        %v975 = vmul.f32 %v947, %v969
        %v976 = vmul.f32 %v948, %v961
        %v977 = vmul.f32 %v949, %v965
        %v978 = vmul.f32 %v950, %v969
        %v979 = vmul.f32 %v951, %v961
        %v980 = vmul.f32 %v952, %v965
        %v981 = vmul.f32 %v953, %v969
        %v982 = vmul.f32 %v954, %v961
        %v983 = vmul.f32 %v955, %v965
        %v984 = vmul.f32 %v956, %v969
        %v985 = vpack.c.bf16 %v976, %v973
        %v986 = vpack.c.bf16 %v977, %v974
        %v987 = vpack.c.bf16 %v978, %v975
        %v988 = vpack.c.bf16 %v982, %v979
        %v989 = vpack.c.bf16 %v983, %v980
        %v990 = vpack.c.bf16 %v984, %v981
        %991 = vst [vmem:[#allocation3] sm:$0xff] %v985
        %992 = vst [vmem:[#allocation3 + $0x8] sm:$0xff] %v986
        %993 = vst [vmem:[#allocation3 + $0x10] sm:$0xff] %v987
        %994 = vst [vmem:[#allocation3 + $0x18] sm:$0xff] %v988
        %995 = vst [vmem:[#allocation3 + $0x20] sm:$0xff] %v989
        %996 = vst [vmem:[#allocation3 + $0x28] sm:$0xff] %v990
        %vm997 = vcmask 154624
        %998 = vst.msk [vmem:[#allocation4] sm:$0xff] %vm997, 0
        %999 = vst.msk [vmem:[#allocation4 + $0x18] sm:$0xff] %vm997, 0
        %v1000 = vld [vmem:[#allocation3] sm:$0xff]
        %v1001 = vld [vmem:[#allocation3 + $0x8] sm:$0xff]
        %v1002 = vld [vmem:[#allocation3 + $0x10] sm:$0xff]
        %v1003 = vld [vmem:[#allocation3 + $0x18] sm:$0xff]
        %v1004 = vld [vmem:[#allocation3 + $0x20] sm:$0xff]
        %v1005 = vld [vmem:[#allocation3 + $0x28] sm:$0xff]
        %1012 = vrot.lane.b32.xlu0 %v1000, 19
        %v1013 = vpop.permute.xlu0 %1012
        %1014 = vrot.lane.b32.xlu0 %v1001, 19
        %v1015 = vpop.permute.xlu0 %1014
        %1016 = vrot.lane.b32.xlu0 %v1002, 19
        %v1017 = vpop.permute.xlu0 %1016
        %1018 = vrot.lane.b32.xlu0 %v1003, 19
        %v1019 = vpop.permute.xlu0 %1018
        %1020 = vrot.lane.b32.xlu0 %v1004, 19
        %v1021 = vpop.permute.xlu0 %1020
        %1022 = vrot.lane.b32.xlu0 %v1005, 19
        %v1023 = vpop.permute.xlu0 %1022
        %v1024 = vsel %vm441, %v1013, %v1015
        %v1025 = vsel %vm441, %v1015, %v1017
        %v1026 = vsel %vm441, %v1019, %v1021
        %v1027 = vsel %vm441, %v1021, %v1023
        %vm1034 = vcmask 1047704
        %1035 = vst.msk [vmem:[#allocation4] sm:$0xff] %vm1034, %v1013
        %1036 = vst [vmem:[#allocation4 + $0x8] sm:$0xff] %v1024
        %1037 = vst [vmem:[#allocation4 + $0x10] sm:$0xff] %v1025
        %1038 = vst.msk [vmem:[#allocation4 + $0x18] sm:$0xff] %vm1034, %v1019
        %1039 = vst [vmem:[#allocation4 + $0x20] sm:$0xff] %v1026
        %1040 = vst [vmem:[#allocation4 + $0x28] sm:$0xff] %v1027
        %vm1041 = vcmask 146432
        %1042 = vst.msk [vmem:[#allocation4 + $0x30] sm:$0xff] %vm1041, 0
        %1043 = vst.msk [vmem:[#allocation4 + $0x48] sm:$0xff] %vm1041, 0
        %v1044 = vld [vmem:[#allocation3] sm:$0xff]
        %v1045 = vld [vmem:[#allocation3 + $0x8] sm:$0xff]
        %v1046 = vld [vmem:[#allocation3 + $0x10] sm:$0xff]
        %v1047 = vld [vmem:[#allocation3 + $0x18] sm:$0xff]
        %v1048 = vld [vmem:[#allocation3 + $0x20] sm:$0xff]
        %v1049 = vld [vmem:[#allocation3 + $0x28] sm:$0xff]
        %1056 = vrot.lane.b32.xlu0 %v1044, 18
        %v1057 = vpop.permute.xlu0 %1056
        %1058 = vrot.lane.b32.xlu0 %v1045, 18
        %v1059 = vpop.permute.xlu0 %1058
        %1060 = vrot.lane.b32.xlu0 %v1046, 18
        %v1061 = vpop.permute.xlu0 %1060
        %1062 = vrot.lane.b32.xlu0 %v1047, 18
        %v1063 = vpop.permute.xlu0 %1062
        %1064 = vrot.lane.b32.xlu0 %v1048, 18
        %v1065 = vpop.permute.xlu0 %1064
        %1066 = vrot.lane.b32.xlu0 %v1049, 18
        %v1067 = vpop.permute.xlu0 %1066
        %v1068 = vsel %vm477, %v1057, %v1059
        %v1069 = vsel %vm477, %v1059, %v1061
        %v1070 = vsel %vm477, %v1063, %v1065
        %v1071 = vsel %vm477, %v1065, %v1067
        %vm1078 = vcmask 1047696
        %1079 = vst.msk [vmem:[#allocation4 + $0x30] sm:$0xff] %vm1078, %v1057
        %1080 = vst [vmem:[#allocation4 + $0x38] sm:$0xff] %v1068
        %1081 = vst [vmem:[#allocation4 + $0x40] sm:$0xff] %v1069
        %1082 = vst.msk [vmem:[#allocation4 + $0x48] sm:$0xff] %vm1078, %v1063
        %1083 = vst [vmem:[#allocation4 + $0x50] sm:$0xff] %v1070
        %1084 = vst [vmem:[#allocation4 + $0x58] sm:$0xff] %v1071
        %vm1085 = vcmask 138240
        %1086 = vst.msk [vmem:[#allocation4 + $0x60] sm:$0xff] %vm1085, 0
        %1087 = vst.msk [vmem:[#allocation4 + $0x78] sm:$0xff] %vm1085, 0
        %v1088 = vld [vmem:[#allocation3] sm:$0xff]
        %v1089 = vld [vmem:[#allocation3 + $0x8] sm:$0xff]
        %v1090 = vld [vmem:[#allocation3 + $0x10] sm:$0xff]
        %v1091 = vld [vmem:[#allocation3 + $0x18] sm:$0xff]
        %v1092 = vld [vmem:[#allocation3 + $0x20] sm:$0xff]
        %v1093 = vld [vmem:[#allocation3 + $0x28] sm:$0xff]
        %1100 = vrot.lane.b32.xlu0 %v1088, 17
        %v1101 = vpop.permute.xlu0 %1100
        %1102 = vrot.lane.b32.xlu0 %v1089, 17
        %v1103 = vpop.permute.xlu0 %1102
        %1104 = vrot.lane.b32.xlu0 %v1090, 17
        %v1105 = vpop.permute.xlu0 %1104
        %1106 = vrot.lane.b32.xlu0 %v1091, 17
        %v1107 = vpop.permute.xlu0 %1106
        %1108 = vrot.lane.b32.xlu0 %v1092, 17
        %v1109 = vpop.permute.xlu0 %1108
        %1110 = vrot.lane.b32.xlu0 %v1093, 17
        %v1111 = vpop.permute.xlu0 %1110
        %v1112 = vsel %vm514, %v1101, %v1103
        %v1113 = vsel %vm514, %v1103, %v1105
        %v1114 = vsel %vm514, %v1107, %v1109
        %v1115 = vsel %vm514, %v1109, %v1111
        %vm1122 = vcmask 1047688
        %1123 = vst.msk [vmem:[#allocation4 + $0x60] sm:$0xff] %vm1122, %v1101
        %1124 = vst [vmem:[#allocation4 + $0x68] sm:$0xff] %v1112
        %1125 = vst [vmem:[#allocation4 + $0x70] sm:$0xff] %v1113
        %1126 = vst.msk [vmem:[#allocation4 + $0x78] sm:$0xff] %vm1122, %v1107
        %1127 = vst [vmem:[#allocation4 + $0x80] sm:$0xff] %v1114
        %1128 = vst [vmem:[#allocation4 + $0x88] sm:$0xff] %v1115
        %vm1129 = vcmask 7168
        %1130 = vst.msk [vmem:[#allocation4 + $0x90] sm:$0xff] %vm1129, 0
        %1131 = vst.msk [vmem:[#allocation4 + $0xa8] sm:$0xff] %vm1129, 0
        %v1132 = vld [vmem:[#allocation3] sm:$0xff]
        %v1133 = vld [vmem:[#allocation3 + $0x8] sm:$0xff]
        %v1134 = vld [vmem:[#allocation3 + $0x10] sm:$0xff]
        %v1135 = vld [vmem:[#allocation3 + $0x18] sm:$0xff]
        %v1136 = vld [vmem:[#allocation3 + $0x20] sm:$0xff]
        %v1137 = vld [vmem:[#allocation3 + $0x28] sm:$0xff]
        %1144 = vrot.lane.b32.xlu0 %v1132, 1
        %v1145 = vpop.permute.xlu0 %1144
        %1146 = vrot.lane.b32.xlu0 %v1133, 1
        %v1147 = vpop.permute.xlu0 %1146
        %1148 = vrot.lane.b32.xlu0 %v1134, 1
        %v1149 = vpop.permute.xlu0 %1148
        %1150 = vrot.lane.b32.xlu0 %v1135, 1
        %v1151 = vpop.permute.xlu0 %1150
        %1152 = vrot.lane.b32.xlu0 %v1136, 1
        %v1153 = vpop.permute.xlu0 %1152
        %1154 = vrot.lane.b32.xlu0 %v1137, 1
        %v1155 = vpop.permute.xlu0 %1154
        %v1156 = vsel %vm551, %v1145, %v1147
        %v1157 = vsel %vm551, %v1147, %v1149
        %v1158 = vsel %vm551, %v1151, %v1153
        %v1159 = vsel %vm551, %v1153, %v1155
        %vm1166 = vcmask 1047560
        %1167 = vst.msk [vmem:[#allocation4 + $0x90] sm:$0xff] %vm1166, %v1145
        %1168 = vst [vmem:[#allocation4 + $0x98] sm:$0xff] %v1156
        %1169 = vst [vmem:[#allocation4 + $0xa0] sm:$0xff] %v1157
        %1170 = vst.msk [vmem:[#allocation4 + $0xa8] sm:$0xff] %vm1166, %v1151
        %1171 = vst [vmem:[#allocation4 + $0xb0] sm:$0xff] %v1158
        %1172 = vst [vmem:[#allocation4 + $0xb8] sm:$0xff] %v1159
        %v1173 = vld [vmem:[#allocation3] sm:$0xff]
        %v1174 = vld [vmem:[#allocation3 + $0x8] sm:$0xff]
        %v1175 = vld [vmem:[#allocation3 + $0x10] sm:$0xff]
        %v1176 = vld [vmem:[#allocation3 + $0x18] sm:$0xff]
        %v1177 = vld [vmem:[#allocation3 + $0x20] sm:$0xff]
        %v1178 = vld [vmem:[#allocation3 + $0x28] sm:$0xff]
        %1179 = vst [vmem:[#allocation4 + $0xc0] sm:$0xff] %v1173
        %1180 = vst [vmem:[#allocation4 + $0xc8] sm:$0xff] %v1174
        %1181 = vst [vmem:[#allocation4 + $0xd0] sm:$0xff] %v1175
        %1182 = vst [vmem:[#allocation4 + $0xd8] sm:$0xff] %v1176
        %1183 = vst [vmem:[#allocation4 + $0xe0] sm:$0xff] %v1177
        %1184 = vst [vmem:[#allocation4 + $0xe8] sm:$0xff] %v1178
        %vm1185 = vcmask 1048568
        %1186 = vst.msk [vmem:[#allocation4 + $0x100] sm:$0xff] %vm1185, 0
        %1187 = vst.msk [vmem:[#allocation4 + $0x118] sm:$0xff] %vm1185, 0
        %v1188 = vld [vmem:[#allocation3] sm:$0xff]
        %v1189 = vld [vmem:[#allocation3 + $0x8] sm:$0xff]
        %v1190 = vld [vmem:[#allocation3 + $0x10] sm:$0xff]
        %v1191 = vld [vmem:[#allocation3 + $0x18] sm:$0xff]
        %v1192 = vld [vmem:[#allocation3 + $0x20] sm:$0xff]
        %v1193 = vld [vmem:[#allocation3 + $0x28] sm:$0xff]
        %1200 = vrot.lane.b32.xlu0 %v1188, 127
        %v1201 = vpop.permute.xlu0 %1200
        %1202 = vrot.lane.b32.xlu0 %v1189, 127
        %v1203 = vpop.permute.xlu0 %1202
        %1204 = vrot.lane.b32.xlu0 %v1190, 127
        %v1205 = vpop.permute.xlu0 %1204
        %1206 = vrot.lane.b32.xlu0 %v1191, 127
        %v1207 = vpop.permute.xlu0 %1206
        %1208 = vrot.lane.b32.xlu0 %v1192, 127
        %v1209 = vpop.permute.xlu0 %1208
        %1210 = vrot.lane.b32.xlu0 %v1193, 127
        %v1211 = vpop.permute.xlu0 %1210
        %v1212 = vsel %vm611, %v1201, %v1203
        %v1213 = vsel %vm611, %v1203, %v1205
        %v1214 = vsel %vm611, %v1207, %v1209
        %v1215 = vsel %vm611, %v1209, %v1211
        %1222 = vst [vmem:[#allocation4 + $0xf0] sm:$0xff] %v1212
        %1223 = vst [vmem:[#allocation4 + $0xf8] sm:$0xff] %v1213
        %vm1224 = vcmask 1039360
        %1225 = vst.msk [vmem:[#allocation4 + $0x100] sm:$0xff] %vm1224, %v1205
        %1226 = vst [vmem:[#allocation4 + $0x108] sm:$0xff] %v1214
        %1227 = vst [vmem:[#allocation4 + $0x110] sm:$0xff] %v1215
        %1228 = vst.msk [vmem:[#allocation4 + $0x118] sm:$0xff] %vm1224, %v1211
        %vm1229 = vcmask 1048440
        %1230 = vst.msk [vmem:[#allocation4 + $0x130] sm:$0xff] %vm1229, 0
        %1231 = vst.msk [vmem:[#allocation4 + $0x148] sm:$0xff] %vm1229, 0
        %v1232 = vld [vmem:[#allocation3] sm:$0xff]
        %v1233 = vld [vmem:[#allocation3 + $0x8] sm:$0xff]
        %v1234 = vld [vmem:[#allocation3 + $0x10] sm:$0xff]
        %v1235 = vld [vmem:[#allocation3 + $0x18] sm:$0xff]
        %v1236 = vld [vmem:[#allocation3 + $0x20] sm:$0xff]
        %v1237 = vld [vmem:[#allocation3 + $0x28] sm:$0xff]
        %1244 = vrot.lane.b32.xlu0 %v1232, 111
        %v1245 = vpop.permute.xlu0 %1244
        %1246 = vrot.lane.b32.xlu0 %v1233, 111
        %v1247 = vpop.permute.xlu0 %1246
        %1248 = vrot.lane.b32.xlu0 %v1234, 111
        %v1249 = vpop.permute.xlu0 %1248
        %1250 = vrot.lane.b32.xlu0 %v1235, 111
        %v1251 = vpop.permute.xlu0 %1250
        %1252 = vrot.lane.b32.xlu0 %v1236, 111
        %v1253 = vpop.permute.xlu0 %1252
        %1254 = vrot.lane.b32.xlu0 %v1237, 111
        %v1255 = vpop.permute.xlu0 %1254
        %v1256 = vsel %vm648, %v1245, %v1247
        %v1257 = vsel %vm648, %v1247, %v1249
        %v1258 = vsel %vm648, %v1251, %v1253
        %v1259 = vsel %vm648, %v1253, %v1255
        %1266 = vst [vmem:[#allocation4 + $0x120] sm:$0xff] %v1256
        %1267 = vst [vmem:[#allocation4 + $0x128] sm:$0xff] %v1257
        %vm1268 = vcmask 908288
        %1269 = vst.msk [vmem:[#allocation4 + $0x130] sm:$0xff] %vm1268, %v1249
        %1270 = vst [vmem:[#allocation4 + $0x138] sm:$0xff] %v1258
        %1271 = vst [vmem:[#allocation4 + $0x140] sm:$0xff] %v1259
        %1272 = vst.msk [vmem:[#allocation4 + $0x148] sm:$0xff] %vm1268, %v1255
        %vm1273 = vcmask 1048432
        %1274 = vst.msk [vmem:[#allocation4 + $0x160] sm:$0xff] %vm1273, 0
        %1275 = vst.msk [vmem:[#allocation4 + $0x178] sm:$0xff] %vm1273, 0
        %v1276 = vld [vmem:[#allocation3] sm:$0xff]
        %v1277 = vld [vmem:[#allocation3 + $0x8] sm:$0xff]
        %v1278 = vld [vmem:[#allocation3 + $0x10] sm:$0xff]
        %v1279 = vld [vmem:[#allocation3 + $0x18] sm:$0xff]
        %v1280 = vld [vmem:[#allocation3 + $0x20] sm:$0xff]
        %v1281 = vld [vmem:[#allocation3 + $0x28] sm:$0xff]
        %1288 = vrot.lane.b32.xlu0 %v1276, 110
        %v1289 = vpop.permute.xlu0 %1288
        %1290 = vrot.lane.b32.xlu0 %v1277, 110
        %v1291 = vpop.permute.xlu0 %1290
        %1292 = vrot.lane.b32.xlu0 %v1278, 110
        %v1293 = vpop.permute.xlu0 %1292
        %1294 = vrot.lane.b32.xlu0 %v1279, 110
        %v1295 = vpop.permute.xlu0 %1294
        %1296 = vrot.lane.b32.xlu0 %v1280, 110
        %v1297 = vpop.permute.xlu0 %1296
        %1298 = vrot.lane.b32.xlu0 %v1281, 110
        %v1299 = vpop.permute.xlu0 %1298
        %v1300 = vsel %vm685, %v1289, %v1291
        %v1301 = vsel %vm685, %v1291, %v1293
        %v1302 = vsel %vm685, %v1295, %v1297
        %v1303 = vsel %vm685, %v1297, %v1299
        %1310 = vst [vmem:[#allocation4 + $0x150] sm:$0xff] %v1300
        %1311 = vst [vmem:[#allocation4 + $0x158] sm:$0xff] %v1301
        %vm1312 = vcmask 900096
        %1313 = vst.msk [vmem:[#allocation4 + $0x160] sm:$0xff] %vm1312, %v1293
        %1314 = vst [vmem:[#allocation4 + $0x168] sm:$0xff] %v1302
        %1315 = vst [vmem:[#allocation4 + $0x170] sm:$0xff] %v1303
        %1316 = vst.msk [vmem:[#allocation4 + $0x178] sm:$0xff] %vm1312, %v1299
        %vm1317 = vcmask 1048424
        %1318 = vst.msk [vmem:[#allocation4 + $0x190] sm:$0xff] %vm1317, 0
        %1319 = vst.msk [vmem:[#allocation4 + $0x1a8] sm:$0xff] %vm1317, 0
        %v1320 = vld [vmem:[#allocation3] sm:$0xff]
        %v1321 = vld [vmem:[#allocation3 + $0x8] sm:$0xff]
        %v1322 = vld [vmem:[#allocation3 + $0x10] sm:$0xff]
        %v1323 = vld [vmem:[#allocation3 + $0x18] sm:$0xff]
        %v1324 = vld [vmem:[#allocation3 + $0x20] sm:$0xff]
        %v1325 = vld [vmem:[#allocation3 + $0x28] sm:$0xff]
        %1332 = vrot.lane.b32.xlu0 %v1320, 109
        %v1333 = vpop.permute.xlu0 %1332
        %1334 = vrot.lane.b32.xlu0 %v1321, 109
        %v1335 = vpop.permute.xlu0 %1334
        %1336 = vrot.lane.b32.xlu0 %v1322, 109
        %v1337 = vpop.permute.xlu0 %1336
        %1338 = vrot.lane.b32.xlu0 %v1323, 109
        %v1339 = vpop.permute.xlu0 %1338
        %1340 = vrot.lane.b32.xlu0 %v1324, 109
        %v1341 = vpop.permute.xlu0 %1340
        %1342 = vrot.lane.b32.xlu0 %v1325, 109
        %v1343 = vpop.permute.xlu0 %1342
        %v1344 = vsel %vm721, %v1333, %v1335
        %v1345 = vsel %vm721, %v1335, %v1337
        %v1346 = vsel %vm721, %v1339, %v1341
        %v1347 = vsel %vm721, %v1341, %v1343
        %1354 = vst [vmem:[#allocation4 + $0x180] sm:$0xff] %v1344
        %1355 = vst [vmem:[#allocation4 + $0x188] sm:$0xff] %v1345
        %vm1356 = vcmask 891904
        %1357 = vst.msk [vmem:[#allocation4 + $0x190] sm:$0xff] %vm1356, %v1337
        %1358 = vst [vmem:[#allocation4 + $0x198] sm:$0xff] %v1346
        %1359 = vst [vmem:[#allocation4 + $0x1a0] sm:$0xff] %v1347
        %1360 = vst.msk [vmem:[#allocation4 + $0x1a8] sm:$0xff] %vm1356, %v1343
        %v1361 = vld [vmem:[%s4] sm:$0xff]
        %v1362 = vld [vmem:[%s4 + $0x8] sm:$0xf]
        %v1363 = vld [vmem:[%s4 + $0xc] sm:$0xff]
        %v1364 = vld [vmem:[%s4 + $0x14] sm:$0xf]
        %v1365 = vld [vmem:[%s4 + $0x18] sm:$0xff]
        %v1366 = vld [vmem:[%s4 + $0x20] sm:$0xf]
        %v1367 = vld [vmem:[%s4 + $0x24] sm:$0xff]
        %v1368 = vld [vmem:[%s4 + $0x2c] sm:$0xf]
        %v1369 = vld [vmem:[#allocation4] sm:$0xff]
        %v1370 = vld [vmem:[#allocation4 + $0x8] sm:$0xff]
        %v1371 = vld [vmem:[#allocation4 + $0x10] sm:$0xff]
        %v1372 = vld [vmem:[#allocation4 + $0x18] sm:$0xff]
        %v1373 = vld [vmem:[#allocation4 + $0x20] sm:$0xff]
        %v1374 = vld [vmem:[#allocation4 + $0x28] sm:$0xff]
        %v1375 = vld [vmem:[#allocation4 + $0x30] sm:$0xff]
        %v1376 = vld [vmem:[#allocation4 + $0x38] sm:$0xff]
        %v1377 = vld [vmem:[#allocation4 + $0x40] sm:$0xff]
        %v1378 = vld [vmem:[#allocation4 + $0x48] sm:$0xff]
        %v1379 = vld [vmem:[#allocation4 + $0x50] sm:$0xff]
        %v1380 = vld [vmem:[#allocation4 + $0x58] sm:$0xff]
        %v1381 = vld [vmem:[#allocation4 + $0x60] sm:$0xff]
        %v1382 = vld [vmem:[#allocation4 + $0x68] sm:$0xff]
        %v1383 = vld [vmem:[#allocation4 + $0x70] sm:$0xff]
        %v1384 = vld [vmem:[#allocation4 + $0x78] sm:$0xff]
        %v1385 = vld [vmem:[#allocation4 + $0x80] sm:$0xff]
        %v1386 = vld [vmem:[#allocation4 + $0x88] sm:$0xff]
        %v1387 = vld [vmem:[#allocation4 + $0x90] sm:$0xff]
        %v1388 = vld [vmem:[#allocation4 + $0x98] sm:$0xff]
        %v1389 = vld [vmem:[#allocation4 + $0xa0] sm:$0xff]
        %v1390 = vld [vmem:[#allocation4 + $0xa8] sm:$0xff]
        %v1391 = vld [vmem:[#allocation4 + $0xb0] sm:$0xff]
        %v1392 = vld [vmem:[#allocation4 + $0xb8] sm:$0xff]
        %v1393 = vld [vmem:[#allocation4 + $0xc0] sm:$0xff]
        %v1394 = vld [vmem:[#allocation4 + $0xc8] sm:$0xff]
        %v1395 = vld [vmem:[#allocation4 + $0xd0] sm:$0xff]
        %v1396 = vld [vmem:[#allocation4 + $0xd8] sm:$0xff]
        %v1397 = vld [vmem:[#allocation4 + $0xe0] sm:$0xff]
        %v1398 = vld [vmem:[#allocation4 + $0xe8] sm:$0xff]
        %v1399 = vld [vmem:[#allocation4 + $0xf0] sm:$0xff]
        %v1400 = vld [vmem:[#allocation4 + $0xf8] sm:$0xff]
        %v1401 = vld [vmem:[#allocation4 + $0x100] sm:$0xff]
        %v1402 = vld [vmem:[#allocation4 + $0x108] sm:$0xff]
        %v1403 = vld [vmem:[#allocation4 + $0x110] sm:$0xff]
        %v1404 = vld [vmem:[#allocation4 + $0x118] sm:$0xff]
        %v1405 = vld [vmem:[#allocation4 + $0x120] sm:$0xff]
        %v1406 = vld [vmem:[#allocation4 + $0x128] sm:$0xff]
        %v1407 = vld [vmem:[#allocation4 + $0x130] sm:$0xff]
        %v1408 = vld [vmem:[#allocation4 + $0x138] sm:$0xff]
        %v1409 = vld [vmem:[#allocation4 + $0x140] sm:$0xff]
        %v1410 = vld [vmem:[#allocation4 + $0x148] sm:$0xff]
        %v1411 = vld [vmem:[#allocation4 + $0x150] sm:$0xff]
        %v1412 = vld [vmem:[#allocation4 + $0x158] sm:$0xff]
        %v1413 = vld [vmem:[#allocation4 + $0x160] sm:$0xff]
        %v1414 = vld [vmem:[#allocation4 + $0x168] sm:$0xff]
        %v1415 = vld [vmem:[#allocation4 + $0x170] sm:$0xff]
        %v1416 = vld [vmem:[#allocation4 + $0x178] sm:$0xff]
        %v1417 = vld [vmem:[#allocation4 + $0x180] sm:$0xff]
        %v1418 = vld [vmem:[#allocation4 + $0x188] sm:$0xff]
        %v1419 = vld [vmem:[#allocation4 + $0x190] sm:$0xff]
        %v1420 = vld [vmem:[#allocation4 + $0x198] sm:$0xff]
        %v1421 = vld [vmem:[#allocation4 + $0x1a0] sm:$0xff]
        %v1422 = vld [vmem:[#allocation4 + $0x1a8] sm:$0xff]
        %v1431 = vunpack.c.l.b16 %v1361
        %v1432 = vunpack.c.h.b16 %v1361
        %v1433 = vunpack.c.l.b16 %v1362
        %v1434 = vunpack.c.l.b16 %v1363
        %v1435 = vunpack.c.h.b16 %v1363
        %v1436 = vunpack.c.l.b16 %v1364
        %v1437 = vunpack.c.l.b16 %v1365
        %v1438 = vunpack.c.h.b16 %v1365
        %v1439 = vunpack.c.l.b16 %v1366
        %v1440 = vunpack.c.l.b16 %v1367
        %v1441 = vunpack.c.h.b16 %v1367
        %v1442 = vunpack.c.l.b16 %v1368
        %v1443 = vpack.c.b16 %v1434, %v1431
        %v1444 = vpack.c.b16 %v1435, %v1432
        %v1445 = vpack.c.b16 %v1436, %v1433
        %v1446 = vpack.c.b16 %v1440, %v1437
        %v1447 = vpack.c.b16 %v1441, %v1438
        %v1448 = vpack.c.b16 %v1442, %v1439
        %vm1453 = vcmask 261120
        %v1455 = vsel %vm1453, %v1445, 0
        %v1458 = vsel %vm1453, %v1448, 0
        %1460 = vmatprep.subr.bf16.mxu0 %v1370
        %1461 = vmatpush1.bf16.msra.mxu0 %v1369
        %1462 = vmatprep.subr.bf16.mxu0 %v1373
        %1463 = vmatpush1.bf16.msra.mxu0 %v1372
        %1464 = vmatprep.subr.bf16.mxu0 %v1376
        %1465 = vmatpush1.bf16.msra.mxu0 %v1375
        %1466 = vmatprep.subr.bf16.mxu0 %v1379
        %1467 = vmatpush1.bf16.msra.mxu0 %v1378
        %1468 = vmatprep.subr.bf16.mxu0 %v1382
        %1469 = vmatpush1.bf16.msra.mxu0 %v1381
        %1470 = vmatprep.subr.bf16.mxu0 %v1385
        %1471 = vmatpush1.bf16.msra.mxu0 %v1384
        %1472 = vmatprep.subr.bf16.mxu0 %v1388
        %1473 = vmatpush1.bf16.msra.mxu0 %v1387
        %1474 = vmatprep.subr.bf16.mxu0 %v1391
        %1475 = vmatpush1.bf16.msra.mxu0 %v1390
        %1476 = vmatprep.subr.bf16.mxu0 %v1394
        %1477 = vmatpush1.bf16.msra.mxu0 %v1393
        %1478 = vmatprep.subr.bf16.mxu0 %v1397
        %1479 = vmatpush1.bf16.msra.mxu0 %v1396
        %1480 = vmatprep.subr.bf16.mxu0 %v1400
        %1481 = vmatpush1.bf16.msra.mxu0 %v1399
        %1482 = vmatprep.subr.bf16.mxu0 %v1403
        %1483 = vmatpush1.bf16.msra.mxu0 %v1402
        %1484 = vmatprep.subr.bf16.mxu0 %v1406
        %1485 = vmatpush1.bf16.msra.mxu0 %v1405
        %1486 = vmatprep.subr.bf16.mxu0 %v1409
        %1487 = vmatpush1.bf16.msra.mxu0 %v1408
        %1488 = vmatprep.subr.bf16.mxu0 %v1412
        %1489 = vmatpush1.bf16.msra.mxu0 %v1411
        %1490 = vmatprep.subr.bf16.mxu0 %v1415
        %1491 = vmatpush1.bf16.msra.mxu0 %v1414
        %1492 = vmatprep.mubr.bf16.mxu0 %v1444
        %1493 = vmatmul.mubr.bf16.gmra.mrb[0].mxu0 %v1443
        %v1494 = vpop.f32.mrb[0].mxu0
        %v1495 = vadd.f32 0.0, %v1494
        %v1496 = vpop.f32.mrb[0].mxu0
        %v1497 = vadd.f32 0.0, %v1496
        %v1498 = vpop.f32.mrb[0].mxu0
        %v1499 = vadd.f32 0.0, %v1498
        %v1500 = vpop.f32.mrb[0].mxu0
        %v1501 = vadd.f32 0.0, %v1500
        %1502 = vmatprep.mubr.bf16.mxu0 %v1447
        %1503 = vmatmul.mubr.bf16.gmra.mrb[0].mxu0 %v1446
        %v1504 = vpop.f32.mrb[0].mxu0
        %v1505 = vadd.f32 0.0, %v1504
        %v1506 = vpop.f32.mrb[0].mxu0
        %v1507 = vadd.f32 0.0, %v1506
        %v1508 = vpop.f32.mrb[0].mxu0
        %v1509 = vadd.f32 0.0, %v1508
        %v1510 = vpop.f32.mrb[0].mxu0
        %v1511 = vadd.f32 0.0, %v1510
        %1512 = vdwg.mxu0
        %1513 = vmatprep.subr.bf16.mxu0 %v1418
        %1514 = vmatpush1.bf16.msra.mxu0 %v1417
        %1515 = vmatprep.subr.bf16.mxu0 %v1421
        %1516 = vmatpush1.bf16.msra.mxu0 %v1420
        %1517 = vmatprep.subr.bf16.mxu0 0
        %1518 = vmatpush1.bf16.msra.mxu0 0
        %1519 = vmatprep.subr.bf16.mxu0 0
        %1520 = vmatpush1.bf16.msra.mxu0 0
        %1521 = vmatprep.subr.bf16.mxu0 0
        %1522 = vmatpush1.bf16.msra.mxu0 0
        %1523 = vmatprep.subr.bf16.mxu0 0
        %1524 = vmatpush1.bf16.msra.mxu0 0
        %1525 = vmatprep.subr.bf16.mxu0 0
        %1526 = vmatpush1.bf16.msra.mxu0 0
        %1527 = vmatprep.subr.bf16.mxu0 0
        %1528 = vmatpush1.bf16.msra.mxu0 0
        %1529 = vmatprep.subr.bf16.mxu0 0
        %1530 = vmatpush1.bf16.msra.mxu0 0
        %1531 = vmatprep.subr.bf16.mxu0 0
        %1532 = vmatpush1.bf16.msra.mxu0 0
        %1533 = vmatprep.subr.bf16.mxu0 0
        %1534 = vmatpush1.bf16.msra.mxu0 0
        %1535 = vmatprep.subr.bf16.mxu0 0
        %1536 = vmatpush1.bf16.msra.mxu0 0
        %1537 = vmatprep.subr.bf16.mxu0 0
        %1538 = vmatpush1.bf16.msra.mxu0 0
        %1539 = vmatprep.subr.bf16.mxu0 0
        %1540 = vmatpush1.bf16.msra.mxu0 0
        %1541 = vmatprep.subr.bf16.mxu0 0
        %1542 = vmatpush1.bf16.msra.mxu0 0
        %1543 = vmatprep.subr.bf16.mxu0 0
        %1544 = vmatpush1.bf16.msra.mxu0 0
        %1545 = vmatprep.mubr.bf16.mxu0 0
        %1546 = vmatmul.mubr.bf16.gmra.mrb[0].mxu0 %v1455
        %v1547 = vpop.f32.mrb[0].mxu0
        %v1548 = vadd.f32 %v1495, %v1547
        %v1549 = vpop.f32.mrb[0].mxu0
        %v1550 = vadd.f32 %v1497, %v1549
        %v1551 = vpop.f32.mrb[0].mxu0
        %v1552 = vadd.f32 %v1499, %v1551
        %v1553 = vpop.f32.mrb[0].mxu0
        %v1554 = vadd.f32 %v1501, %v1553
        %1555 = vmatprep.mubr.bf16.mxu0 0
        %1556 = vmatmul.mubr.bf16.gmra.mrb[0].mxu0 %v1458
        %v1557 = vpop.f32.mrb[0].mxu0
        %v1558 = vadd.f32 %v1505, %v1557
        %v1559 = vpop.f32.mrb[0].mxu0
        %v1560 = vadd.f32 %v1507, %v1559
        %v1561 = vpop.f32.mrb[0].mxu0
        %v1562 = vadd.f32 %v1509, %v1561
        %v1563 = vpop.f32.mrb[0].mxu0
        %v1564 = vadd.f32 %v1511, %v1563
        %1565 = vdwg.mxu0
        %1566 = vmatprep.subr.bf16.mxu0 0
        %1567 = vmatpush1.bf16.msra.mxu0 %v1371
        %1568 = vmatprep.subr.bf16.mxu0 0
        %1569 = vmatpush1.bf16.msra.mxu0 %v1374
        %1570 = vmatprep.subr.bf16.mxu0 0
        %1571 = vmatpush1.bf16.msra.mxu0 %v1377
        %1572 = vmatprep.subr.bf16.mxu0 0
        %1573 = vmatpush1.bf16.msra.mxu0 %v1380
        %1574 = vmatprep.subr.bf16.mxu0 0
        %1575 = vmatpush1.bf16.msra.mxu0 %v1383
        %1576 = vmatprep.subr.bf16.mxu0 0
        %1577 = vmatpush1.bf16.msra.mxu0 %v1386
        %1578 = vmatprep.subr.bf16.mxu0 0
        %1579 = vmatpush1.bf16.msra.mxu0 %v1389
        %1580 = vmatprep.subr.bf16.mxu0 0
        %1581 = vmatpush1.bf16.msra.mxu0 %v1392
        %1582 = vmatprep.subr.bf16.mxu0 0
        %1583 = vmatpush1.bf16.msra.mxu0 %v1395
        %1584 = vmatprep.subr.bf16.mxu0 0
        %1585 = vmatpush1.bf16.msra.mxu0 %v1398
        %1586 = vmatprep.subr.bf16.mxu0 0
        %1587 = vmatpush1.bf16.msra.mxu0 %v1401
        %1588 = vmatprep.subr.bf16.mxu0 0
        %1589 = vmatpush1.bf16.msra.mxu0 %v1404
        %1590 = vmatprep.subr.bf16.mxu0 0
        %1591 = vmatpush1.bf16.msra.mxu0 %v1407
        %1592 = vmatprep.subr.bf16.mxu0 0
        %1593 = vmatpush1.bf16.msra.mxu0 %v1410
        %1594 = vmatprep.subr.bf16.mxu0 0
        %1595 = vmatpush1.bf16.msra.mxu0 %v1413
        %1596 = vmatprep.subr.bf16.mxu0 0
        %1597 = vmatpush1.bf16.msra.mxu0 %v1416
        %1598 = vmatprep.mubr.bf16.mxu0 %v1444
        %1599 = vmatmul.mubr.bf16.gmra.mrb[0].mxu0 %v1443
        %v1600 = vpop.f32.mrb[0].mxu0
        %v1601 = vadd.f32 0.0, %v1600
        %v1602 = vpop.f32.mrb[0].mxu0
        %v1603 = vpop.f32.mrb[0].mxu0
        %v1604 = vadd.f32 0.0, %v1603
        %v1605 = vpop.f32.mrb[0].mxu0
        %1606 = vmatprep.mubr.bf16.mxu0 %v1447
        %1607 = vmatmul.mubr.bf16.gmra.mrb[0].mxu0 %v1446
        %v1608 = vpop.f32.mrb[0].mxu0
        %v1609 = vadd.f32 0.0, %v1608
        %v1610 = vpop.f32.mrb[0].mxu0
        %v1611 = vpop.f32.mrb[0].mxu0
        %v1612 = vadd.f32 0.0, %v1611
        %v1613 = vpop.f32.mrb[0].mxu0
        %1614 = vdwg.mxu0
        %1615 = vmatprep.subr.bf16.mxu0 0
        %1616 = vmatpush1.bf16.msra.mxu0 %v1419
        %1617 = vmatprep.subr.bf16.mxu0 0
        %1618 = vmatpush1.bf16.msra.mxu0 %v1422
        %1619 = vmatprep.subr.bf16.mxu0 0
        %1620 = vmatpush1.bf16.msra.mxu0 0
        %1621 = vmatprep.subr.bf16.mxu0 0
        %1622 = vmatpush1.bf16.msra.mxu0 0
        %1623 = vmatprep.subr.bf16.mxu0 0
        %1624 = vmatpush1.bf16.msra.mxu0 0
        %1625 = vmatprep.subr.bf16.mxu0 0
        %1626 = vmatpush1.bf16.msra.mxu0 0
        %1627 = vmatprep.subr.bf16.mxu0 0
        %1628 = vmatpush1.bf16.msra.mxu0 0
        %1629 = vmatprep.subr.bf16.mxu0 0
        %1630 = vmatpush1.bf16.msra.mxu0 0
        %1631 = vmatprep.subr.bf16.mxu0 0
        %1632 = vmatpush1.bf16.msra.mxu0 0
        %1633 = vmatprep.subr.bf16.mxu0 0
        %1634 = vmatpush1.bf16.msra.mxu0 0
        %1635 = vmatprep.subr.bf16.mxu0 0
        %1636 = vmatpush1.bf16.msra.mxu0 0
        %1637 = vmatprep.subr.bf16.mxu0 0
        %1638 = vmatpush1.bf16.msra.mxu0 0
        %1639 = vmatprep.subr.bf16.mxu0 0
        %1640 = vmatpush1.bf16.msra.mxu0 0
        %1641 = vmatprep.subr.bf16.mxu0 0
        %1642 = vmatpush1.bf16.msra.mxu0 0
        %1643 = vmatprep.subr.bf16.mxu0 0
        %1644 = vmatpush1.bf16.msra.mxu0 0
        %1645 = vmatprep.subr.bf16.mxu0 0
        %1646 = vmatpush1.bf16.msra.mxu0 0
        %1647 = vmatprep.mubr.bf16.mxu0 0
        %1648 = vmatmul.mubr.bf16.gmra.mrb[0].mxu0 %v1455
        %v1649 = vpop.f32.mrb[0].mxu0
        %v1650 = vadd.f32 %v1601, %v1649
        %v1651 = vpop.f32.mrb[0].mxu0
        %v1652 = vpop.f32.mrb[0].mxu0
        %v1653 = vadd.f32 %v1604, %v1652
        %v1654 = vpop.f32.mrb[0].mxu0
        %1655 = vmatprep.mubr.bf16.mxu0 0
        %1656 = vmatmul.mubr.bf16.gmra.mrb[0].mxu0 %v1458
        %v1657 = vpop.f32.mrb[0].mxu0
        %v1658 = vadd.f32 %v1609, %v1657
        %v1659 = vpop.f32.mrb[0].mxu0
        %v1660 = vpop.f32.mrb[0].mxu0
        %v1661 = vadd.f32 %v1612, %v1660
        %v1662 = vpop.f32.mrb[0].mxu0
        %1663 = vdwg.mxu0
        %v1664 = vld [vmem:[%s5] sm:$0xff]
        %v1665 = vld [vmem:[%s5 + $0x8] sm:$0xff]
        %v1666 = vld [vmem:[%s5 + $0x10] sm:$0xff]
        %v1667 = vld [vmem:[%s5 + $0x18] sm:$0xff]
        %1669 = vset.pattern.permute.xlu0 0
        %1670 = vperm.xlu0 %1669, %v1664
        %v1671 = vpop.permute.xlu0 %1670
        %1674 = vset.pattern.permute.xlu0 0
        %1675 = vperm.xlu0 %1674, %v1665
        %v1676 = vpop.permute.xlu0 %1675
        %1679 = vset.pattern.permute.xlu0 0
        %1680 = vperm.xlu0 %1679, %v1666
        %v1681 = vpop.permute.xlu0 %1680
        %1684 = vset.pattern.permute.xlu0 0
        %1685 = vperm.xlu0 %1684, %v1667
        %v1686 = vpop.permute.xlu0 %1685
        %v1688 = vmul.f32 %v1548, %v1671
        %v1689 = vmul.f32 %v1550, %v1671
        %v1690 = vmul.f32 %v1650, %v1671
        %v1691 = vmul.f32 %v1552, %v1676
        %v1692 = vmul.f32 %v1554, %v1676
        %v1693 = vmul.f32 %v1653, %v1676
        %v1694 = vmul.f32 %v1558, %v1681
        %v1695 = vmul.f32 %v1560, %v1681
        %v1696 = vmul.f32 %v1658, %v1681
        %v1697 = vmul.f32 %v1562, %v1686
        %v1698 = vmul.f32 %v1564, %v1686
        %v1699 = vmul.f32 %v1661, %v1686
        %v1700 = vld [vmem:[%s6] sm:$0xff]
        %v1701 = vld [vmem:[%s6 + $0x8] sm:$0xff]
        %v1702 = vld [vmem:[%s6 + $0x10] sm:$0xff]
        %v1703 = vld [vmem:[%s6 + $0x18] sm:$0xff]
        %1705 = vset.pattern.permute.xlu0 0
        %1706 = vperm.xlu0 %1705, %v1700
        %v1707 = vpop.permute.xlu0 %1706
        %1710 = vset.pattern.permute.xlu0 0
        %1711 = vperm.xlu0 %1710, %v1701
        %v1712 = vpop.permute.xlu0 %1711
        %1715 = vset.pattern.permute.xlu0 0
        %1716 = vperm.xlu0 %1715, %v1702
        %v1717 = vpop.permute.xlu0 %1716
        %1720 = vset.pattern.permute.xlu0 0
        %1721 = vperm.xlu0 %1720, %v1703
        %v1722 = vpop.permute.xlu0 %1721
        %v1724 = vadd.f32 %v1688, %v1707
        %v1725 = vadd.f32 %v1689, %v1707
        %v1726 = vadd.f32 %v1690, %v1707
        %v1727 = vadd.f32 %v1691, %v1712
        %v1728 = vadd.f32 %v1692, %v1712
        %v1729 = vadd.f32 %v1693, %v1712
        %v1730 = vadd.f32 %v1694, %v1717
        %v1731 = vadd.f32 %v1695, %v1717
        %v1732 = vadd.f32 %v1696, %v1717
        %v1733 = vadd.f32 %v1697, %v1722
        %v1734 = vadd.f32 %v1698, %v1722
        %v1735 = vadd.f32 %v1699, %v1722
        %v1736 = vld [vmem:[#allocation2] sm:$0x3f]
        %v1737 = vld [vmem:[%s8] sm:$0xf]
        %v1738 = vld [vmem:[%s8 + $0x4] sm:$0xf]
        %v1739 = vld [vmem:[%s8 + $0x8] sm:$0xf]
        %v1740 = vld [vmem:[%s8 + $0xc] sm:$0xf]
        %v1745 = vunpack.c.l.b16 %v1737
        %v1746 = vunpack.c.l.b16 %v1738
        %v1747 = vunpack.c.l.b16 %v1739
        %v1748 = vunpack.c.l.b16 %v1740
        %v1749 = vpack.c.b16 %v1746, %v1745
        %v1750 = vpack.c.b16 %v1748, %v1747
        %v1752 = vcombine.high %v1736, %v1736
        %v1754 = vunpack.c.l.s4 1983009808
        %v1755 = vunpack.c.0.s8 %v1754
        %v1756 = vlaneseq
        %v1757 = vshrl.u32 %v1756, 7
        %v1758 = vsub.s32 %v1755, %v1757
        %v1759 = vrot.slane %v1736, %v1758
        %v1761 = vunpack.c.l.s4 1983009808
        %v1762 = vunpack.c.0.s8 %v1761
        %v1763 = vlaneseq
        %v1764 = vshrl.u32 %v1763, 7
        %v1765 = vsub.s32 %v1762, %v1764
        %v1766 = vrot.slane %v1752, %v1765
        %v1767 = vcombine.high %v1759, %v1759
        %vm1768 = vcmask 31744
        %v1770 = vsel %vm1768, %v1749, 0
        %v1773 = vsel %vm1768, %v1750, 0
        %v1776 = vsel %vm761, %v1759, 0
        %v1779 = vsel %vm761, %v1767, 0
        %v1782 = vsel %vm761, %v1766, 0
        %1784 = vmatprep.subr.bf16.mxu0 %v1779
        %1785 = vmatpush1.bf16.msra.mxu0 %v1776
        %1786 = vmatprep.subr.bf16.mxu0 0
        %1787 = vmatpush1.bf16.msra.mxu0 0
        %1788 = vmatprep.subr.bf16.mxu0 0
        %1789 = vmatpush1.bf16.msra.mxu0 0
        %1790 = vmatprep.subr.bf16.mxu0 0
        %1791 = vmatpush1.bf16.msra.mxu0 0
        %1792 = vmatprep.subr.bf16.mxu0 0
        %1793 = vmatpush1.bf16.msra.mxu0 0
        %1794 = vmatprep.subr.bf16.mxu0 0
        %1795 = vmatpush1.bf16.msra.mxu0 0
        %1796 = vmatprep.subr.bf16.mxu0 0
        %1797 = vmatpush1.bf16.msra.mxu0 0
        %1798 = vmatprep.subr.bf16.mxu0 0
        %1799 = vmatpush1.bf16.msra.mxu0 0
        %1800 = vmatprep.subr.bf16.mxu0 0
        %1801 = vmatpush1.bf16.msra.mxu0 0
        %1802 = vmatprep.subr.bf16.mxu0 0
        %1803 = vmatpush1.bf16.msra.mxu0 0
        %1804 = vmatprep.subr.bf16.mxu0 0
        %1805 = vmatpush1.bf16.msra.mxu0 0
        %1806 = vmatprep.subr.bf16.mxu0 0
        %1807 = vmatpush1.bf16.msra.mxu0 0
        %1808 = vmatprep.subr.bf16.mxu0 0
        %1809 = vmatpush1.bf16.msra.mxu0 0
        %1810 = vmatprep.subr.bf16.mxu0 0
        %1811 = vmatpush1.bf16.msra.mxu0 0
        %1812 = vmatprep.subr.bf16.mxu0 0
        %1813 = vmatpush1.bf16.msra.mxu0 0
        %1814 = vmatprep.subr.bf16.mxu0 0
        %1815 = vmatpush1.bf16.msra.mxu0 0
        %1816 = vmatprep.mubr.bf16.mxu0 0
        %1817 = vmatmul.mubr.bf16.gmra.mrb[0].mxu0 %v1770
        %v1818 = vpop.f32.mrb[0].mxu0
        %v1819 = vadd.f32 0.0, %v1818
        %v1820 = vpop.f32.mrb[0].mxu0
        %v1821 = vadd.f32 0.0, %v1820
        %v1822 = vpop.f32.mrb[0].mxu0
        %v1823 = vadd.f32 0.0, %v1822
        %v1824 = vpop.f32.mrb[0].mxu0
        %v1825 = vadd.f32 0.0, %v1824
        %1826 = vmatprep.mubr.bf16.mxu0 0
        %1827 = vmatmul.mubr.bf16.gmra.mrb[0].mxu0 %v1773
        %v1828 = vpop.f32.mrb[0].mxu0
        %v1829 = vadd.f32 0.0, %v1828
        %v1830 = vpop.f32.mrb[0].mxu0
        %v1831 = vadd.f32 0.0, %v1830
        %v1832 = vpop.f32.mrb[0].mxu0
        %v1833 = vadd.f32 0.0, %v1832
        %v1834 = vpop.f32.mrb[0].mxu0
        %v1835 = vadd.f32 0.0, %v1834
        %1836 = vdwg.mxu0
        %1837 = vmatprep.subr.bf16.mxu0 0
        %1838 = vmatpush1.bf16.msra.mxu0 %v1782
        %1839 = vmatprep.subr.bf16.mxu0 0
        %1840 = vmatpush1.bf16.msra.mxu0 0
        %1841 = vmatprep.subr.bf16.mxu0 0
        %1842 = vmatpush1.bf16.msra.mxu0 0
        %1843 = vmatprep.subr.bf16.mxu0 0
        %1844 = vmatpush1.bf16.msra.mxu0 0
        %1845 = vmatprep.subr.bf16.mxu0 0
        %1846 = vmatpush1.bf16.msra.mxu0 0
        %1847 = vmatprep.subr.bf16.mxu0 0
        %1848 = vmatpush1.bf16.msra.mxu0 0
        %1849 = vmatprep.subr.bf16.mxu0 0
        %1850 = vmatpush1.bf16.msra.mxu0 0
        %1851 = vmatprep.subr.bf16.mxu0 0
        %1852 = vmatpush1.bf16.msra.mxu0 0
        %1853 = vmatprep.subr.bf16.mxu0 0
        %1854 = vmatpush1.bf16.msra.mxu0 0
        %1855 = vmatprep.subr.bf16.mxu0 0
        %1856 = vmatpush1.bf16.msra.mxu0 0
        %1857 = vmatprep.subr.bf16.mxu0 0
        %1858 = vmatpush1.bf16.msra.mxu0 0
        %1859 = vmatprep.subr.bf16.mxu0 0
        %1860 = vmatpush1.bf16.msra.mxu0 0
        %1861 = vmatprep.subr.bf16.mxu0 0
        %1862 = vmatpush1.bf16.msra.mxu0 0
        %1863 = vmatprep.subr.bf16.mxu0 0
        %1864 = vmatpush1.bf16.msra.mxu0 0
        %1865 = vmatprep.subr.bf16.mxu0 0
        %1866 = vmatpush1.bf16.msra.mxu0 0
        %1867 = vmatprep.subr.bf16.mxu0 0
        %1868 = vmatpush1.bf16.msra.mxu0 0
        %1869 = vmatprep.mubr.bf16.mxu0 0
        %1870 = vmatmul.mubr.bf16.gmra.mrb[0].mxu0 %v1770
        %v1871 = vpop.f32.mrb[0].mxu0
        %v1872 = vadd.f32 0.0, %v1871
        %v1873 = vpop.f32.mrb[0].mxu0
        %v1874 = vpop.f32.mrb[0].mxu0
        %v1875 = vadd.f32 0.0, %v1874
        %v1876 = vpop.f32.mrb[0].mxu0
        %1877 = vmatprep.mubr.bf16.mxu0 0
        %1878 = vmatmul.mubr.bf16.gmra.mrb[0].mxu0 %v1773
        %v1879 = vpop.f32.mrb[0].mxu0
        %v1880 = vadd.f32 0.0, %v1879
        %v1881 = vpop.f32.mrb[0].mxu0
        %v1882 = vpop.f32.mrb[0].mxu0
        %v1883 = vadd.f32 0.0, %v1882
        %v1884 = vpop.f32.mrb[0].mxu0
        %1885 = vdwg.mxu0
        %v1886 = vld [vmem:[%s9] sm:$0xff]
        %v1887 = vld [vmem:[%s9 + $0x8] sm:$0xff]
        %v1888 = vld [vmem:[%s9 + $0x10] sm:$0xff]
        %v1889 = vld [vmem:[%s9 + $0x18] sm:$0xff]
        %1891 = vset.pattern.permute.xlu0 0
        %1892 = vperm.xlu0 %1891, %v1886
        %v1893 = vpop.permute.xlu0 %1892
        %1896 = vset.pattern.permute.xlu0 0
        %1897 = vperm.xlu0 %1896, %v1887
        %v1898 = vpop.permute.xlu0 %1897
        %1901 = vset.pattern.permute.xlu0 0
        %1902 = vperm.xlu0 %1901, %v1888
        %v1903 = vpop.permute.xlu0 %1902
        %1906 = vset.pattern.permute.xlu0 0
        %1907 = vperm.xlu0 %1906, %v1889
        %v1908 = vpop.permute.xlu0 %1907
        %v1910 = vmul.f32 %v1819, %v1893
        %v1911 = vmul.f32 %v1821, %v1893
        %v1912 = vmul.f32 %v1872, %v1893
        %v1913 = vmul.f32 %v1823, %v1898
        %v1914 = vmul.f32 %v1825, %v1898
        %v1915 = vmul.f32 %v1875, %v1898
        %v1916 = vmul.f32 %v1829, %v1903
        %v1917 = vmul.f32 %v1831, %v1903
        %v1918 = vmul.f32 %v1880, %v1903
        %v1919 = vmul.f32 %v1833, %v1908
        %v1920 = vmul.f32 %v1835, %v1908
        %v1921 = vmul.f32 %v1883, %v1908
        %v1922 = vld [vmem:[%s10] sm:$0xff]
        %v1923 = vld [vmem:[%s10 + $0x8] sm:$0xff]
        %v1924 = vld [vmem:[%s10 + $0x10] sm:$0xff]
        %v1925 = vld [vmem:[%s10 + $0x18] sm:$0xff]
        %1927 = vset.pattern.permute.xlu0 0
        %1928 = vperm.xlu0 %1927, %v1922
        %v1929 = vpop.permute.xlu0 %1928
        %1932 = vset.pattern.permute.xlu0 0
        %1933 = vperm.xlu0 %1932, %v1923
        %v1934 = vpop.permute.xlu0 %1933
        %1937 = vset.pattern.permute.xlu0 0
        %1938 = vperm.xlu0 %1937, %v1924
        %v1939 = vpop.permute.xlu0 %1938
        %1942 = vset.pattern.permute.xlu0 0
        %1943 = vperm.xlu0 %1942, %v1925
        %v1944 = vpop.permute.xlu0 %1943
        %v1946 = vadd.f32 %v1910, %v1929
        %v1947 = vadd.f32 %v1911, %v1929
        %v1948 = vadd.f32 %v1912, %v1929
        %v1949 = vadd.f32 %v1913, %v1934
        %v1950 = vadd.f32 %v1914, %v1934
        %v1951 = vadd.f32 %v1915, %v1934
        %v1952 = vadd.f32 %v1916, %v1939
        %v1953 = vadd.f32 %v1917, %v1939
        %v1954 = vadd.f32 %v1918, %v1939
        %v1955 = vadd.f32 %v1919, %v1944
        %v1956 = vadd.f32 %v1920, %v1944
        %v1957 = vadd.f32 %v1921, %v1944
        %v1958 = vadd.f32 %v1724, %v1946
        %v1959 = vadd.f32 %v1725, %v1947
        %v1960 = vadd.f32 %v1726, %v1948
        %v1961 = vadd.f32 %v1727, %v1949
        %v1962 = vadd.f32 %v1728, %v1950
        %v1963 = vadd.f32 %v1729, %v1951
        %v1964 = vadd.f32 %v1730, %v1952
        %v1965 = vadd.f32 %v1731, %v1953
        %v1966 = vadd.f32 %v1732, %v1954
        %v1967 = vadd.f32 %v1733, %v1955
        %v1968 = vadd.f32 %v1734, %v1956
        %v1969 = vadd.f32 %v1735, %v1957
        %v1970 = vmax.f32 %v1958, 0.0
        %v1971 = vmax.f32 %v1959, 0.0
        %v1972 = vmax.f32 %v1960, 0.0
        %v1973 = vmax.f32 %v1961, 0.0
        %v1974 = vmax.f32 %v1962, 0.0
        %v1975 = vmax.f32 %v1963, 0.0
        %v1976 = vmax.f32 %v1964, 0.0
        %v1977 = vmax.f32 %v1965, 0.0
        %v1978 = vmax.f32 %v1966, 0.0
        %v1979 = vmax.f32 %v1967, 0.0
        %v1980 = vmax.f32 %v1968, 0.0
        %v1981 = vmax.f32 %v1969, 0.0
        %v1982 = vmul.f32 %v1970, %v961
        %v1983 = vmul.f32 %v1971, %v965
        %v1984 = vmul.f32 %v1972, %v969
        %v1985 = vmul.f32 %v1973, %v961
        %v1986 = vmul.f32 %v1974, %v965
        %v1987 = vmul.f32 %v1975, %v969
        %v1988 = vmul.f32 %v1976, %v961
        %v1989 = vmul.f32 %v1977, %v965
        %v1990 = vmul.f32 %v1978, %v969
        %v1991 = vmul.f32 %v1979, %v961
        %v1992 = vmul.f32 %v1980, %v965
        %v1993 = vmul.f32 %v1981, %v969
        %1994 = vst [vmem:[%s376] sm:$0xff] %v1982
        %1995 = vst [vmem:[%s376 + $0x8] sm:$0xff] %v1983
        %1996 = vst [vmem:[%s376 + $0x10] sm:$0xff] %v1984
        %1997 = vst [vmem:[%s376 + $0x18] sm:$0xff] %v1985
        %1998 = vst [vmem:[%s376 + $0x20] sm:$0xff] %v1986
        %1999 = vst [vmem:[%s376 + $0x28] sm:$0xff] %v1987
        %2000 = vst [vmem:[%s376 + $0x30] sm:$0xff] %v1988
        %2001 = vst [vmem:[%s376 + $0x38] sm:$0xff] %v1989
        %2002 = vst [vmem:[%s376 + $0x40] sm:$0xff] %v1990
        %2003 = vst [vmem:[%s376 + $0x48] sm:$0xff] %v1991
        %2004 = vst [vmem:[%s376 + $0x50] sm:$0xff] %v1992
        %2005 = vst [vmem:[%s376 + $0x58] sm:$0xff] %v1993
        %s2006 = sand.u32 %s266, 1
        %s2007 = sand.u32 %s266, 1
        %s2008 = smul.addr %s2007, 96
        %s2009 = scalar_lea.vmem [#allocation5], %s2008
        // Predicated region
        $region65: #{forward.3} parent=63 // pred_check
          %p2010 = pneg %p276
        $region66: #{forward.3} parent=63 // pred_check_branch
          %2012 = sbr.rel (%p2010) target = $region68
        $region67: #{forward.3} parent=63 // pred_region
          %s2013 = smul.u32 3, %s22
          %s2014 = smul.addr %s2013, 8
          %s2015 = scalar_lea.vmem %s11, %s2014
          // Predicated region
          $region69: #{forward.3} parent=67 // pred_check
            _
          $region70: #{forward.3} parent=67 // pred_check_branch
            %2017 = sbr.rel (0) target = $region72
          $region71: #{forward.3} parent=67 // pred_region
            // Predicated region
            $region73: #{forward.3} parent=71 // pred_check
              _
            $region74: #{forward.3} parent=71 // pred_check_branch
              %2019 = sbr.rel (0) target = $region76
            $region75: #{forward.3} parent=71 // pred_region
              loop: start=0, step=1, limit=1
              $region77: #{forward.3} parent=75 // loop_pre_header
                _
              $region78: #{forward.3} parent=75 // loop_header
                %s2021 = sphi 0, %s2025
                %p2022 = scmp.ge.s32.totalorder %s2021, 1
                %s2026 = sphi %s2009, %s2009
                %s2027 = sphi %s2015, %s2015
              $region79: #{forward.3} parent=75 // loop_header_branch
                %2024 = sbr.rel (%p2022) target = $region83
              $region80: #{forward.3} parent=75 // loop_body
                %v2028 = vld [vmem:[%s2026] sm:$0xff]
                %2029 = vst [vmem:[%s2027] sm:$0xff] %v2028
                %v2030 = vld [vmem:[%s2026 + $0x8] sm:$0xff]
                %2031 = vst [vmem:[%s2027 + $0x8] sm:$0xff] %v2030
                %v2032 = vld [vmem:[%s2026 + $0x10] sm:$0xff]
                %2033 = vst [vmem:[%s2027 + $0x10] sm:$0xff] %v2032
                %v2034 = vld [vmem:[%s2026 + $0x18] sm:$0xff]
                %2035 = vst [vmem:[%s2027 + $0x30] sm:$0xff] %v2034
                %v2036 = vld [vmem:[%s2026 + $0x20] sm:$0xff]
                %2037 = vst [vmem:[%s2027 + $0x38] sm:$0xff] %v2036
                %v2038 = vld [vmem:[%s2026 + $0x28] sm:$0xff]
                %2039 = vst [vmem:[%s2027 + $0x40] sm:$0xff] %v2038
                %v2040 = vld [vmem:[%s2026 + $0x30] sm:$0xff]
                %2041 = vst [vmem:[%s2027 + $0x60] sm:$0xff] %v2040
                %v2042 = vld [vmem:[%s2026 + $0x38] sm:$0xff]
                %2043 = vst [vmem:[%s2027 + $0x68] sm:$0xff] %v2042
                %v2044 = vld [vmem:[%s2026 + $0x40] sm:$0xff]
                %2045 = vst [vmem:[%s2027 + $0x70] sm:$0xff] %v2044
                %v2046 = vld [vmem:[%s2026 + $0x48] sm:$0xff]
                %2047 = vst [vmem:[%s2027 + $0x90] sm:$0xff] %v2046
                %v2048 = vld [vmem:[%s2026 + $0x50] sm:$0xff]
                %2049 = vst [vmem:[%s2027 + $0x98] sm:$0xff] %v2048
                %v2050 = vld [vmem:[%s2026 + $0x58] sm:$0xff]
                %2051 = vst [vmem:[%s2027 + $0xa0] sm:$0xff] %v2050
              $region81: #{forward.3} parent=75 // loop_footer
                %s2025 = sadd.s32 1, %s2021
              $region82: #{forward.3} parent=75 // loop_footer_branch
                %2020 = sbr.rel target = $region78
              $region83: #{forward.3} parent=75 // loop_exit
                _
            $region76: #{forward.3} parent=71 // pred_fallthru
              _
            // Predicated region
            $region84: #{forward.3} parent=71 // pred_check
              _
            $region85: #{forward.3} parent=71 // pred_check_branch
              %2053 = sbr.rel target = $region87
            $region86: #{forward.3} parent=71 // pred_region
              _
            $region87: #{forward.3} parent=71 // pred_fallthru
              _
          $region72: #{forward.3} parent=67 // pred_fallthru
            _
          %2054 = vnop
        $region68: #{forward.3} parent=63 // pred_fallthru
          _
      $region64: #{forward.3} parent=5 // pred_fallthru
        _
      %p2055 = scmp.le.s32.totalorder 2, %s17
      // Predicated region
      $region88: #{forward.3} parent=5 // pred_check
        %p2056 = pneg %p2055
      $region89: #{forward.3} parent=5 // pred_check_branch
        %2058 = sbr.rel (%p2056) target = $region91
      $region90: #{forward.3} parent=5 // pred_region
        %s2059 = ssub.s32 %s17, 2
        // Predicated region
        $region92: #{forward.3} parent=90 // pred_check
          %p2060 = pneg %p282
        $region93: #{forward.3} parent=90 // pred_check_branch
          %2062 = sbr.rel (%p2060) target = $region95
        $region94: #{forward.3} parent=90 // pred_region
          %s2063 = sand.u32 %s267, 1
          %s2064 = sand.u32 %s267, 1
          %s2065 = smul.addr %s2064, 96
          %s2066 = scalar_lea.vmem [#allocation5], %s2065
        $region95: #{forward.3} parent=90 // pred_fallthru
          _
      $region91: #{forward.3} parent=5 // pred_fallthru
        _
    $region6: #{forward.3} parent=1 // loop_footer
      %s21 = sadd.s32 1, %s17
    $region7: #{forward.3} parent=1 // loop_footer_branch
      %16 = sbr.rel target = $region3
    $region8: #{forward.3} parent=1 // loop_exit
      _

// kernel: forward.4
$region0: #{forward.4}
  #allocation0 [shape = 'u32[]', space=smem, size = 0x4, offset = 0x4, fixed_abs, tag = 'smem constant byte address 0x4 - core index']
  #allocation1 [shape = 'u32[144,128]{1,0:T(1,128)}', space=vmem, size = 0x12000, scoped, tag = 'internal scratch']
  #allocation2 [shape = 'bf16[32,384]{1,0:T(16,128)(2,1)}', space=vmem, size = 0x6000, scoped, tag = 'scratch operand']
  #allocation3 [shape = 'bf16[32,384]{1,0:T(16,128)(2,1)}', space=vmem, size = 0x6000, scoped, tag = 'scratch operand']
  #allocation4 [shape = 'bf16[288,384]{1,0:T(16,128)(2,1)}', space=vmem, size = 0x36000, scoped, tag = 'scratch operand']
  %s0 = inlined_call_operand.vmem [shape: f32[32,768], index: 0, kind: input, shape index: {}]
  %s1 = inlined_call_operand.vmem [shape: bf16[32,288], index: 1, kind: input, shape index: {}]
  %s2 = inlined_call_operand.vmem [shape: f32[32,1], index: 2, kind: input, shape index: {}]
  %s3 = inlined_call_operand.vmem [shape: f32[32,1], index: 3, kind: input, shape index: {}]
  %s4 = inlined_call_operand.vmem [shape: bf16[32,288], index: 4, kind: input, shape index: {}]
  %s5 = inlined_call_operand.vmem [shape: f32[32,1], index: 5, kind: input, shape index: {}]
  %s6 = inlined_call_operand.vmem [shape: f32[32,1], index: 6, kind: input, shape index: {}]
  %s7 = inlined_call_operand.vmem [shape: f32[1,384], index: 7, kind: input, shape index: {}]
  %s8 = inlined_call_operand.vmem [shape: f32[32,768], index: 8, kind: output, shape index: {}]
  %s9 = sld [smem:[#allocation0]]
  $region107: #{forward.4} parent=0
    _
  %s11 = ssub.s32 1, %s9
  %s12 = scalar_select 0, %s11, %s9
  $region1: #{forward.4} parent=0
    #allocation5 [shape = 'u8[98304]{0}', space=vmem, size = 0x18000, scoped, tag = 'input window, operand 0']
    #allocation6 [shape = 'u8[98304]{0}', space=vmem, size = 0x18000, scoped, tag = 'output window, operand 0']
    loop: start=0, step=1, limit=4
    $region2: #{forward.4} parent=1 // loop_pre_header
      _
    $region3: #{forward.4} parent=1 // loop_header
      %s14 = sphi 0, %s18
      %p15 = scmp.ge.s32.totalorder %s14, 4
      %s24 = sphi 0, %s26
      %s27 = sphi 0, %s24
      %s28 = sphi 0, %s27
      %s44 = sphi 0, %s28
      %s48 = sphi 0, %s48
      %s50 = sphi 0, %s48
      %s51 = sphi 0, %s50
      %s65 = sphi 0, %s51
      %s69 = sphi 0, %s69
      %s71 = sphi 0, %s69
      %s72 = sphi 0, %s71
      %s86 = sphi 0, %s72
      %s90 = sphi 0, %s90
      %s92 = sphi 0, %s90
      %s93 = sphi 0, %s92
      %s107 = sphi 0, %s93
      %s111 = sphi 0, %s111
      %s113 = sphi 0, %s111
      %s114 = sphi 0, %s113
      %s128 = sphi 0, %s114
      %s132 = sphi 0, %s132
      %s134 = sphi 0, %s132
      %s135 = sphi 0, %s134
      %s149 = sphi 0, %s135
      %s153 = sphi 0, %s153
      %s155 = sphi 0, %s153
      %s156 = sphi 0, %s155
      %s170 = sphi 0, %s156
      %s174 = sphi 0, %s174
      %s176 = sphi 0, %s174
      %s177 = sphi 0, %s176
      %s191 = sphi 0, %s177
      %s197 = sphi 0, %s199
      %s200 = sphi 0, %s197
      %s201 = sphi 0, %s200
      %s217 = sphi 0, %s201
    $region4: #{forward.4} parent=1 // loop_header_branch
      %17 = sbr.rel (%p15) target = $region8
    $region5: #{forward.4} parent=1 // loop_body
      %s19 = ssub.s32 %s14, 1
      %s20 = ssub.s32 %s14, 2
      %s21 = sadd.s32 %s14, 1
      %s22 = ssub.s32 %s14, %s21
      %p23 = scmp.eq.s32.totalorder %s22, 0
      %s25 = sadd.s32 %s24, 1
      %s26 = scalar_select %p23, %s24, %s25
      %p29 = pneg %p23
      %p30 = scmp.eq.s32.totalorder %s14, 1
      %p31 = por %p29, %p30
      %p32 = scmp.ne.s32.totalorder %s24, %s27
      %p33 = scmp.eq.s32.totalorder %s14, 0
      %p34 = por %p32, %p33
      %p35 = scmp.ne.s32.totalorder %s24, %s27
      %p36 = scmp.eq.s32.totalorder %s19, 1
      %p37 = por %p35, %p36
      %p38 = scmp.ne.s32.totalorder %s27, %s28
      %p39 = scmp.eq.s32.totalorder %s19, 0
      %p40 = por %p38, %p39
      %p41 = scmp.ne.s32.totalorder %s27, %s28
      %p42 = scmp.eq.s32.totalorder %s20, 1
      %p43 = por %p41, %p42
      %p45 = scmp.ne.s32.totalorder %s28, %s44
      %p46 = scmp.eq.s32.totalorder %s20, 0
      %p47 = por %p45, %p46
      %s49 = sadd.s32 %s48, 1
      %p52 = scmp.eq.s32.totalorder %s14, 1
      %p53 = scmp.ne.s32.totalorder %s48, %s50
      %p54 = scmp.eq.s32.totalorder %s14, 0
      %p55 = por %p53, %p54
      %p56 = scmp.ne.s32.totalorder %s48, %s50
      %p57 = scmp.eq.s32.totalorder %s19, 1
      %p58 = por %p56, %p57
      %p59 = scmp.ne.s32.totalorder %s50, %s51
      %p60 = scmp.eq.s32.totalorder %s19, 0
      %p61 = por %p59, %p60
      %p62 = scmp.ne.s32.totalorder %s50, %s51
      %p63 = scmp.eq.s32.totalorder %s20, 1
      %p64 = por %p62, %p63
      %p66 = scmp.ne.s32.totalorder %s51, %s65
      %p67 = scmp.eq.s32.totalorder %s20, 0
      %p68 = por %p66, %p67
      %s70 = sadd.s32 %s69, 1
      %p73 = scmp.eq.s32.totalorder %s14, 1
      %p74 = scmp.ne.s32.totalorder %s69, %s71
      %p75 = scmp.eq.s32.totalorder %s14, 0
      %p76 = por %p74, %p75
      %p77 = scmp.ne.s32.totalorder %s69, %s71
      %p78 = scmp.eq.s32.totalorder %s19, 1
      %p79 = por %p77, %p78
      %p80 = scmp.ne.s32.totalorder %s71, %s72
      %p81 = scmp.eq.s32.totalorder %s19, 0
      %p82 = por %p80, %p81
      %p83 = scmp.ne.s32.totalorder %s71, %s72
      %p84 = scmp.eq.s32.totalorder %s20, 1
      %p85 = por %p83, %p84
      %p87 = scmp.ne.s32.totalorder %s72, %s86
      %p88 = scmp.eq.s32.totalorder %s20, 0
      %p89 = por %p87, %p88
      %s91 = sadd.s32 %s90, 1
      %p94 = scmp.eq.s32.totalorder %s14, 1
      %p95 = scmp.ne.s32.totalorder %s90, %s92
      %p96 = scmp.eq.s32.totalorder %s14, 0
      %p97 = por %p95, %p96
      %p98 = scmp.ne.s32.totalorder %s90, %s92
      %p99 = scmp.eq.s32.totalorder %s19, 1
      %p100 = por %p98, %p99
      %p101 = scmp.ne.s32.totalorder %s92, %s93
      %p102 = scmp.eq.s32.totalorder %s19, 0
      %p103 = por %p101, %p102
      %p104 = scmp.ne.s32.totalorder %s92, %s93
      %p105 = scmp.eq.s32.totalorder %s20, 1
      %p106 = por %p104, %p105
      %p108 = scmp.ne.s32.totalorder %s93, %s107
      %p109 = scmp.eq.s32.totalorder %s20, 0
      %p110 = por %p108, %p109
      %s112 = sadd.s32 %s111, 1
      %p115 = scmp.eq.s32.totalorder %s14, 1
      %p116 = scmp.ne.s32.totalorder %s111, %s113
      %p117 = scmp.eq.s32.totalorder %s14, 0
      %p118 = por %p116, %p117
      %p119 = scmp.ne.s32.totalorder %s111, %s113
      %p120 = scmp.eq.s32.totalorder %s19, 1
      %p121 = por %p119, %p120
      %p122 = scmp.ne.s32.totalorder %s113, %s114
      %p123 = scmp.eq.s32.totalorder %s19, 0
      %p124 = por %p122, %p123
      %p125 = scmp.ne.s32.totalorder %s113, %s114
      %p126 = scmp.eq.s32.totalorder %s20, 1
      %p127 = por %p125, %p126
      %p129 = scmp.ne.s32.totalorder %s114, %s128
      %p130 = scmp.eq.s32.totalorder %s20, 0
      %p131 = por %p129, %p130
      %s133 = sadd.s32 %s132, 1
      %p136 = scmp.eq.s32.totalorder %s14, 1
      %p137 = scmp.ne.s32.totalorder %s132, %s134
      %p138 = scmp.eq.s32.totalorder %s14, 0
      %p139 = por %p137, %p138
      %p140 = scmp.ne.s32.totalorder %s132, %s134
      %p141 = scmp.eq.s32.totalorder %s19, 1
      %p142 = por %p140, %p141
      %p143 = scmp.ne.s32.totalorder %s134, %s135
      %p144 = scmp.eq.s32.totalorder %s19, 0
      %p145 = por %p143, %p144
      %p146 = scmp.ne.s32.totalorder %s134, %s135
      %p147 = scmp.eq.s32.totalorder %s20, 1
      %p148 = por %p146, %p147
      %p150 = scmp.ne.s32.totalorder %s135, %s149
      %p151 = scmp.eq.s32.totalorder %s20, 0
      %p152 = por %p150, %p151
      %s154 = sadd.s32 %s153, 1
      %p157 = scmp.eq.s32.totalorder %s14, 1
      %p158 = scmp.ne.s32.totalorder %s153, %s155
      %p159 = scmp.eq.s32.totalorder %s14, 0
      %p160 = por %p158, %p159
      %p161 = scmp.ne.s32.totalorder %s153, %s155
      %p162 = scmp.eq.s32.totalorder %s19, 1
      %p163 = por %p161, %p162
      %p164 = scmp.ne.s32.totalorder %s155, %s156
      %p165 = scmp.eq.s32.totalorder %s19, 0
      %p166 = por %p164, %p165
      %p167 = scmp.ne.s32.totalorder %s155, %s156
      %p168 = scmp.eq.s32.totalorder %s20, 1
      %p169 = por %p167, %p168
      %p171 = scmp.ne.s32.totalorder %s156, %s170
      %p172 = scmp.eq.s32.totalorder %s20, 0
      %p173 = por %p171, %p172
      %s175 = sadd.s32 %s174, 1
      %p178 = scmp.eq.s32.totalorder %s14, 1
      %p179 = scmp.ne.s32.totalorder %s174, %s176
      %p180 = scmp.eq.s32.totalorder %s14, 0
      %p181 = por %p179, %p180
      %p182 = scmp.ne.s32.totalorder %s174, %s176
      %p183 = scmp.eq.s32.totalorder %s19, 1
      %p184 = por %p182, %p183
      %p185 = scmp.ne.s32.totalorder %s176, %s177
      %p186 = scmp.eq.s32.totalorder %s19, 0
      %p187 = por %p185, %p186
      %p188 = scmp.ne.s32.totalorder %s176, %s177
      %p189 = scmp.eq.s32.totalorder %s20, 1
      %p190 = por %p188, %p189
      %p192 = scmp.ne.s32.totalorder %s177, %s191
      %p193 = scmp.eq.s32.totalorder %s20, 0
      %p194 = por %p192, %p193
      %s195 = ssub.s32 %s14, %s21
      %p196 = scmp.eq.s32.totalorder %s195, 0
      %s198 = sadd.s32 %s197, 1
      %s199 = scalar_select %p196, %s197, %s198
      %p202 = pneg %p196
      %p203 = scmp.eq.s32.totalorder %s14, 1
      %p204 = por %p202, %p203
      %p205 = scmp.ne.s32.totalorder %s197, %s200
      %p206 = scmp.eq.s32.totalorder %s14, 0
      %p207 = por %p205, %p206
      %p208 = scmp.ne.s32.totalorder %s197, %s200
      %p209 = scmp.eq.s32.totalorder %s19, 1
      %p210 = por %p208, %p209
      %p211 = scmp.ne.s32.totalorder %s200, %s201
      %p212 = scmp.eq.s32.totalorder %s19, 0
      %p213 = por %p211, %p212
      %p214 = scmp.ne.s32.totalorder %s200, %s201
      %p215 = scmp.eq.s32.totalorder %s20, 1
      %p216 = por %p214, %p215
      %p218 = scmp.ne.s32.totalorder %s201, %s217
      %p219 = scmp.eq.s32.totalorder %s20, 0
      %p220 = por %p218, %p219
      %p221 = scmp.le.s32.totalorder 1, %s14
      %p222 = scmp.lt.s32.totalorder %s14, 3
      %p223 = pnand %p221, %p222
      %p224 = pneg %p223
      // Predicated region
      $region9: #{forward.4} parent=5 // pred_check
        _
      $region10: #{forward.4} parent=5 // pred_check_branch
        %226 = sbr.rel (%p223) target = $region12
      $region11: #{forward.4} parent=5 // pred_region
        %s227 = ssub.s32 %s14, 1
        // Predicated region
        $region13: #{forward.4} parent=11 // pred_check
          %p228 = pneg %p61
        $region14: #{forward.4} parent=11 // pred_check_branch
          %230 = sbr.rel (%p228) target = $region16
        $region15: #{forward.4} parent=11 // pred_region
          _
        $region16: #{forward.4} parent=11 // pred_fallthru
          _
        // Predicated region
        $region17: #{forward.4} parent=11 // pred_check
          %p231 = pneg %p82
        $region18: #{forward.4} parent=11 // pred_check_branch
          %233 = sbr.rel (%p231) target = $region20
        $region19: #{forward.4} parent=11 // pred_region
          _
        $region20: #{forward.4} parent=11 // pred_fallthru
          _
        // Predicated region
        $region21: #{forward.4} parent=11 // pred_check
          %p234 = pneg %p103
        $region22: #{forward.4} parent=11 // pred_check_branch
          %236 = sbr.rel (%p234) target = $region24
        $region23: #{forward.4} parent=11 // pred_region
          _
        $region24: #{forward.4} parent=11 // pred_fallthru
          _
        // Predicated region
        $region25: #{forward.4} parent=11 // pred_check
          %p237 = pneg %p124
        $region26: #{forward.4} parent=11 // pred_check_branch
          %239 = sbr.rel (%p237) target = $region28
        $region27: #{forward.4} parent=11 // pred_region
          _
        $region28: #{forward.4} parent=11 // pred_fallthru
          _
        // Predicated region
        $region29: #{forward.4} parent=11 // pred_check
          %p240 = pneg %p145
        $region30: #{forward.4} parent=11 // pred_check_branch
          %242 = sbr.rel (%p240) target = $region32
        $region31: #{forward.4} parent=11 // pred_region
          _
        $region32: #{forward.4} parent=11 // pred_fallthru
          _
        // Predicated region
        $region33: #{forward.4} parent=11 // pred_check
          %p243 = pneg %p166
        $region34: #{forward.4} parent=11 // pred_check_branch
          %245 = sbr.rel (%p243) target = $region36
        $region35: #{forward.4} parent=11 // pred_region
          _
        $region36: #{forward.4} parent=11 // pred_fallthru
          _
        // Predicated region
        $region37: #{forward.4} parent=11 // pred_check
          %p246 = pneg %p187
        $region38: #{forward.4} parent=11 // pred_check_branch
          %248 = sbr.rel (%p246) target = $region40
        $region39: #{forward.4} parent=11 // pred_region
          _
        $region40: #{forward.4} parent=11 // pred_fallthru
          _
      $region12: #{forward.4} parent=5 // pred_fallthru
        _
      %p249 = scmp.lt.s32.totalorder %s14, 2
      // Predicated region
      $region41: #{forward.4} parent=5 // pred_check
        %p250 = pneg %p249
      $region42: #{forward.4} parent=5 // pred_check_branch
        %252 = sbr.rel (%p250) target = $region44
      $region43: #{forward.4} parent=5 // pred_region
        // Predicated region
        $region45: #{forward.4} parent=43 // pred_check
          %p253 = pneg %p34
        $region46: #{forward.4} parent=43 // pred_check_branch
          %255 = sbr.rel (%p253) target = $region48
        $region47: #{forward.4} parent=43 // pred_region
          %s256 = sand.u32 %s24, 1
          %s257 = sand.u32 %s24, 1
          %s258 = smul.addr %s257, 96
          %s259 = scalar_lea.vmem [#allocation5], %s258
          %s260 = smul.u32 3, %s14
          %s261 = smul.addr %s260, 8
          %s262 = scalar_lea.vmem %s0, %s261
          // Predicated region
          $region49: #{forward.4} parent=47 // pred_check
            _
          $region50: #{forward.4} parent=47 // pred_check_branch
            %264 = sbr.rel (0) target = $region52
          $region51: #{forward.4} parent=47 // pred_region
            // Predicated region
            $region53: #{forward.4} parent=51 // pred_check
              _
            $region54: #{forward.4} parent=51 // pred_check_branch
              %266 = sbr.rel (0) target = $region56
            $region55: #{forward.4} parent=51 // pred_region
              loop: start=0, step=1, limit=1
              $region57: #{forward.4} parent=55 // loop_pre_header
                _
              $region58: #{forward.4} parent=55 // loop_header
                %s268 = sphi 0, %s272
                %p269 = scmp.ge.s32.totalorder %s268, 1
                %s273 = sphi %s262, %s262
                %s274 = sphi %s259, %s259
              $region59: #{forward.4} parent=55 // loop_header_branch
                %271 = sbr.rel (%p269) target = $region63
              $region60: #{forward.4} parent=55 // loop_body
                %v275 = vld [vmem:[%s273] sm:$0xff]
                %276 = vst [vmem:[%s274] sm:$0xff] %v275
                %v277 = vld [vmem:[%s273 + $0x8] sm:$0xff]
                %278 = vst [vmem:[%s274 + $0x8] sm:$0xff] %v277
                %v279 = vld [vmem:[%s273 + $0x10] sm:$0xff]
                %280 = vst [vmem:[%s274 + $0x10] sm:$0xff] %v279
                %v281 = vld [vmem:[%s273 + $0x30] sm:$0xff]
                %282 = vst [vmem:[%s274 + $0x18] sm:$0xff] %v281
                %v283 = vld [vmem:[%s273 + $0x38] sm:$0xff]
                %284 = vst [vmem:[%s274 + $0x20] sm:$0xff] %v283
                %v285 = vld [vmem:[%s273 + $0x40] sm:$0xff]
                %286 = vst [vmem:[%s274 + $0x28] sm:$0xff] %v285
                %v287 = vld [vmem:[%s273 + $0x60] sm:$0xff]
                %288 = vst [vmem:[%s274 + $0x30] sm:$0xff] %v287
                %v289 = vld [vmem:[%s273 + $0x68] sm:$0xff]
                %290 = vst [vmem:[%s274 + $0x38] sm:$0xff] %v289
                %v291 = vld [vmem:[%s273 + $0x70] sm:$0xff]
                %292 = vst [vmem:[%s274 + $0x40] sm:$0xff] %v291
                %v293 = vld [vmem:[%s273 + $0x90] sm:$0xff]
                %294 = vst [vmem:[%s274 + $0x48] sm:$0xff] %v293
                %v295 = vld [vmem:[%s273 + $0x98] sm:$0xff]
                %296 = vst [vmem:[%s274 + $0x50] sm:$0xff] %v295
                %v297 = vld [vmem:[%s273 + $0xa0] sm:$0xff]
                %298 = vst [vmem:[%s274 + $0x58] sm:$0xff] %v297
              $region61: #{forward.4} parent=55 // loop_footer
                %s272 = sadd.s32 1, %s268
              $region62: #{forward.4} parent=55 // loop_footer_branch
                %267 = sbr.rel target = $region58
              $region63: #{forward.4} parent=55 // loop_exit
                _
            $region56: #{forward.4} parent=51 // pred_fallthru
              _
            // Predicated region
            $region64: #{forward.4} parent=51 // pred_check
              _
            $region65: #{forward.4} parent=51 // pred_check_branch
              %300 = sbr.rel target = $region67
            $region66: #{forward.4} parent=51 // pred_region
              _
            $region67: #{forward.4} parent=51 // pred_fallthru
              _
          $region52: #{forward.4} parent=47 // pred_fallthru
            _
          %301 = vnop
        $region48: #{forward.4} parent=43 // pred_fallthru
          _
      $region44: #{forward.4} parent=5 // pred_fallthru
        _
      %p302 = scmp.le.s32.totalorder 1, %s14
      %p303 = scmp.lt.s32.totalorder %s14, 3
      %p304 = pnand %p302, %p303
      %p305 = pneg %p304
      // Predicated region
      $region68: #{forward.4} parent=5 // pred_check
        _
      $region69: #{forward.4} parent=5 // pred_check_branch
        %307 = sbr.rel (%p304) target = $region71
      $region70: #{forward.4} parent=5 // pred_region
        %s308 = ssub.s32 %s14, 1
        %s309 = sand.u32 %s27, 1
        %s310 = sand.u32 %s27, 1
        %s311 = smul.addr %s310, 96
        %s312 = scalar_lea.vmem [#allocation5], %s311
        // Predicated region
        $region72: #{forward.4} parent=70 // pred_check
          %p313 = pneg %p40
        $region73: #{forward.4} parent=70 // pred_check_branch
          %315 = sbr.rel (%p313) target = $region75
        $region74: #{forward.4} parent=70 // pred_region
          _
        $region75: #{forward.4} parent=70 // pred_fallthru
          _
        %s316 = sand.u32 %s27, 1
        %s317 = sand.u32 %s27, 1
        %s318 = smul.addr %s317, 96
        %s319 = scalar_lea.vmem [#allocation5], %s318
        %p320 = pneg %p40
        %p321 = pneg %p37
        %p322 = pneg %p61
        %p323 = pneg %p58
        %p324 = pneg %p82
        %p325 = pneg %p79
        %p326 = pneg %p103
        %p327 = pneg %p100
        %p328 = pneg %p124
        %p329 = pneg %p121
        %p330 = pneg %p145
        %p331 = pneg %p142
        %p332 = pneg %p166
        %p333 = pneg %p163
        %p334 = pneg %p187
        %p335 = pneg %p184
        %p336 = pneg %p213
        %p337 = pneg %p210
        %s338 = sand.u32 %s200, 1
        %s339 = sand.u32 %s200, 1
        %s340 = smul.addr %s339, 96
        %s341 = scalar_lea.vmem [#allocation6], %s340
        %s342 = smul.u32 3, %s19
        %s343 = smul.u32 3, %s19
        %v345 = vld [vmem:[%s7] sm:$0x7]
        %v346 = vld [vmem:[%s312] sm:$0xff]
        %v347 = vld [vmem:[%s312 + $0x8] sm:$0xff]
        %v348 = vld [vmem:[%s312 + $0x10] sm:$0xff]
        %v349 = vld [vmem:[%s312 + $0x18] sm:$0xff]
        %v350 = vld [vmem:[%s312 + $0x20] sm:$0xff]
        %v351 = vld [vmem:[%s312 + $0x28] sm:$0xff]
        %v352 = vld [vmem:[%s312 + $0x30] sm:$0xff]
        %v353 = vld [vmem:[%s312 + $0x38] sm:$0xff]
        %v354 = vld [vmem:[%s312 + $0x40] sm:$0xff]
        %v355 = vld [vmem:[%s312 + $0x48] sm:$0xff]
        %v356 = vld [vmem:[%s312 + $0x50] sm:$0xff]
        %v357 = vld [vmem:[%s312 + $0x58] sm:$0xff]
        %v358 = vpack.c.bf16 %v349, %v346
        %v359 = vpack.c.bf16 %v350, %v347
        %v360 = vpack.c.bf16 %v351, %v348
        %v361 = vpack.c.bf16 %v355, %v352
        %v362 = vpack.c.bf16 %v356, %v353
        %v363 = vpack.c.bf16 %v357, %v354
        %364 = vst [vmem:[#allocation2] sm:$0xff] %v358
        %365 = vst [vmem:[#allocation2 + $0x8] sm:$0xff] %v359
        %366 = vst [vmem:[#allocation2 + $0x10] sm:$0xff] %v360
        %367 = vst [vmem:[#allocation2 + $0x18] sm:$0xff] %v361
        %368 = vst [vmem:[#allocation2 + $0x20] sm:$0xff] %v362
        %369 = vst [vmem:[#allocation2 + $0x28] sm:$0xff] %v363
        %vm370 = vcmask 154624
        %371 = vst.msk [vmem:[#allocation4] sm:$0xff] %vm370, 0
        %372 = vst.msk [vmem:[#allocation4 + $0x18] sm:$0xff] %vm370, 0
        %v373 = vld [vmem:[#allocation2] sm:$0xff]
        %v374 = vld [vmem:[#allocation2 + $0x8] sm:$0xff]
        %v375 = vld [vmem:[#allocation2 + $0x10] sm:$0xff]
        %v376 = vld [vmem:[#allocation2 + $0x18] sm:$0xff]
        %v377 = vld [vmem:[#allocation2 + $0x20] sm:$0xff]
        %v378 = vld [vmem:[#allocation2 + $0x28] sm:$0xff]
        %385 = vrot.lane.b32.xlu0 %v373, 19
        %v386 = vpop.permute.xlu0 %385
        %387 = vrot.lane.b32.xlu0 %v374, 19
        %v388 = vpop.permute.xlu0 %387
        %389 = vrot.lane.b32.xlu0 %v375, 19
        %v390 = vpop.permute.xlu0 %389
        %391 = vrot.lane.b32.xlu0 %v376, 19
        %v392 = vpop.permute.xlu0 %391
        %393 = vrot.lane.b32.xlu0 %v377, 19
        %v394 = vpop.permute.xlu0 %393
        %395 = vrot.lane.b32.xlu0 %v378, 19
        %v396 = vpop.permute.xlu0 %395
        %vm397 = vcmask 154624
        %v398 = vsel %vm397, %v386, %v388
        %v399 = vsel %vm397, %v388, %v390
        %v400 = vsel %vm397, %v392, %v394
        %v401 = vsel %vm397, %v394, %v396
        %vm408 = vcmask 1047704
        %409 = vst.msk [vmem:[#allocation4] sm:$0xff] %vm408, %v386
        %410 = vst [vmem:[#allocation4 + $0x8] sm:$0xff] %v398
        %411 = vst [vmem:[#allocation4 + $0x10] sm:$0xff] %v399
        %412 = vst.msk [vmem:[#allocation4 + $0x18] sm:$0xff] %vm408, %v392
        %413 = vst [vmem:[#allocation4 + $0x20] sm:$0xff] %v400
        %414 = vst [vmem:[#allocation4 + $0x28] sm:$0xff] %v401
        %vm415 = vcmask 146432
        %416 = vst.msk [vmem:[#allocation4 + $0x30] sm:$0xff] %vm415, 0
        %417 = vst.msk [vmem:[#allocation4 + $0x48] sm:$0xff] %vm415, 0
        %v418 = vld [vmem:[#allocation2] sm:$0xff]
        %v419 = vld [vmem:[#allocation2 + $0x8] sm:$0xff]
        %v420 = vld [vmem:[#allocation2 + $0x10] sm:$0xff]
        %v421 = vld [vmem:[#allocation2 + $0x18] sm:$0xff]
        %v422 = vld [vmem:[#allocation2 + $0x20] sm:$0xff]
        %v423 = vld [vmem:[#allocation2 + $0x28] sm:$0xff]
        %430 = vrot.lane.b32.xlu0 %v418, 18
        %v431 = vpop.permute.xlu0 %430
        %432 = vrot.lane.b32.xlu0 %v419, 18
        %v433 = vpop.permute.xlu0 %432
        %434 = vrot.lane.b32.xlu0 %v420, 18
        %v435 = vpop.permute.xlu0 %434
        %436 = vrot.lane.b32.xlu0 %v421, 18
        %v437 = vpop.permute.xlu0 %436
        %438 = vrot.lane.b32.xlu0 %v422, 18
        %v439 = vpop.permute.xlu0 %438
        %440 = vrot.lane.b32.xlu0 %v423, 18
        %v441 = vpop.permute.xlu0 %440
        %vm442 = vcmask 146432
        %v443 = vsel %vm442, %v431, %v433
        %v444 = vsel %vm442, %v433, %v435
        %v445 = vsel %vm442, %v437, %v439
        %v446 = vsel %vm442, %v439, %v441
        %vm453 = vcmask 1047696
        %454 = vst.msk [vmem:[#allocation4 + $0x30] sm:$0xff] %vm453, %v431
        %455 = vst [vmem:[#allocation4 + $0x38] sm:$0xff] %v443
        %456 = vst [vmem:[#allocation4 + $0x40] sm:$0xff] %v444
        %457 = vst.msk [vmem:[#allocation4 + $0x48] sm:$0xff] %vm453, %v437
        %458 = vst [vmem:[#allocation4 + $0x50] sm:$0xff] %v445
        %459 = vst [vmem:[#allocation4 + $0x58] sm:$0xff] %v446
        %vm460 = vcmask 138240
        %461 = vst.msk [vmem:[#allocation4 + $0x60] sm:$0xff] %vm460, 0
        %462 = vst.msk [vmem:[#allocation4 + $0x78] sm:$0xff] %vm460, 0
        %v463 = vld [vmem:[#allocation2] sm:$0xff]
        %v464 = vld [vmem:[#allocation2 + $0x8] sm:$0xff]
        %v465 = vld [vmem:[#allocation2 + $0x10] sm:$0xff]
        %v466 = vld [vmem:[#allocation2 + $0x18] sm:$0xff]
        %v467 = vld [vmem:[#allocation2 + $0x20] sm:$0xff]
        %v468 = vld [vmem:[#allocation2 + $0x28] sm:$0xff]
        %475 = vrot.lane.b32.xlu0 %v463, 17
        %v476 = vpop.permute.xlu0 %475
        %477 = vrot.lane.b32.xlu0 %v464, 17
        %v478 = vpop.permute.xlu0 %477
        %479 = vrot.lane.b32.xlu0 %v465, 17
        %v480 = vpop.permute.xlu0 %479
        %481 = vrot.lane.b32.xlu0 %v466, 17
        %v482 = vpop.permute.xlu0 %481
        %483 = vrot.lane.b32.xlu0 %v467, 17
        %v484 = vpop.permute.xlu0 %483
        %485 = vrot.lane.b32.xlu0 %v468, 17
        %v486 = vpop.permute.xlu0 %485
        %vm487 = vcmask 138240
        %v488 = vsel %vm487, %v476, %v478
        %v489 = vsel %vm487, %v478, %v480
        %v490 = vsel %vm487, %v482, %v484
        %v491 = vsel %vm487, %v484, %v486
        %vm498 = vcmask 1047688
        %499 = vst.msk [vmem:[#allocation4 + $0x60] sm:$0xff] %vm498, %v476
        %500 = vst [vmem:[#allocation4 + $0x68] sm:$0xff] %v488
        %501 = vst [vmem:[#allocation4 + $0x70] sm:$0xff] %v489
        %502 = vst.msk [vmem:[#allocation4 + $0x78] sm:$0xff] %vm498, %v482
        %503 = vst [vmem:[#allocation4 + $0x80] sm:$0xff] %v490
        %504 = vst [vmem:[#allocation4 + $0x88] sm:$0xff] %v491
        %vm505 = vcmask 7168
        %506 = vst.msk [vmem:[#allocation4 + $0x90] sm:$0xff] %vm505, 0
        %507 = vst.msk [vmem:[#allocation4 + $0xa8] sm:$0xff] %vm505, 0
        %v508 = vld [vmem:[#allocation2] sm:$0xff]
        %v509 = vld [vmem:[#allocation2 + $0x8] sm:$0xff]
        %v510 = vld [vmem:[#allocation2 + $0x10] sm:$0xff]
        %v511 = vld [vmem:[#allocation2 + $0x18] sm:$0xff]
        %v512 = vld [vmem:[#allocation2 + $0x20] sm:$0xff]
        %v513 = vld [vmem:[#allocation2 + $0x28] sm:$0xff]
        %520 = vrot.lane.b32.xlu0 %v508, 1
        %v521 = vpop.permute.xlu0 %520
        %522 = vrot.lane.b32.xlu0 %v509, 1
        %v523 = vpop.permute.xlu0 %522
        %524 = vrot.lane.b32.xlu0 %v510, 1
        %v525 = vpop.permute.xlu0 %524
        %526 = vrot.lane.b32.xlu0 %v511, 1
        %v527 = vpop.permute.xlu0 %526
        %528 = vrot.lane.b32.xlu0 %v512, 1
        %v529 = vpop.permute.xlu0 %528
        %530 = vrot.lane.b32.xlu0 %v513, 1
        %v531 = vpop.permute.xlu0 %530
        %vm532 = vcmask 7168
        %v533 = vsel %vm532, %v521, %v523
        %v534 = vsel %vm532, %v523, %v525
        %v535 = vsel %vm532, %v527, %v529
        %v536 = vsel %vm532, %v529, %v531
        %vm543 = vcmask 1047560
        %544 = vst.msk [vmem:[#allocation4 + $0x90] sm:$0xff] %vm543, %v521
        %545 = vst [vmem:[#allocation4 + $0x98] sm:$0xff] %v533
        %546 = vst [vmem:[#allocation4 + $0xa0] sm:$0xff] %v534
        %547 = vst.msk [vmem:[#allocation4 + $0xa8] sm:$0xff] %vm543, %v527
        %548 = vst [vmem:[#allocation4 + $0xb0] sm:$0xff] %v535
        %549 = vst [vmem:[#allocation4 + $0xb8] sm:$0xff] %v536
        %v550 = vld [vmem:[#allocation2] sm:$0xff]
        %v551 = vld [vmem:[#allocation2 + $0x8] sm:$0xff]
        %v552 = vld [vmem:[#allocation2 + $0x10] sm:$0xff]
        %v553 = vld [vmem:[#allocation2 + $0x18] sm:$0xff]
        %v554 = vld [vmem:[#allocation2 + $0x20] sm:$0xff]
        %v555 = vld [vmem:[#allocation2 + $0x28] sm:$0xff]
        %556 = vst [vmem:[#allocation4 + $0xc0] sm:$0xff] %v550
        %557 = vst [vmem:[#allocation4 + $0xc8] sm:$0xff] %v551
        %558 = vst [vmem:[#allocation4 + $0xd0] sm:$0xff] %v552
        %559 = vst [vmem:[#allocation4 + $0xd8] sm:$0xff] %v553
        %560 = vst [vmem:[#allocation4 + $0xe0] sm:$0xff] %v554
        %561 = vst [vmem:[#allocation4 + $0xe8] sm:$0xff] %v555
        %vm562 = vcmask 1048568
        %563 = vst.msk [vmem:[#allocation4 + $0x100] sm:$0xff] %vm562, 0
        %564 = vst.msk [vmem:[#allocation4 + $0x118] sm:$0xff] %vm562, 0
        %v565 = vld [vmem:[#allocation2] sm:$0xff]
        %v566 = vld [vmem:[#allocation2 + $0x8] sm:$0xff]
        %v567 = vld [vmem:[#allocation2 + $0x10] sm:$0xff]
        %v568 = vld [vmem:[#allocation2 + $0x18] sm:$0xff]
        %v569 = vld [vmem:[#allocation2 + $0x20] sm:$0xff]
        %v570 = vld [vmem:[#allocation2 + $0x28] sm:$0xff]
        %577 = vrot.lane.b32.xlu0 %v565, 127
        %v578 = vpop.permute.xlu0 %577
        %579 = vrot.lane.b32.xlu0 %v566, 127
        %v580 = vpop.permute.xlu0 %579
        %581 = vrot.lane.b32.xlu0 %v567, 127
        %v582 = vpop.permute.xlu0 %581
        %583 = vrot.lane.b32.xlu0 %v568, 127
        %v584 = vpop.permute.xlu0 %583
        %585 = vrot.lane.b32.xlu0 %v569, 127
        %v586 = vpop.permute.xlu0 %585
        %587 = vrot.lane.b32.xlu0 %v570, 127
        %v588 = vpop.permute.xlu0 %587
        %vm589 = vcmask 1039360
        %v590 = vsel %vm589, %v578, %v580
        %v591 = vsel %vm589, %v580, %v582
        %v592 = vsel %vm589, %v584, %v586
        %v593 = vsel %vm589, %v586, %v588
        %600 = vst [vmem:[#allocation4 + $0xf0] sm:$0xff] %v590
        %601 = vst [vmem:[#allocation4 + $0xf8] sm:$0xff] %v591
        %vm602 = vcmask 1039360
        %603 = vst.msk [vmem:[#allocation4 + $0x100] sm:$0xff] %vm602, %v582
        %604 = vst [vmem:[#allocation4 + $0x108] sm:$0xff] %v592
        %605 = vst [vmem:[#allocation4 + $0x110] sm:$0xff] %v593
        %606 = vst.msk [vmem:[#allocation4 + $0x118] sm:$0xff] %vm602, %v588
        %vm607 = vcmask 1048440
        %608 = vst.msk [vmem:[#allocation4 + $0x130] sm:$0xff] %vm607, 0
        %609 = vst.msk [vmem:[#allocation4 + $0x148] sm:$0xff] %vm607, 0
        %v610 = vld [vmem:[#allocation2] sm:$0xff]
        %v611 = vld [vmem:[#allocation2 + $0x8] sm:$0xff]
        %v612 = vld [vmem:[#allocation2 + $0x10] sm:$0xff]
        %v613 = vld [vmem:[#allocation2 + $0x18] sm:$0xff]
        %v614 = vld [vmem:[#allocation2 + $0x20] sm:$0xff]
        %v615 = vld [vmem:[#allocation2 + $0x28] sm:$0xff]
        %622 = vrot.lane.b32.xlu0 %v610, 111
        %v623 = vpop.permute.xlu0 %622
        %624 = vrot.lane.b32.xlu0 %v611, 111
        %v625 = vpop.permute.xlu0 %624
        %626 = vrot.lane.b32.xlu0 %v612, 111
        %v627 = vpop.permute.xlu0 %626
        %628 = vrot.lane.b32.xlu0 %v613, 111
        %v629 = vpop.permute.xlu0 %628
        %630 = vrot.lane.b32.xlu0 %v614, 111
        %v631 = vpop.permute.xlu0 %630
        %632 = vrot.lane.b32.xlu0 %v615, 111
        %v633 = vpop.permute.xlu0 %632
        %vm634 = vcmask 908288
        %v635 = vsel %vm634, %v623, %v625
        %v636 = vsel %vm634, %v625, %v627
        %v637 = vsel %vm634, %v629, %v631
        %v638 = vsel %vm634, %v631, %v633
        %645 = vst [vmem:[#allocation4 + $0x120] sm:$0xff] %v635
        %646 = vst [vmem:[#allocation4 + $0x128] sm:$0xff] %v636
        %vm647 = vcmask 908288
        %648 = vst.msk [vmem:[#allocation4 + $0x130] sm:$0xff] %vm647, %v627
        %649 = vst [vmem:[#allocation4 + $0x138] sm:$0xff] %v637
        %650 = vst [vmem:[#allocation4 + $0x140] sm:$0xff] %v638
        %651 = vst.msk [vmem:[#allocation4 + $0x148] sm:$0xff] %vm647, %v633
        %vm652 = vcmask 1048432
        %653 = vst.msk [vmem:[#allocation4 + $0x160] sm:$0xff] %vm652, 0
        %654 = vst.msk [vmem:[#allocation4 + $0x178] sm:$0xff] %vm652, 0
        %v655 = vld [vmem:[#allocation2] sm:$0xff]
        %v656 = vld [vmem:[#allocation2 + $0x8] sm:$0xff]
        %v657 = vld [vmem:[#allocation2 + $0x10] sm:$0xff]
        %v658 = vld [vmem:[#allocation2 + $0x18] sm:$0xff]
        %v659 = vld [vmem:[#allocation2 + $0x20] sm:$0xff]
        %v660 = vld [vmem:[#allocation2 + $0x28] sm:$0xff]
        %667 = vrot.lane.b32.xlu0 %v655, 110
        %v668 = vpop.permute.xlu0 %667
        %669 = vrot.lane.b32.xlu0 %v656, 110
        %v670 = vpop.permute.xlu0 %669
        %671 = vrot.lane.b32.xlu0 %v657, 110
        %v672 = vpop.permute.xlu0 %671
        %673 = vrot.lane.b32.xlu0 %v658, 110
        %v674 = vpop.permute.xlu0 %673
        %675 = vrot.lane.b32.xlu0 %v659, 110
        %v676 = vpop.permute.xlu0 %675
        %677 = vrot.lane.b32.xlu0 %v660, 110
        %v678 = vpop.permute.xlu0 %677
        %vm679 = vcmask 900096
        %v680 = vsel %vm679, %v668, %v670
        %v681 = vsel %vm679, %v670, %v672
        %v682 = vsel %vm679, %v674, %v676
        %v683 = vsel %vm679, %v676, %v678
        %690 = vst [vmem:[#allocation4 + $0x150] sm:$0xff] %v680
        %691 = vst [vmem:[#allocation4 + $0x158] sm:$0xff] %v681
        %vm692 = vcmask 900096
        %693 = vst.msk [vmem:[#allocation4 + $0x160] sm:$0xff] %vm692, %v672
        %694 = vst [vmem:[#allocation4 + $0x168] sm:$0xff] %v682
        %695 = vst [vmem:[#allocation4 + $0x170] sm:$0xff] %v683
        %696 = vst.msk [vmem:[#allocation4 + $0x178] sm:$0xff] %vm692, %v678
        %vm697 = vcmask 1048424
        %698 = vst.msk [vmem:[#allocation4 + $0x190] sm:$0xff] %vm697, 0
        %699 = vst.msk [vmem:[#allocation4 + $0x1a8] sm:$0xff] %vm697, 0
        %v700 = vld [vmem:[#allocation2] sm:$0xff]
        %v701 = vld [vmem:[#allocation2 + $0x8] sm:$0xff]
        %v702 = vld [vmem:[#allocation2 + $0x10] sm:$0xff]
        %v703 = vld [vmem:[#allocation2 + $0x18] sm:$0xff]
        %v704 = vld [vmem:[#allocation2 + $0x20] sm:$0xff]
        %v705 = vld [vmem:[#allocation2 + $0x28] sm:$0xff]
        %712 = vrot.lane.b32.xlu0 %v700, 109
        %v713 = vpop.permute.xlu0 %712
        %714 = vrot.lane.b32.xlu0 %v701, 109
        %v715 = vpop.permute.xlu0 %714
        %716 = vrot.lane.b32.xlu0 %v702, 109
        %v717 = vpop.permute.xlu0 %716
        %718 = vrot.lane.b32.xlu0 %v703, 109
        %v719 = vpop.permute.xlu0 %718
        %720 = vrot.lane.b32.xlu0 %v704, 109
        %v721 = vpop.permute.xlu0 %720
        %722 = vrot.lane.b32.xlu0 %v705, 109
        %v723 = vpop.permute.xlu0 %722
        %vm724 = vcmask 891904
        %v725 = vsel %vm724, %v713, %v715
        %v726 = vsel %vm724, %v715, %v717
        %v727 = vsel %vm724, %v719, %v721
        %v728 = vsel %vm724, %v721, %v723
        %735 = vst [vmem:[#allocation4 + $0x180] sm:$0xff] %v725
        %736 = vst [vmem:[#allocation4 + $0x188] sm:$0xff] %v726
        %vm737 = vcmask 891904
        %738 = vst.msk [vmem:[#allocation4 + $0x190] sm:$0xff] %vm737, %v717
        %739 = vst [vmem:[#allocation4 + $0x198] sm:$0xff] %v727
        %740 = vst [vmem:[#allocation4 + $0x1a0] sm:$0xff] %v728
        %741 = vst.msk [vmem:[#allocation4 + $0x1a8] sm:$0xff] %vm737, %v723
        %v742 = vld [vmem:[%s1] sm:$0xff]
        %v743 = vld [vmem:[%s1 + $0x8] sm:$0xf]
        %v744 = vld [vmem:[%s1 + $0xc] sm:$0xff]
        %v745 = vld [vmem:[%s1 + $0x14] sm:$0xf]
        %v746 = vld [vmem:[%s1 + $0x18] sm:$0xff]
        %v747 = vld [vmem:[%s1 + $0x20] sm:$0xf]
        %v748 = vld [vmem:[%s1 + $0x24] sm:$0xff]
        %v749 = vld [vmem:[%s1 + $0x2c] sm:$0xf]
        %v750 = vld [vmem:[#allocation4] sm:$0xff]
        %v751 = vld [vmem:[#allocation4 + $0x8] sm:$0xff]
        %v752 = vld [vmem:[#allocation4 + $0x10] sm:$0xff]
        %v753 = vld [vmem:[#allocation4 + $0x18] sm:$0xff]
        %v754 = vld [vmem:[#allocation4 + $0x20] sm:$0xff]
        %v755 = vld [vmem:[#allocation4 + $0x28] sm:$0xff]
        %v756 = vld [vmem:[#allocation4 + $0x30] sm:$0xff]
        %v757 = vld [vmem:[#allocation4 + $0x38] sm:$0xff]
        %v758 = vld [vmem:[#allocation4 + $0x40] sm:$0xff]
        %v759 = vld [vmem:[#allocation4 + $0x48] sm:$0xff]
        %v760 = vld [vmem:[#allocation4 + $0x50] sm:$0xff]
        %v761 = vld [vmem:[#allocation4 + $0x58] sm:$0xff]
        %v762 = vld [vmem:[#allocation4 + $0x60] sm:$0xff]
        %v763 = vld [vmem:[#allocation4 + $0x68] sm:$0xff]
        %v764 = vld [vmem:[#allocation4 + $0x70] sm:$0xff]
        %v765 = vld [vmem:[#allocation4 + $0x78] sm:$0xff]
        %v766 = vld [vmem:[#allocation4 + $0x80] sm:$0xff]
        %v767 = vld [vmem:[#allocation4 + $0x88] sm:$0xff]
        %v768 = vld [vmem:[#allocation4 + $0x90] sm:$0xff]
        %v769 = vld [vmem:[#allocation4 + $0x98] sm:$0xff]
        %v770 = vld [vmem:[#allocation4 + $0xa0] sm:$0xff]
        %v771 = vld [vmem:[#allocation4 + $0xa8] sm:$0xff]
        %v772 = vld [vmem:[#allocation4 + $0xb0] sm:$0xff]
        %v773 = vld [vmem:[#allocation4 + $0xb8] sm:$0xff]
        %v774 = vld [vmem:[#allocation4 + $0xc0] sm:$0xff]
        %v775 = vld [vmem:[#allocation4 + $0xc8] sm:$0xff]
        %v776 = vld [vmem:[#allocation4 + $0xd0] sm:$0xff]
        %v777 = vld [vmem:[#allocation4 + $0xd8] sm:$0xff]
        %v778 = vld [vmem:[#allocation4 + $0xe0] sm:$0xff]
        %v779 = vld [vmem:[#allocation4 + $0xe8] sm:$0xff]
        %v780 = vld [vmem:[#allocation4 + $0xf0] sm:$0xff]
        %v781 = vld [vmem:[#allocation4 + $0xf8] sm:$0xff]
        %v782 = vld [vmem:[#allocation4 + $0x100] sm:$0xff]
        %v783 = vld [vmem:[#allocation4 + $0x108] sm:$0xff]
        %v784 = vld [vmem:[#allocation4 + $0x110] sm:$0xff]
        %v785 = vld [vmem:[#allocation4 + $0x118] sm:$0xff]
        %v786 = vld [vmem:[#allocation4 + $0x120] sm:$0xff]
        %v787 = vld [vmem:[#allocation4 + $0x128] sm:$0xff]
        %v788 = vld [vmem:[#allocation4 + $0x130] sm:$0xff]
        %v789 = vld [vmem:[#allocation4 + $0x138] sm:$0xff]
        %v790 = vld [vmem:[#allocation4 + $0x140] sm:$0xff]
        %v791 = vld [vmem:[#allocation4 + $0x148] sm:$0xff]
        %v792 = vld [vmem:[#allocation4 + $0x150] sm:$0xff]
        %v793 = vld [vmem:[#allocation4 + $0x158] sm:$0xff]
        %v794 = vld [vmem:[#allocation4 + $0x160] sm:$0xff]
        %v795 = vld [vmem:[#allocation4 + $0x168] sm:$0xff]
        %v796 = vld [vmem:[#allocation4 + $0x170] sm:$0xff]
        %v797 = vld [vmem:[#allocation4 + $0x178] sm:$0xff]
        %v798 = vld [vmem:[#allocation4 + $0x180] sm:$0xff]
        %v799 = vld [vmem:[#allocation4 + $0x188] sm:$0xff]
        %v800 = vld [vmem:[#allocation4 + $0x190] sm:$0xff]
        %v801 = vld [vmem:[#allocation4 + $0x198] sm:$0xff]
        %v802 = vld [vmem:[#allocation4 + $0x1a0] sm:$0xff]
        %v803 = vld [vmem:[#allocation4 + $0x1a8] sm:$0xff]
        %v812 = vunpack.c.l.b16 %v742
        %v813 = vunpack.c.h.b16 %v742
        %v814 = vunpack.c.l.b16 %v743
        %v815 = vunpack.c.l.b16 %v744
        %v816 = vunpack.c.h.b16 %v744
        %v817 = vunpack.c.l.b16 %v745
        %v818 = vunpack.c.l.b16 %v746
        %v819 = vunpack.c.h.b16 %v746
        %v820 = vunpack.c.l.b16 %v747
        %v821 = vunpack.c.l.b16 %v748
        %v822 = vunpack.c.h.b16 %v748
        %v823 = vunpack.c.l.b16 %v749
        %v824 = vpack.c.b16 %v815, %v812
        %v825 = vpack.c.b16 %v816, %v813
        %v826 = vpack.c.b16 %v817, %v814
        %v827 = vpack.c.b16 %v821, %v818
        %v828 = vpack.c.b16 %v822, %v819
        %v829 = vpack.c.b16 %v823, %v820
        %vm834 = vcmask 261120
        %v836 = vsel %vm834, %v826, 0
        %v839 = vsel %vm834, %v829, 0
        %841 = vmatprep.subr.bf16.mxu0 %v751
        %842 = vmatpush1.bf16.msra.mxu0 %v750
        %843 = vmatprep.subr.bf16.mxu0 %v754
        %844 = vmatpush1.bf16.msra.mxu0 %v753
        %845 = vmatprep.subr.bf16.mxu0 %v757
        %846 = vmatpush1.bf16.msra.mxu0 %v756
        %847 = vmatprep.subr.bf16.mxu0 %v760
        %848 = vmatpush1.bf16.msra.mxu0 %v759
        %849 = vmatprep.subr.bf16.mxu0 %v763
        %850 = vmatpush1.bf16.msra.mxu0 %v762
        %851 = vmatprep.subr.bf16.mxu0 %v766
        %852 = vmatpush1.bf16.msra.mxu0 %v765
        %853 = vmatprep.subr.bf16.mxu0 %v769
        %854 = vmatpush1.bf16.msra.mxu0 %v768
        %855 = vmatprep.subr.bf16.mxu0 %v772
        %856 = vmatpush1.bf16.msra.mxu0 %v771
        %857 = vmatprep.subr.bf16.mxu0 %v775
        %858 = vmatpush1.bf16.msra.mxu0 %v774
        %859 = vmatprep.subr.bf16.mxu0 %v778
        %860 = vmatpush1.bf16.msra.mxu0 %v777
        %861 = vmatprep.subr.bf16.mxu0 %v781
        %862 = vmatpush1.bf16.msra.mxu0 %v780
        %863 = vmatprep.subr.bf16.mxu0 %v784
        %864 = vmatpush1.bf16.msra.mxu0 %v783
        %865 = vmatprep.subr.bf16.mxu0 %v787
        %866 = vmatpush1.bf16.msra.mxu0 %v786
        %867 = vmatprep.subr.bf16.mxu0 %v790
        %868 = vmatpush1.bf16.msra.mxu0 %v789
        %869 = vmatprep.subr.bf16.mxu0 %v793
        %870 = vmatpush1.bf16.msra.mxu0 %v792
        %871 = vmatprep.subr.bf16.mxu0 %v796
        %872 = vmatpush1.bf16.msra.mxu0 %v795
        %873 = vmatprep.mubr.bf16.mxu0 %v825
        %874 = vmatmul.mubr.bf16.gmra.mrb[0].mxu0 %v824
        %v875 = vpop.f32.mrb[0].mxu0
        %v876 = vadd.f32 0.0, %v875
        %v877 = vpop.f32.mrb[0].mxu0
        %v878 = vadd.f32 0.0, %v877
        %v879 = vpop.f32.mrb[0].mxu0
        %v880 = vadd.f32 0.0, %v879
        %v881 = vpop.f32.mrb[0].mxu0
        %v882 = vadd.f32 0.0, %v881
        %883 = vmatprep.mubr.bf16.mxu0 %v828
        %884 = vmatmul.mubr.bf16.gmra.mrb[0].mxu0 %v827
        %v885 = vpop.f32.mrb[0].mxu0
        %v886 = vadd.f32 0.0, %v885
        %v887 = vpop.f32.mrb[0].mxu0
        %v888 = vadd.f32 0.0, %v887
        %v889 = vpop.f32.mrb[0].mxu0
        %v890 = vadd.f32 0.0, %v889
        %v891 = vpop.f32.mrb[0].mxu0
        %v892 = vadd.f32 0.0, %v891
        %893 = vdwg.mxu0
        %894 = vmatprep.subr.bf16.mxu0 %v799
        %895 = vmatpush1.bf16.msra.mxu0 %v798
        %896 = vmatprep.subr.bf16.mxu0 %v802
        %897 = vmatpush1.bf16.msra.mxu0 %v801
        %898 = vmatprep.subr.bf16.mxu0 0
        %899 = vmatpush1.bf16.msra.mxu0 0
        %900 = vmatprep.subr.bf16.mxu0 0
        %901 = vmatpush1.bf16.msra.mxu0 0
        %902 = vmatprep.subr.bf16.mxu0 0
        %903 = vmatpush1.bf16.msra.mxu0 0
        %904 = vmatprep.subr.bf16.mxu0 0
        %905 = vmatpush1.bf16.msra.mxu0 0
        %906 = vmatprep.subr.bf16.mxu0 0
        %907 = vmatpush1.bf16.msra.mxu0 0
        %908 = vmatprep.subr.bf16.mxu0 0
        %909 = vmatpush1.bf16.msra.mxu0 0
        %910 = vmatprep.subr.bf16.mxu0 0
        %911 = vmatpush1.bf16.msra.mxu0 0
        %912 = vmatprep.subr.bf16.mxu0 0
        %913 = vmatpush1.bf16.msra.mxu0 0
        %914 = vmatprep.subr.bf16.mxu0 0
        %915 = vmatpush1.bf16.msra.mxu0 0
        %916 = vmatprep.subr.bf16.mxu0 0
        %917 = vmatpush1.bf16.msra.mxu0 0
        %918 = vmatprep.subr.bf16.mxu0 0
        %919 = vmatpush1.bf16.msra.mxu0 0
        %920 = vmatprep.subr.bf16.mxu0 0
        %921 = vmatpush1.bf16.msra.mxu0 0
        %922 = vmatprep.subr.bf16.mxu0 0
        %923 = vmatpush1.bf16.msra.mxu0 0
        %924 = vmatprep.subr.bf16.mxu0 0
        %925 = vmatpush1.bf16.msra.mxu0 0
        %926 = vmatprep.mubr.bf16.mxu0 0
        %927 = vmatmul.mubr.bf16.gmra.mrb[0].mxu0 %v836
        %v928 = vpop.f32.mrb[0].mxu0
        %v929 = vadd.f32 %v876, %v928
        %v930 = vpop.f32.mrb[0].mxu0
        %v931 = vadd.f32 %v878, %v930
        %v932 = vpop.f32.mrb[0].mxu0
        %v933 = vadd.f32 %v880, %v932
        %v934 = vpop.f32.mrb[0].mxu0
        %v935 = vadd.f32 %v882, %v934
        %936 = vmatprep.mubr.bf16.mxu0 0
        %937 = vmatmul.mubr.bf16.gmra.mrb[0].mxu0 %v839
        %v938 = vpop.f32.mrb[0].mxu0
        %v939 = vadd.f32 %v886, %v938
        %v940 = vpop.f32.mrb[0].mxu0
        %v941 = vadd.f32 %v888, %v940
        %v942 = vpop.f32.mrb[0].mxu0
        %v943 = vadd.f32 %v890, %v942
        %v944 = vpop.f32.mrb[0].mxu0
        %v945 = vadd.f32 %v892, %v944
        %946 = vdwg.mxu0
        %947 = vmatprep.subr.bf16.mxu0 0
        %948 = vmatpush1.bf16.msra.mxu0 %v752
        %949 = vmatprep.subr.bf16.mxu0 0
        %950 = vmatpush1.bf16.msra.mxu0 %v755
        %951 = vmatprep.subr.bf16.mxu0 0
        %952 = vmatpush1.bf16.msra.mxu0 %v758
        %953 = vmatprep.subr.bf16.mxu0 0
        %954 = vmatpush1.bf16.msra.mxu0 %v761
        %955 = vmatprep.subr.bf16.mxu0 0
        %956 = vmatpush1.bf16.msra.mxu0 %v764
        %957 = vmatprep.subr.bf16.mxu0 0
        %958 = vmatpush1.bf16.msra.mxu0 %v767
        %959 = vmatprep.subr.bf16.mxu0 0
        %960 = vmatpush1.bf16.msra.mxu0 %v770
        %961 = vmatprep.subr.bf16.mxu0 0
        %962 = vmatpush1.bf16.msra.mxu0 %v773
        %963 = vmatprep.subr.bf16.mxu0 0
        %964 = vmatpush1.bf16.msra.mxu0 %v776
        %965 = vmatprep.subr.bf16.mxu0 0
        %966 = vmatpush1.bf16.msra.mxu0 %v779
        %967 = vmatprep.subr.bf16.mxu0 0
        %968 = vmatpush1.bf16.msra.mxu0 %v782
        %969 = vmatprep.subr.bf16.mxu0 0
        %970 = vmatpush1.bf16.msra.mxu0 %v785
        %971 = vmatprep.subr.bf16.mxu0 0
        %972 = vmatpush1.bf16.msra.mxu0 %v788
        %973 = vmatprep.subr.bf16.mxu0 0
        %974 = vmatpush1.bf16.msra.mxu0 %v791
        %975 = vmatprep.subr.bf16.mxu0 0
        %976 = vmatpush1.bf16.msra.mxu0 %v794
        %977 = vmatprep.subr.bf16.mxu0 0
        %978 = vmatpush1.bf16.msra.mxu0 %v797
        %979 = vmatprep.mubr.bf16.mxu0 %v825
        %980 = vmatmul.mubr.bf16.gmra.mrb[0].mxu0 %v824
        %v981 = vpop.f32.mrb[0].mxu0
        %v982 = vadd.f32 0.0, %v981
        %v983 = vpop.f32.mrb[0].mxu0
        %v984 = vpop.f32.mrb[0].mxu0
        %v985 = vadd.f32 0.0, %v984
        %v986 = vpop.f32.mrb[0].mxu0
        %987 = vmatprep.mubr.bf16.mxu0 %v828
        %988 = vmatmul.mubr.bf16.gmra.mrb[0].mxu0 %v827
        %v989 = vpop.f32.mrb[0].mxu0
        %v990 = vadd.f32 0.0, %v989
        %v991 = vpop.f32.mrb[0].mxu0
        %v992 = vpop.f32.mrb[0].mxu0
        %v993 = vadd.f32 0.0, %v992
        %v994 = vpop.f32.mrb[0].mxu0
        %995 = vdwg.mxu0
        %996 = vmatprep.subr.bf16.mxu0 0
        %997 = vmatpush1.bf16.msra.mxu0 %v800
        %998 = vmatprep.subr.bf16.mxu0 0
        %999 = vmatpush1.bf16.msra.mxu0 %v803
        %1000 = vmatprep.subr.bf16.mxu0 0
        %1001 = vmatpush1.bf16.msra.mxu0 0
        %1002 = vmatprep.subr.bf16.mxu0 0
        %1003 = vmatpush1.bf16.msra.mxu0 0
        %1004 = vmatprep.subr.bf16.mxu0 0
        %1005 = vmatpush1.bf16.msra.mxu0 0
        %1006 = vmatprep.subr.bf16.mxu0 0
        %1007 = vmatpush1.bf16.msra.mxu0 0
        %1008 = vmatprep.subr.bf16.mxu0 0
        %1009 = vmatpush1.bf16.msra.mxu0 0
        %1010 = vmatprep.subr.bf16.mxu0 0
        %1011 = vmatpush1.bf16.msra.mxu0 0
        %1012 = vmatprep.subr.bf16.mxu0 0
        %1013 = vmatpush1.bf16.msra.mxu0 0
        %1014 = vmatprep.subr.bf16.mxu0 0
        %1015 = vmatpush1.bf16.msra.mxu0 0
        %1016 = vmatprep.subr.bf16.mxu0 0
        %1017 = vmatpush1.bf16.msra.mxu0 0
        %1018 = vmatprep.subr.bf16.mxu0 0
        %1019 = vmatpush1.bf16.msra.mxu0 0
        %1020 = vmatprep.subr.bf16.mxu0 0
        %1021 = vmatpush1.bf16.msra.mxu0 0
        %1022 = vmatprep.subr.bf16.mxu0 0
        %1023 = vmatpush1.bf16.msra.mxu0 0
        %1024 = vmatprep.subr.bf16.mxu0 0
        %1025 = vmatpush1.bf16.msra.mxu0 0
        %1026 = vmatprep.subr.bf16.mxu0 0
        %1027 = vmatpush1.bf16.msra.mxu0 0
        %1028 = vmatprep.mubr.bf16.mxu0 0
        %1029 = vmatmul.mubr.bf16.gmra.mrb[0].mxu0 %v836
        %v1030 = vpop.f32.mrb[0].mxu0
        %v1031 = vadd.f32 %v982, %v1030
        %v1032 = vpop.f32.mrb[0].mxu0
        %v1033 = vpop.f32.mrb[0].mxu0
        %v1034 = vadd.f32 %v985, %v1033
        %v1035 = vpop.f32.mrb[0].mxu0
        %1036 = vmatprep.mubr.bf16.mxu0 0
        %1037 = vmatmul.mubr.bf16.gmra.mrb[0].mxu0 %v839
        %v1038 = vpop.f32.mrb[0].mxu0
        %v1039 = vadd.f32 %v990, %v1038
        %v1040 = vpop.f32.mrb[0].mxu0
        %v1041 = vpop.f32.mrb[0].mxu0
        %v1042 = vadd.f32 %v993, %v1041
        %v1043 = vpop.f32.mrb[0].mxu0
        %1044 = vdwg.mxu0
        %v1045 = vld [vmem:[%s2] sm:$0xff]
        %v1046 = vld [vmem:[%s2 + $0x8] sm:$0xff]
        %v1047 = vld [vmem:[%s2 + $0x10] sm:$0xff]
        %v1048 = vld [vmem:[%s2 + $0x18] sm:$0xff]
        %1050 = vset.pattern.permute.xlu0 0
        %1051 = vperm.xlu0 %1050, %v1045
        %v1052 = vpop.permute.xlu0 %1051
        %1055 = vset.pattern.permute.xlu0 0
        %1056 = vperm.xlu0 %1055, %v1046
        %v1057 = vpop.permute.xlu0 %1056
        %1060 = vset.pattern.permute.xlu0 0
        %1061 = vperm.xlu0 %1060, %v1047
        %v1062 = vpop.permute.xlu0 %1061
        %1065 = vset.pattern.permute.xlu0 0
        %1066 = vperm.xlu0 %1065, %v1048
        %v1067 = vpop.permute.xlu0 %1066
        %v1069 = vmul.f32 %v929, %v1052
        %v1070 = vmul.f32 %v931, %v1052
        %v1071 = vmul.f32 %v1031, %v1052
        %v1072 = vmul.f32 %v933, %v1057
        %v1073 = vmul.f32 %v935, %v1057
        %v1074 = vmul.f32 %v1034, %v1057
        %v1075 = vmul.f32 %v939, %v1062
        %v1076 = vmul.f32 %v941, %v1062
        %v1077 = vmul.f32 %v1039, %v1062
        %v1078 = vmul.f32 %v943, %v1067
        %v1079 = vmul.f32 %v945, %v1067
        %v1080 = vmul.f32 %v1042, %v1067
        %v1081 = vld [vmem:[%s3] sm:$0xff]
        %v1082 = vld [vmem:[%s3 + $0x8] sm:$0xff]
        %v1083 = vld [vmem:[%s3 + $0x10] sm:$0xff]
        %v1084 = vld [vmem:[%s3 + $0x18] sm:$0xff]
        %1086 = vset.pattern.permute.xlu0 0
        %1087 = vperm.xlu0 %1086, %v1081
        %v1088 = vpop.permute.xlu0 %1087
        %1091 = vset.pattern.permute.xlu0 0
        %1092 = vperm.xlu0 %1091, %v1082
        %v1093 = vpop.permute.xlu0 %1092
        %1096 = vset.pattern.permute.xlu0 0
        %1097 = vperm.xlu0 %1096, %v1083
        %v1098 = vpop.permute.xlu0 %1097
        %1101 = vset.pattern.permute.xlu0 0
        %1102 = vperm.xlu0 %1101, %v1084
        %v1103 = vpop.permute.xlu0 %1102
        %v1105 = vadd.f32 %v1069, %v1088
        %v1106 = vadd.f32 %v1070, %v1088
        %v1107 = vadd.f32 %v1071, %v1088
        %v1108 = vadd.f32 %v1072, %v1093
        %v1109 = vadd.f32 %v1073, %v1093
        %v1110 = vadd.f32 %v1074, %v1093
        %v1111 = vadd.f32 %v1075, %v1098
        %v1112 = vadd.f32 %v1076, %v1098
        %v1113 = vadd.f32 %v1077, %v1098
        %v1114 = vadd.f32 %v1078, %v1103
        %v1115 = vadd.f32 %v1079, %v1103
        %v1116 = vadd.f32 %v1080, %v1103
        %v1117 = vmax.f32 %v1105, 0.0
        %v1118 = vmax.f32 %v1106, 0.0
        %v1119 = vmax.f32 %v1107, 0.0
        %v1120 = vmax.f32 %v1108, 0.0
        %v1121 = vmax.f32 %v1109, 0.0
        %v1122 = vmax.f32 %v1110, 0.0
        %v1123 = vmax.f32 %v1111, 0.0
        %v1124 = vmax.f32 %v1112, 0.0
        %v1125 = vmax.f32 %v1113, 0.0
        %v1126 = vmax.f32 %v1114, 0.0
        %v1127 = vmax.f32 %v1115, 0.0
        %v1128 = vmax.f32 %v1116, 0.0
        %v1130 = vlaneseq
        %v1131 = vshrl.u32 %v1130, 7
        %v1132 = vsub.s32 0, %v1131
        %v1133 = vrot.slane %v345, %v1132
        %v1134 = vlaneseq
        %v1135 = vshrl.u32 %v1134, 7
        %v1136 = vsub.s32 1, %v1135
        %v1137 = vrot.slane %v345, %v1136
        %v1138 = vlaneseq
        %v1139 = vshrl.u32 %v1138, 7
        %v1140 = vsub.s32 2, %v1139
        %v1141 = vrot.slane %v345, %v1140
        %v1145 = vmul.f32 %v1117, %v1133
        %v1146 = vmul.f32 %v1118, %v1137
        %v1147 = vmul.f32 %v1119, %v1141
        %v1148 = vmul.f32 %v1120, %v1133
        %v1149 = vmul.f32 %v1121, %v1137
        %v1150 = vmul.f32 %v1122, %v1141
        %v1151 = vmul.f32 %v1123, %v1133
        %v1152 = vmul.f32 %v1124, %v1137
        %v1153 = vmul.f32 %v1125, %v1141
        %v1154 = vmul.f32 %v1126, %v1133
        %v1155 = vmul.f32 %v1127, %v1137
        %v1156 = vmul.f32 %v1128, %v1141
        %v1157 = vpack.c.bf16 %v1148, %v1145
        %v1158 = vpack.c.bf16 %v1149, %v1146
        %v1159 = vpack.c.bf16 %v1150, %v1147
        %v1160 = vpack.c.bf16 %v1154, %v1151
        %v1161 = vpack.c.bf16 %v1155, %v1152
        %v1162 = vpack.c.bf16 %v1156, %v1153
        %1163 = vst [vmem:[#allocation3] sm:$0xff] %v1157
        %1164 = vst [vmem:[#allocation3 + $0x8] sm:$0xff] %v1158
        %1165 = vst [vmem:[#allocation3 + $0x10] sm:$0xff] %v1159
        %1166 = vst [vmem:[#allocation3 + $0x18] sm:$0xff] %v1160
        %1167 = vst [vmem:[#allocation3 + $0x20] sm:$0xff] %v1161
        %1168 = vst [vmem:[#allocation3 + $0x28] sm:$0xff] %v1162
        %1169 = vst.msk [vmem:[#allocation4] sm:$0xff] %vm370, 0
        %1170 = vst.msk [vmem:[#allocation4 + $0x18] sm:$0xff] %vm370, 0
        %v1171 = vld [vmem:[#allocation3] sm:$0xff]
        %v1172 = vld [vmem:[#allocation3 + $0x8] sm:$0xff]
        %v1173 = vld [vmem:[#allocation3 + $0x10] sm:$0xff]
        %v1174 = vld [vmem:[#allocation3 + $0x18] sm:$0xff]
        %v1175 = vld [vmem:[#allocation3 + $0x20] sm:$0xff]
        %v1176 = vld [vmem:[#allocation3 + $0x28] sm:$0xff]
        %1183 = vrot.lane.b32.xlu0 %v1171, 19
        %v1184 = vpop.permute.xlu0 %1183
        %1185 = vrot.lane.b32.xlu0 %v1172, 19
        %v1186 = vpop.permute.xlu0 %1185
        %1187 = vrot.lane.b32.xlu0 %v1173, 19
        %v1188 = vpop.permute.xlu0 %1187
        %1189 = vrot.lane.b32.xlu0 %v1174, 19
        %v1190 = vpop.permute.xlu0 %1189
        %1191 = vrot.lane.b32.xlu0 %v1175, 19
        %v1192 = vpop.permute.xlu0 %1191
        %1193 = vrot.lane.b32.xlu0 %v1176, 19
        %v1194 = vpop.permute.xlu0 %1193
        %v1195 = vsel %vm397, %v1184, %v1186
        %v1196 = vsel %vm397, %v1186, %v1188
        %v1197 = vsel %vm397, %v1190, %v1192
        %v1198 = vsel %vm397, %v1192, %v1194
        %1205 = vst.msk [vmem:[#allocation4] sm:$0xff] %vm408, %v1184
        %1206 = vst [vmem:[#allocation4 + $0x8] sm:$0xff] %v1195
        %1207 = vst [vmem:[#allocation4 + $0x10] sm:$0xff] %v1196
        %1208 = vst.msk [vmem:[#allocation4 + $0x18] sm:$0xff] %vm408, %v1190
        %1209 = vst [vmem:[#allocation4 + $0x20] sm:$0xff] %v1197
        %1210 = vst [vmem:[#allocation4 + $0x28] sm:$0xff] %v1198
        %1211 = vst.msk [vmem:[#allocation4 + $0x30] sm:$0xff] %vm415, 0
        %1212 = vst.msk [vmem:[#allocation4 + $0x48] sm:$0xff] %vm415, 0
        %v1213 = vld [vmem:[#allocation3] sm:$0xff]
        %v1214 = vld [vmem:[#allocation3 + $0x8] sm:$0xff]
        %v1215 = vld [vmem:[#allocation3 + $0x10] sm:$0xff]
        %v1216 = vld [vmem:[#allocation3 + $0x18] sm:$0xff]
        %v1217 = vld [vmem:[#allocation3 + $0x20] sm:$0xff]
        %v1218 = vld [vmem:[#allocation3 + $0x28] sm:$0xff]
        %1225 = vrot.lane.b32.xlu0 %v1213, 18
        %v1226 = vpop.permute.xlu0 %1225
        %1227 = vrot.lane.b32.xlu0 %v1214, 18
        %v1228 = vpop.permute.xlu0 %1227
        %1229 = vrot.lane.b32.xlu0 %v1215, 18
        %v1230 = vpop.permute.xlu0 %1229
        %1231 = vrot.lane.b32.xlu0 %v1216, 18
        %v1232 = vpop.permute.xlu0 %1231
        %1233 = vrot.lane.b32.xlu0 %v1217, 18
        %v1234 = vpop.permute.xlu0 %1233
        %1235 = vrot.lane.b32.xlu0 %v1218, 18
        %v1236 = vpop.permute.xlu0 %1235
        %v1237 = vsel %vm442, %v1226, %v1228
        %v1238 = vsel %vm442, %v1228, %v1230
        %v1239 = vsel %vm442, %v1232, %v1234
        %v1240 = vsel %vm442, %v1234, %v1236
        %1247 = vst.msk [vmem:[#allocation4 + $0x30] sm:$0xff] %vm453, %v1226
        %1248 = vst [vmem:[#allocation4 + $0x38] sm:$0xff] %v1237
        %1249 = vst [vmem:[#allocation4 + $0x40] sm:$0xff] %v1238
        %1250 = vst.msk [vmem:[#allocation4 + $0x48] sm:$0xff] %vm453, %v1232
        %1251 = vst [vmem:[#allocation4 + $0x50] sm:$0xff] %v1239
        %1252 = vst [vmem:[#allocation4 + $0x58] sm:$0xff] %v1240
        %1253 = vst.msk [vmem:[#allocation4 + $0x60] sm:$0xff] %vm460, 0
        %1254 = vst.msk [vmem:[#allocation4 + $0x78] sm:$0xff] %vm460, 0
        %v1255 = vld [vmem:[#allocation3] sm:$0xff]
        %v1256 = vld [vmem:[#allocation3 + $0x8] sm:$0xff]
        %v1257 = vld [vmem:[#allocation3 + $0x10] sm:$0xff]
        %v1258 = vld [vmem:[#allocation3 + $0x18] sm:$0xff]
        %v1259 = vld [vmem:[#allocation3 + $0x20] sm:$0xff]
        %v1260 = vld [vmem:[#allocation3 + $0x28] sm:$0xff]
        %1267 = vrot.lane.b32.xlu0 %v1255, 17
        %v1268 = vpop.permute.xlu0 %1267
        %1269 = vrot.lane.b32.xlu0 %v1256, 17
        %v1270 = vpop.permute.xlu0 %1269
        %1271 = vrot.lane.b32.xlu0 %v1257, 17
        %v1272 = vpop.permute.xlu0 %1271
        %1273 = vrot.lane.b32.xlu0 %v1258, 17
        %v1274 = vpop.permute.xlu0 %1273
        %1275 = vrot.lane.b32.xlu0 %v1259, 17
        %v1276 = vpop.permute.xlu0 %1275
        %1277 = vrot.lane.b32.xlu0 %v1260, 17
        %v1278 = vpop.permute.xlu0 %1277
        %v1279 = vsel %vm487, %v1268, %v1270
        %v1280 = vsel %vm487, %v1270, %v1272
        %v1281 = vsel %vm487, %v1274, %v1276
        %v1282 = vsel %vm487, %v1276, %v1278
        %1289 = vst.msk [vmem:[#allocation4 + $0x60] sm:$0xff] %vm498, %v1268
        %1290 = vst [vmem:[#allocation4 + $0x68] sm:$0xff] %v1279
        %1291 = vst [vmem:[#allocation4 + $0x70] sm:$0xff] %v1280
        %1292 = vst.msk [vmem:[#allocation4 + $0x78] sm:$0xff] %vm498, %v1274
        %1293 = vst [vmem:[#allocation4 + $0x80] sm:$0xff] %v1281
        %1294 = vst [vmem:[#allocation4 + $0x88] sm:$0xff] %v1282
        %1295 = vst.msk [vmem:[#allocation4 + $0x90] sm:$0xff] %vm505, 0
        %1296 = vst.msk [vmem:[#allocation4 + $0xa8] sm:$0xff] %vm505, 0
        %v1297 = vld [vmem:[#allocation3] sm:$0xff]
        %v1298 = vld [vmem:[#allocation3 + $0x8] sm:$0xff]
        %v1299 = vld [vmem:[#allocation3 + $0x10] sm:$0xff]
        %v1300 = vld [vmem:[#allocation3 + $0x18] sm:$0xff]
        %v1301 = vld [vmem:[#allocation3 + $0x20] sm:$0xff]
        %v1302 = vld [vmem:[#allocation3 + $0x28] sm:$0xff]
        %1309 = vrot.lane.b32.xlu0 %v1297, 1
        %v1310 = vpop.permute.xlu0 %1309
        %1311 = vrot.lane.b32.xlu0 %v1298, 1
        %v1312 = vpop.permute.xlu0 %1311
        %1313 = vrot.lane.b32.xlu0 %v1299, 1
        %v1314 = vpop.permute.xlu0 %1313
        %1315 = vrot.lane.b32.xlu0 %v1300, 1
        %v1316 = vpop.permute.xlu0 %1315
        %1317 = vrot.lane.b32.xlu0 %v1301, 1
        %v1318 = vpop.permute.xlu0 %1317
        %1319 = vrot.lane.b32.xlu0 %v1302, 1
        %v1320 = vpop.permute.xlu0 %1319
        %v1321 = vsel %vm532, %v1310, %v1312
        %v1322 = vsel %vm532, %v1312, %v1314
        %v1323 = vsel %vm532, %v1316, %v1318
        %v1324 = vsel %vm532, %v1318, %v1320
        %1331 = vst.msk [vmem:[#allocation4 + $0x90] sm:$0xff] %vm543, %v1310
        %1332 = vst [vmem:[#allocation4 + $0x98] sm:$0xff] %v1321
        %1333 = vst [vmem:[#allocation4 + $0xa0] sm:$0xff] %v1322
        %1334 = vst.msk [vmem:[#allocation4 + $0xa8] sm:$0xff] %vm543, %v1316
        %1335 = vst [vmem:[#allocation4 + $0xb0] sm:$0xff] %v1323
        %1336 = vst [vmem:[#allocation4 + $0xb8] sm:$0xff] %v1324
        %v1337 = vld [vmem:[#allocation3] sm:$0xff]
        %v1338 = vld [vmem:[#allocation3 + $0x8] sm:$0xff]
        %v1339 = vld [vmem:[#allocation3 + $0x10] sm:$0xff]
        %v1340 = vld [vmem:[#allocation3 + $0x18] sm:$0xff]
        %v1341 = vld [vmem:[#allocation3 + $0x20] sm:$0xff]
        %v1342 = vld [vmem:[#allocation3 + $0x28] sm:$0xff]
        %1343 = vst [vmem:[#allocation4 + $0xc0] sm:$0xff] %v1337
        %1344 = vst [vmem:[#allocation4 + $0xc8] sm:$0xff] %v1338
        %1345 = vst [vmem:[#allocation4 + $0xd0] sm:$0xff] %v1339
        %1346 = vst [vmem:[#allocation4 + $0xd8] sm:$0xff] %v1340
        %1347 = vst [vmem:[#allocation4 + $0xe0] sm:$0xff] %v1341
        %1348 = vst [vmem:[#allocation4 + $0xe8] sm:$0xff] %v1342
        %1349 = vst.msk [vmem:[#allocation4 + $0x100] sm:$0xff] %vm562, 0
        %1350 = vst.msk [vmem:[#allocation4 + $0x118] sm:$0xff] %vm562, 0
        %v1351 = vld [vmem:[#allocation3] sm:$0xff]
        %v1352 = vld [vmem:[#allocation3 + $0x8] sm:$0xff]
        %v1353 = vld [vmem:[#allocation3 + $0x10] sm:$0xff]
        %v1354 = vld [vmem:[#allocation3 + $0x18] sm:$0xff]
        %v1355 = vld [vmem:[#allocation3 + $0x20] sm:$0xff]
        %v1356 = vld [vmem:[#allocation3 + $0x28] sm:$0xff]
        %1363 = vrot.lane.b32.xlu0 %v1351, 127
        %v1364 = vpop.permute.xlu0 %1363
        %1365 = vrot.lane.b32.xlu0 %v1352, 127
        %v1366 = vpop.permute.xlu0 %1365
        %1367 = vrot.lane.b32.xlu0 %v1353, 127
        %v1368 = vpop.permute.xlu0 %1367
        %1369 = vrot.lane.b32.xlu0 %v1354, 127
        %v1370 = vpop.permute.xlu0 %1369
        %1371 = vrot.lane.b32.xlu0 %v1355, 127
        %v1372 = vpop.permute.xlu0 %1371
        %1373 = vrot.lane.b32.xlu0 %v1356, 127
        %v1374 = vpop.permute.xlu0 %1373
        %v1375 = vsel %vm589, %v1364, %v1366
        %v1376 = vsel %vm589, %v1366, %v1368
        %v1377 = vsel %vm589, %v1370, %v1372
        %v1378 = vsel %vm589, %v1372, %v1374
        %1385 = vst [vmem:[#allocation4 + $0xf0] sm:$0xff] %v1375
        %1386 = vst [vmem:[#allocation4 + $0xf8] sm:$0xff] %v1376
        %1387 = vst.msk [vmem:[#allocation4 + $0x100] sm:$0xff] %vm602, %v1368
        %1388 = vst [vmem:[#allocation4 + $0x108] sm:$0xff] %v1377
        %1389 = vst [vmem:[#allocation4 + $0x110] sm:$0xff] %v1378
        %1390 = vst.msk [vmem:[#allocation4 + $0x118] sm:$0xff] %vm602, %v1374
        %1391 = vst.msk [vmem:[#allocation4 + $0x130] sm:$0xff] %vm607, 0
        %1392 = vst.msk [vmem:[#allocation4 + $0x148] sm:$0xff] %vm607, 0
        %v1393 = vld [vmem:[#allocation3] sm:$0xff]
        %v1394 = vld [vmem:[#allocation3 + $0x8] sm:$0xff]
        %v1395 = vld [vmem:[#allocation3 + $0x10] sm:$0xff]
        %v1396 = vld [vmem:[#allocation3 + $0x18] sm:$0xff]
        %v1397 = vld [vmem:[#allocation3 + $0x20] sm:$0xff]
        %v1398 = vld [vmem:[#allocation3 + $0x28] sm:$0xff]
        %1405 = vrot.lane.b32.xlu0 %v1393, 111
        %v1406 = vpop.permute.xlu0 %1405
        %1407 = vrot.lane.b32.xlu0 %v1394, 111
        %v1408 = vpop.permute.xlu0 %1407
        %1409 = vrot.lane.b32.xlu0 %v1395, 111
        %v1410 = vpop.permute.xlu0 %1409
        %1411 = vrot.lane.b32.xlu0 %v1396, 111
        %v1412 = vpop.permute.xlu0 %1411
        %1413 = vrot.lane.b32.xlu0 %v1397, 111
        %v1414 = vpop.permute.xlu0 %1413
        %1415 = vrot.lane.b32.xlu0 %v1398, 111
        %v1416 = vpop.permute.xlu0 %1415
        %v1417 = vsel %vm634, %v1406, %v1408
        %v1418 = vsel %vm634, %v1408, %v1410
        %v1419 = vsel %vm634, %v1412, %v1414
        %v1420 = vsel %vm634, %v1414, %v1416
        %1427 = vst [vmem:[#allocation4 + $0x120] sm:$0xff] %v1417
        %1428 = vst [vmem:[#allocation4 + $0x128] sm:$0xff] %v1418
        %1429 = vst.msk [vmem:[#allocation4 + $0x130] sm:$0xff] %vm647, %v1410
        %1430 = vst [vmem:[#allocation4 + $0x138] sm:$0xff] %v1419
        %1431 = vst [vmem:[#allocation4 + $0x140] sm:$0xff] %v1420
        %1432 = vst.msk [vmem:[#allocation4 + $0x148] sm:$0xff] %vm647, %v1416
        %1433 = vst.msk [vmem:[#allocation4 + $0x160] sm:$0xff] %vm652, 0
        %1434 = vst.msk [vmem:[#allocation4 + $0x178] sm:$0xff] %vm652, 0
        %v1435 = vld [vmem:[#allocation3] sm:$0xff]
        %v1436 = vld [vmem:[#allocation3 + $0x8] sm:$0xff]
        %v1437 = vld [vmem:[#allocation3 + $0x10] sm:$0xff]
        %v1438 = vld [vmem:[#allocation3 + $0x18] sm:$0xff]
        %v1439 = vld [vmem:[#allocation3 + $0x20] sm:$0xff]
        %v1440 = vld [vmem:[#allocation3 + $0x28] sm:$0xff]
        %1447 = vrot.lane.b32.xlu0 %v1435, 110
        %v1448 = vpop.permute.xlu0 %1447
        %1449 = vrot.lane.b32.xlu0 %v1436, 110
        %v1450 = vpop.permute.xlu0 %1449
        %1451 = vrot.lane.b32.xlu0 %v1437, 110
        %v1452 = vpop.permute.xlu0 %1451
        %1453 = vrot.lane.b32.xlu0 %v1438, 110
        %v1454 = vpop.permute.xlu0 %1453
        %1455 = vrot.lane.b32.xlu0 %v1439, 110
        %v1456 = vpop.permute.xlu0 %1455
        %1457 = vrot.lane.b32.xlu0 %v1440, 110
        %v1458 = vpop.permute.xlu0 %1457
        %v1459 = vsel %vm679, %v1448, %v1450
        %v1460 = vsel %vm679, %v1450, %v1452
        %v1461 = vsel %vm679, %v1454, %v1456
        %v1462 = vsel %vm679, %v1456, %v1458
        %1469 = vst [vmem:[#allocation4 + $0x150] sm:$0xff] %v1459
        %1470 = vst [vmem:[#allocation4 + $0x158] sm:$0xff] %v1460
        %1471 = vst.msk [vmem:[#allocation4 + $0x160] sm:$0xff] %vm692, %v1452
        %1472 = vst [vmem:[#allocation4 + $0x168] sm:$0xff] %v1461
        %1473 = vst [vmem:[#allocation4 + $0x170] sm:$0xff] %v1462
        %1474 = vst.msk [vmem:[#allocation4 + $0x178] sm:$0xff] %vm692, %v1458
        %1475 = vst.msk [vmem:[#allocation4 + $0x190] sm:$0xff] %vm697, 0
        %1476 = vst.msk [vmem:[#allocation4 + $0x1a8] sm:$0xff] %vm697, 0
        %v1477 = vld [vmem:[#allocation3] sm:$0xff]
        %v1478 = vld [vmem:[#allocation3 + $0x8] sm:$0xff]
        %v1479 = vld [vmem:[#allocation3 + $0x10] sm:$0xff]
        %v1480 = vld [vmem:[#allocation3 + $0x18] sm:$0xff]
        %v1481 = vld [vmem:[#allocation3 + $0x20] sm:$0xff]
        %v1482 = vld [vmem:[#allocation3 + $0x28] sm:$0xff]
        %1489 = vrot.lane.b32.xlu0 %v1477, 109
        %v1490 = vpop.permute.xlu0 %1489
        %1491 = vrot.lane.b32.xlu0 %v1478, 109
        %v1492 = vpop.permute.xlu0 %1491
        %1493 = vrot.lane.b32.xlu0 %v1479, 109
        %v1494 = vpop.permute.xlu0 %1493
        %1495 = vrot.lane.b32.xlu0 %v1480, 109
        %v1496 = vpop.permute.xlu0 %1495
        %1497 = vrot.lane.b32.xlu0 %v1481, 109
        %v1498 = vpop.permute.xlu0 %1497
        %1499 = vrot.lane.b32.xlu0 %v1482, 109
        %v1500 = vpop.permute.xlu0 %1499
        %v1501 = vsel %vm724, %v1490, %v1492
        %v1502 = vsel %vm724, %v1492, %v1494
        %v1503 = vsel %vm724, %v1496, %v1498
        %v1504 = vsel %vm724, %v1498, %v1500
        %1511 = vst [vmem:[#allocation4 + $0x180] sm:$0xff] %v1501
        %1512 = vst [vmem:[#allocation4 + $0x188] sm:$0xff] %v1502
        %1513 = vst.msk [vmem:[#allocation4 + $0x190] sm:$0xff] %vm737, %v1494
        %1514 = vst [vmem:[#allocation4 + $0x198] sm:$0xff] %v1503
        %1515 = vst [vmem:[#allocation4 + $0x1a0] sm:$0xff] %v1504
        %1516 = vst.msk [vmem:[#allocation4 + $0x1a8] sm:$0xff] %vm737, %v1500
        %v1517 = vld [vmem:[%s4] sm:$0xff]
        %v1518 = vld [vmem:[%s4 + $0x8] sm:$0xf]
        %v1519 = vld [vmem:[%s4 + $0xc] sm:$0xff]
        %v1520 = vld [vmem:[%s4 + $0x14] sm:$0xf]
        %v1521 = vld [vmem:[%s4 + $0x18] sm:$0xff]
        %v1522 = vld [vmem:[%s4 + $0x20] sm:$0xf]
        %v1523 = vld [vmem:[%s4 + $0x24] sm:$0xff]
        %v1524 = vld [vmem:[%s4 + $0x2c] sm:$0xf]
        %v1525 = vld [vmem:[#allocation4] sm:$0xff]
        %v1526 = vld [vmem:[#allocation4 + $0x8] sm:$0xff]
        %v1527 = vld [vmem:[#allocation4 + $0x10] sm:$0xff]
        %v1528 = vld [vmem:[#allocation4 + $0x18] sm:$0xff]
        %v1529 = vld [vmem:[#allocation4 + $0x20] sm:$0xff]
        %v1530 = vld [vmem:[#allocation4 + $0x28] sm:$0xff]
        %v1531 = vld [vmem:[#allocation4 + $0x30] sm:$0xff]
        %v1532 = vld [vmem:[#allocation4 + $0x38] sm:$0xff]
        %v1533 = vld [vmem:[#allocation4 + $0x40] sm:$0xff]
        %v1534 = vld [vmem:[#allocation4 + $0x48] sm:$0xff]
        %v1535 = vld [vmem:[#allocation4 + $0x50] sm:$0xff]
        %v1536 = vld [vmem:[#allocation4 + $0x58] sm:$0xff]
        %v1537 = vld [vmem:[#allocation4 + $0x60] sm:$0xff]
        %v1538 = vld [vmem:[#allocation4 + $0x68] sm:$0xff]
        %v1539 = vld [vmem:[#allocation4 + $0x70] sm:$0xff]
        %v1540 = vld [vmem:[#allocation4 + $0x78] sm:$0xff]
        %v1541 = vld [vmem:[#allocation4 + $0x80] sm:$0xff]
        %v1542 = vld [vmem:[#allocation4 + $0x88] sm:$0xff]
        %v1543 = vld [vmem:[#allocation4 + $0x90] sm:$0xff]
        %v1544 = vld [vmem:[#allocation4 + $0x98] sm:$0xff]
        %v1545 = vld [vmem:[#allocation4 + $0xa0] sm:$0xff]
        %v1546 = vld [vmem:[#allocation4 + $0xa8] sm:$0xff]
        %v1547 = vld [vmem:[#allocation4 + $0xb0] sm:$0xff]
        %v1548 = vld [vmem:[#allocation4 + $0xb8] sm:$0xff]
        %v1549 = vld [vmem:[#allocation4 + $0xc0] sm:$0xff]
        %v1550 = vld [vmem:[#allocation4 + $0xc8] sm:$0xff]
        %v1551 = vld [vmem:[#allocation4 + $0xd0] sm:$0xff]
        %v1552 = vld [vmem:[#allocation4 + $0xd8] sm:$0xff]
        %v1553 = vld [vmem:[#allocation4 + $0xe0] sm:$0xff]
        %v1554 = vld [vmem:[#allocation4 + $0xe8] sm:$0xff]
        %v1555 = vld [vmem:[#allocation4 + $0xf0] sm:$0xff]
        %v1556 = vld [vmem:[#allocation4 + $0xf8] sm:$0xff]
        %v1557 = vld [vmem:[#allocation4 + $0x100] sm:$0xff]
        %v1558 = vld [vmem:[#allocation4 + $0x108] sm:$0xff]
        %v1559 = vld [vmem:[#allocation4 + $0x110] sm:$0xff]
        %v1560 = vld [vmem:[#allocation4 + $0x118] sm:$0xff]
        %v1561 = vld [vmem:[#allocation4 + $0x120] sm:$0xff]
        %v1562 = vld [vmem:[#allocation4 + $0x128] sm:$0xff]
        %v1563 = vld [vmem:[#allocation4 + $0x130] sm:$0xff]
        %v1564 = vld [vmem:[#allocation4 + $0x138] sm:$0xff]
        %v1565 = vld [vmem:[#allocation4 + $0x140] sm:$0xff]
        %v1566 = vld [vmem:[#allocation4 + $0x148] sm:$0xff]
        %v1567 = vld [vmem:[#allocation4 + $0x150] sm:$0xff]
        %v1568 = vld [vmem:[#allocation4 + $0x158] sm:$0xff]
        %v1569 = vld [vmem:[#allocation4 + $0x160] sm:$0xff]
        %v1570 = vld [vmem:[#allocation4 + $0x168] sm:$0xff]
        %v1571 = vld [vmem:[#allocation4 + $0x170] sm:$0xff]
        %v1572 = vld [vmem:[#allocation4 + $0x178] sm:$0xff]
        %v1573 = vld [vmem:[#allocation4 + $0x180] sm:$0xff]
        %v1574 = vld [vmem:[#allocation4 + $0x188] sm:$0xff]
        %v1575 = vld [vmem:[#allocation4 + $0x190] sm:$0xff]
        %v1576 = vld [vmem:[#allocation4 + $0x198] sm:$0xff]
        %v1577 = vld [vmem:[#allocation4 + $0x1a0] sm:$0xff]
        %v1578 = vld [vmem:[#allocation4 + $0x1a8] sm:$0xff]
        %v1587 = vunpack.c.l.b16 %v1517
        %v1588 = vunpack.c.h.b16 %v1517
        %v1589 = vunpack.c.l.b16 %v1518
        %v1590 = vunpack.c.l.b16 %v1519
        %v1591 = vunpack.c.h.b16 %v1519
        %v1592 = vunpack.c.l.b16 %v1520
        %v1593 = vunpack.c.l.b16 %v1521
        %v1594 = vunpack.c.h.b16 %v1521
        %v1595 = vunpack.c.l.b16 %v1522
        %v1596 = vunpack.c.l.b16 %v1523
        %v1597 = vunpack.c.h.b16 %v1523
        %v1598 = vunpack.c.l.b16 %v1524
        %v1599 = vpack.c.b16 %v1590, %v1587
        %v1600 = vpack.c.b16 %v1591, %v1588
        %v1601 = vpack.c.b16 %v1592, %v1589
        %v1602 = vpack.c.b16 %v1596, %v1593
        %v1603 = vpack.c.b16 %v1597, %v1594
        %v1604 = vpack.c.b16 %v1598, %v1595
        %v1610 = vsel %vm834, %v1601, 0
        %v1613 = vsel %vm834, %v1604, 0
        %1615 = vmatprep.subr.bf16.mxu0 %v1526
        %1616 = vmatpush1.bf16.msra.mxu0 %v1525
        %1617 = vmatprep.subr.bf16.mxu0 %v1529
        %1618 = vmatpush1.bf16.msra.mxu0 %v1528
        %1619 = vmatprep.subr.bf16.mxu0 %v1532
        %1620 = vmatpush1.bf16.msra.mxu0 %v1531
        %1621 = vmatprep.subr.bf16.mxu0 %v1535
        %1622 = vmatpush1.bf16.msra.mxu0 %v1534
        %1623 = vmatprep.subr.bf16.mxu0 %v1538
        %1624 = vmatpush1.bf16.msra.mxu0 %v1537
        %1625 = vmatprep.subr.bf16.mxu0 %v1541
        %1626 = vmatpush1.bf16.msra.mxu0 %v1540
        %1627 = vmatprep.subr.bf16.mxu0 %v1544
        %1628 = vmatpush1.bf16.msra.mxu0 %v1543
        %1629 = vmatprep.subr.bf16.mxu0 %v1547
        %1630 = vmatpush1.bf16.msra.mxu0 %v1546
        %1631 = vmatprep.subr.bf16.mxu0 %v1550
        %1632 = vmatpush1.bf16.msra.mxu0 %v1549
        %1633 = vmatprep.subr.bf16.mxu0 %v1553
        %1634 = vmatpush1.bf16.msra.mxu0 %v1552
        %1635 = vmatprep.subr.bf16.mxu0 %v1556
        %1636 = vmatpush1.bf16.msra.mxu0 %v1555
        %1637 = vmatprep.subr.bf16.mxu0 %v1559
        %1638 = vmatpush1.bf16.msra.mxu0 %v1558
        %1639 = vmatprep.subr.bf16.mxu0 %v1562
        %1640 = vmatpush1.bf16.msra.mxu0 %v1561
        %1641 = vmatprep.subr.bf16.mxu0 %v1565
        %1642 = vmatpush1.bf16.msra.mxu0 %v1564
        %1643 = vmatprep.subr.bf16.mxu0 %v1568
        %1644 = vmatpush1.bf16.msra.mxu0 %v1567
        %1645 = vmatprep.subr.bf16.mxu0 %v1571
        %1646 = vmatpush1.bf16.msra.mxu0 %v1570
        %1647 = vmatprep.mubr.bf16.mxu0 %v1600
        %1648 = vmatmul.mubr.bf16.gmra.mrb[0].mxu0 %v1599
        %v1649 = vpop.f32.mrb[0].mxu0
        %v1650 = vadd.f32 0.0, %v1649
        %v1651 = vpop.f32.mrb[0].mxu0
        %v1652 = vadd.f32 0.0, %v1651
        %v1653 = vpop.f32.mrb[0].mxu0
        %v1654 = vadd.f32 0.0, %v1653
        %v1655 = vpop.f32.mrb[0].mxu0
        %v1656 = vadd.f32 0.0, %v1655
        %1657 = vmatprep.mubr.bf16.mxu0 %v1603
        %1658 = vmatmul.mubr.bf16.gmra.mrb[0].mxu0 %v1602
        %v1659 = vpop.f32.mrb[0].mxu0
        %v1660 = vadd.f32 0.0, %v1659
        %v1661 = vpop.f32.mrb[0].mxu0
        %v1662 = vadd.f32 0.0, %v1661
        %v1663 = vpop.f32.mrb[0].mxu0
        %v1664 = vadd.f32 0.0, %v1663
        %v1665 = vpop.f32.mrb[0].mxu0
        %v1666 = vadd.f32 0.0, %v1665
        %1667 = vdwg.mxu0
        %1668 = vmatprep.subr.bf16.mxu0 %v1574
        %1669 = vmatpush1.bf16.msra.mxu0 %v1573
        %1670 = vmatprep.subr.bf16.mxu0 %v1577
        %1671 = vmatpush1.bf16.msra.mxu0 %v1576
        %1672 = vmatprep.subr.bf16.mxu0 0
        %1673 = vmatpush1.bf16.msra.mxu0 0
        %1674 = vmatprep.subr.bf16.mxu0 0
        %1675 = vmatpush1.bf16.msra.mxu0 0
        %1676 = vmatprep.subr.bf16.mxu0 0
        %1677 = vmatpush1.bf16.msra.mxu0 0
        %1678 = vmatprep.subr.bf16.mxu0 0
        %1679 = vmatpush1.bf16.msra.mxu0 0
        %1680 = vmatprep.subr.bf16.mxu0 0
        %1681 = vmatpush1.bf16.msra.mxu0 0
        %1682 = vmatprep.subr.bf16.mxu0 0
        %1683 = vmatpush1.bf16.msra.mxu0 0
        %1684 = vmatprep.subr.bf16.mxu0 0
        %1685 = vmatpush1.bf16.msra.mxu0 0
        %1686 = vmatprep.subr.bf16.mxu0 0
        %1687 = vmatpush1.bf16.msra.mxu0 0
        %1688 = vmatprep.subr.bf16.mxu0 0
        %1689 = vmatpush1.bf16.msra.mxu0 0
        %1690 = vmatprep.subr.bf16.mxu0 0
        %1691 = vmatpush1.bf16.msra.mxu0 0
        %1692 = vmatprep.subr.bf16.mxu0 0
        %1693 = vmatpush1.bf16.msra.mxu0 0
        %1694 = vmatprep.subr.bf16.mxu0 0
        %1695 = vmatpush1.bf16.msra.mxu0 0
        %1696 = vmatprep.subr.bf16.mxu0 0
        %1697 = vmatpush1.bf16.msra.mxu0 0
        %1698 = vmatprep.subr.bf16.mxu0 0
        %1699 = vmatpush1.bf16.msra.mxu0 0
        %1700 = vmatprep.mubr.bf16.mxu0 0
        %1701 = vmatmul.mubr.bf16.gmra.mrb[0].mxu0 %v1610
        %v1702 = vpop.f32.mrb[0].mxu0
        %v1703 = vadd.f32 %v1650, %v1702
        %v1704 = vpop.f32.mrb[0].mxu0
        %v1705 = vadd.f32 %v1652, %v1704
        %v1706 = vpop.f32.mrb[0].mxu0
        %v1707 = vadd.f32 %v1654, %v1706
        %v1708 = vpop.f32.mrb[0].mxu0
        %v1709 = vadd.f32 %v1656, %v1708
        %1710 = vmatprep.mubr.bf16.mxu0 0
        %1711 = vmatmul.mubr.bf16.gmra.mrb[0].mxu0 %v1613
        %v1712 = vpop.f32.mrb[0].mxu0
        %v1713 = vadd.f32 %v1660, %v1712
        %v1714 = vpop.f32.mrb[0].mxu0
        %v1715 = vadd.f32 %v1662, %v1714
        %v1716 = vpop.f32.mrb[0].mxu0
        %v1717 = vadd.f32 %v1664, %v1716
        %v1718 = vpop.f32.mrb[0].mxu0
        %v1719 = vadd.f32 %v1666, %v1718
        %1720 = vdwg.mxu0
        %1721 = vmatprep.subr.bf16.mxu0 0
        %1722 = vmatpush1.bf16.msra.mxu0 %v1527
        %1723 = vmatprep.subr.bf16.mxu0 0
        %1724 = vmatpush1.bf16.msra.mxu0 %v1530
        %1725 = vmatprep.subr.bf16.mxu0 0
        %1726 = vmatpush1.bf16.msra.mxu0 %v1533
        %1727 = vmatprep.subr.bf16.mxu0 0
        %1728 = vmatpush1.bf16.msra.mxu0 %v1536
        %1729 = vmatprep.subr.bf16.mxu0 0
        %1730 = vmatpush1.bf16.msra.mxu0 %v1539
        %1731 = vmatprep.subr.bf16.mxu0 0
        %1732 = vmatpush1.bf16.msra.mxu0 %v1542
        %1733 = vmatprep.subr.bf16.mxu0 0
        %1734 = vmatpush1.bf16.msra.mxu0 %v1545
        %1735 = vmatprep.subr.bf16.mxu0 0
        %1736 = vmatpush1.bf16.msra.mxu0 %v1548
        %1737 = vmatprep.subr.bf16.mxu0 0
        %1738 = vmatpush1.bf16.msra.mxu0 %v1551
        %1739 = vmatprep.subr.bf16.mxu0 0
        %1740 = vmatpush1.bf16.msra.mxu0 %v1554
        %1741 = vmatprep.subr.bf16.mxu0 0
        %1742 = vmatpush1.bf16.msra.mxu0 %v1557
        %1743 = vmatprep.subr.bf16.mxu0 0
        %1744 = vmatpush1.bf16.msra.mxu0 %v1560
        %1745 = vmatprep.subr.bf16.mxu0 0
        %1746 = vmatpush1.bf16.msra.mxu0 %v1563
        %1747 = vmatprep.subr.bf16.mxu0 0
        %1748 = vmatpush1.bf16.msra.mxu0 %v1566
        %1749 = vmatprep.subr.bf16.mxu0 0
        %1750 = vmatpush1.bf16.msra.mxu0 %v1569
        %1751 = vmatprep.subr.bf16.mxu0 0
        %1752 = vmatpush1.bf16.msra.mxu0 %v1572
        %1753 = vmatprep.mubr.bf16.mxu0 %v1600
        %1754 = vmatmul.mubr.bf16.gmra.mrb[0].mxu0 %v1599
        %v1755 = vpop.f32.mrb[0].mxu0
        %v1756 = vadd.f32 0.0, %v1755
        %v1757 = vpop.f32.mrb[0].mxu0
        %v1758 = vpop.f32.mrb[0].mxu0
        %v1759 = vadd.f32 0.0, %v1758
        %v1760 = vpop.f32.mrb[0].mxu0
        %1761 = vmatprep.mubr.bf16.mxu0 %v1603
        %1762 = vmatmul.mubr.bf16.gmra.mrb[0].mxu0 %v1602
        %v1763 = vpop.f32.mrb[0].mxu0
        %v1764 = vadd.f32 0.0, %v1763
        %v1765 = vpop.f32.mrb[0].mxu0
        %v1766 = vpop.f32.mrb[0].mxu0
        %v1767 = vadd.f32 0.0, %v1766
        %v1768 = vpop.f32.mrb[0].mxu0
        %1769 = vdwg.mxu0
        %1770 = vmatprep.subr.bf16.mxu0 0
        %1771 = vmatpush1.bf16.msra.mxu0 %v1575
        %1772 = vmatprep.subr.bf16.mxu0 0
        %1773 = vmatpush1.bf16.msra.mxu0 %v1578
        %1774 = vmatprep.subr.bf16.mxu0 0
        %1775 = vmatpush1.bf16.msra.mxu0 0
        %1776 = vmatprep.subr.bf16.mxu0 0
        %1777 = vmatpush1.bf16.msra.mxu0 0
        %1778 = vmatprep.subr.bf16.mxu0 0
        %1779 = vmatpush1.bf16.msra.mxu0 0
        %1780 = vmatprep.subr.bf16.mxu0 0
        %1781 = vmatpush1.bf16.msra.mxu0 0
        %1782 = vmatprep.subr.bf16.mxu0 0
        %1783 = vmatpush1.bf16.msra.mxu0 0
        %1784 = vmatprep.subr.bf16.mxu0 0
        %1785 = vmatpush1.bf16.msra.mxu0 0
        %1786 = vmatprep.subr.bf16.mxu0 0
        %1787 = vmatpush1.bf16.msra.mxu0 0
        %1788 = vmatprep.subr.bf16.mxu0 0
        %1789 = vmatpush1.bf16.msra.mxu0 0
        %1790 = vmatprep.subr.bf16.mxu0 0
        %1791 = vmatpush1.bf16.msra.mxu0 0
        %1792 = vmatprep.subr.bf16.mxu0 0
        %1793 = vmatpush1.bf16.msra.mxu0 0
        %1794 = vmatprep.subr.bf16.mxu0 0
        %1795 = vmatpush1.bf16.msra.mxu0 0
        %1796 = vmatprep.subr.bf16.mxu0 0
        %1797 = vmatpush1.bf16.msra.mxu0 0
        %1798 = vmatprep.subr.bf16.mxu0 0
        %1799 = vmatpush1.bf16.msra.mxu0 0
        %1800 = vmatprep.subr.bf16.mxu0 0
        %1801 = vmatpush1.bf16.msra.mxu0 0
        %1802 = vmatprep.mubr.bf16.mxu0 0
        %1803 = vmatmul.mubr.bf16.gmra.mrb[0].mxu0 %v1610
        %v1804 = vpop.f32.mrb[0].mxu0
        %v1805 = vadd.f32 %v1756, %v1804
        %v1806 = vpop.f32.mrb[0].mxu0
        %v1807 = vpop.f32.mrb[0].mxu0
        %v1808 = vadd.f32 %v1759, %v1807
        %v1809 = vpop.f32.mrb[0].mxu0
        %1810 = vmatprep.mubr.bf16.mxu0 0
        %1811 = vmatmul.mubr.bf16.gmra.mrb[0].mxu0 %v1613
        %v1812 = vpop.f32.mrb[0].mxu0
        %v1813 = vadd.f32 %v1764, %v1812
        %v1814 = vpop.f32.mrb[0].mxu0
        %v1815 = vpop.f32.mrb[0].mxu0
        %v1816 = vadd.f32 %v1767, %v1815
        %v1817 = vpop.f32.mrb[0].mxu0
        %1818 = vdwg.mxu0
        %v1819 = vld [vmem:[%s5] sm:$0xff]
        %v1820 = vld [vmem:[%s5 + $0x8] sm:$0xff]
        %v1821 = vld [vmem:[%s5 + $0x10] sm:$0xff]
        %v1822 = vld [vmem:[%s5 + $0x18] sm:$0xff]
        %1824 = vset.pattern.permute.xlu0 0
        %1825 = vperm.xlu0 %1824, %v1819
        %v1826 = vpop.permute.xlu0 %1825
        %1829 = vset.pattern.permute.xlu0 0
        %1830 = vperm.xlu0 %1829, %v1820
        %v1831 = vpop.permute.xlu0 %1830
        %1834 = vset.pattern.permute.xlu0 0
        %1835 = vperm.xlu0 %1834, %v1821
        %v1836 = vpop.permute.xlu0 %1835
        %1839 = vset.pattern.permute.xlu0 0
        %1840 = vperm.xlu0 %1839, %v1822
        %v1841 = vpop.permute.xlu0 %1840
        %v1843 = vmul.f32 %v1703, %v1826
        %v1844 = vmul.f32 %v1705, %v1826
        %v1845 = vmul.f32 %v1805, %v1826
        %v1846 = vmul.f32 %v1707, %v1831
        %v1847 = vmul.f32 %v1709, %v1831
        %v1848 = vmul.f32 %v1808, %v1831
        %v1849 = vmul.f32 %v1713, %v1836
        %v1850 = vmul.f32 %v1715, %v1836
        %v1851 = vmul.f32 %v1813, %v1836
        %v1852 = vmul.f32 %v1717, %v1841
        %v1853 = vmul.f32 %v1719, %v1841
        %v1854 = vmul.f32 %v1816, %v1841
        %v1855 = vld [vmem:[%s6] sm:$0xff]
        %v1856 = vld [vmem:[%s6 + $0x8] sm:$0xff]
        %v1857 = vld [vmem:[%s6 + $0x10] sm:$0xff]
        %v1858 = vld [vmem:[%s6 + $0x18] sm:$0xff]
        %1860 = vset.pattern.permute.xlu0 0
        %1861 = vperm.xlu0 %1860, %v1855
        %v1862 = vpop.permute.xlu0 %1861
        %1865 = vset.pattern.permute.xlu0 0
        %1866 = vperm.xlu0 %1865, %v1856
        %v1867 = vpop.permute.xlu0 %1866
        %1870 = vset.pattern.permute.xlu0 0
        %1871 = vperm.xlu0 %1870, %v1857
        %v1872 = vpop.permute.xlu0 %1871
        %1875 = vset.pattern.permute.xlu0 0
        %1876 = vperm.xlu0 %1875, %v1858
        %v1877 = vpop.permute.xlu0 %1876
        %v1879 = vadd.f32 %v1843, %v1862
        %v1880 = vadd.f32 %v1844, %v1862
        %v1881 = vadd.f32 %v1845, %v1862
        %v1882 = vadd.f32 %v1846, %v1867
        %v1883 = vadd.f32 %v1847, %v1867
        %v1884 = vadd.f32 %v1848, %v1867
        %v1885 = vadd.f32 %v1849, %v1872
        %v1886 = vadd.f32 %v1850, %v1872
        %v1887 = vadd.f32 %v1851, %v1872
        %v1888 = vadd.f32 %v1852, %v1877
        %v1889 = vadd.f32 %v1853, %v1877
        %v1890 = vadd.f32 %v1854, %v1877
        %v1891 = vld [vmem:[%s312] sm:$0xff]
        %v1892 = vld [vmem:[%s312 + $0x8] sm:$0xff]
        %v1893 = vld [vmem:[%s312 + $0x10] sm:$0xff]
        %v1894 = vld [vmem:[%s312 + $0x18] sm:$0xff]
        %v1895 = vld [vmem:[%s312 + $0x20] sm:$0xff]
        %v1896 = vld [vmem:[%s312 + $0x28] sm:$0xff]
        %v1897 = vld [vmem:[%s312 + $0x30] sm:$0xff]
        %v1898 = vld [vmem:[%s312 + $0x38] sm:$0xff]
        %v1899 = vld [vmem:[%s312 + $0x40] sm:$0xff]
        %v1900 = vld [vmem:[%s312 + $0x48] sm:$0xff]
        %v1901 = vld [vmem:[%s312 + $0x50] sm:$0xff]
        %v1902 = vld [vmem:[%s312 + $0x58] sm:$0xff]
        %v1903 = vadd.f32 %v1879, %v1891
        %v1904 = vadd.f32 %v1880, %v1892
        %v1905 = vadd.f32 %v1881, %v1893
        %v1906 = vadd.f32 %v1882, %v1894
        %v1907 = vadd.f32 %v1883, %v1895
        %v1908 = vadd.f32 %v1884, %v1896
        %v1909 = vadd.f32 %v1885, %v1897
        %v1910 = vadd.f32 %v1886, %v1898
        %v1911 = vadd.f32 %v1887, %v1899
        %v1912 = vadd.f32 %v1888, %v1900
        %v1913 = vadd.f32 %v1889, %v1901
        %v1914 = vadd.f32 %v1890, %v1902
        %v1915 = vmax.f32 %v1903, 0.0
        %v1916 = vmax.f32 %v1904, 0.0
        %v1917 = vmax.f32 %v1905, 0.0
        %v1918 = vmax.f32 %v1906, 0.0
        %v1919 = vmax.f32 %v1907, 0.0
        %v1920 = vmax.f32 %v1908, 0.0
        %v1921 = vmax.f32 %v1909, 0.0
        %v1922 = vmax.f32 %v1910, 0.0
        %v1923 = vmax.f32 %v1911, 0.0
        %v1924 = vmax.f32 %v1912, 0.0
        %v1925 = vmax.f32 %v1913, 0.0
        %v1926 = vmax.f32 %v1914, 0.0
        %v1927 = vmul.f32 %v1915, %v1133
        %v1928 = vmul.f32 %v1916, %v1137
        %v1929 = vmul.f32 %v1917, %v1141
        %v1930 = vmul.f32 %v1918, %v1133
        %v1931 = vmul.f32 %v1919, %v1137
        %v1932 = vmul.f32 %v1920, %v1141
        %v1933 = vmul.f32 %v1921, %v1133
        %v1934 = vmul.f32 %v1922, %v1137
        %v1935 = vmul.f32 %v1923, %v1141
        %v1936 = vmul.f32 %v1924, %v1133
        %v1937 = vmul.f32 %v1925, %v1137
        %v1938 = vmul.f32 %v1926, %v1141
        %1939 = vst [vmem:[%s341] sm:$0xff] %v1927
        %1940 = vst [vmem:[%s341 + $0x8] sm:$0xff] %v1928
        %1941 = vst [vmem:[%s341 + $0x10] sm:$0xff] %v1929
        %1942 = vst [vmem:[%s341 + $0x18] sm:$0xff] %v1930
        %1943 = vst [vmem:[%s341 + $0x20] sm:$0xff] %v1931
        %1944 = vst [vmem:[%s341 + $0x28] sm:$0xff] %v1932
        %1945 = vst [vmem:[%s341 + $0x30] sm:$0xff] %v1933
        %1946 = vst [vmem:[%s341 + $0x38] sm:$0xff] %v1934
        %1947 = vst [vmem:[%s341 + $0x40] sm:$0xff] %v1935
        %1948 = vst [vmem:[%s341 + $0x48] sm:$0xff] %v1936
        %1949 = vst [vmem:[%s341 + $0x50] sm:$0xff] %v1937
        %1950 = vst [vmem:[%s341 + $0x58] sm:$0xff] %v1938
        %s1951 = sand.u32 %s200, 1
        %s1952 = sand.u32 %s200, 1
        %s1953 = smul.addr %s1952, 96
        %s1954 = scalar_lea.vmem [#allocation6], %s1953
        // Predicated region
        $region76: #{forward.4} parent=70 // pred_check
          %p1955 = pneg %p210
        $region77: #{forward.4} parent=70 // pred_check_branch
          %1957 = sbr.rel (%p1955) target = $region79
        $region78: #{forward.4} parent=70 // pred_region
          %s1958 = smul.u32 3, %s19
          %s1959 = smul.addr %s1958, 8
          %s1960 = scalar_lea.vmem %s8, %s1959
          // Predicated region
          $region80: #{forward.4} parent=78 // pred_check
            _
          $region81: #{forward.4} parent=78 // pred_check_branch
            %1962 = sbr.rel (0) target = $region83
          $region82: #{forward.4} parent=78 // pred_region
            // Predicated region
            $region84: #{forward.4} parent=82 // pred_check
              _
            $region85: #{forward.4} parent=82 // pred_check_branch
              %1964 = sbr.rel (0) target = $region87
            $region86: #{forward.4} parent=82 // pred_region
              loop: start=0, step=1, limit=1
              $region88: #{forward.4} parent=86 // loop_pre_header
                _
              $region89: #{forward.4} parent=86 // loop_header
                %s1966 = sphi 0, %s1970
                %p1967 = scmp.ge.s32.totalorder %s1966, 1
                %s1971 = sphi %s1954, %s1954
                %s1972 = sphi %s1960, %s1960
              $region90: #{forward.4} parent=86 // loop_header_branch
                %1969 = sbr.rel (%p1967) target = $region94
              $region91: #{forward.4} parent=86 // loop_body
                %v1973 = vld [vmem:[%s1971] sm:$0xff]
                %1974 = vst [vmem:[%s1972] sm:$0xff] %v1973
                %v1975 = vld [vmem:[%s1971 + $0x8] sm:$0xff]
                %1976 = vst [vmem:[%s1972 + $0x8] sm:$0xff] %v1975
                %v1977 = vld [vmem:[%s1971 + $0x10] sm:$0xff]
                %1978 = vst [vmem:[%s1972 + $0x10] sm:$0xff] %v1977
                %v1979 = vld [vmem:[%s1971 + $0x18] sm:$0xff]
                %1980 = vst [vmem:[%s1972 + $0x30] sm:$0xff] %v1979
                %v1981 = vld [vmem:[%s1971 + $0x20] sm:$0xff]
                %1982 = vst [vmem:[%s1972 + $0x38] sm:$0xff] %v1981
                %v1983 = vld [vmem:[%s1971 + $0x28] sm:$0xff]
                %1984 = vst [vmem:[%s1972 + $0x40] sm:$0xff] %v1983
                %v1985 = vld [vmem:[%s1971 + $0x30] sm:$0xff]
                %1986 = vst [vmem:[%s1972 + $0x60] sm:$0xff] %v1985
                %v1987 = vld [vmem:[%s1971 + $0x38] sm:$0xff]
                %1988 = vst [vmem:[%s1972 + $0x68] sm:$0xff] %v1987
                %v1989 = vld [vmem:[%s1971 + $0x40] sm:$0xff]
                %1990 = vst [vmem:[%s1972 + $0x70] sm:$0xff] %v1989
                %v1991 = vld [vmem:[%s1971 + $0x48] sm:$0xff]
                %1992 = vst [vmem:[%s1972 + $0x90] sm:$0xff] %v1991
                %v1993 = vld [vmem:[%s1971 + $0x50] sm:$0xff]
                %1994 = vst [vmem:[%s1972 + $0x98] sm:$0xff] %v1993
                %v1995 = vld [vmem:[%s1971 + $0x58] sm:$0xff]
                %1996 = vst [vmem:[%s1972 + $0xa0] sm:$0xff] %v1995
              $region92: #{forward.4} parent=86 // loop_footer
                %s1970 = sadd.s32 1, %s1966
              $region93: #{forward.4} parent=86 // loop_footer_branch
                %1965 = sbr.rel target = $region89
              $region94: #{forward.4} parent=86 // loop_exit
                _
            $region87: #{forward.4} parent=82 // pred_fallthru
              _
            // Predicated region
            $region95: #{forward.4} parent=82 // pred_check
              _
            $region96: #{forward.4} parent=82 // pred_check_branch
              %1998 = sbr.rel target = $region98
            $region97: #{forward.4} parent=82 // pred_region
              _
            $region98: #{forward.4} parent=82 // pred_fallthru
              _
          $region83: #{forward.4} parent=78 // pred_fallthru
            _
          %1999 = vnop
        $region79: #{forward.4} parent=70 // pred_fallthru
          _
      $region71: #{forward.4} parent=5 // pred_fallthru
        _
      %p2000 = scmp.le.s32.totalorder 2, %s14
      // Predicated region
      $region99: #{forward.4} parent=5 // pred_check
        %p2001 = pneg %p2000
      $region100: #{forward.4} parent=5 // pred_check_branch
        %2003 = sbr.rel (%p2001) target = $region102
      $region101: #{forward.4} parent=5 // pred_region
        %s2004 = ssub.s32 %s14, 2
        // Predicated region
        $region103: #{forward.4} parent=101 // pred_check
          %p2005 = pneg %p216
        $region104: #{forward.4} parent=101 // pred_check_branch
          %2007 = sbr.rel (%p2005) target = $region106
        $region105: #{forward.4} parent=101 // pred_region
          %s2008 = sand.u32 %s201, 1
          %s2009 = sand.u32 %s201, 1
          %s2010 = smul.addr %s2009, 96
          %s2011 = scalar_lea.vmem [#allocation6], %s2010
        $region106: #{forward.4} parent=101 // pred_fallthru
          _
      $region102: #{forward.4} parent=5 // pred_fallthru
        _
    $region6: #{forward.4} parent=1 // loop_footer
      %s18 = sadd.s32 1, %s14
    $region7: #{forward.4} parent=1 // loop_footer_branch
      %13 = sbr.rel target = $region3
    $region8: #{forward.4} parent=1 // loop_exit
      _

// kernel: forward.5
$region0: #{forward.5}
  #allocation0 [shape = 'u32[]', space=smem, size = 0x4, offset = 0x4, fixed_abs, tag = 'smem constant byte address 0x4 - core index']
  #allocation1 [shape = 'u32[144,128]{1,0:T(1,128)}', space=vmem, size = 0x12000, scoped, tag = 'internal scratch']
  #allocation2 [shape = 'bf16[64,128]{1,0:T(16,128)(2,1)}', space=vmem, size = 0x4000, scoped, tag = 'scratch operand']
  #allocation3 [shape = 'bf16[576,128]{1,0:T(16,128)(2,1)}', space=vmem, size = 0x24000, scoped, tag = 'scratch operand']
  %s0 = inlined_call_operand.vmem [shape: bf16[288,256], index: 0, kind: input, shape index: {}]
  %s1 = inlined_call_operand.vmem [shape: bf16[64,288], index: 1, kind: input, shape index: {}]
  %s2 = inlined_call_operand.vmem [shape: f32[64,1], index: 2, kind: input, shape index: {}]
  %s3 = inlined_call_operand.vmem [shape: f32[64,1], index: 3, kind: input, shape index: {}]
  %s4 = inlined_call_operand.vmem [shape: bf16[64,576], index: 4, kind: input, shape index: {}]
  %s5 = inlined_call_operand.vmem [shape: f32[64,1], index: 5, kind: input, shape index: {}]
  %s6 = inlined_call_operand.vmem [shape: f32[64,1], index: 6, kind: input, shape index: {}]
  %s7 = inlined_call_operand.vmem [shape: f32[1,128], index: 7, kind: input, shape index: {}]
  %s8 = inlined_call_operand.vmem [shape: bf16[64,32], index: 8, kind: input, shape index: {}]
  %s9 = inlined_call_operand.vmem [shape: f32[64,1], index: 9, kind: input, shape index: {}]
  %s10 = inlined_call_operand.vmem [shape: f32[64,1], index: 10, kind: input, shape index: {}]
  %s11 = inlined_call_operand.vmem [shape: f32[64,256], index: 11, kind: output, shape index: {}]
  %s12 = sld [smem:[#allocation0]]
  $region152: #{forward.5} parent=0
    _
  %s14 = ssub.s32 1, %s12
  %s15 = scalar_select 0, %s14, %s12
  $region1: #{forward.5} parent=0
    #allocation4 [shape = 'u8[147456]{0}', space=vmem, size = 0x24000, scoped, tag = 'input window, operand 0']
    #allocation5 [shape = 'u8[65536]{0}', space=vmem, size = 0x10000, scoped, tag = 'output window, operand 0']
    loop: start=0, step=1, limit=4
    $region2: #{forward.5} parent=1 // loop_pre_header
      _
    $region3: #{forward.5} parent=1 // loop_header
      %s17 = sphi 0, %s21
      %p18 = scmp.ge.s32.totalorder %s17, 4
      %s27 = sphi 0, %s29
      %s30 = sphi 0, %s27
      %s31 = sphi 0, %s30
      %s47 = sphi 0, %s31
      %s51 = sphi 0, %s51
      %s53 = sphi 0, %s51
      %s54 = sphi 0, %s53
      %s68 = sphi 0, %s54
      %s72 = sphi 0, %s72
      %s74 = sphi 0, %s72
      %s75 = sphi 0, %s74
      %s89 = sphi 0, %s75
      %s93 = sphi 0, %s93
      %s95 = sphi 0, %s93
      %s96 = sphi 0, %s95
      %s110 = sphi 0, %s96
      %s114 = sphi 0, %s114
      %s116 = sphi 0, %s114
      %s117 = sphi 0, %s116
      %s131 = sphi 0, %s117
      %s135 = sphi 0, %s135
      %s137 = sphi 0, %s135
      %s138 = sphi 0, %s137
      %s152 = sphi 0, %s138
      %s156 = sphi 0, %s156
      %s158 = sphi 0, %s156
      %s159 = sphi 0, %s158
      %s173 = sphi 0, %s159
      %s177 = sphi 0, %s177
      %s179 = sphi 0, %s177
      %s180 = sphi 0, %s179
      %s194 = sphi 0, %s180
      %s198 = sphi 0, %s198
      %s200 = sphi 0, %s198
      %s201 = sphi 0, %s200
      %s215 = sphi 0, %s201
      %s219 = sphi 0, %s219
      %s221 = sphi 0, %s219
      %s222 = sphi 0, %s221
      %s236 = sphi 0, %s222
      %s240 = sphi 0, %s240
      %s242 = sphi 0, %s240
      %s243 = sphi 0, %s242
      %s257 = sphi 0, %s243
      %s263 = sphi 0, %s265
      %s266 = sphi 0, %s263
      %s267 = sphi 0, %s266
      %s283 = sphi 0, %s267
    $region4: #{forward.5} parent=1 // loop_header_branch
      %20 = sbr.rel (%p18) target = $region8
    $region5: #{forward.5} parent=1 // loop_body
      %s22 = ssub.s32 %s17, 1
      %s23 = ssub.s32 %s17, 2
      %s24 = sadd.s32 %s17, 1
      %s25 = ssub.s32 %s17, %s24
      %p26 = scmp.eq.s32.totalorder %s25, 0
      %s28 = sadd.s32 %s27, 1
      %s29 = scalar_select %p26, %s27, %s28
      %p32 = pneg %p26
      %p33 = scmp.eq.s32.totalorder %s17, 1
      %p34 = por %p32, %p33
      %p35 = scmp.ne.s32.totalorder %s27, %s30
      %p36 = scmp.eq.s32.totalorder %s17, 0
      %p37 = por %p35, %p36
      %p38 = scmp.ne.s32.totalorder %s27, %s30
      %p39 = scmp.eq.s32.totalorder %s22, 1
      %p40 = por %p38, %p39
      %p41 = scmp.ne.s32.totalorder %s30, %s31
      %p42 = scmp.eq.s32.totalorder %s22, 0
      %p43 = por %p41, %p42
      %p44 = scmp.ne.s32.totalorder %s30, %s31
      %p45 = scmp.eq.s32.totalorder %s23, 1
      %p46 = por %p44, %p45
      %p48 = scmp.ne.s32.totalorder %s31, %s47
      %p49 = scmp.eq.s32.totalorder %s23, 0
      %p50 = por %p48, %p49
      %s52 = sadd.s32 %s51, 1
      %p55 = scmp.eq.s32.totalorder %s17, 1
      %p56 = scmp.ne.s32.totalorder %s51, %s53
      %p57 = scmp.eq.s32.totalorder %s17, 0
      %p58 = por %p56, %p57
      %p59 = scmp.ne.s32.totalorder %s51, %s53
      %p60 = scmp.eq.s32.totalorder %s22, 1
      %p61 = por %p59, %p60
      %p62 = scmp.ne.s32.totalorder %s53, %s54
      %p63 = scmp.eq.s32.totalorder %s22, 0
      %p64 = por %p62, %p63
      %p65 = scmp.ne.s32.totalorder %s53, %s54
      %p66 = scmp.eq.s32.totalorder %s23, 1
      %p67 = por %p65, %p66
      %p69 = scmp.ne.s32.totalorder %s54, %s68
      %p70 = scmp.eq.s32.totalorder %s23, 0
      %p71 = por %p69, %p70
      %s73 = sadd.s32 %s72, 1
      %p76 = scmp.eq.s32.totalorder %s17, 1
      %p77 = scmp.ne.s32.totalorder %s72, %s74
      %p78 = scmp.eq.s32.totalorder %s17, 0
      %p79 = por %p77, %p78
      %p80 = scmp.ne.s32.totalorder %s72, %s74
      %p81 = scmp.eq.s32.totalorder %s22, 1
      %p82 = por %p80, %p81
      %p83 = scmp.ne.s32.totalorder %s74, %s75
      %p84 = scmp.eq.s32.totalorder %s22, 0
      %p85 = por %p83, %p84
      %p86 = scmp.ne.s32.totalorder %s74, %s75
      %p87 = scmp.eq.s32.totalorder %s23, 1
      %p88 = por %p86, %p87
      %p90 = scmp.ne.s32.totalorder %s75, %s89
      %p91 = scmp.eq.s32.totalorder %s23, 0
      %p92 = por %p90, %p91
      %s94 = sadd.s32 %s93, 1
      %p97 = scmp.eq.s32.totalorder %s17, 1
      %p98 = scmp.ne.s32.totalorder %s93, %s95
      %p99 = scmp.eq.s32.totalorder %s17, 0
      %p100 = por %p98, %p99
      %p101 = scmp.ne.s32.totalorder %s93, %s95
      %p102 = scmp.eq.s32.totalorder %s22, 1
      %p103 = por %p101, %p102
      %p104 = scmp.ne.s32.totalorder %s95, %s96
      %p105 = scmp.eq.s32.totalorder %s22, 0
      %p106 = por %p104, %p105
      %p107 = scmp.ne.s32.totalorder %s95, %s96
      %p108 = scmp.eq.s32.totalorder %s23, 1
      %p109 = por %p107, %p108
      %p111 = scmp.ne.s32.totalorder %s96, %s110
      %p112 = scmp.eq.s32.totalorder %s23, 0
      %p113 = por %p111, %p112
      %s115 = sadd.s32 %s114, 1
      %p118 = scmp.eq.s32.totalorder %s17, 1
      %p119 = scmp.ne.s32.totalorder %s114, %s116
      %p120 = scmp.eq.s32.totalorder %s17, 0
      %p121 = por %p119, %p120
      %p122 = scmp.ne.s32.totalorder %s114, %s116
      %p123 = scmp.eq.s32.totalorder %s22, 1
      %p124 = por %p122, %p123
      %p125 = scmp.ne.s32.totalorder %s116, %s117
      %p126 = scmp.eq.s32.totalorder %s22, 0
      %p127 = por %p125, %p126
      %p128 = scmp.ne.s32.totalorder %s116, %s117
      %p129 = scmp.eq.s32.totalorder %s23, 1
      %p130 = por %p128, %p129
      %p132 = scmp.ne.s32.totalorder %s117, %s131
      %p133 = scmp.eq.s32.totalorder %s23, 0
      %p134 = por %p132, %p133
      %s136 = sadd.s32 %s135, 1
      %p139 = scmp.eq.s32.totalorder %s17, 1
      %p140 = scmp.ne.s32.totalorder %s135, %s137
      %p141 = scmp.eq.s32.totalorder %s17, 0
      %p142 = por %p140, %p141
      %p143 = scmp.ne.s32.totalorder %s135, %s137
      %p144 = scmp.eq.s32.totalorder %s22, 1
      %p145 = por %p143, %p144
      %p146 = scmp.ne.s32.totalorder %s137, %s138
      %p147 = scmp.eq.s32.totalorder %s22, 0
      %p148 = por %p146, %p147
      %p149 = scmp.ne.s32.totalorder %s137, %s138
      %p150 = scmp.eq.s32.totalorder %s23, 1
      %p151 = por %p149, %p150
      %p153 = scmp.ne.s32.totalorder %s138, %s152
      %p154 = scmp.eq.s32.totalorder %s23, 0
      %p155 = por %p153, %p154
      %s157 = sadd.s32 %s156, 1
      %p160 = scmp.eq.s32.totalorder %s17, 1
      %p161 = scmp.ne.s32.totalorder %s156, %s158
      %p162 = scmp.eq.s32.totalorder %s17, 0
      %p163 = por %p161, %p162
      %p164 = scmp.ne.s32.totalorder %s156, %s158
      %p165 = scmp.eq.s32.totalorder %s22, 1
      %p166 = por %p164, %p165
      %p167 = scmp.ne.s32.totalorder %s158, %s159
      %p168 = scmp.eq.s32.totalorder %s22, 0
      %p169 = por %p167, %p168
      %p170 = scmp.ne.s32.totalorder %s158, %s159
      %p171 = scmp.eq.s32.totalorder %s23, 1
      %p172 = por %p170, %p171
      %p174 = scmp.ne.s32.totalorder %s159, %s173
      %p175 = scmp.eq.s32.totalorder %s23, 0
      %p176 = por %p174, %p175
      %s178 = sadd.s32 %s177, 1
      %p181 = scmp.eq.s32.totalorder %s17, 1
      %p182 = scmp.ne.s32.totalorder %s177, %s179
      %p183 = scmp.eq.s32.totalorder %s17, 0
      %p184 = por %p182, %p183
      %p185 = scmp.ne.s32.totalorder %s177, %s179
      %p186 = scmp.eq.s32.totalorder %s22, 1
      %p187 = por %p185, %p186
      %p188 = scmp.ne.s32.totalorder %s179, %s180
      %p189 = scmp.eq.s32.totalorder %s22, 0
      %p190 = por %p188, %p189
      %p191 = scmp.ne.s32.totalorder %s179, %s180
      %p192 = scmp.eq.s32.totalorder %s23, 1
      %p193 = por %p191, %p192
      %p195 = scmp.ne.s32.totalorder %s180, %s194
      %p196 = scmp.eq.s32.totalorder %s23, 0
      %p197 = por %p195, %p196
      %s199 = sadd.s32 %s198, 1
      %p202 = scmp.eq.s32.totalorder %s17, 1
      %p203 = scmp.ne.s32.totalorder %s198, %s200
      %p204 = scmp.eq.s32.totalorder %s17, 0
      %p205 = por %p203, %p204
      %p206 = scmp.ne.s32.totalorder %s198, %s200
      %p207 = scmp.eq.s32.totalorder %s22, 1
      %p208 = por %p206, %p207
      %p209 = scmp.ne.s32.totalorder %s200, %s201
      %p210 = scmp.eq.s32.totalorder %s22, 0
      %p211 = por %p209, %p210
      %p212 = scmp.ne.s32.totalorder %s200, %s201
      %p213 = scmp.eq.s32.totalorder %s23, 1
      %p214 = por %p212, %p213
      %p216 = scmp.ne.s32.totalorder %s201, %s215
      %p217 = scmp.eq.s32.totalorder %s23, 0
      %p218 = por %p216, %p217
      %s220 = sadd.s32 %s219, 1
      %p223 = scmp.eq.s32.totalorder %s17, 1
      %p224 = scmp.ne.s32.totalorder %s219, %s221
      %p225 = scmp.eq.s32.totalorder %s17, 0
      %p226 = por %p224, %p225
      %p227 = scmp.ne.s32.totalorder %s219, %s221
      %p228 = scmp.eq.s32.totalorder %s22, 1
      %p229 = por %p227, %p228
      %p230 = scmp.ne.s32.totalorder %s221, %s222
      %p231 = scmp.eq.s32.totalorder %s22, 0
      %p232 = por %p230, %p231
      %p233 = scmp.ne.s32.totalorder %s221, %s222
      %p234 = scmp.eq.s32.totalorder %s23, 1
      %p235 = por %p233, %p234
      %p237 = scmp.ne.s32.totalorder %s222, %s236
      %p238 = scmp.eq.s32.totalorder %s23, 0
      %p239 = por %p237, %p238
      %s241 = sadd.s32 %s240, 1
      %p244 = scmp.eq.s32.totalorder %s17, 1
      %p245 = scmp.ne.s32.totalorder %s240, %s242
      %p246 = scmp.eq.s32.totalorder %s17, 0
      %p247 = por %p245, %p246
      %p248 = scmp.ne.s32.totalorder %s240, %s242
      %p249 = scmp.eq.s32.totalorder %s22, 1
      %p250 = por %p248, %p249
      %p251 = scmp.ne.s32.totalorder %s242, %s243
      %p252 = scmp.eq.s32.totalorder %s22, 0
      %p253 = por %p251, %p252
      %p254 = scmp.ne.s32.totalorder %s242, %s243
      %p255 = scmp.eq.s32.totalorder %s23, 1
      %p256 = por %p254, %p255
      %p258 = scmp.ne.s32.totalorder %s243, %s257
      %p259 = scmp.eq.s32.totalorder %s23, 0
      %p260 = por %p258, %p259
      %s261 = ssub.s32 %s17, %s24
      %p262 = scmp.eq.s32.totalorder %s261, 0
      %s264 = sadd.s32 %s263, 1
      %s265 = scalar_select %p262, %s263, %s264
      %p268 = pneg %p262
      %p269 = scmp.eq.s32.totalorder %s17, 1
      %p270 = por %p268, %p269
      %p271 = scmp.ne.s32.totalorder %s263, %s266
      %p272 = scmp.eq.s32.totalorder %s17, 0
      %p273 = por %p271, %p272
      %p274 = scmp.ne.s32.totalorder %s263, %s266
      %p275 = scmp.eq.s32.totalorder %s22, 1
      %p276 = por %p274, %p275
      %p277 = scmp.ne.s32.totalorder %s266, %s267
      %p278 = scmp.eq.s32.totalorder %s22, 0
      %p279 = por %p277, %p278
      %p280 = scmp.ne.s32.totalorder %s266, %s267
      %p281 = scmp.eq.s32.totalorder %s23, 1
      %p282 = por %p280, %p281
      %p284 = scmp.ne.s32.totalorder %s267, %s283
      %p285 = scmp.eq.s32.totalorder %s23, 0
      %p286 = por %p284, %p285
      %p287 = scmp.le.s32.totalorder 1, %s17
      %p288 = scmp.lt.s32.totalorder %s17, 3
      %p289 = pnand %p287, %p288
      %p290 = pneg %p289
      // Predicated region
      $region9: #{forward.5} parent=5 // pred_check
        _
      $region10: #{forward.5} parent=5 // pred_check_branch
        %292 = sbr.rel (%p289) target = $region12
      $region11: #{forward.5} parent=5 // pred_region
        %s293 = ssub.s32 %s17, 1
        // Predicated region
        $region13: #{forward.5} parent=11 // pred_check
          %p294 = pneg %p64
        $region14: #{forward.5} parent=11 // pred_check_branch
          %296 = sbr.rel (%p294) target = $region16
        $region15: #{forward.5} parent=11 // pred_region
          _
        $region16: #{forward.5} parent=11 // pred_fallthru
          _
        // Predicated region
        $region17: #{forward.5} parent=11 // pred_check
          %p297 = pneg %p85
        $region18: #{forward.5} parent=11 // pred_check_branch
          %299 = sbr.rel (%p297) target = $region20
        $region19: #{forward.5} parent=11 // pred_region
          _
        $region20: #{forward.5} parent=11 // pred_fallthru
          _
        // Predicated region
        $region21: #{forward.5} parent=11 // pred_check
          %p300 = pneg %p106
        $region22: #{forward.5} parent=11 // pred_check_branch
          %302 = sbr.rel (%p300) target = $region24
        $region23: #{forward.5} parent=11 // pred_region
          _
        $region24: #{forward.5} parent=11 // pred_fallthru
          _
        // Predicated region
        $region25: #{forward.5} parent=11 // pred_check
          %p303 = pneg %p127
        $region26: #{forward.5} parent=11 // pred_check_branch
          %305 = sbr.rel (%p303) target = $region28
        $region27: #{forward.5} parent=11 // pred_region
          _
        $region28: #{forward.5} parent=11 // pred_fallthru
          _
        // Predicated region
        $region29: #{forward.5} parent=11 // pred_check
          %p306 = pneg %p148
        $region30: #{forward.5} parent=11 // pred_check_branch
          %308 = sbr.rel (%p306) target = $region32
        $region31: #{forward.5} parent=11 // pred_region
          _
        $region32: #{forward.5} parent=11 // pred_fallthru
          _
        // Predicated region
        $region33: #{forward.5} parent=11 // pred_check
          %p309 = pneg %p169
        $region34: #{forward.5} parent=11 // pred_check_branch
          %311 = sbr.rel (%p309) target = $region36
        $region35: #{forward.5} parent=11 // pred_region
          _
        $region36: #{forward.5} parent=11 // pred_fallthru
          _
        // Predicated region
        $region37: #{forward.5} parent=11 // pred_check
          %p312 = pneg %p190
        $region38: #{forward.5} parent=11 // pred_check_branch
          %314 = sbr.rel (%p312) target = $region40
        $region39: #{forward.5} parent=11 // pred_region
          _
        $region40: #{forward.5} parent=11 // pred_fallthru
          _
        // Predicated region
        $region41: #{forward.5} parent=11 // pred_check
          %p315 = pneg %p211
        $region42: #{forward.5} parent=11 // pred_check_branch
          %317 = sbr.rel (%p315) target = $region44
        $region43: #{forward.5} parent=11 // pred_region
          _
        $region44: #{forward.5} parent=11 // pred_fallthru
          _
        // Predicated region
        $region45: #{forward.5} parent=11 // pred_check
          %p318 = pneg %p232
        $region46: #{forward.5} parent=11 // pred_check_branch
          %320 = sbr.rel (%p318) target = $region48
        $region47: #{forward.5} parent=11 // pred_region
          _
        $region48: #{forward.5} parent=11 // pred_fallthru
          _
        // Predicated region
        $region49: #{forward.5} parent=11 // pred_check
          %p321 = pneg %p253
        $region50: #{forward.5} parent=11 // pred_check_branch
          %323 = sbr.rel (%p321) target = $region52
        $region51: #{forward.5} parent=11 // pred_region
          _
        $region52: #{forward.5} parent=11 // pred_fallthru
          _
      $region12: #{forward.5} parent=5 // pred_fallthru
        _
      %p324 = scmp.lt.s32.totalorder %s17, 2
      // Predicated region
      $region53: #{forward.5} parent=5 // pred_check
        %p325 = pneg %p324
      $region54: #{forward.5} parent=5 // pred_check_branch
        %327 = sbr.rel (%p325) target = $region56
      $region55: #{forward.5} parent=5 // pred_region
        // Predicated region
        $region57: #{forward.5} parent=55 // pred_check
          %p328 = pneg %p37
        $region58: #{forward.5} parent=55 // pred_check_branch
          %330 = sbr.rel (%p328) target = $region60
        $region59: #{forward.5} parent=55 // pred_region
          %s331 = sand.u32 %s27, 1
          %s332 = sand.u32 %s27, 1
          %s333 = smul.addr %s332, 144
          %s334 = scalar_lea.vmem [#allocation4], %s333
          %s335 = smul.addr %s17, 4
          %s336 = scalar_lea.vmem %s0, %s335
          // Predicated region
          $region61: #{forward.5} parent=59 // pred_check
            _
          $region62: #{forward.5} parent=59 // pred_check_branch
            %338 = sbr.rel (0) target = $region64
          $region63: #{forward.5} parent=59 // pred_region
            // Predicated region
            $region65: #{forward.5} parent=63 // pred_check
              _
            $region66: #{forward.5} parent=63 // pred_check_branch
              %340 = sbr.rel target = $region68
            $region67: #{forward.5} parent=63 // pred_region
              // Predicated region
              $region80: #{forward.5} parent=67 // pred_check
                _
              $region81: #{forward.5} parent=67 // pred_check_branch
                %425 = sbr.rel (0) target = $region83
              $region82: #{forward.5} parent=67 // pred_region
                loop: start=0, step=1, limit=1
                $region84: #{forward.5} parent=82 // loop_pre_header
                  _
                $region85: #{forward.5} parent=82 // loop_header
                  %s427 = sphi 0, %s431
                  %p428 = scmp.ge.s32.totalorder %s427, 1
                  %s432 = sphi %s336, %s336
                  %s433 = sphi %s334, %s334
                $region86: #{forward.5} parent=82 // loop_header_branch
                  %430 = sbr.rel (%p428) target = $region90
                $region87: #{forward.5} parent=82 // loop_body
                  _
                $region88: #{forward.5} parent=82 // loop_footer
                  %s431 = sadd.s32 1, %s427
                $region89: #{forward.5} parent=82 // loop_footer_branch
                  %426 = sbr.rel target = $region85
                $region90: #{forward.5} parent=82 // loop_exit
                  _
                loop: start=0, step=1, limit=1
                $region91: #{forward.5} parent=82 // loop_pre_header
                  _
                $region92: #{forward.5} parent=82 // loop_header
                  %s436 = sphi 0, %s440
                  %p437 = scmp.ge.s32.totalorder %s436, 1
                  %s441 = sphi %s336, %s336
                  %s442 = sphi %s334, %s334
                $region93: #{forward.5} parent=82 // loop_header_branch
                  %439 = sbr.rel (%p437) target = $region97
                $region94: #{forward.5} parent=82 // loop_body
                  %v443 = vld [vmem:[%s441] sm:$0xf]
                  %444 = vst [vmem:[%s442] sm:$0xf] %v443
                  %v445 = vld [vmem:[%s441 + $0x8] sm:$0xf]
                  %446 = vst [vmem:[%s442 + $0x4] sm:$0xf] %v445
                  %v447 = vld [vmem:[%s441 + $0x10] sm:$0xf]
                  %448 = vst [vmem:[%s442 + $0x8] sm:$0xf] %v447
                  %v449 = vld [vmem:[%s441 + $0x18] sm:$0xf]
                  %450 = vst [vmem:[%s442 + $0xc] sm:$0xf] %v449
                  %v451 = vld [vmem:[%s441 + $0x20] sm:$0xf]
                  %452 = vst [vmem:[%s442 + $0x10] sm:$0xf] %v451
                  %v453 = vld [vmem:[%s441 + $0x28] sm:$0xf]
                  %454 = vst [vmem:[%s442 + $0x14] sm:$0xf] %v453
                  %v455 = vld [vmem:[%s441 + $0x30] sm:$0xf]
                  %456 = vst [vmem:[%s442 + $0x18] sm:$0xf] %v455
                  %v457 = vld [vmem:[%s441 + $0x38] sm:$0xf]
                  %458 = vst [vmem:[%s442 + $0x1c] sm:$0xf] %v457
                  %v459 = vld [vmem:[%s441 + $0x40] sm:$0xf]
                  %460 = vst [vmem:[%s442 + $0x20] sm:$0xf] %v459
                  %v461 = vld [vmem:[%s441 + $0x48] sm:$0xf]
                  %462 = vst [vmem:[%s442 + $0x24] sm:$0xf] %v461
                  %v463 = vld [vmem:[%s441 + $0x50] sm:$0xf]
                  %464 = vst [vmem:[%s442 + $0x28] sm:$0xf] %v463
                  %v465 = vld [vmem:[%s441 + $0x58] sm:$0xf]
                  %466 = vst [vmem:[%s442 + $0x2c] sm:$0xf] %v465
                  %v467 = vld [vmem:[%s441 + $0x60] sm:$0xf]
                  %468 = vst [vmem:[%s442 + $0x30] sm:$0xf] %v467
                  %v469 = vld [vmem:[%s441 + $0x68] sm:$0xf]
                  %470 = vst [vmem:[%s442 + $0x34] sm:$0xf] %v469
                  %v471 = vld [vmem:[%s441 + $0x70] sm:$0xf]
                  %472 = vst [vmem:[%s442 + $0x38] sm:$0xf] %v471
                  %v473 = vld [vmem:[%s441 + $0x78] sm:$0xf]
                  %474 = vst [vmem:[%s442 + $0x3c] sm:$0xf] %v473
                  %v475 = vld [vmem:[%s441 + $0x80] sm:$0xf]
                  %476 = vst [vmem:[%s442 + $0x40] sm:$0xf] %v475
                  %v477 = vld [vmem:[%s441 + $0x88] sm:$0xf]
                  %478 = vst [vmem:[%s442 + $0x44] sm:$0xf] %v477
                  %v479 = vld [vmem:[%s441 + $0x90] sm:$0xf]
                  %480 = vst [vmem:[%s442 + $0x48] sm:$0xf] %v479
                  %v481 = vld [vmem:[%s441 + $0x98] sm:$0xf]
                  %482 = vst [vmem:[%s442 + $0x4c] sm:$0xf] %v481
                  %v483 = vld [vmem:[%s441 + $0xa0] sm:$0xf]
                  %484 = vst [vmem:[%s442 + $0x50] sm:$0xf] %v483
                  %v485 = vld [vmem:[%s441 + $0xa8] sm:$0xf]
                  %486 = vst [vmem:[%s442 + $0x54] sm:$0xf] %v485
                  %v487 = vld [vmem:[%s441 + $0xb0] sm:$0xf]
                  %488 = vst [vmem:[%s442 + $0x58] sm:$0xf] %v487
                  %v489 = vld [vmem:[%s441 + $0xb8] sm:$0xf]
                  %490 = vst [vmem:[%s442 + $0x5c] sm:$0xf] %v489
                  %v491 = vld [vmem:[%s441 + $0xc0] sm:$0xf]
                  %492 = vst [vmem:[%s442 + $0x60] sm:$0xf] %v491
                  %v493 = vld [vmem:[%s441 + $0xc8] sm:$0xf]
                  %494 = vst [vmem:[%s442 + $0x64] sm:$0xf] %v493
                  %v495 = vld [vmem:[%s441 + $0xd0] sm:$0xf]
                  %496 = vst [vmem:[%s442 + $0x68] sm:$0xf] %v495
                  %v497 = vld [vmem:[%s441 + $0xd8] sm:$0xf]
                  %498 = vst [vmem:[%s442 + $0x6c] sm:$0xf] %v497
                  %v499 = vld [vmem:[%s441 + $0xe0] sm:$0xf]
                  %500 = vst [vmem:[%s442 + $0x70] sm:$0xf] %v499
                  %v501 = vld [vmem:[%s441 + $0xe8] sm:$0xf]
                  %502 = vst [vmem:[%s442 + $0x74] sm:$0xf] %v501
                  %v503 = vld [vmem:[%s441 + $0xf0] sm:$0xf]
                  %504 = vst [vmem:[%s442 + $0x78] sm:$0xf] %v503
                  %v505 = vld [vmem:[%s441 + $0xf8] sm:$0xf]
                  %506 = vst [vmem:[%s442 + $0x7c] sm:$0xf] %v505
                  %v507 = vld [vmem:[%s441 + $0x100] sm:$0xf]
                  %508 = vst [vmem:[%s442 + $0x80] sm:$0xf] %v507
                  %v509 = vld [vmem:[%s441 + $0x108] sm:$0xf]
                  %510 = vst [vmem:[%s442 + $0x84] sm:$0xf] %v509
                  %v511 = vld [vmem:[%s441 + $0x110] sm:$0xf]
                  %512 = vst [vmem:[%s442 + $0x88] sm:$0xf] %v511
                  %v513 = vld [vmem:[%s441 + $0x118] sm:$0xf]
                  %514 = vst [vmem:[%s442 + $0x8c] sm:$0xf] %v513
                $region95: #{forward.5} parent=82 // loop_footer
                  %s440 = sadd.s32 1, %s436
                $region96: #{forward.5} parent=82 // loop_footer_branch
                  %435 = sbr.rel target = $region92
                $region97: #{forward.5} parent=82 // loop_exit
                  _
              $region83: #{forward.5} parent=67 // pred_fallthru
                _
            $region68: #{forward.5} parent=63 // pred_fallthru
              _
            // Predicated region
            $region69: #{forward.5} parent=63 // pred_check
              _
            $region70: #{forward.5} parent=63 // pred_check_branch
              %342 = sbr.rel (0) target = $region72
            $region71: #{forward.5} parent=63 // pred_region
              loop: start=0, step=1, limit=1
              $region73: #{forward.5} parent=71 // loop_pre_header
                _
              $region74: #{forward.5} parent=71 // loop_header
                %s345 = sphi 0, %s349
                %p346 = scmp.ge.s32.totalorder %s345, 1
                %s350 = sphi %s336, %s336
                %s351 = sphi %s334, %s334
              $region75: #{forward.5} parent=71 // loop_header_branch
                %348 = sbr.rel (%p346) target = $region79
              $region76: #{forward.5} parent=71 // loop_body
                %v352 = vld [vmem:[%s350] sm:$0xf]
                %353 = vst [vmem:[%s351] sm:$0xf] %v352
                %v354 = vld [vmem:[%s350 + $0x8] sm:$0xf]
                %355 = vst [vmem:[%s351 + $0x4] sm:$0xf] %v354
                %v356 = vld [vmem:[%s350 + $0x10] sm:$0xf]
                %357 = vst [vmem:[%s351 + $0x8] sm:$0xf] %v356
                %v358 = vld [vmem:[%s350 + $0x18] sm:$0xf]
                %359 = vst [vmem:[%s351 + $0xc] sm:$0xf] %v358
                %v360 = vld [vmem:[%s350 + $0x20] sm:$0xf]
                %361 = vst [vmem:[%s351 + $0x10] sm:$0xf] %v360
                %v362 = vld [vmem:[%s350 + $0x28] sm:$0xf]
                %363 = vst [vmem:[%s351 + $0x14] sm:$0xf] %v362
                %v364 = vld [vmem:[%s350 + $0x30] sm:$0xf]
                %365 = vst [vmem:[%s351 + $0x18] sm:$0xf] %v364
                %v366 = vld [vmem:[%s350 + $0x38] sm:$0xf]
                %367 = vst [vmem:[%s351 + $0x1c] sm:$0xf] %v366
                %v368 = vld [vmem:[%s350 + $0x40] sm:$0xf]
                %369 = vst [vmem:[%s351 + $0x20] sm:$0xf] %v368
                %v370 = vld [vmem:[%s350 + $0x48] sm:$0xf]
                %371 = vst [vmem:[%s351 + $0x24] sm:$0xf] %v370
                %v372 = vld [vmem:[%s350 + $0x50] sm:$0xf]
                %373 = vst [vmem:[%s351 + $0x28] sm:$0xf] %v372
                %v374 = vld [vmem:[%s350 + $0x58] sm:$0xf]
                %375 = vst [vmem:[%s351 + $0x2c] sm:$0xf] %v374
                %v376 = vld [vmem:[%s350 + $0x60] sm:$0xf]
                %377 = vst [vmem:[%s351 + $0x30] sm:$0xf] %v376
                %v378 = vld [vmem:[%s350 + $0x68] sm:$0xf]
                %379 = vst [vmem:[%s351 + $0x34] sm:$0xf] %v378
                %v380 = vld [vmem:[%s350 + $0x70] sm:$0xf]
                %381 = vst [vmem:[%s351 + $0x38] sm:$0xf] %v380
                %v382 = vld [vmem:[%s350 + $0x78] sm:$0xf]
                %383 = vst [vmem:[%s351 + $0x3c] sm:$0xf] %v382
                %v384 = vld [vmem:[%s350 + $0x80] sm:$0xf]
                %385 = vst [vmem:[%s351 + $0x40] sm:$0xf] %v384
                %v386 = vld [vmem:[%s350 + $0x88] sm:$0xf]
                %387 = vst [vmem:[%s351 + $0x44] sm:$0xf] %v386
                %v388 = vld [vmem:[%s350 + $0x90] sm:$0xf]
                %389 = vst [vmem:[%s351 + $0x48] sm:$0xf] %v388
                %v390 = vld [vmem:[%s350 + $0x98] sm:$0xf]
                %391 = vst [vmem:[%s351 + $0x4c] sm:$0xf] %v390
                %v392 = vld [vmem:[%s350 + $0xa0] sm:$0xf]
                %393 = vst [vmem:[%s351 + $0x50] sm:$0xf] %v392
                %v394 = vld [vmem:[%s350 + $0xa8] sm:$0xf]
                %395 = vst [vmem:[%s351 + $0x54] sm:$0xf] %v394
                %v396 = vld [vmem:[%s350 + $0xb0] sm:$0xf]
                %397 = vst [vmem:[%s351 + $0x58] sm:$0xf] %v396
                %v398 = vld [vmem:[%s350 + $0xb8] sm:$0xf]
                %399 = vst [vmem:[%s351 + $0x5c] sm:$0xf] %v398
                %v400 = vld [vmem:[%s350 + $0xc0] sm:$0xf]
                %401 = vst [vmem:[%s351 + $0x60] sm:$0xf] %v400
                %v402 = vld [vmem:[%s350 + $0xc8] sm:$0xf]
                %403 = vst [vmem:[%s351 + $0x64] sm:$0xf] %v402
                %v404 = vld [vmem:[%s350 + $0xd0] sm:$0xf]
                %405 = vst [vmem:[%s351 + $0x68] sm:$0xf] %v404
                %v406 = vld [vmem:[%s350 + $0xd8] sm:$0xf]
                %407 = vst [vmem:[%s351 + $0x6c] sm:$0xf] %v406
                %v408 = vld [vmem:[%s350 + $0xe0] sm:$0xf]
                %409 = vst [vmem:[%s351 + $0x70] sm:$0xf] %v408
                %v410 = vld [vmem:[%s350 + $0xe8] sm:$0xf]
                %411 = vst [vmem:[%s351 + $0x74] sm:$0xf] %v410
                %v412 = vld [vmem:[%s350 + $0xf0] sm:$0xf]
                %413 = vst [vmem:[%s351 + $0x78] sm:$0xf] %v412
                %v414 = vld [vmem:[%s350 + $0xf8] sm:$0xf]
                %415 = vst [vmem:[%s351 + $0x7c] sm:$0xf] %v414
                %v416 = vld [vmem:[%s350 + $0x100] sm:$0xf]
                %417 = vst [vmem:[%s351 + $0x80] sm:$0xf] %v416
                %v418 = vld [vmem:[%s350 + $0x108] sm:$0xf]
                %419 = vst [vmem:[%s351 + $0x84] sm:$0xf] %v418
                %v420 = vld [vmem:[%s350 + $0x110] sm:$0xf]
                %421 = vst [vmem:[%s351 + $0x88] sm:$0xf] %v420
                %v422 = vld [vmem:[%s350 + $0x118] sm:$0xf]
                %423 = vst [vmem:[%s351 + $0x8c] sm:$0xf] %v422
              $region77: #{forward.5} parent=71 // loop_footer
                %s349 = sadd.s32 1, %s345
              $region78: #{forward.5} parent=71 // loop_footer_branch
                %344 = sbr.rel target = $region74
              $region79: #{forward.5} parent=71 // loop_exit
                _
            $region72: #{forward.5} parent=63 // pred_fallthru
              _
          $region64: #{forward.5} parent=59 // pred_fallthru
            _
          %515 = vnop
        $region60: #{forward.5} parent=55 // pred_fallthru
          _
      $region56: #{forward.5} parent=5 // pred_fallthru
        _
      %p516 = scmp.le.s32.totalorder 1, %s17
      %p517 = scmp.lt.s32.totalorder %s17, 3
      %p518 = pnand %p516, %p517
      %p519 = pneg %p518
      // Predicated region
      $region98: #{forward.5} parent=5 // pred_check
        _
      $region99: #{forward.5} parent=5 // pred_check_branch
        %521 = sbr.rel (%p518) target = $region101
      $region100: #{forward.5} parent=5 // pred_region
        %s522 = ssub.s32 %s17, 1
        %s523 = sand.u32 %s30, 1
        %s524 = sand.u32 %s30, 1
        %s525 = smul.addr %s524, 144
        %s526 = scalar_lea.vmem [#allocation4], %s525
        // Predicated region
        $region102: #{forward.5} parent=100 // pred_check
          %p527 = pneg %p43
        $region103: #{forward.5} parent=100 // pred_check_branch
          %529 = sbr.rel (%p527) target = $region105
        $region104: #{forward.5} parent=100 // pred_region
          _
        $region105: #{forward.5} parent=100 // pred_fallthru
          _
        %s530 = sand.u32 %s30, 1
        %s531 = sand.u32 %s30, 1
        %s532 = smul.addr %s531, 144
        %s533 = scalar_lea.vmem [#allocation4], %s532
        %p534 = pneg %p43
        %p535 = pneg %p40
        %p536 = pneg %p64
        %p537 = pneg %p61
        %p538 = pneg %p85
        %p539 = pneg %p82
        %p540 = pneg %p106
        %p541 = pneg %p103
        %p542 = pneg %p127
        %p543 = pneg %p124
        %p544 = pneg %p148
        %p545 = pneg %p145
        %p546 = pneg %p169
        %p547 = pneg %p166
        %p548 = pneg %p190
        %p549 = pneg %p187
        %p550 = pneg %p211
        %p551 = pneg %p208
        %p552 = pneg %p232
        %p553 = pneg %p229
        %p554 = pneg %p253
        %p555 = pneg %p250
        %p556 = pneg %p279
        %p557 = pneg %p276
        %s558 = sand.u32 %s266, 1
        %s559 = sand.u32 %s266, 1
        %s560 = smul.addr %s559, 64
        %s561 = scalar_lea.vmem [#allocation5], %s560
        %v563 = vld [vmem:[%s7] sm:$0x1]
        %v564 = vld [vmem:[%s1] sm:$0xff]
        %v565 = vld [vmem:[%s1 + $0x8] sm:$0xf]
        %v566 = vld [vmem:[%s1 + $0xc] sm:$0xff]
        %v567 = vld [vmem:[%s1 + $0x14] sm:$0xf]
        %v568 = vld [vmem:[%s1 + $0x18] sm:$0xff]
        %v569 = vld [vmem:[%s1 + $0x20] sm:$0xf]
        %v570 = vld [vmem:[%s1 + $0x24] sm:$0xff]
        %v571 = vld [vmem:[%s1 + $0x2c] sm:$0xf]
        %v572 = vld [vmem:[%s1 + $0x30] sm:$0xff]
        %v573 = vld [vmem:[%s1 + $0x38] sm:$0xf]
        %v574 = vld [vmem:[%s1 + $0x3c] sm:$0xff]
        %v575 = vld [vmem:[%s1 + $0x44] sm:$0xf]
        %v576 = vld [vmem:[%s1 + $0x48] sm:$0xff]
        %v577 = vld [vmem:[%s1 + $0x50] sm:$0xf]
        %v578 = vld [vmem:[%s1 + $0x54] sm:$0xff]
        %v579 = vld [vmem:[%s1 + $0x5c] sm:$0xf]
        %v580 = vld [vmem:[%s526] sm:$0xf]
        %v581 = vld [vmem:[%s526 + $0x4] sm:$0xf]
        %v582 = vld [vmem:[%s526 + $0x8] sm:$0xf]
        %v583 = vld [vmem:[%s526 + $0xc] sm:$0xf]
        %v584 = vld [vmem:[%s526 + $0x10] sm:$0xf]
        %v585 = vld [vmem:[%s526 + $0x14] sm:$0xf]
        %v586 = vld [vmem:[%s526 + $0x18] sm:$0xf]
        %v587 = vld [vmem:[%s526 + $0x1c] sm:$0xf]
        %v588 = vld [vmem:[%s526 + $0x20] sm:$0xf]
        %v589 = vld [vmem:[%s526 + $0x24] sm:$0xf]
        %v590 = vld [vmem:[%s526 + $0x28] sm:$0xf]
        %v591 = vld [vmem:[%s526 + $0x2c] sm:$0xf]
        %v592 = vld [vmem:[%s526 + $0x30] sm:$0xf]
        %v593 = vld [vmem:[%s526 + $0x34] sm:$0xf]
        %v594 = vld [vmem:[%s526 + $0x38] sm:$0xf]
        %v595 = vld [vmem:[%s526 + $0x3c] sm:$0xf]
        %v596 = vld [vmem:[%s526 + $0x40] sm:$0xf]
        %v597 = vld [vmem:[%s526 + $0x44] sm:$0xf]
        %v598 = vld [vmem:[%s526 + $0x48] sm:$0xf]
        %v599 = vld [vmem:[%s526 + $0x4c] sm:$0xf]
        %v600 = vld [vmem:[%s526 + $0x50] sm:$0xf]
        %v601 = vld [vmem:[%s526 + $0x54] sm:$0xf]
        %v602 = vld [vmem:[%s526 + $0x58] sm:$0xf]
        %v603 = vld [vmem:[%s526 + $0x5c] sm:$0xf]
        %v604 = vld [vmem:[%s526 + $0x60] sm:$0xf]
        %v605 = vld [vmem:[%s526 + $0x64] sm:$0xf]
        %v606 = vld [vmem:[%s526 + $0x68] sm:$0xf]
        %v607 = vld [vmem:[%s526 + $0x6c] sm:$0xf]
        %v608 = vld [vmem:[%s526 + $0x70] sm:$0xf]
        %v609 = vld [vmem:[%s526 + $0x74] sm:$0xf]
        %v610 = vld [vmem:[%s526 + $0x78] sm:$0xf]
        %v611 = vld [vmem:[%s526 + $0x7c] sm:$0xf]
        %v612 = vld [vmem:[%s526 + $0x80] sm:$0xf]
        %v613 = vld [vmem:[%s526 + $0x84] sm:$0xf]
        %v614 = vld [vmem:[%s526 + $0x88] sm:$0xf]
        %v615 = vld [vmem:[%s526 + $0x8c] sm:$0xf]
        %v632 = vunpack.c.l.b16 %v564
        %v633 = vunpack.c.h.b16 %v564
        %v634 = vunpack.c.l.b16 %v565
        %v635 = vunpack.c.l.b16 %v566
        %v636 = vunpack.c.h.b16 %v566
        %v637 = vunpack.c.l.b16 %v567
        %v638 = vunpack.c.l.b16 %v568
        %v639 = vunpack.c.h.b16 %v568
        %v640 = vunpack.c.l.b16 %v569
        %v641 = vunpack.c.l.b16 %v570
        %v642 = vunpack.c.h.b16 %v570
        %v643 = vunpack.c.l.b16 %v571
        %v644 = vunpack.c.l.b16 %v572
        %v645 = vunpack.c.h.b16 %v572
        %v646 = vunpack.c.l.b16 %v573
        %v647 = vunpack.c.l.b16 %v574
        %v648 = vunpack.c.h.b16 %v574
        %v649 = vunpack.c.l.b16 %v575
        %v650 = vunpack.c.l.b16 %v576
        %v651 = vunpack.c.h.b16 %v576
        %v652 = vunpack.c.l.b16 %v577
        %v653 = vunpack.c.l.b16 %v578
        %v654 = vunpack.c.h.b16 %v578
        %v655 = vunpack.c.l.b16 %v579
        %v656 = vpack.c.b16 %v635, %v632
        %v657 = vpack.c.b16 %v636, %v633
        %v658 = vpack.c.b16 %v637, %v634
        %v659 = vpack.c.b16 %v641, %v638
        %v660 = vpack.c.b16 %v642, %v639
        %v661 = vpack.c.b16 %v643, %v640
        %v662 = vpack.c.b16 %v647, %v644
        %v663 = vpack.c.b16 %v648, %v645
        %v664 = vpack.c.b16 %v649, %v646
        %v665 = vpack.c.b16 %v653, %v650
        %v666 = vpack.c.b16 %v654, %v651
        %v667 = vpack.c.b16 %v655, %v652
        %v712 = vunpack.c.l.b16 %v580
        %v713 = vunpack.c.l.b16 %v581
        %v714 = vunpack.c.l.b16 %v582
        %v715 = vunpack.c.l.b16 %v583
        %v716 = vunpack.c.l.b16 %v584
        %v717 = vunpack.c.l.b16 %v585
        %v718 = vunpack.c.l.b16 %v586
        %v719 = vunpack.c.l.b16 %v587
        %v720 = vunpack.c.l.b16 %v588
        %v721 = vunpack.c.l.b16 %v589
        %v722 = vunpack.c.l.b16 %v590
        %v723 = vunpack.c.l.b16 %v591
        %v724 = vunpack.c.l.b16 %v592
        %v725 = vunpack.c.l.b16 %v593
        %v726 = vunpack.c.l.b16 %v594
        %v727 = vunpack.c.l.b16 %v595
        %v728 = vunpack.c.l.b16 %v596
        %v729 = vunpack.c.l.b16 %v597
        %v730 = vunpack.c.l.b16 %v598
        %v731 = vunpack.c.l.b16 %v599
        %v732 = vunpack.c.l.b16 %v600
        %v733 = vunpack.c.l.b16 %v601
        %v734 = vunpack.c.l.b16 %v602
        %v735 = vunpack.c.l.b16 %v603
        %v736 = vunpack.c.l.b16 %v604
        %v737 = vunpack.c.l.b16 %v605
        %v738 = vunpack.c.l.b16 %v606
        %v739 = vunpack.c.l.b16 %v607
        %v740 = vunpack.c.l.b16 %v608
        %v741 = vunpack.c.l.b16 %v609
        %v742 = vunpack.c.l.b16 %v610
        %v743 = vunpack.c.l.b16 %v611
        %v744 = vunpack.c.l.b16 %v612
        %v745 = vunpack.c.l.b16 %v613
        %v746 = vunpack.c.l.b16 %v614
        %v747 = vunpack.c.l.b16 %v615
        %v748 = vpack.c.b16 %v713, %v712
        %v749 = vpack.c.b16 %v715, %v714
        %v750 = vpack.c.b16 %v717, %v716
        %v751 = vpack.c.b16 %v719, %v718
        %v752 = vpack.c.b16 %v721, %v720
        %v753 = vpack.c.b16 %v723, %v722
        %v754 = vpack.c.b16 %v725, %v724
        %v755 = vpack.c.b16 %v727, %v726
        %v756 = vpack.c.b16 %v729, %v728
        %v757 = vpack.c.b16 %v731, %v730
        %v758 = vpack.c.b16 %v733, %v732
        %v759 = vpack.c.b16 %v735, %v734
        %v760 = vpack.c.b16 %v737, %v736
        %v761 = vpack.c.b16 %v739, %v738
        %v762 = vpack.c.b16 %v741, %v740
        %v763 = vpack.c.b16 %v743, %v742
        %v764 = vpack.c.b16 %v745, %v744
        %v765 = vpack.c.b16 %v747, %v746
        %vm784 = vcmask 261120
        %v786 = vsel %vm784, %v658, 0
        %v789 = vsel %vm784, %v661, 0
        %v792 = vsel %vm784, %v664, 0
        %v795 = vsel %vm784, %v667, 0
        %797 = vmatprep.subr.bf16.mxu0 0
        %798 = vmatpush1.bf16.msra.mxu0 %v748
        %799 = vmatprep.subr.bf16.mxu0 0
        %800 = vmatpush1.bf16.msra.mxu0 %v749
        %801 = vmatprep.subr.bf16.mxu0 0
        %802 = vmatpush1.bf16.msra.mxu0 %v750
        %803 = vmatprep.subr.bf16.mxu0 0
        %804 = vmatpush1.bf16.msra.mxu0 %v751
        %805 = vmatprep.subr.bf16.mxu0 0
        %806 = vmatpush1.bf16.msra.mxu0 %v752
        %807 = vmatprep.subr.bf16.mxu0 0
        %808 = vmatpush1.bf16.msra.mxu0 %v753
        %809 = vmatprep.subr.bf16.mxu0 0
        %810 = vmatpush1.bf16.msra.mxu0 %v754
        %811 = vmatprep.subr.bf16.mxu0 0
        %812 = vmatpush1.bf16.msra.mxu0 %v755
        %813 = vmatprep.subr.bf16.mxu0 0
        %814 = vmatpush1.bf16.msra.mxu0 %v756
        %815 = vmatprep.subr.bf16.mxu0 0
        %816 = vmatpush1.bf16.msra.mxu0 %v757
        %817 = vmatprep.subr.bf16.mxu0 0
        %818 = vmatpush1.bf16.msra.mxu0 %v758
        %819 = vmatprep.subr.bf16.mxu0 0
        %820 = vmatpush1.bf16.msra.mxu0 %v759
        %821 = vmatprep.subr.bf16.mxu0 0
        %822 = vmatpush1.bf16.msra.mxu0 %v760
        %823 = vmatprep.subr.bf16.mxu0 0
        %824 = vmatpush1.bf16.msra.mxu0 %v761
        %825 = vmatprep.subr.bf16.mxu0 0
        %826 = vmatpush1.bf16.msra.mxu0 %v762
        %827 = vmatprep.subr.bf16.mxu0 0
        %828 = vmatpush1.bf16.msra.mxu0 %v763
        %829 = vmatprep.mubr.bf16.mxu0 %v657
        %830 = vmatmul.mubr.bf16.gmra.mrb[0].mxu0 %v656
        %v831 = vpop.f32.mrb[0].mxu0
        %v832 = vadd.f32 0.0, %v831
        %v833 = vpop.f32.mrb[0].mxu0
        %v834 = vpop.f32.mrb[0].mxu0
        %v835 = vadd.f32 0.0, %v834
        %v836 = vpop.f32.mrb[0].mxu0
        %837 = vmatprep.mubr.bf16.mxu0 %v660
        %838 = vmatmul.mubr.bf16.gmra.mrb[0].mxu0 %v659
        %v839 = vpop.f32.mrb[0].mxu0
        %v840 = vadd.f32 0.0, %v839
        %v841 = vpop.f32.mrb[0].mxu0
        %v842 = vpop.f32.mrb[0].mxu0
        %v843 = vadd.f32 0.0, %v842
        %v844 = vpop.f32.mrb[0].mxu0
        %845 = vmatprep.mubr.bf16.mxu0 %v663
        %846 = vmatmul.mubr.bf16.gmra.mrb[0].mxu0 %v662
        %v847 = vpop.f32.mrb[0].mxu0
        %v848 = vadd.f32 0.0, %v847
        %v849 = vpop.f32.mrb[0].mxu0
        %v850 = vpop.f32.mrb[0].mxu0
        %v851 = vadd.f32 0.0, %v850
        %v852 = vpop.f32.mrb[0].mxu0
        %853 = vmatprep.mubr.bf16.mxu0 %v666
        %854 = vmatmul.mubr.bf16.gmra.mrb[0].mxu0 %v665
        %v855 = vpop.f32.mrb[0].mxu0
        %v856 = vadd.f32 0.0, %v855
        %v857 = vpop.f32.mrb[0].mxu0
        %v858 = vpop.f32.mrb[0].mxu0
        %v859 = vadd.f32 0.0, %v858
        %v860 = vpop.f32.mrb[0].mxu0
        %861 = vdwg.mxu0
        %862 = vmatprep.subr.bf16.mxu0 0
        %863 = vmatpush1.bf16.msra.mxu0 %v764
        %864 = vmatprep.subr.bf16.mxu0 0
        %865 = vmatpush1.bf16.msra.mxu0 %v765
        %866 = vmatprep.subr.bf16.mxu0 0
        %867 = vmatpush1.bf16.msra.mxu0 0
        %868 = vmatprep.subr.bf16.mxu0 0
        %869 = vmatpush1.bf16.msra.mxu0 0
        %870 = vmatprep.subr.bf16.mxu0 0
        %871 = vmatpush1.bf16.msra.mxu0 0
        %872 = vmatprep.subr.bf16.mxu0 0
        %873 = vmatpush1.bf16.msra.mxu0 0
        %874 = vmatprep.subr.bf16.mxu0 0
        %875 = vmatpush1.bf16.msra.mxu0 0
        %876 = vmatprep.subr.bf16.mxu0 0
        %877 = vmatpush1.bf16.msra.mxu0 0
        %878 = vmatprep.subr.bf16.mxu0 0
        %879 = vmatpush1.bf16.msra.mxu0 0
        %880 = vmatprep.subr.bf16.mxu0 0
        %881 = vmatpush1.bf16.msra.mxu0 0
        %882 = vmatprep.subr.bf16.mxu0 0
        %883 = vmatpush1.bf16.msra.mxu0 0
        %884 = vmatprep.subr.bf16.mxu0 0
        %885 = vmatpush1.bf16.msra.mxu0 0
        %886 = vmatprep.subr.bf16.mxu0 0
        %887 = vmatpush1.bf16.msra.mxu0 0
        %888 = vmatprep.subr.bf16.mxu0 0
        %889 = vmatpush1.bf16.msra.mxu0 0
        %890 = vmatprep.subr.bf16.mxu0 0
        %891 = vmatpush1.bf16.msra.mxu0 0
        %892 = vmatprep.subr.bf16.mxu0 0
        %893 = vmatpush1.bf16.msra.mxu0 0
        %894 = vmatprep.mubr.bf16.mxu0 0
        %895 = vmatmul.mubr.bf16.gmra.mrb[0].mxu0 %v786
        %v896 = vpop.f32.mrb[0].mxu0
        %v897 = vadd.f32 %v832, %v896
        %v898 = vpop.f32.mrb[0].mxu0
        %v899 = vpop.f32.mrb[0].mxu0
        %v900 = vadd.f32 %v835, %v899
        %v901 = vpop.f32.mrb[0].mxu0
        %902 = vmatprep.mubr.bf16.mxu0 0
        %903 = vmatmul.mubr.bf16.gmra.mrb[0].mxu0 %v789
        %v904 = vpop.f32.mrb[0].mxu0
        %v905 = vadd.f32 %v840, %v904
        %v906 = vpop.f32.mrb[0].mxu0
        %v907 = vpop.f32.mrb[0].mxu0
        %v908 = vadd.f32 %v843, %v907
        %v909 = vpop.f32.mrb[0].mxu0
        %910 = vmatprep.mubr.bf16.mxu0 0
        %911 = vmatmul.mubr.bf16.gmra.mrb[0].mxu0 %v792
        %v912 = vpop.f32.mrb[0].mxu0
        %v913 = vadd.f32 %v848, %v912
        %v914 = vpop.f32.mrb[0].mxu0
        %v915 = vpop.f32.mrb[0].mxu0
        %v916 = vadd.f32 %v851, %v915
        %v917 = vpop.f32.mrb[0].mxu0
        %918 = vmatprep.mubr.bf16.mxu0 0
        %919 = vmatmul.mubr.bf16.gmra.mrb[0].mxu0 %v795
        %v920 = vpop.f32.mrb[0].mxu0
        %v921 = vadd.f32 %v856, %v920
        %v922 = vpop.f32.mrb[0].mxu0
        %v923 = vpop.f32.mrb[0].mxu0
        %v924 = vadd.f32 %v859, %v923
        %v925 = vpop.f32.mrb[0].mxu0
        %926 = vdwg.mxu0
        %v927 = vld [vmem:[%s2] sm:$0xff]
        %v928 = vld [vmem:[%s2 + $0x8] sm:$0xff]
        %v929 = vld [vmem:[%s2 + $0x10] sm:$0xff]
        %v930 = vld [vmem:[%s2 + $0x18] sm:$0xff]
        %v931 = vld [vmem:[%s2 + $0x20] sm:$0xff]
        %v932 = vld [vmem:[%s2 + $0x28] sm:$0xff]
        %v933 = vld [vmem:[%s2 + $0x30] sm:$0xff]
        %v934 = vld [vmem:[%s2 + $0x38] sm:$0xff]
        %936 = vset.pattern.permute.xlu0 0
        %937 = vperm.xlu0 %936, %v927
        %v938 = vpop.permute.xlu0 %937
        %941 = vset.pattern.permute.xlu0 0
        %942 = vperm.xlu0 %941, %v928
        %v943 = vpop.permute.xlu0 %942
        %946 = vset.pattern.permute.xlu0 0
        %947 = vperm.xlu0 %946, %v929
        %v948 = vpop.permute.xlu0 %947
        %951 = vset.pattern.permute.xlu0 0
        %952 = vperm.xlu0 %951, %v930
        %v953 = vpop.permute.xlu0 %952
        %956 = vset.pattern.permute.xlu0 0
        %957 = vperm.xlu0 %956, %v931
        %v958 = vpop.permute.xlu0 %957
        %961 = vset.pattern.permute.xlu0 0
        %962 = vperm.xlu0 %961, %v932
        %v963 = vpop.permute.xlu0 %962
        %966 = vset.pattern.permute.xlu0 0
        %967 = vperm.xlu0 %966, %v933
        %v968 = vpop.permute.xlu0 %967
        %971 = vset.pattern.permute.xlu0 0
        %972 = vperm.xlu0 %971, %v934
        %v973 = vpop.permute.xlu0 %972
        %v975 = vmul.f32 %v897, %v938
        %v976 = vmul.f32 %v900, %v943
        %v977 = vmul.f32 %v905, %v948
        %v978 = vmul.f32 %v908, %v953
        %v979 = vmul.f32 %v913, %v958
        %v980 = vmul.f32 %v916, %v963
        %v981 = vmul.f32 %v921, %v968
        %v982 = vmul.f32 %v924, %v973
        %v983 = vld [vmem:[%s3] sm:$0xff]
        %v984 = vld [vmem:[%s3 + $0x8] sm:$0xff]
        %v985 = vld [vmem:[%s3 + $0x10] sm:$0xff]
        %v986 = vld [vmem:[%s3 + $0x18] sm:$0xff]
        %v987 = vld [vmem:[%s3 + $0x20] sm:$0xff]
        %v988 = vld [vmem:[%s3 + $0x28] sm:$0xff]
        %v989 = vld [vmem:[%s3 + $0x30] sm:$0xff]
        %v990 = vld [vmem:[%s3 + $0x38] sm:$0xff]
        %992 = vset.pattern.permute.xlu0 0
        %993 = vperm.xlu0 %992, %v983
        %v994 = vpop.permute.xlu0 %993
        %997 = vset.pattern.permute.xlu0 0
        %998 = vperm.xlu0 %997, %v984
        %v999 = vpop.permute.xlu0 %998
        %1002 = vset.pattern.permute.xlu0 0
        %1003 = vperm.xlu0 %1002, %v985
        %v1004 = vpop.permute.xlu0 %1003
        %1007 = vset.pattern.permute.xlu0 0
        %1008 = vperm.xlu0 %1007, %v986
        %v1009 = vpop.permute.xlu0 %1008
        %1012 = vset.pattern.permute.xlu0 0
        %1013 = vperm.xlu0 %1012, %v987
        %v1014 = vpop.permute.xlu0 %1013
        %1017 = vset.pattern.permute.xlu0 0
        %1018 = vperm.xlu0 %1017, %v988
        %v1019 = vpop.permute.xlu0 %1018
        %1022 = vset.pattern.permute.xlu0 0
        %1023 = vperm.xlu0 %1022, %v989
        %v1024 = vpop.permute.xlu0 %1023
        %1027 = vset.pattern.permute.xlu0 0
        %1028 = vperm.xlu0 %1027, %v990
        %v1029 = vpop.permute.xlu0 %1028
        %v1031 = vadd.f32 %v975, %v994
        %v1032 = vadd.f32 %v976, %v999
        %v1033 = vadd.f32 %v977, %v1004
        %v1034 = vadd.f32 %v978, %v1009
        %v1035 = vadd.f32 %v979, %v1014
        %v1036 = vadd.f32 %v980, %v1019
        %v1037 = vadd.f32 %v981, %v1024
        %v1038 = vadd.f32 %v982, %v1029
        %v1039 = vmax.f32 %v1031, 0.0
        %v1040 = vmax.f32 %v1032, 0.0
        %v1041 = vmax.f32 %v1033, 0.0
        %v1042 = vmax.f32 %v1034, 0.0
        %v1043 = vmax.f32 %v1035, 0.0
        %v1044 = vmax.f32 %v1036, 0.0
        %v1045 = vmax.f32 %v1037, 0.0
        %v1046 = vmax.f32 %v1038, 0.0
        %v1048 = vlaneseq
        %v1049 = vshrl.u32 %v1048, 7
        %v1050 = vsub.s32 0, %v1049
        %v1051 = vrot.slane %v563, %v1050
        %v1053 = vmul.f32 %v1039, %v1051
        %v1054 = vmul.f32 %v1040, %v1051
        %v1055 = vmul.f32 %v1041, %v1051
        %v1056 = vmul.f32 %v1042, %v1051
        %v1057 = vmul.f32 %v1043, %v1051
        %v1058 = vmul.f32 %v1044, %v1051
        %v1059 = vmul.f32 %v1045, %v1051
        %v1060 = vmul.f32 %v1046, %v1051
        %v1061 = vpack.c.bf16 %v1054, %v1053
        %v1062 = vpack.c.bf16 %v1056, %v1055
        %v1063 = vpack.c.bf16 %v1058, %v1057
        %v1064 = vpack.c.bf16 %v1060, %v1059
        %1065 = vst [vmem:[#allocation2] sm:$0xff] %v1061
        %1066 = vst [vmem:[#allocation2 + $0x8] sm:$0xff] %v1062
        %1067 = vst [vmem:[#allocation2 + $0x10] sm:$0xff] %v1063
        %1068 = vst [vmem:[#allocation2 + $0x18] sm:$0xff] %v1064
        %vm1069 = vcmask 89088
        %1070 = vst.msk [vmem:[#allocation3] sm:$0xff] %vm1069, 0
        %1071 = vst.msk [vmem:[#allocation3 + $0x8] sm:$0xff] %vm1069, 0
        %1072 = vst.msk [vmem:[#allocation3 + $0x10] sm:$0xff] %vm1069, 0
        %1073 = vst.msk [vmem:[#allocation3 + $0x18] sm:$0xff] %vm1069, 0
        %v1074 = vld [vmem:[#allocation2] sm:$0xff]
        %v1075 = vld [vmem:[#allocation2 + $0x8] sm:$0xff]
        %v1076 = vld [vmem:[#allocation2 + $0x10] sm:$0xff]
        %v1077 = vld [vmem:[#allocation2 + $0x18] sm:$0xff]
        %1082 = vrot.lane.b32.xlu0 %v1074, 11
        %v1083 = vpop.permute.xlu0 %1082
        %1084 = vrot.lane.b32.xlu0 %v1075, 11
        %v1085 = vpop.permute.xlu0 %1084
        %1086 = vrot.lane.b32.xlu0 %v1076, 11
        %v1087 = vpop.permute.xlu0 %1086
        %1088 = vrot.lane.b32.xlu0 %v1077, 11
        %v1089 = vpop.permute.xlu0 %1088
        %vm1094 = vcmask 1047640
        %1095 = vst.msk [vmem:[#allocation3] sm:$0xff] %vm1094, %v1083
        %1096 = vst.msk [vmem:[#allocation3 + $0x8] sm:$0xff] %vm1094, %v1085
        %1097 = vst.msk [vmem:[#allocation3 + $0x10] sm:$0xff] %vm1094, %v1087
        %1098 = vst.msk [vmem:[#allocation3 + $0x18] sm:$0xff] %vm1094, %v1089
        %vm1099 = vcmask 80896
        %1100 = vst.msk [vmem:[#allocation3 + $0x20] sm:$0xff] %vm1099, 0
        %1101 = vst.msk [vmem:[#allocation3 + $0x28] sm:$0xff] %vm1099, 0
        %1102 = vst.msk [vmem:[#allocation3 + $0x30] sm:$0xff] %vm1099, 0
        %1103 = vst.msk [vmem:[#allocation3 + $0x38] sm:$0xff] %vm1099, 0
        %v1104 = vld [vmem:[#allocation2] sm:$0xff]
        %v1105 = vld [vmem:[#allocation2 + $0x8] sm:$0xff]
        %v1106 = vld [vmem:[#allocation2 + $0x10] sm:$0xff]
        %v1107 = vld [vmem:[#allocation2 + $0x18] sm:$0xff]
        %1112 = vrot.lane.b32.xlu0 %v1104, 10
        %v1113 = vpop.permute.xlu0 %1112
        %1114 = vrot.lane.b32.xlu0 %v1105, 10
        %v1115 = vpop.permute.xlu0 %1114
        %1116 = vrot.lane.b32.xlu0 %v1106, 10
        %v1117 = vpop.permute.xlu0 %1116
        %1118 = vrot.lane.b32.xlu0 %v1107, 10
        %v1119 = vpop.permute.xlu0 %1118
        %vm1124 = vcmask 1047632
        %1125 = vst.msk [vmem:[#allocation3 + $0x20] sm:$0xff] %vm1124, %v1113
        %1126 = vst.msk [vmem:[#allocation3 + $0x28] sm:$0xff] %vm1124, %v1115
        %1127 = vst.msk [vmem:[#allocation3 + $0x30] sm:$0xff] %vm1124, %v1117
        %1128 = vst.msk [vmem:[#allocation3 + $0x38] sm:$0xff] %vm1124, %v1119
        %vm1129 = vcmask 72704
        %1130 = vst.msk [vmem:[#allocation3 + $0x40] sm:$0xff] %vm1129, 0
        %1131 = vst.msk [vmem:[#allocation3 + $0x48] sm:$0xff] %vm1129, 0
        %1132 = vst.msk [vmem:[#allocation3 + $0x50] sm:$0xff] %vm1129, 0
        %1133 = vst.msk [vmem:[#allocation3 + $0x58] sm:$0xff] %vm1129, 0
        %v1134 = vld [vmem:[#allocation2] sm:$0xff]
        %v1135 = vld [vmem:[#allocation2 + $0x8] sm:$0xff]
        %v1136 = vld [vmem:[#allocation2 + $0x10] sm:$0xff]
        %v1137 = vld [vmem:[#allocation2 + $0x18] sm:$0xff]
        %1142 = vrot.lane.b32.xlu0 %v1134, 9
        %v1143 = vpop.permute.xlu0 %1142
        %1144 = vrot.lane.b32.xlu0 %v1135, 9
        %v1145 = vpop.permute.xlu0 %1144
        %1146 = vrot.lane.b32.xlu0 %v1136, 9
        %v1147 = vpop.permute.xlu0 %1146
        %1148 = vrot.lane.b32.xlu0 %v1137, 9
        %v1149 = vpop.permute.xlu0 %1148
        %vm1154 = vcmask 1047624
        %1155 = vst.msk [vmem:[#allocation3 + $0x40] sm:$0xff] %vm1154, %v1143
        %1156 = vst.msk [vmem:[#allocation3 + $0x48] sm:$0xff] %vm1154, %v1145
        %1157 = vst.msk [vmem:[#allocation3 + $0x50] sm:$0xff] %vm1154, %v1147
        %1158 = vst.msk [vmem:[#allocation3 + $0x58] sm:$0xff] %vm1154, %v1149
        %vm1159 = vcmask 7168
        %1160 = vst.msk [vmem:[#allocation3 + $0x60] sm:$0xff] %vm1159, 0
        %1161 = vst.msk [vmem:[#allocation3 + $0x68] sm:$0xff] %vm1159, 0
        %1162 = vst.msk [vmem:[#allocation3 + $0x70] sm:$0xff] %vm1159, 0
        %1163 = vst.msk [vmem:[#allocation3 + $0x78] sm:$0xff] %vm1159, 0
        %v1164 = vld [vmem:[#allocation2] sm:$0xff]
        %v1165 = vld [vmem:[#allocation2 + $0x8] sm:$0xff]
        %v1166 = vld [vmem:[#allocation2 + $0x10] sm:$0xff]
        %v1167 = vld [vmem:[#allocation2 + $0x18] sm:$0xff]
        %1172 = vrot.lane.b32.xlu0 %v1164, 1
        %v1173 = vpop.permute.xlu0 %1172
        %1174 = vrot.lane.b32.xlu0 %v1165, 1
        %v1175 = vpop.permute.xlu0 %1174
        %1176 = vrot.lane.b32.xlu0 %v1166, 1
        %v1177 = vpop.permute.xlu0 %1176
        %1178 = vrot.lane.b32.xlu0 %v1167, 1
        %v1179 = vpop.permute.xlu0 %1178
        %vm1184 = vcmask 1047560
        %1185 = vst.msk [vmem:[#allocation3 + $0x60] sm:$0xff] %vm1184, %v1173
        %1186 = vst.msk [vmem:[#allocation3 + $0x68] sm:$0xff] %vm1184, %v1175
        %1187 = vst.msk [vmem:[#allocation3 + $0x70] sm:$0xff] %vm1184, %v1177
        %1188 = vst.msk [vmem:[#allocation3 + $0x78] sm:$0xff] %vm1184, %v1179
        %v1189 = vld [vmem:[#allocation2] sm:$0xff]
        %v1190 = vld [vmem:[#allocation2 + $0x8] sm:$0xff]
        %v1191 = vld [vmem:[#allocation2 + $0x10] sm:$0xff]
        %v1192 = vld [vmem:[#allocation2 + $0x18] sm:$0xff]
        %1193 = vst [vmem:[#allocation3 + $0x80] sm:$0xff] %v1189
        %1194 = vst [vmem:[#allocation3 + $0x88] sm:$0xff] %v1190
        %1195 = vst [vmem:[#allocation3 + $0x90] sm:$0xff] %v1191
        %1196 = vst [vmem:[#allocation3 + $0x98] sm:$0xff] %v1192
        %vm1197 = vcmask 1048568
        %1198 = vst.msk [vmem:[#allocation3 + $0xa0] sm:$0xff] %vm1197, 0
        %1199 = vst.msk [vmem:[#allocation3 + $0xa8] sm:$0xff] %vm1197, 0
        %1200 = vst.msk [vmem:[#allocation3 + $0xb0] sm:$0xff] %vm1197, 0
        %1201 = vst.msk [vmem:[#allocation3 + $0xb8] sm:$0xff] %vm1197, 0
        %v1202 = vld [vmem:[#allocation2] sm:$0xff]
        %v1203 = vld [vmem:[#allocation2 + $0x8] sm:$0xff]
        %v1204 = vld [vmem:[#allocation2 + $0x10] sm:$0xff]
        %v1205 = vld [vmem:[#allocation2 + $0x18] sm:$0xff]
        %1210 = vrot.lane.b32.xlu0 %v1202, 127
        %v1211 = vpop.permute.xlu0 %1210
        %1212 = vrot.lane.b32.xlu0 %v1203, 127
        %v1213 = vpop.permute.xlu0 %1212
        %1214 = vrot.lane.b32.xlu0 %v1204, 127
        %v1215 = vpop.permute.xlu0 %1214
        %1216 = vrot.lane.b32.xlu0 %v1205, 127
        %v1217 = vpop.permute.xlu0 %1216
        %vm1222 = vcmask 1039360
        %1223 = vst.msk [vmem:[#allocation3 + $0xa0] sm:$0xff] %vm1222, %v1211
        %1224 = vst.msk [vmem:[#allocation3 + $0xa8] sm:$0xff] %vm1222, %v1213
        %1225 = vst.msk [vmem:[#allocation3 + $0xb0] sm:$0xff] %vm1222, %v1215
        %1226 = vst.msk [vmem:[#allocation3 + $0xb8] sm:$0xff] %vm1222, %v1217
        %vm1227 = vcmask 1048504
        %1228 = vst.msk [vmem:[#allocation3 + $0xc0] sm:$0xff] %vm1227, 0
        %1229 = vst.msk [vmem:[#allocation3 + $0xc8] sm:$0xff] %vm1227, 0
        %1230 = vst.msk [vmem:[#allocation3 + $0xd0] sm:$0xff] %vm1227, 0
        %1231 = vst.msk [vmem:[#allocation3 + $0xd8] sm:$0xff] %vm1227, 0
        %v1232 = vld [vmem:[#allocation2] sm:$0xff]
        %v1233 = vld [vmem:[#allocation2 + $0x8] sm:$0xff]
        %v1234 = vld [vmem:[#allocation2 + $0x10] sm:$0xff]
        %v1235 = vld [vmem:[#allocation2 + $0x18] sm:$0xff]
        %1240 = vrot.lane.b32.xlu0 %v1232, 119
        %v1241 = vpop.permute.xlu0 %1240
        %1242 = vrot.lane.b32.xlu0 %v1233, 119
        %v1243 = vpop.permute.xlu0 %1242
        %1244 = vrot.lane.b32.xlu0 %v1234, 119
        %v1245 = vpop.permute.xlu0 %1244
        %1246 = vrot.lane.b32.xlu0 %v1235, 119
        %v1247 = vpop.permute.xlu0 %1246
        %vm1252 = vcmask 973824
        %1253 = vst.msk [vmem:[#allocation3 + $0xc0] sm:$0xff] %vm1252, %v1241
        %1254 = vst.msk [vmem:[#allocation3 + $0xc8] sm:$0xff] %vm1252, %v1243
        %1255 = vst.msk [vmem:[#allocation3 + $0xd0] sm:$0xff] %vm1252, %v1245
        %1256 = vst.msk [vmem:[#allocation3 + $0xd8] sm:$0xff] %vm1252, %v1247
        %vm1257 = vcmask 1048496
        %1258 = vst.msk [vmem:[#allocation3 + $0xe0] sm:$0xff] %vm1257, 0
        %1259 = vst.msk [vmem:[#allocation3 + $0xe8] sm:$0xff] %vm1257, 0
        %1260 = vst.msk [vmem:[#allocation3 + $0xf0] sm:$0xff] %vm1257, 0
        %1261 = vst.msk [vmem:[#allocation3 + $0xf8] sm:$0xff] %vm1257, 0
        %v1262 = vld [vmem:[#allocation2] sm:$0xff]
        %v1263 = vld [vmem:[#allocation2 + $0x8] sm:$0xff]
        %v1264 = vld [vmem:[#allocation2 + $0x10] sm:$0xff]
        %v1265 = vld [vmem:[#allocation2 + $0x18] sm:$0xff]
        %1270 = vrot.lane.b32.xlu0 %v1262, 118
        %v1271 = vpop.permute.xlu0 %1270
        %1272 = vrot.lane.b32.xlu0 %v1263, 118
        %v1273 = vpop.permute.xlu0 %1272
        %1274 = vrot.lane.b32.xlu0 %v1264, 118
        %v1275 = vpop.permute.xlu0 %1274
        %1276 = vrot.lane.b32.xlu0 %v1265, 118
        %v1277 = vpop.permute.xlu0 %1276
        %vm1282 = vcmask 965632
        %1283 = vst.msk [vmem:[#allocation3 + $0xe0] sm:$0xff] %vm1282, %v1271
        %1284 = vst.msk [vmem:[#allocation3 + $0xe8] sm:$0xff] %vm1282, %v1273
        %1285 = vst.msk [vmem:[#allocation3 + $0xf0] sm:$0xff] %vm1282, %v1275
        %1286 = vst.msk [vmem:[#allocation3 + $0xf8] sm:$0xff] %vm1282, %v1277
        %vm1287 = vcmask 1048488
        %1288 = vst.msk [vmem:[#allocation3 + $0x100] sm:$0xff] %vm1287, 0
        %1289 = vst.msk [vmem:[#allocation3 + $0x108] sm:$0xff] %vm1287, 0
        %1290 = vst.msk [vmem:[#allocation3 + $0x110] sm:$0xff] %vm1287, 0
        %1291 = vst.msk [vmem:[#allocation3 + $0x118] sm:$0xff] %vm1287, 0
        %v1292 = vld [vmem:[#allocation2] sm:$0xff]
        %v1293 = vld [vmem:[#allocation2 + $0x8] sm:$0xff]
        %v1294 = vld [vmem:[#allocation2 + $0x10] sm:$0xff]
        %v1295 = vld [vmem:[#allocation2 + $0x18] sm:$0xff]
        %1300 = vrot.lane.b32.xlu0 %v1292, 117
        %v1301 = vpop.permute.xlu0 %1300
        %1302 = vrot.lane.b32.xlu0 %v1293, 117
        %v1303 = vpop.permute.xlu0 %1302
        %1304 = vrot.lane.b32.xlu0 %v1294, 117
        %v1305 = vpop.permute.xlu0 %1304
        %1306 = vrot.lane.b32.xlu0 %v1295, 117
        %v1307 = vpop.permute.xlu0 %1306
        %vm1312 = vcmask 957440
        %1313 = vst.msk [vmem:[#allocation3 + $0x100] sm:$0xff] %vm1312, %v1301
        %1314 = vst.msk [vmem:[#allocation3 + $0x108] sm:$0xff] %vm1312, %v1303
        %1315 = vst.msk [vmem:[#allocation3 + $0x110] sm:$0xff] %vm1312, %v1305
        %1316 = vst.msk [vmem:[#allocation3 + $0x118] sm:$0xff] %vm1312, %v1307
        %v1317 = vld [vmem:[%s4] sm:$0xff]
        %v1318 = vld [vmem:[%s4 + $0x8] sm:$0xff]
        %v1319 = vld [vmem:[%s4 + $0x10] sm:$0xf]
        %v1320 = vld [vmem:[%s4 + $0x14] sm:$0xff]
        %v1321 = vld [vmem:[%s4 + $0x1c] sm:$0xff]
        %v1322 = vld [vmem:[%s4 + $0x24] sm:$0xf]
        %v1323 = vld [vmem:[%s4 + $0x28] sm:$0xff]
        %v1324 = vld [vmem:[%s4 + $0x30] sm:$0xff]
        %v1325 = vld [vmem:[%s4 + $0x38] sm:$0xf]
        %v1326 = vld [vmem:[%s4 + $0x3c] sm:$0xff]
        %v1327 = vld [vmem:[%s4 + $0x44] sm:$0xff]
        %v1328 = vld [vmem:[%s4 + $0x4c] sm:$0xf]
        %v1329 = vld [vmem:[%s4 + $0x50] sm:$0xff]
        %v1330 = vld [vmem:[%s4 + $0x58] sm:$0xff]
        %v1331 = vld [vmem:[%s4 + $0x60] sm:$0xf]
        %v1332 = vld [vmem:[%s4 + $0x64] sm:$0xff]
        %v1333 = vld [vmem:[%s4 + $0x6c] sm:$0xff]
        %v1334 = vld [vmem:[%s4 + $0x74] sm:$0xf]
        %v1335 = vld [vmem:[%s4 + $0x78] sm:$0xff]
        %v1336 = vld [vmem:[%s4 + $0x80] sm:$0xff]
        %v1337 = vld [vmem:[%s4 + $0x88] sm:$0xf]
        %v1338 = vld [vmem:[%s4 + $0x8c] sm:$0xff]
        %v1339 = vld [vmem:[%s4 + $0x94] sm:$0xff]
        %v1340 = vld [vmem:[%s4 + $0x9c] sm:$0xf]
        %v1341 = vld [vmem:[#allocation3] sm:$0xff]
        %v1342 = vld [vmem:[#allocation3 + $0x8] sm:$0xff]
        %v1343 = vld [vmem:[#allocation3 + $0x10] sm:$0xff]
        %v1344 = vld [vmem:[#allocation3 + $0x18] sm:$0xff]
        %v1345 = vld [vmem:[#allocation3 + $0x20] sm:$0xff]
        %v1346 = vld [vmem:[#allocation3 + $0x28] sm:$0xff]
        %v1347 = vld [vmem:[#allocation3 + $0x30] sm:$0xff]
        %v1348 = vld [vmem:[#allocation3 + $0x38] sm:$0xff]
        %v1349 = vld [vmem:[#allocation3 + $0x40] sm:$0xff]
        %v1350 = vld [vmem:[#allocation3 + $0x48] sm:$0xff]
        %v1351 = vld [vmem:[#allocation3 + $0x50] sm:$0xff]
        %v1352 = vld [vmem:[#allocation3 + $0x58] sm:$0xff]
        %v1353 = vld [vmem:[#allocation3 + $0x60] sm:$0xff]
        %v1354 = vld [vmem:[#allocation3 + $0x68] sm:$0xff]
        %v1355 = vld [vmem:[#allocation3 + $0x70] sm:$0xff]
        %v1356 = vld [vmem:[#allocation3 + $0x78] sm:$0xff]
        %v1357 = vld [vmem:[#allocation3 + $0x80] sm:$0xff]
        %v1358 = vld [vmem:[#allocation3 + $0x88] sm:$0xff]
        %v1359 = vld [vmem:[#allocation3 + $0x90] sm:$0xff]
        %v1360 = vld [vmem:[#allocation3 + $0x98] sm:$0xff]
        %v1361 = vld [vmem:[#allocation3 + $0xa0] sm:$0xff]
        %v1362 = vld [vmem:[#allocation3 + $0xa8] sm:$0xff]
        %v1363 = vld [vmem:[#allocation3 + $0xb0] sm:$0xff]
        %v1364 = vld [vmem:[#allocation3 + $0xb8] sm:$0xff]
        %v1365 = vld [vmem:[#allocation3 + $0xc0] sm:$0xff]
        %v1366 = vld [vmem:[#allocation3 + $0xc8] sm:$0xff]
        %v1367 = vld [vmem:[#allocation3 + $0xd0] sm:$0xff]
        %v1368 = vld [vmem:[#allocation3 + $0xd8] sm:$0xff]
        %v1369 = vld [vmem:[#allocation3 + $0xe0] sm:$0xff]
        %v1370 = vld [vmem:[#allocation3 + $0xe8] sm:$0xff]
        %v1371 = vld [vmem:[#allocation3 + $0xf0] sm:$0xff]
        %v1372 = vld [vmem:[#allocation3 + $0xf8] sm:$0xff]
        %v1373 = vld [vmem:[#allocation3 + $0x100] sm:$0xff]
        %v1374 = vld [vmem:[#allocation3 + $0x108] sm:$0xff]
        %v1375 = vld [vmem:[#allocation3 + $0x110] sm:$0xff]
        %v1376 = vld [vmem:[#allocation3 + $0x118] sm:$0xff]
        %v1401 = vunpack.c.l.b16 %v1317
        %v1402 = vunpack.c.h.b16 %v1317
        %v1403 = vunpack.c.l.b16 %v1318
        %v1404 = vunpack.c.h.b16 %v1318
        %v1405 = vunpack.c.l.b16 %v1319
        %v1406 = vunpack.c.l.b16 %v1320
        %v1407 = vunpack.c.h.b16 %v1320
        %v1408 = vunpack.c.l.b16 %v1321
        %v1409 = vunpack.c.h.b16 %v1321
        %v1410 = vunpack.c.l.b16 %v1322
        %v1411 = vunpack.c.l.b16 %v1323
        %v1412 = vunpack.c.h.b16 %v1323
        %v1413 = vunpack.c.l.b16 %v1324
        %v1414 = vunpack.c.h.b16 %v1324
        %v1415 = vunpack.c.l.b16 %v1325
        %v1416 = vunpack.c.l.b16 %v1326
        %v1417 = vunpack.c.h.b16 %v1326
        %v1418 = vunpack.c.l.b16 %v1327
        %v1419 = vunpack.c.h.b16 %v1327
        %v1420 = vunpack.c.l.b16 %v1328
        %v1421 = vunpack.c.l.b16 %v1329
        %v1422 = vunpack.c.h.b16 %v1329
        %v1423 = vunpack.c.l.b16 %v1330
        %v1424 = vunpack.c.h.b16 %v1330
        %v1425 = vunpack.c.l.b16 %v1331
        %v1426 = vunpack.c.l.b16 %v1332
        %v1427 = vunpack.c.h.b16 %v1332
        %v1428 = vunpack.c.l.b16 %v1333
        %v1429 = vunpack.c.h.b16 %v1333
        %v1430 = vunpack.c.l.b16 %v1334
        %v1431 = vunpack.c.l.b16 %v1335
        %v1432 = vunpack.c.h.b16 %v1335
        %v1433 = vunpack.c.l.b16 %v1336
        %v1434 = vunpack.c.h.b16 %v1336
        %v1435 = vunpack.c.l.b16 %v1337
        %v1436 = vunpack.c.l.b16 %v1338
        %v1437 = vunpack.c.h.b16 %v1338
        %v1438 = vunpack.c.l.b16 %v1339
        %v1439 = vunpack.c.h.b16 %v1339
        %v1440 = vunpack.c.l.b16 %v1340
        %v1441 = vpack.c.b16 %v1406, %v1401
        %v1442 = vpack.c.b16 %v1407, %v1402
        %v1443 = vpack.c.b16 %v1408, %v1403
        %v1444 = vpack.c.b16 %v1409, %v1404
        %v1445 = vpack.c.b16 %v1410, %v1405
        %v1446 = vpack.c.b16 %v1416, %v1411
        %v1447 = vpack.c.b16 %v1417, %v1412
        %v1448 = vpack.c.b16 %v1418, %v1413
        %v1449 = vpack.c.b16 %v1419, %v1414
        %v1450 = vpack.c.b16 %v1420, %v1415
        %v1451 = vpack.c.b16 %v1426, %v1421
        %v1452 = vpack.c.b16 %v1427, %v1422
        %v1453 = vpack.c.b16 %v1428, %v1423
        %v1454 = vpack.c.b16 %v1429, %v1424
        %v1455 = vpack.c.b16 %v1430, %v1425
        %v1456 = vpack.c.b16 %v1436, %v1431
        %v1457 = vpack.c.b16 %v1437, %v1432
        %v1458 = vpack.c.b16 %v1438, %v1433
        %v1459 = vpack.c.b16 %v1439, %v1434
        %v1460 = vpack.c.b16 %v1440, %v1435
        %vm1477 = vcmask 523264
        %v1479 = vsel %vm1477, %v1445, 0
        %v1482 = vsel %vm1477, %v1450, 0
        %v1485 = vsel %vm1477, %v1455, 0
        %v1488 = vsel %vm1477, %v1460, 0
        %1490 = vmatprep.subr.bf16.mxu0 0
        %1491 = vmatpush1.bf16.msra.mxu0 %v1341
        %1492 = vmatprep.subr.bf16.mxu0 0
        %1493 = vmatpush1.bf16.msra.mxu0 %v1342
        %1494 = vmatprep.subr.bf16.mxu0 0
        %1495 = vmatpush1.bf16.msra.mxu0 %v1343
        %1496 = vmatprep.subr.bf16.mxu0 0
        %1497 = vmatpush1.bf16.msra.mxu0 %v1344
        %1498 = vmatprep.subr.bf16.mxu0 0
        %1499 = vmatpush1.bf16.msra.mxu0 %v1345
        %1500 = vmatprep.subr.bf16.mxu0 0
        %1501 = vmatpush1.bf16.msra.mxu0 %v1346
        %1502 = vmatprep.subr.bf16.mxu0 0
        %1503 = vmatpush1.bf16.msra.mxu0 %v1347
        %1504 = vmatprep.subr.bf16.mxu0 0
        %1505 = vmatpush1.bf16.msra.mxu0 %v1348
        %1506 = vmatprep.subr.bf16.mxu0 0
        %1507 = vmatpush1.bf16.msra.mxu0 %v1349
        %1508 = vmatprep.subr.bf16.mxu0 0
        %1509 = vmatpush1.bf16.msra.mxu0 %v1350
        %1510 = vmatprep.subr.bf16.mxu0 0
        %1511 = vmatpush1.bf16.msra.mxu0 %v1351
        %1512 = vmatprep.subr.bf16.mxu0 0
        %1513 = vmatpush1.bf16.msra.mxu0 %v1352
        %1514 = vmatprep.subr.bf16.mxu0 0
        %1515 = vmatpush1.bf16.msra.mxu0 %v1353
        %1516 = vmatprep.subr.bf16.mxu0 0
        %1517 = vmatpush1.bf16.msra.mxu0 %v1354
        %1518 = vmatprep.subr.bf16.mxu0 0
        %1519 = vmatpush1.bf16.msra.mxu0 %v1355
        %1520 = vmatprep.subr.bf16.mxu0 0
        %1521 = vmatpush1.bf16.msra.mxu0 %v1356
        %1522 = vmatprep.mubr.bf16.mxu0 %v1442
        %1523 = vmatmul.mubr.bf16.gmra.mrb[0].mxu0 %v1441
        %v1524 = vpop.f32.mrb[0].mxu0
        %v1525 = vadd.f32 0.0, %v1524
        %v1526 = vpop.f32.mrb[0].mxu0
        %v1527 = vpop.f32.mrb[0].mxu0
        %v1528 = vadd.f32 0.0, %v1527
        %v1529 = vpop.f32.mrb[0].mxu0
        %1530 = vmatprep.mubr.bf16.mxu0 %v1447
        %1531 = vmatmul.mubr.bf16.gmra.mrb[0].mxu0 %v1446
        %v1532 = vpop.f32.mrb[0].mxu0
        %v1533 = vadd.f32 0.0, %v1532
        %v1534 = vpop.f32.mrb[0].mxu0
        %v1535 = vpop.f32.mrb[0].mxu0
        %v1536 = vadd.f32 0.0, %v1535
        %v1537 = vpop.f32.mrb[0].mxu0
        %1538 = vmatprep.mubr.bf16.mxu0 %v1452
        %1539 = vmatmul.mubr.bf16.gmra.mrb[0].mxu0 %v1451
        %v1540 = vpop.f32.mrb[0].mxu0
        %v1541 = vadd.f32 0.0, %v1540
        %v1542 = vpop.f32.mrb[0].mxu0
        %v1543 = vpop.f32.mrb[0].mxu0
        %v1544 = vadd.f32 0.0, %v1543
        %v1545 = vpop.f32.mrb[0].mxu0
        %1546 = vmatprep.mubr.bf16.mxu0 %v1457
        %1547 = vmatmul.mubr.bf16.gmra.mrb[0].mxu0 %v1456
        %v1548 = vpop.f32.mrb[0].mxu0
        %v1549 = vadd.f32 0.0, %v1548
        %v1550 = vpop.f32.mrb[0].mxu0
        %v1551 = vpop.f32.mrb[0].mxu0
        %v1552 = vadd.f32 0.0, %v1551
        %v1553 = vpop.f32.mrb[0].mxu0
        %1554 = vdwg.mxu0
        %1555 = vmatprep.subr.bf16.mxu0 0
        %1556 = vmatpush1.bf16.msra.mxu0 %v1357
        %1557 = vmatprep.subr.bf16.mxu0 0
        %1558 = vmatpush1.bf16.msra.mxu0 %v1358
        %1559 = vmatprep.subr.bf16.mxu0 0
        %1560 = vmatpush1.bf16.msra.mxu0 %v1359
        %1561 = vmatprep.subr.bf16.mxu0 0
        %1562 = vmatpush1.bf16.msra.mxu0 %v1360
        %1563 = vmatprep.subr.bf16.mxu0 0
        %1564 = vmatpush1.bf16.msra.mxu0 %v1361
        %1565 = vmatprep.subr.bf16.mxu0 0
        %1566 = vmatpush1.bf16.msra.mxu0 %v1362
        %1567 = vmatprep.subr.bf16.mxu0 0
        %1568 = vmatpush1.bf16.msra.mxu0 %v1363
        %1569 = vmatprep.subr.bf16.mxu0 0
        %1570 = vmatpush1.bf16.msra.mxu0 %v1364
        %1571 = vmatprep.subr.bf16.mxu0 0
        %1572 = vmatpush1.bf16.msra.mxu0 %v1365
        %1573 = vmatprep.subr.bf16.mxu0 0
        %1574 = vmatpush1.bf16.msra.mxu0 %v1366
        %1575 = vmatprep.subr.bf16.mxu0 0
        %1576 = vmatpush1.bf16.msra.mxu0 %v1367
        %1577 = vmatprep.subr.bf16.mxu0 0
        %1578 = vmatpush1.bf16.msra.mxu0 %v1368
        %1579 = vmatprep.subr.bf16.mxu0 0
        %1580 = vmatpush1.bf16.msra.mxu0 %v1369
        %1581 = vmatprep.subr.bf16.mxu0 0
        %1582 = vmatpush1.bf16.msra.mxu0 %v1370
        %1583 = vmatprep.subr.bf16.mxu0 0
        %1584 = vmatpush1.bf16.msra.mxu0 %v1371
        %1585 = vmatprep.subr.bf16.mxu0 0
        %1586 = vmatpush1.bf16.msra.mxu0 %v1372
        %1587 = vmatprep.mubr.bf16.mxu0 %v1444
        %1588 = vmatmul.mubr.bf16.gmra.mrb[0].mxu0 %v1443
        %v1589 = vpop.f32.mrb[0].mxu0
        %v1590 = vadd.f32 %v1525, %v1589
        %v1591 = vpop.f32.mrb[0].mxu0
        %v1592 = vpop.f32.mrb[0].mxu0
        %v1593 = vadd.f32 %v1528, %v1592
        %v1594 = vpop.f32.mrb[0].mxu0
        %1595 = vmatprep.mubr.bf16.mxu0 %v1449
        %1596 = vmatmul.mubr.bf16.gmra.mrb[0].mxu0 %v1448
        %v1597 = vpop.f32.mrb[0].mxu0
        %v1598 = vadd.f32 %v1533, %v1597
        %v1599 = vpop.f32.mrb[0].mxu0
        %v1600 = vpop.f32.mrb[0].mxu0
        %v1601 = vadd.f32 %v1536, %v1600
        %v1602 = vpop.f32.mrb[0].mxu0
        %1603 = vmatprep.mubr.bf16.mxu0 %v1454
        %1604 = vmatmul.mubr.bf16.gmra.mrb[0].mxu0 %v1453
        %v1605 = vpop.f32.mrb[0].mxu0
        %v1606 = vadd.f32 %v1541, %v1605
        %v1607 = vpop.f32.mrb[0].mxu0
        %v1608 = vpop.f32.mrb[0].mxu0
        %v1609 = vadd.f32 %v1544, %v1608
        %v1610 = vpop.f32.mrb[0].mxu0
        %1611 = vmatprep.mubr.bf16.mxu0 %v1459
        %1612 = vmatmul.mubr.bf16.gmra.mrb[0].mxu0 %v1458
        %v1613 = vpop.f32.mrb[0].mxu0
        %v1614 = vadd.f32 %v1549, %v1613
        %v1615 = vpop.f32.mrb[0].mxu0
        %v1616 = vpop.f32.mrb[0].mxu0
        %v1617 = vadd.f32 %v1552, %v1616
        %v1618 = vpop.f32.mrb[0].mxu0
        %1619 = vdwg.mxu0
        %1620 = vmatprep.subr.bf16.mxu0 0
        %1621 = vmatpush1.bf16.msra.mxu0 %v1373
        %1622 = vmatprep.subr.bf16.mxu0 0
        %1623 = vmatpush1.bf16.msra.mxu0 %v1374
        %1624 = vmatprep.subr.bf16.mxu0 0
        %1625 = vmatpush1.bf16.msra.mxu0 %v1375
        %1626 = vmatprep.subr.bf16.mxu0 0
        %1627 = vmatpush1.bf16.msra.mxu0 %v1376
        %1628 = vmatprep.subr.bf16.mxu0 0
        %1629 = vmatpush1.bf16.msra.mxu0 0
        %1630 = vmatprep.subr.bf16.mxu0 0
        %1631 = vmatpush1.bf16.msra.mxu0 0
        %1632 = vmatprep.subr.bf16.mxu0 0
        %1633 = vmatpush1.bf16.msra.mxu0 0
        %1634 = vmatprep.subr.bf16.mxu0 0
        %1635 = vmatpush1.bf16.msra.mxu0 0
        %1636 = vmatprep.subr.bf16.mxu0 0
        %1637 = vmatpush1.bf16.msra.mxu0 0
        %1638 = vmatprep.subr.bf16.mxu0 0
        %1639 = vmatpush1.bf16.msra.mxu0 0
        %1640 = vmatprep.subr.bf16.mxu0 0
        %1641 = vmatpush1.bf16.msra.mxu0 0
        %1642 = vmatprep.subr.bf16.mxu0 0
        %1643 = vmatpush1.bf16.msra.mxu0 0
        %1644 = vmatprep.subr.bf16.mxu0 0
        %1645 = vmatpush1.bf16.msra.mxu0 0
        %1646 = vmatprep.subr.bf16.mxu0 0
        %1647 = vmatpush1.bf16.msra.mxu0 0
        %1648 = vmatprep.subr.bf16.mxu0 0
        %1649 = vmatpush1.bf16.msra.mxu0 0
        %1650 = vmatprep.subr.bf16.mxu0 0
        %1651 = vmatpush1.bf16.msra.mxu0 0
        %1652 = vmatprep.mubr.bf16.mxu0 0
        %1653 = vmatmul.mubr.bf16.gmra.mrb[0].mxu0 %v1479
        %v1654 = vpop.f32.mrb[0].mxu0
        %v1655 = vadd.f32 %v1590, %v1654
        %v1656 = vpop.f32.mrb[0].mxu0
        %v1657 = vpop.f32.mrb[0].mxu0
        %v1658 = vadd.f32 %v1593, %v1657
        %v1659 = vpop.f32.mrb[0].mxu0
        %1660 = vmatprep.mubr.bf16.mxu0 0
        %1661 = vmatmul.mubr.bf16.gmra.mrb[0].mxu0 %v1482
        %v1662 = vpop.f32.mrb[0].mxu0
        %v1663 = vadd.f32 %v1598, %v1662
        %v1664 = vpop.f32.mrb[0].mxu0
        %v1665 = vpop.f32.mrb[0].mxu0
        %v1666 = vadd.f32 %v1601, %v1665
        %v1667 = vpop.f32.mrb[0].mxu0
        %1668 = vmatprep.mubr.bf16.mxu0 0
        %1669 = vmatmul.mubr.bf16.gmra.mrb[0].mxu0 %v1485
        %v1670 = vpop.f32.mrb[0].mxu0
        %v1671 = vadd.f32 %v1606, %v1670
        %v1672 = vpop.f32.mrb[0].mxu0
        %v1673 = vpop.f32.mrb[0].mxu0
        %v1674 = vadd.f32 %v1609, %v1673
        %v1675 = vpop.f32.mrb[0].mxu0
        %1676 = vmatprep.mubr.bf16.mxu0 0
        %1677 = vmatmul.mubr.bf16.gmra.mrb[0].mxu0 %v1488
        %v1678 = vpop.f32.mrb[0].mxu0
        %v1679 = vadd.f32 %v1614, %v1678
        %v1680 = vpop.f32.mrb[0].mxu0
        %v1681 = vpop.f32.mrb[0].mxu0
        %v1682 = vadd.f32 %v1617, %v1681
        %v1683 = vpop.f32.mrb[0].mxu0
        %1684 = vdwg.mxu0
        %v1685 = vld [vmem:[%s5] sm:$0xff]
        %v1686 = vld [vmem:[%s5 + $0x8] sm:$0xff]
        %v1687 = vld [vmem:[%s5 + $0x10] sm:$0xff]
        %v1688 = vld [vmem:[%s5 + $0x18] sm:$0xff]
        %v1689 = vld [vmem:[%s5 + $0x20] sm:$0xff]
        %v1690 = vld [vmem:[%s5 + $0x28] sm:$0xff]
        %v1691 = vld [vmem:[%s5 + $0x30] sm:$0xff]
        %v1692 = vld [vmem:[%s5 + $0x38] sm:$0xff]
        %1694 = vset.pattern.permute.xlu0 0
        %1695 = vperm.xlu0 %1694, %v1685
        %v1696 = vpop.permute.xlu0 %1695
        %1699 = vset.pattern.permute.xlu0 0
        %1700 = vperm.xlu0 %1699, %v1686
        %v1701 = vpop.permute.xlu0 %1700
        %1704 = vset.pattern.permute.xlu0 0
        %1705 = vperm.xlu0 %1704, %v1687
        %v1706 = vpop.permute.xlu0 %1705
        %1709 = vset.pattern.permute.xlu0 0
        %1710 = vperm.xlu0 %1709, %v1688
        %v1711 = vpop.permute.xlu0 %1710
        %1714 = vset.pattern.permute.xlu0 0
        %1715 = vperm.xlu0 %1714, %v1689
        %v1716 = vpop.permute.xlu0 %1715
        %1719 = vset.pattern.permute.xlu0 0
        %1720 = vperm.xlu0 %1719, %v1690
        %v1721 = vpop.permute.xlu0 %1720
        %1724 = vset.pattern.permute.xlu0 0
        %1725 = vperm.xlu0 %1724, %v1691
        %v1726 = vpop.permute.xlu0 %1725
        %1729 = vset.pattern.permute.xlu0 0
        %1730 = vperm.xlu0 %1729, %v1692
        %v1731 = vpop.permute.xlu0 %1730
        %v1733 = vmul.f32 %v1655, %v1696
        %v1734 = vmul.f32 %v1658, %v1701
        %v1735 = vmul.f32 %v1663, %v1706
        %v1736 = vmul.f32 %v1666, %v1711
        %v1737 = vmul.f32 %v1671, %v1716
        %v1738 = vmul.f32 %v1674, %v1721
        %v1739 = vmul.f32 %v1679, %v1726
        %v1740 = vmul.f32 %v1682, %v1731
        %v1741 = vld [vmem:[%s6] sm:$0xff]
        %v1742 = vld [vmem:[%s6 + $0x8] sm:$0xff]
        %v1743 = vld [vmem:[%s6 + $0x10] sm:$0xff]
        %v1744 = vld [vmem:[%s6 + $0x18] sm:$0xff]
        %v1745 = vld [vmem:[%s6 + $0x20] sm:$0xff]
        %v1746 = vld [vmem:[%s6 + $0x28] sm:$0xff]
        %v1747 = vld [vmem:[%s6 + $0x30] sm:$0xff]
        %v1748 = vld [vmem:[%s6 + $0x38] sm:$0xff]
        %1750 = vset.pattern.permute.xlu0 0
        %1751 = vperm.xlu0 %1750, %v1741
        %v1752 = vpop.permute.xlu0 %1751
        %1755 = vset.pattern.permute.xlu0 0
        %1756 = vperm.xlu0 %1755, %v1742
        %v1757 = vpop.permute.xlu0 %1756
        %1760 = vset.pattern.permute.xlu0 0
        %1761 = vperm.xlu0 %1760, %v1743
        %v1762 = vpop.permute.xlu0 %1761
        %1765 = vset.pattern.permute.xlu0 0
        %1766 = vperm.xlu0 %1765, %v1744
        %v1767 = vpop.permute.xlu0 %1766
        %1770 = vset.pattern.permute.xlu0 0
        %1771 = vperm.xlu0 %1770, %v1745
        %v1772 = vpop.permute.xlu0 %1771
        %1775 = vset.pattern.permute.xlu0 0
        %1776 = vperm.xlu0 %1775, %v1746
        %v1777 = vpop.permute.xlu0 %1776
        %1780 = vset.pattern.permute.xlu0 0
        %1781 = vperm.xlu0 %1780, %v1747
        %v1782 = vpop.permute.xlu0 %1781
        %1785 = vset.pattern.permute.xlu0 0
        %1786 = vperm.xlu0 %1785, %v1748
        %v1787 = vpop.permute.xlu0 %1786
        %v1789 = vadd.f32 %v1733, %v1752
        %v1790 = vadd.f32 %v1734, %v1757
        %v1791 = vadd.f32 %v1735, %v1762
        %v1792 = vadd.f32 %v1736, %v1767
        %v1793 = vadd.f32 %v1737, %v1772
        %v1794 = vadd.f32 %v1738, %v1777
        %v1795 = vadd.f32 %v1739, %v1782
        %v1796 = vadd.f32 %v1740, %v1787
        %v1797 = vld [vmem:[%s526 + $0x40] sm:$0xf]
        %v1798 = vld [vmem:[%s526 + $0x44] sm:$0xf]
        %v1799 = vld [vmem:[%s526 + $0x48] sm:$0xf]
        %v1800 = vld [vmem:[%s526 + $0x4c] sm:$0xf]
        %v1801 = vld [vmem:[%s8] sm:$0xf]
        %v1802 = vld [vmem:[%s8 + $0x4] sm:$0xf]
        %v1803 = vld [vmem:[%s8 + $0x8] sm:$0xf]
        %v1804 = vld [vmem:[%s8 + $0xc] sm:$0xf]
        %v1805 = vld [vmem:[%s8 + $0x10] sm:$0xf]
        %v1806 = vld [vmem:[%s8 + $0x14] sm:$0xf]
        %v1807 = vld [vmem:[%s8 + $0x18] sm:$0xf]
        %v1808 = vld [vmem:[%s8 + $0x1c] sm:$0xf]
        %v1817 = vunpack.c.l.b16 %v1801
        %v1818 = vunpack.c.l.b16 %v1802
        %v1819 = vunpack.c.l.b16 %v1803
        %v1820 = vunpack.c.l.b16 %v1804
        %v1821 = vunpack.c.l.b16 %v1805
        %v1822 = vunpack.c.l.b16 %v1806
        %v1823 = vunpack.c.l.b16 %v1807
        %v1824 = vunpack.c.l.b16 %v1808
        %v1825 = vpack.c.b16 %v1818, %v1817
        %v1826 = vpack.c.b16 %v1820, %v1819
        %v1827 = vpack.c.b16 %v1822, %v1821
        %v1828 = vpack.c.b16 %v1824, %v1823
        %v1833 = vunpack.c.l.b16 %v1797
        %v1834 = vunpack.c.l.b16 %v1798
        %v1835 = vunpack.c.l.b16 %v1799
        %v1836 = vunpack.c.l.b16 %v1800
        %v1837 = vpack.c.b16 %v1834, %v1833
        %v1838 = vpack.c.b16 %v1836, %v1835
        %v1842 = vsel %vm784, %v1825, 0
        %v1845 = vsel %vm784, %v1826, 0
        %v1848 = vsel %vm784, %v1827, 0
        %v1851 = vsel %vm784, %v1828, 0
        %1853 = vmatprep.subr.bf16.mxu0 0
        %1854 = vmatpush1.bf16.msra.mxu0 %v1837
        %1855 = vmatprep.subr.bf16.mxu0 0
        %1856 = vmatpush1.bf16.msra.mxu0 %v1838
        %1857 = vmatprep.subr.bf16.mxu0 0
        %1858 = vmatpush1.bf16.msra.mxu0 0
        %1859 = vmatprep.subr.bf16.mxu0 0
        %1860 = vmatpush1.bf16.msra.mxu0 0
        %1861 = vmatprep.subr.bf16.mxu0 0
        %1862 = vmatpush1.bf16.msra.mxu0 0
        %1863 = vmatprep.subr.bf16.mxu0 0
        %1864 = vmatpush1.bf16.msra.mxu0 0
        %1865 = vmatprep.subr.bf16.mxu0 0
        %1866 = vmatpush1.bf16.msra.mxu0 0
        %1867 = vmatprep.subr.bf16.mxu0 0
        %1868 = vmatpush1.bf16.msra.mxu0 0
        %1869 = vmatprep.subr.bf16.mxu0 0
        %1870 = vmatpush1.bf16.msra.mxu0 0
        %1871 = vmatprep.subr.bf16.mxu0 0
        %1872 = vmatpush1.bf16.msra.mxu0 0
        %1873 = vmatprep.subr.bf16.mxu0 0
        %1874 = vmatpush1.bf16.msra.mxu0 0
        %1875 = vmatprep.subr.bf16.mxu0 0
        %1876 = vmatpush1.bf16.msra.mxu0 0
        %1877 = vmatprep.subr.bf16.mxu0 0
        %1878 = vmatpush1.bf16.msra.mxu0 0
        %1879 = vmatprep.subr.bf16.mxu0 0
        %1880 = vmatpush1.bf16.msra.mxu0 0
        %1881 = vmatprep.subr.bf16.mxu0 0
        %1882 = vmatpush1.bf16.msra.mxu0 0
        %1883 = vmatprep.subr.bf16.mxu0 0
        %1884 = vmatpush1.bf16.msra.mxu0 0
        %1885 = vmatprep.mubr.bf16.mxu0 0
        %1886 = vmatmul.mubr.bf16.gmra.mrb[0].mxu0 %v1842
        %v1887 = vpop.f32.mrb[0].mxu0
        %v1888 = vadd.f32 0.0, %v1887
        %v1889 = vpop.f32.mrb[0].mxu0
        %v1890 = vpop.f32.mrb[0].mxu0
        %v1891 = vadd.f32 0.0, %v1890
        %v1892 = vpop.f32.mrb[0].mxu0
        %1893 = vmatprep.mubr.bf16.mxu0 0
        %1894 = vmatmul.mubr.bf16.gmra.mrb[0].mxu0 %v1845
        %v1895 = vpop.f32.mrb[0].mxu0
        %v1896 = vadd.f32 0.0, %v1895
        %v1897 = vpop.f32.mrb[0].mxu0
        %v1898 = vpop.f32.mrb[0].mxu0
        %v1899 = vadd.f32 0.0, %v1898
        %v1900 = vpop.f32.mrb[0].mxu0
        %1901 = vmatprep.mubr.bf16.mxu0 0
        %1902 = vmatmul.mubr.bf16.gmra.mrb[0].mxu0 %v1848
        %v1903 = vpop.f32.mrb[0].mxu0
        %v1904 = vadd.f32 0.0, %v1903
        %v1905 = vpop.f32.mrb[0].mxu0
        %v1906 = vpop.f32.mrb[0].mxu0
        %v1907 = vadd.f32 0.0, %v1906
        %v1908 = vpop.f32.mrb[0].mxu0
        %1909 = vmatprep.mubr.bf16.mxu0 0
        %1910 = vmatmul.mubr.bf16.gmra.mrb[0].mxu0 %v1851
        %v1911 = vpop.f32.mrb[0].mxu0
        %v1912 = vadd.f32 0.0, %v1911
        %v1913 = vpop.f32.mrb[0].mxu0
        %v1914 = vpop.f32.mrb[0].mxu0
        %v1915 = vadd.f32 0.0, %v1914
        %v1916 = vpop.f32.mrb[0].mxu0
        %1917 = vdwg.mxu0
        %v1918 = vld [vmem:[%s9] sm:$0xff]
        %v1919 = vld [vmem:[%s9 + $0x8] sm:$0xff]
        %v1920 = vld [vmem:[%s9 + $0x10] sm:$0xff]
        %v1921 = vld [vmem:[%s9 + $0x18] sm:$0xff]
        %v1922 = vld [vmem:[%s9 + $0x20] sm:$0xff]
        %v1923 = vld [vmem:[%s9 + $0x28] sm:$0xff]
        %v1924 = vld [vmem:[%s9 + $0x30] sm:$0xff]
        %v1925 = vld [vmem:[%s9 + $0x38] sm:$0xff]
        %1927 = vset.pattern.permute.xlu0 0
        %1928 = vperm.xlu0 %1927, %v1918
        %v1929 = vpop.permute.xlu0 %1928
        %1932 = vset.pattern.permute.xlu0 0
        %1933 = vperm.xlu0 %1932, %v1919
        %v1934 = vpop.permute.xlu0 %1933
        %1937 = vset.pattern.permute.xlu0 0
        %1938 = vperm.xlu0 %1937, %v1920
        %v1939 = vpop.permute.xlu0 %1938
        %1942 = vset.pattern.permute.xlu0 0
        %1943 = vperm.xlu0 %1942, %v1921
        %v1944 = vpop.permute.xlu0 %1943
        %1947 = vset.pattern.permute.xlu0 0
        %1948 = vperm.xlu0 %1947, %v1922
        %v1949 = vpop.permute.xlu0 %1948
        %1952 = vset.pattern.permute.xlu0 0
        %1953 = vperm.xlu0 %1952, %v1923
        %v1954 = vpop.permute.xlu0 %1953
        %1957 = vset.pattern.permute.xlu0 0
        %1958 = vperm.xlu0 %1957, %v1924
        %v1959 = vpop.permute.xlu0 %1958
        %1962 = vset.pattern.permute.xlu0 0
        %1963 = vperm.xlu0 %1962, %v1925
        %v1964 = vpop.permute.xlu0 %1963
        %v1966 = vmul.f32 %v1888, %v1929
        %v1967 = vmul.f32 %v1891, %v1934
        %v1968 = vmul.f32 %v1896, %v1939
        %v1969 = vmul.f32 %v1899, %v1944
        %v1970 = vmul.f32 %v1904, %v1949
        %v1971 = vmul.f32 %v1907, %v1954
        %v1972 = vmul.f32 %v1912, %v1959
        %v1973 = vmul.f32 %v1915, %v1964
        %v1974 = vld [vmem:[%s10] sm:$0xff]
        %v1975 = vld [vmem:[%s10 + $0x8] sm:$0xff]
        %v1976 = vld [vmem:[%s10 + $0x10] sm:$0xff]
        %v1977 = vld [vmem:[%s10 + $0x18] sm:$0xff]
        %v1978 = vld [vmem:[%s10 + $0x20] sm:$0xff]
        %v1979 = vld [vmem:[%s10 + $0x28] sm:$0xff]
        %v1980 = vld [vmem:[%s10 + $0x30] sm:$0xff]
        %v1981 = vld [vmem:[%s10 + $0x38] sm:$0xff]
        %1983 = vset.pattern.permute.xlu0 0
        %1984 = vperm.xlu0 %1983, %v1974
        %v1985 = vpop.permute.xlu0 %1984
        %1988 = vset.pattern.permute.xlu0 0
        %1989 = vperm.xlu0 %1988, %v1975
        %v1990 = vpop.permute.xlu0 %1989
        %1993 = vset.pattern.permute.xlu0 0
        %1994 = vperm.xlu0 %1993, %v1976
        %v1995 = vpop.permute.xlu0 %1994
        %1998 = vset.pattern.permute.xlu0 0
        %1999 = vperm.xlu0 %1998, %v1977
        %v2000 = vpop.permute.xlu0 %1999
        %2003 = vset.pattern.permute.xlu0 0
        %2004 = vperm.xlu0 %2003, %v1978
        %v2005 = vpop.permute.xlu0 %2004
        %2008 = vset.pattern.permute.xlu0 0
        %2009 = vperm.xlu0 %2008, %v1979
        %v2010 = vpop.permute.xlu0 %2009
        %2013 = vset.pattern.permute.xlu0 0
        %2014 = vperm.xlu0 %2013, %v1980
        %v2015 = vpop.permute.xlu0 %2014
        %2018 = vset.pattern.permute.xlu0 0
        %2019 = vperm.xlu0 %2018, %v1981
        %v2020 = vpop.permute.xlu0 %2019
        %v2022 = vadd.f32 %v1966, %v1985
        %v2023 = vadd.f32 %v1967, %v1990
        %v2024 = vadd.f32 %v1968, %v1995
        %v2025 = vadd.f32 %v1969, %v2000
        %v2026 = vadd.f32 %v1970, %v2005
        %v2027 = vadd.f32 %v1971, %v2010
        %v2028 = vadd.f32 %v1972, %v2015
        %v2029 = vadd.f32 %v1973, %v2020
        %v2030 = vadd.f32 %v1789, %v2022
        %v2031 = vadd.f32 %v1790, %v2023
        %v2032 = vadd.f32 %v1791, %v2024
        %v2033 = vadd.f32 %v1792, %v2025
        %v2034 = vadd.f32 %v1793, %v2026
        %v2035 = vadd.f32 %v1794, %v2027
        %v2036 = vadd.f32 %v1795, %v2028
        %v2037 = vadd.f32 %v1796, %v2029
        %v2038 = vmax.f32 %v2030, 0.0
        %v2039 = vmax.f32 %v2031, 0.0
        %v2040 = vmax.f32 %v2032, 0.0
        %v2041 = vmax.f32 %v2033, 0.0
        %v2042 = vmax.f32 %v2034, 0.0
        %v2043 = vmax.f32 %v2035, 0.0
        %v2044 = vmax.f32 %v2036, 0.0
        %v2045 = vmax.f32 %v2037, 0.0
        %v2046 = vmul.f32 %v2038, %v1051
        %v2047 = vmul.f32 %v2039, %v1051
        %v2048 = vmul.f32 %v2040, %v1051
        %v2049 = vmul.f32 %v2041, %v1051
        %v2050 = vmul.f32 %v2042, %v1051
        %v2051 = vmul.f32 %v2043, %v1051
        %v2052 = vmul.f32 %v2044, %v1051
        %v2053 = vmul.f32 %v2045, %v1051
        %2054 = vst [vmem:[%s561] sm:$0xff] %v2046
        %2055 = vst [vmem:[%s561 + $0x8] sm:$0xff] %v2047
        %2056 = vst [vmem:[%s561 + $0x10] sm:$0xff] %v2048
        %2057 = vst [vmem:[%s561 + $0x18] sm:$0xff] %v2049
        %2058 = vst [vmem:[%s561 + $0x20] sm:$0xff] %v2050
        %2059 = vst [vmem:[%s561 + $0x28] sm:$0xff] %v2051
        %2060 = vst [vmem:[%s561 + $0x30] sm:$0xff] %v2052
        %2061 = vst [vmem:[%s561 + $0x38] sm:$0xff] %v2053
        %s2062 = sand.u32 %s266, 1
        %s2063 = sand.u32 %s266, 1
        %s2064 = smul.addr %s2063, 64
        %s2065 = scalar_lea.vmem [#allocation5], %s2064
        // Predicated region
        $region106: #{forward.5} parent=100 // pred_check
          %p2066 = pneg %p276
        $region107: #{forward.5} parent=100 // pred_check_branch
          %2068 = sbr.rel (%p2066) target = $region109
        $region108: #{forward.5} parent=100 // pred_region
          %s2069 = smul.addr %s22, 8
          %s2070 = scalar_lea.vmem %s11, %s2069
          // Predicated region
          $region110: #{forward.5} parent=108 // pred_check
            _
          $region111: #{forward.5} parent=108 // pred_check_branch
            %2072 = sbr.rel (0) target = $region113
          $region112: #{forward.5} parent=108 // pred_region
            // Predicated region
            $region114: #{forward.5} parent=112 // pred_check
              _
            $region115: #{forward.5} parent=112 // pred_check_branch
              %2074 = sbr.rel (0) target = $region117
            $region116: #{forward.5} parent=112 // pred_region
              // Predicated region
              $region129: #{forward.5} parent=116 // pred_check
                _
              $region130: #{forward.5} parent=116 // pred_check_branch
                %2103 = sbr.rel (0) target = $region132
              $region131: #{forward.5} parent=116 // pred_region
                loop: start=0, step=1, limit=1
                $region133: #{forward.5} parent=131 // loop_pre_header
                  _
                $region134: #{forward.5} parent=131 // loop_header
                  %s2105 = sphi 0, %s2109
                  %p2106 = scmp.ge.s32.totalorder %s2105, 1
                  %s2110 = sphi %s2065, %s2065
                  %s2111 = sphi %s2070, %s2070
                $region135: #{forward.5} parent=131 // loop_header_branch
                  %2108 = sbr.rel (%p2106) target = $region139
                $region136: #{forward.5} parent=131 // loop_body
                  %v2112 = vld [vmem:[%s2110] sm:$0xff]
                  %2113 = vst [vmem:[%s2111] sm:$0xff] %v2112
                  %v2114 = vld [vmem:[%s2110 + $0x8] sm:$0xff]
                  %2115 = vst [vmem:[%s2111 + $0x10] sm:$0xff] %v2114
                  %v2116 = vld [vmem:[%s2110 + $0x10] sm:$0xff]
                  %2117 = vst [vmem:[%s2111 + $0x20] sm:$0xff] %v2116
                  %v2118 = vld [vmem:[%s2110 + $0x18] sm:$0xff]
                  %2119 = vst [vmem:[%s2111 + $0x30] sm:$0xff] %v2118
                  %v2120 = vld [vmem:[%s2110 + $0x20] sm:$0xff]
                  %2121 = vst [vmem:[%s2111 + $0x40] sm:$0xff] %v2120
                  %v2122 = vld [vmem:[%s2110 + $0x28] sm:$0xff]
                  %2123 = vst [vmem:[%s2111 + $0x50] sm:$0xff] %v2122
                  %v2124 = vld [vmem:[%s2110 + $0x30] sm:$0xff]
                  %2125 = vst [vmem:[%s2111 + $0x60] sm:$0xff] %v2124
                  %v2126 = vld [vmem:[%s2110 + $0x38] sm:$0xff]
                  %2127 = vst [vmem:[%s2111 + $0x70] sm:$0xff] %v2126
                $region137: #{forward.5} parent=131 // loop_footer
                  %s2109 = sadd.s32 1, %s2105
                $region138: #{forward.5} parent=131 // loop_footer_branch
                  %2104 = sbr.rel target = $region134
                $region139: #{forward.5} parent=131 // loop_exit
                  _
              $region132: #{forward.5} parent=116 // pred_fallthru
                _
              // Predicated region
              $region140: #{forward.5} parent=116 // pred_check
                _
              $region141: #{forward.5} parent=116 // pred_check_branch
                %2129 = sbr.rel target = $region143
              $region142: #{forward.5} parent=116 // pred_region
                _
              $region143: #{forward.5} parent=116 // pred_fallthru
                _
            $region117: #{forward.5} parent=112 // pred_fallthru
              _
            // Predicated region
            $region118: #{forward.5} parent=112 // pred_check
              _
            $region119: #{forward.5} parent=112 // pred_check_branch
              %2076 = sbr.rel target = $region121
            $region120: #{forward.5} parent=112 // pred_region
              loop: start=0, step=1, limit=1
              $region122: #{forward.5} parent=120 // loop_pre_header
                _
              $region123: #{forward.5} parent=120 // loop_header
                %s2079 = sphi 0, %s2083
                %p2080 = scmp.ge.s32.totalorder %s2079, 1
                %s2084 = sphi %s2065, %s2065
                %s2085 = sphi %s2070, %s2070
              $region124: #{forward.5} parent=120 // loop_header_branch
                %2082 = sbr.rel (%p2080) target = $region128
              $region125: #{forward.5} parent=120 // loop_body
                %v2086 = vld [vmem:[%s2084] sm:$0xff]
                %2087 = vst [vmem:[%s2085] sm:$0xff] %v2086
                %v2088 = vld [vmem:[%s2084 + $0x8] sm:$0xff]
                %2089 = vst [vmem:[%s2085 + $0x10] sm:$0xff] %v2088
                %v2090 = vld [vmem:[%s2084 + $0x10] sm:$0xff]
                %2091 = vst [vmem:[%s2085 + $0x20] sm:$0xff] %v2090
                %v2092 = vld [vmem:[%s2084 + $0x18] sm:$0xff]
                %2093 = vst [vmem:[%s2085 + $0x30] sm:$0xff] %v2092
                %v2094 = vld [vmem:[%s2084 + $0x20] sm:$0xff]
                %2095 = vst [vmem:[%s2085 + $0x40] sm:$0xff] %v2094
                %v2096 = vld [vmem:[%s2084 + $0x28] sm:$0xff]
                %2097 = vst [vmem:[%s2085 + $0x50] sm:$0xff] %v2096
                %v2098 = vld [vmem:[%s2084 + $0x30] sm:$0xff]
                %2099 = vst [vmem:[%s2085 + $0x60] sm:$0xff] %v2098
                %v2100 = vld [vmem:[%s2084 + $0x38] sm:$0xff]
                %2101 = vst [vmem:[%s2085 + $0x70] sm:$0xff] %v2100
              $region126: #{forward.5} parent=120 // loop_footer
                %s2083 = sadd.s32 1, %s2079
              $region127: #{forward.5} parent=120 // loop_footer_branch
                %2078 = sbr.rel target = $region123
              $region128: #{forward.5} parent=120 // loop_exit
                _
            $region121: #{forward.5} parent=112 // pred_fallthru
              _
          $region113: #{forward.5} parent=108 // pred_fallthru
            _
          %2130 = vnop
        $region109: #{forward.5} parent=100 // pred_fallthru
          _
      $region101: #{forward.5} parent=5 // pred_fallthru
        _
      %p2131 = scmp.le.s32.totalorder 2, %s17
      // Predicated region
      $region144: #{forward.5} parent=5 // pred_check
        %p2132 = pneg %p2131
      $region145: #{forward.5} parent=5 // pred_check_branch
        %2134 = sbr.rel (%p2132) target = $region147
      $region146: #{forward.5} parent=5 // pred_region
        %s2135 = ssub.s32 %s17, 2
        // Predicated region
        $region148: #{forward.5} parent=146 // pred_check
          %p2136 = pneg %p282
        $region149: #{forward.5} parent=146 // pred_check_branch
          %2138 = sbr.rel (%p2136) target = $region151
        $region150: #{forward.5} parent=146 // pred_region
          %s2139 = sand.u32 %s267, 1
          %s2140 = sand.u32 %s267, 1
          %s2141 = smul.addr %s2140, 64
          %s2142 = scalar_lea.vmem [#allocation5], %s2141
        $region151: #{forward.5} parent=146 // pred_fallthru
          _
      $region147: #{forward.5} parent=5 // pred_fallthru
        _
    $region6: #{forward.5} parent=1 // loop_footer
      %s21 = sadd.s32 1, %s17
    $region7: #{forward.5} parent=1 // loop_footer_branch
      %16 = sbr.rel target = $region3
    $region8: #{forward.5} parent=1 // loop_exit
      _

</llo_original>
